<compile_context>
chip_gen: v7x
topology: tpu7x:2x2x1
jax: 0.10.0
libtpu: 0.0.40
codegen_flags: <defaults>
</compile_context>

<pallas_src>
import jax
import jax.numpy as jnp
from jax import lax
from jax.experimental import pallas as pl
from jax.experimental.pallas import tpu as pltpu

# local_center_loss defaults
ALPHA = 0.5            # defined by the reference module but unused in forward
BETA = 1.0
IGNORE_INDEX = 6
NUM_CLASSES = 6
NUM_PROTO = 8          # prototypes per class


# ---------------------------------------------------------------------------
# bilinear interpolation matrices (F.interpolate, bilinear, align_corners=False)
# ---------------------------------------------------------------------------
def _interp_matrix(out_size, in_size):
    """(out_size, in_size) matrix M s.t. up = M @ coarse along one axis."""
    scale = in_size / out_size
    s = (jnp.arange(out_size, dtype=jnp.float32) + 0.5) * scale - 0.5
    s = jnp.maximum(s, 0.0)
    i0 = jnp.minimum(jnp.floor(s).astype(jnp.int32), in_size - 1)
    i1 = jnp.minimum(i0 + 1, in_size - 1)
    f = s - i0.astype(jnp.float32)
    return (jax.nn.one_hot(i0, in_size, dtype=jnp.float32) * (1.0 - f)[:, None]
            + jax.nn.one_hot(i1, in_size, dtype=jnp.float32) * f[:, None])


# ---------------------------------------------------------------------------
# VMEM-budget-driven tile selection
# ---------------------------------------------------------------------------
def _vmem_capacity_bytes():
    try:
        return int(pltpu.get_tpu_info().vmem_capacity_bytes)
    except Exception:
        return 64 * 1024 * 1024          # conservative (v7x-sized) fallback


def _pick_tile_and_vmem(H, W, K, MK, h_head, w_head, act_bytes, n_rows):
    cap = _vmem_capacity_bytes()
    budget = int(cap * 0.45)             # leave room for compiler temps / pipeline
    lane_w = max(W, 128)

    def estimate(th):
        # double-buffered streamed inputs
        io = 2 * (2 * K * th * W * act_bytes      # pred + aux
                  + th * W * 4                    # gt (int32)
                  + th * h_head * 2)              # wy tile (bf16)
        # coarse-resolution constants (coarse_pred + distance_l2 + wxT), bf16
        const = 2 * ((K + MK) * h_head * w_head * 2 + w_head * W * 2)
        acc = n_rows * 8 * lane_w * 4             # (n_rows, 1, W) scratch, padded
        # rough bound on live per-pixel f32 temporaries in the kernel body
        tmp = (3 * K + 8) * th * lane_w * 4
        return io + const + acc + tmp

    cands = [t for t in (256, 128, 64, 32, 16, 8) if H % t == 0]
    tile_h = None
    for t in cands:
        if estimate(t) <= budget:
            tile_h = t
            break
    if tile_h is None:
        tile_h = cands[-1] if cands else H
    vmem_limit = min(int(cap * 0.8), 100 * 1024 * 1024)
    return tile_h, vmem_limit


# ---------------------------------------------------------------------------
# pixel kernel: fused CE (pred + aux), dice stats, inter / outer p2c stats,
# with bilinear upsampling of the coarse maps done on the MXU inside the kernel
# ---------------------------------------------------------------------------
def _pixel_loss_kernel(pred_ref, aux_ref, gt_ref, coarse_ref, dist_ref,
                       wy_ref, wx_ref, out_ref, acc_ref):
    t = pl.program_id(1)
    n_t = pl.num_programs(1)

    K = pred_ref.shape[1]
    W = pred_ref.shape[3]
    MK = dist_ref.shape[1]
    M = MK // K
    n_rows = acc_ref.shape[0]

    ROW_CE, ROW_AUX, ROW_VALID, ROW_INTER, ROW_OUTER = 0, 1, 2, 3, 4
    ROW_DI, ROW_DP, ROW_DG = 5, 5 + K, 5 + 2 * K

    # ---- init accumulators at the first spatial tile of each batch ----
    @pl.when(t == 0)
    def _init():
        acc_ref[...] = jnp.zeros_like(acc_ref)
        acc_ref[ROW_OUTER] = jnp.full((1, W), jnp.inf, jnp.float32)

    gt = gt_ref[0, 0]                                   # (TH, W) int32
    valid = gt != IGNORE_INDEX
    validf = valid.astype(jnp.float32)
    ohf = [((gt == k) & valid).astype(jnp.float32) for k in range(K)]

    # ---- masked softmax cross-entropy (per-pixel NLL), channels unrolled ----
    def masked_nll(ref):
        logits = [ref[0, k].astype(jnp.float32) for k in range(K)]
        mx = logits[0]
        for k in range(1, K):
            mx = jnp.maximum(mx, logits[k])
        z = [logits[k] - mx for k in range(K)]
        se = jnp.exp(z[0])
        for k in range(1, K):
            se = se + jnp.exp(z[k])
        lse = jnp.log(se)
        z_gt = ohf[0] * z[0]
        for k in range(1, K):
            z_gt = z_gt + ohf[k] * z[k]
        return (lse - z_gt) * validf                    # (TH, W)

    acc_ref[ROW_CE] += jnp.sum(masked_nll(pred_ref), axis=0, keepdims=True)
    acc_ref[ROW_AUX] += jnp.sum(masked_nll(aux_ref), axis=0, keepdims=True)
    acc_ref[ROW_VALID] += jnp.sum(validf, axis=0, keepdims=True)

    # ---- fused bilinear upsample (row pass then column pass, both on MXU) ----
    wy = wy_ref[...]                                    # (TH, h_head)  bf16
    wx = wx_ref[...]                                    # (w_head, W)   bf16

    def upsample(chan):                                 # (h_head, w_head) bf16
        rows = jnp.dot(wy, chan, preferred_element_type=jnp.float32)
        return jnp.dot(rows.astype(jnp.bfloat16), wx,
                       preferred_element_type=jnp.float32)   # (TH, W) f32

    # ---- dice statistics on the upsampled coarse prediction ----
    cl = [upsample(coarse_ref[0, k]) for k in range(K)]
    mc = cl[0]
    for k in range(1, K):
        mc = jnp.maximum(mc, cl[k])
    ex = [jnp.exp(cl[k] - mc) for k in range(K)]
    s = ex[0]
    for k in range(1, K):
        s = s + ex[k]
    inv_s = pl.reciprocal(s, approx=True)
    for k in range(K):
        pm = ex[k] * inv_s * validf
        acc_ref[ROW_DI + k] += jnp.sum(pm * ohf[k], axis=0, keepdims=True)
        acc_ref[ROW_DP + k] += jnp.sum(pm, axis=0, keepdims=True)
        acc_ref[ROW_DG + k] += jnp.sum(ohf[k], axis=0, keepdims=True)

    # ---- per-class min distance over prototypes, chunked per channel ----
    # distance_l2 channel layout is m*K + k (torch .view(B, M, K, h, w), min dim=1)
    inter = None
    outer = None
    for k in range(K):
        md = upsample(dist_ref[0, k])                   # m = 0 channel
        for m in range(1, M):
            md = jnp.minimum(md, upsample(dist_ref[0, m * K + k]))
        sel = md * ohf[k]
        inter = sel if inter is None else inter + sel
        oth = md * (1.0 - ohf[k]) * validf
        oth = jnp.where(oth != 0.0, oth, jnp.inf)       # matches torch != 0 filter
        outer = oth if outer is None else jnp.minimum(outer, oth)
    acc_ref[ROW_INTER] += jnp.sum(inter, axis=0, keepdims=True)
    acc_ref[ROW_OUTER] = jnp.minimum(acc_ref[ROW_OUTER],
                                     jnp.min(outer, axis=0, keepdims=True))

    # ---- finalize once per batch: lane reductions, write per-batch stats ----
    @pl.when(t == n_t - 1)
    def _finalize():
        for r in range(n_rows):
            if r == ROW_OUTER:
                v = jnp.min(acc_ref[r], axis=1, keepdims=True)
            else:
                v = jnp.sum(acc_ref[r], axis=1, keepdims=True)
            out_ref[0, r] = v                           # (1, 1) row write


def _pixel_stats(pred, aux, gt4, coarse_bf, dist_bf, wy_bf, wxT_bf):
    B, K, H, W = pred.shape
    MK = dist_bf.shape[1]
    h_head, w_head = coarse_bf.shape[2], coarse_bf.shape[3]
    n_rows = 5 + 3 * K
    act_bytes = jnp.dtype(pred.dtype).itemsize
    tile_h, vmem_limit = _pick_tile_and_vmem(H, W, K, MK, h_head, w_head,
                                             act_bytes, n_rows)
    n_t = H // tile_h

    out = pl.pallas_call(
        _pixel_loss_kernel,
        out_shape=jax.ShapeDtypeStruct((B, n_rows, 1, 1), jnp.float32),
        grid_spec=pltpu.PrefetchScalarGridSpec(
            num_scalar_prefetch=0,
            grid=(B, n_t),
            in_specs=[
                pl.BlockSpec((1, K, tile_h, W), lambda b, t: (b, 0, t, 0)),
                pl.BlockSpec((1, K, tile_h, W), lambda b, t: (b, 0, t, 0)),
                pl.BlockSpec((1, 1, tile_h, W), lambda b, t: (b, 0, t, 0)),
                pl.BlockSpec((1, K, h_head, w_head), lambda b, t: (b, 0, 0, 0)),
                pl.BlockSpec((1, MK, h_head, w_head), lambda b, t: (b, 0, 0, 0)),
                pl.BlockSpec((tile_h, h_head), lambda b, t: (t, 0)),
                pl.BlockSpec((w_head, W), lambda b, t: (0, 0)),
            ],
            out_specs=pl.BlockSpec((1, n_rows, 1, 1), lambda b, t: (b, 0, 0, 0)),
            scratch_shapes=[pltpu.VMEM((n_rows, 1, W), jnp.float32)],
        ),
        compiler_params=pltpu.CompilerParams(
            dimension_semantics=("parallel", "arbitrary"),
            vmem_limit_bytes=vmem_limit),
    )(pred, aux, gt4, coarse_bf, dist_bf, wy_bf, wxT_bf)
    return out.reshape(B, n_rows)


# ---------------------------------------------------------------------------
# prototype terms: orthogonality L1 cost + pairwise subspace separation.
# (48 x 32) problem — computed in plain JAX/XLA per the performance review;
# exactly matches the reference (elementwise +1e-10 before the Frobenius norm).
# ---------------------------------------------------------------------------
def _prototype_losses(prototypes, num_classes, num_proto):
    c = prototypes.shape[-1]
    S = prototypes.reshape(num_classes, num_proto, c).astype(jnp.float32)
    orth = jnp.einsum('kmc,knc->kmn', S, S)                     # (K, M, M)
    eye_m = jnp.eye(num_proto, dtype=jnp.float32)
    diff = orth - eye_m
    # torch.norm(p=1, dim=[1,2]) is the entrywise L1 norm; relu(x - 0) == relu
    orth_cost = jnp.sum(jax.nn.relu(jnp.sum(jnp.abs(diff), axis=(1, 2))))
    proj = jnp.einsum('kmc,kmd->kcd', S, S)                     # (K, c, c)
    pair = jnp.sqrt(jnp.sum(jnp.square(proj[:, None] - proj[None, :] + 1e-10),
                            axis=(2, 3)))                       # (K, K)
    subspace_sep = 0.5 * jnp.sum(jnp.abs(pair)) / jnp.sqrt(jnp.float32(2.0))
    return orth_cost, subspace_sep


# ---------------------------------------------------------------------------
# forward
# ---------------------------------------------------------------------------
@jax.jit
def local_center_loss_forward(pred, coarse_pred, adaptive_class_center, aux,
                              p2c_sim_map, distance_l2, prototypes, gt_mask):
    """Training-mode forward of local_center_loss (nn.Module default training=True)."""
    del adaptive_class_center, p2c_sim_map  # unpacked but unused by the reference forward
    B, h, w = gt_mask.shape
    _, _, h_head, w_head = coarse_pred.shape
    K = NUM_CLASSES
    M = NUM_PROTO
    c = prototypes.shape[-1]

    # Separable bilinear upsample (align_corners=False) as two in-kernel matmuls.
    wy_bf = _interp_matrix(h, h_head).astype(jnp.bfloat16)       # (h, h_head)
    wxT_bf = _interp_matrix(w, w_head).T.astype(jnp.bfloat16)    # (w_head, w)

    coarse_bf = coarse_pred.astype(jnp.bfloat16)                 # (B, K, h_head, w_head)
    dist_bf = distance_l2.reshape(B, M * K, h_head, w_head).astype(jnp.bfloat16)
    gt4 = gt_mask.reshape(B, 1, h, w).astype(jnp.int32)

    stats = _pixel_stats(pred, aux, gt4, coarse_bf, dist_bf, wy_bf, wxT_bf)
    ce_sum = stats[:, 0]
    aux_sum = stats[:, 1]
    valid = stats[:, 2]
    inter_sum = stats[:, 3]
    outer_min = stats[:, 4]
    dice_i = stats[:, 5:5 + K]
    dice_p = stats[:, 5 + K:5 + 2 * K]
    dice_g = stats[:, 5 + 2 * K:5 + 3 * K]

    ce_loss = jnp.sum(ce_sum) / jnp.sum(valid)
    aux_loss = jnp.sum(aux_sum) / jnp.sum(valid)
    inter_p2c_loss = jnp.sum(inter_sum / valid) / B
    outer_p2c_loss = 1.0 / (jnp.min(outer_min) + 0.001)

    # TODO(synk): DiceLoss is not defined in the reference source; using a
    # standard multi-class soft dice (softmax probs, ignore_index pixels
    # masked, per-class dice averaged) built from the kernel's statistics.
    eps = 1e-6
    inter_c = jnp.sum(dice_i, axis=0)
    psum_c = jnp.sum(dice_p, axis=0)
    gsum_c = jnp.sum(dice_g, axis=0)
    dice_per_class = (2.0 * inter_c + eps) / (psum_c + gsum_c + eps)
    dice_loss = 1.0 - jnp.mean(dice_per_class)

    orth_raw, sep_raw = _prototype_losses(prototypes, K, M)
    orth_cost = orth_raw / (c * K)
    subspace_sep = sep_raw / (c * K)

    total = (0.1 * inter_p2c_loss + ce_loss + BETA * dice_loss
             + 0.4 * aux_loss - 0.08 * subspace_sep + orth_cost + outer_p2c_loss)
    return total


if __name__ == "__main__":
    key = jax.random.PRNGKey(0)
    B, h, w = 2, 16, 16
    h_head, w_head = 8, 8
    c = 32
    K, M = NUM_CLASSES, NUM_PROTO

    ks = jax.random.split(key, 7)
    pred = jax.random.normal(ks[0], (B, K, h, w), jnp.float32)
    coarse_pred = jax.random.normal(ks[1], (B, K, h_head, w_head), jnp.float32)
    adaptive_class_center = jax.random.normal(ks[2], (B, K * M, c), jnp.float32)  # unused
    aux = jax.random.normal(ks[3], (B, K, h, w), jnp.float32)
    p2c_sim_map = jax.random.normal(ks[4], (B, K * M, h_head, w_head), jnp.float32)  # unused
    distance_l2 = jnp.abs(
        jax.random.normal(ks[5], (B, K * M, h_head, w_head), jnp.float32)) + 0.1
    prototypes = jax.random.normal(ks[6], (K * M, c), jnp.float32)
    gt_mask = jax.random.randint(jax.random.PRNGKey(42), (B, h, w), 0, K + 1,
                                 jnp.int32)  # values 0..6, 6 == ignore_index

    loss = local_center_loss_forward(pred, coarse_pred, adaptive_class_center,
                                     aux, p2c_sim_map, distance_l2, prototypes,
                                     gt_mask)
    jax.block_until_ready(loss)
    print("KERNEL_OK")
</pallas_src>

<mosaic_0001>
module attributes {stable_mosaic.version = 11 : i64} {
  func.func @_pixel_loss_kernel(%arg0: i32, %arg1: i32, %arg2: memref<1x6x16x16xf32, #tpu.memory_space<vmem>>, %arg3: memref<1x6x16x16xf32, #tpu.memory_space<vmem>>, %arg4: memref<1x1x16x16xi32, #tpu.memory_space<vmem>>, %arg5: memref<1x6x8x8xbf16, #tpu.memory_space<vmem>>, %arg6: memref<1x48x8x8xbf16, #tpu.memory_space<vmem>>, %arg7: memref<16x8xbf16, #tpu.memory_space<vmem>>, %arg8: memref<8x16xbf16, #tpu.memory_space<vmem>>, %arg9: memref<1x23x1x1xf32, #tpu.memory_space<vmem>>, %arg10: memref<23x1x16xf32, #tpu.memory_space<vmem>>) attributes {dimension_semantics = [#tpu.dimension_semantics<parallel>, #tpu.dimension_semantics<arbitrary>], iteration_bounds = array<i64: 2, 1>, scalar_prefetch = 0 : i64, scratch_operands = 1 : i64, tpu.core_type = #tpu.core_type<tc>, window_params = [{transform_indices = @transform_0, window_bounds = array<i64: 1, 6, 16, 16>}, {transform_indices = @transform_1, window_bounds = array<i64: 1, 6, 16, 16>}, {transform_indices = @transform_2, window_bounds = array<i64: 1, 1, 16, 16>}, {transform_indices = @transform_3, window_bounds = array<i64: 1, 6, 8, 8>}, {transform_indices = @transform_4, window_bounds = array<i64: 1, 48, 8, 8>}, {transform_indices = @transform_5, window_bounds = array<i64: 16, 8>}, {pipeline_mode = #tpu.pipeline_mode<synchronous>, transform_indices = @transform_6, window_bounds = array<i64: 8, 16>}, {transform_indices = @transform_7, window_bounds = array<i64: 1, 23, 1, 1>}]} {
    %c0_i32 = arith.constant 0 : i32
    %0 = arith.cmpi eq, %arg1, %c0_i32 : i32
    %1 = arith.extui %0 : i1 to i32
    %c0_i32_0 = arith.constant 0 : i32
    %2 = arith.cmpi ne, %1, %c0_i32_0 : i32
    scf.if %2 {
      %cst_514 = arith.constant 0.000000e+00 : f32
      %741 = vector.broadcast %cst_514 : f32 to vector<23x1x16xf32>
      %c0_515 = arith.constant 0 : index
      %c0_516 = arith.constant 0 : index
      %c0_517 = arith.constant 0 : index
      %742 = vector.load %arg10[%c0_515, %c0_516, %c0_517] : memref<23x1x16xf32, #tpu.memory_space<vmem>>, vector<23x1x16xf32>
      tpu.vector_store %arg10[%c0_515, %c0_516, %c0_517], %741 {strides = array<i32>} : memref<23x1x16xf32, #tpu.memory_space<vmem>>, vector<23x1x16xf32>,
      %cst_518 = arith.constant 0x7F800000 : f32
      %743 = vector.broadcast %cst_518 : f32 to vector<1x16xf32>
      %c4_519 = arith.constant 4 : index
      %c0_520 = arith.constant 0 : index
      %c0_521 = arith.constant 0 : index
      %744 = vector.load %arg10[%c4_519, %c0_520, %c0_521] : memref<23x1x16xf32, #tpu.memory_space<vmem>>, vector<1x1x16xf32>
      %745 = vector.shape_cast %744 : vector<1x1x16xf32> to vector<1x16xf32>
      %746 = vector.shape_cast %743 : vector<1x16xf32> to vector<1x1x16xf32>
      tpu.vector_store %arg10[%c4_519, %c0_520, %c0_521], %746 {strides = array<i32>} : memref<23x1x16xf32, #tpu.memory_space<vmem>>, vector<1x1x16xf32>,
    } else {
    }
    %c0 = arith.constant 0 : index
    %c0_1 = arith.constant 0 : index
    %c0_2 = arith.constant 0 : index
    %c0_3 = arith.constant 0 : index
    %3 = vector.load %arg4[%c0, %c0_1, %c0_2, %c0_3] : memref<1x1x16x16xi32, #tpu.memory_space<vmem>>, vector<1x1x16x16xi32>
    %4 = vector.shape_cast %3 : vector<1x1x16x16xi32> to vector<16x16xi32>
    %c6_i32 = arith.constant 6 : i32
    %5 = vector.broadcast %c6_i32 : i32 to vector<16x16xi32>
    %6 = arith.cmpi ne, %4, %5 : vector<16x16xi32>
    %7 = arith.extui %6 : vector<16x16xi1> to vector<16x16xi32>
    %8 = arith.sitofp %7 : vector<16x16xi32> to vector<16x16xf32>
    %c0_i32_4 = arith.constant 0 : i32
    %9 = vector.broadcast %c0_i32_4 : i32 to vector<16x16xi32>
    %10 = arith.cmpi eq, %4, %9 : vector<16x16xi32>
    %11 = arith.andi %10, %6 : vector<16x16xi1>
    %12 = arith.extui %11 : vector<16x16xi1> to vector<16x16xi32>
    %13 = arith.sitofp %12 : vector<16x16xi32> to vector<16x16xf32>
    %c1_i32 = arith.constant 1 : i32
    %14 = vector.broadcast %c1_i32 : i32 to vector<16x16xi32>
    %15 = arith.cmpi eq, %4, %14 : vector<16x16xi32>
    %16 = arith.andi %15, %6 : vector<16x16xi1>
    %17 = arith.extui %16 : vector<16x16xi1> to vector<16x16xi32>
    %18 = arith.sitofp %17 : vector<16x16xi32> to vector<16x16xf32>
    %c2_i32 = arith.constant 2 : i32
    %19 = vector.broadcast %c2_i32 : i32 to vector<16x16xi32>
    %20 = arith.cmpi eq, %4, %19 : vector<16x16xi32>
    %21 = arith.andi %20, %6 : vector<16x16xi1>
    %22 = arith.extui %21 : vector<16x16xi1> to vector<16x16xi32>
    %23 = arith.sitofp %22 : vector<16x16xi32> to vector<16x16xf32>
    %c3_i32 = arith.constant 3 : i32
    %24 = vector.broadcast %c3_i32 : i32 to vector<16x16xi32>
    %25 = arith.cmpi eq, %4, %24 : vector<16x16xi32>
    %26 = arith.andi %25, %6 : vector<16x16xi1>
    %27 = arith.extui %26 : vector<16x16xi1> to vector<16x16xi32>
    %28 = arith.sitofp %27 : vector<16x16xi32> to vector<16x16xf32>
    %c4_i32 = arith.constant 4 : i32
    %29 = vector.broadcast %c4_i32 : i32 to vector<16x16xi32>
    %30 = arith.cmpi eq, %4, %29 : vector<16x16xi32>
    %31 = arith.andi %30, %6 : vector<16x16xi1>
    %32 = arith.extui %31 : vector<16x16xi1> to vector<16x16xi32>
    %33 = arith.sitofp %32 : vector<16x16xi32> to vector<16x16xf32>
    %c5_i32 = arith.constant 5 : i32
    %34 = vector.broadcast %c5_i32 : i32 to vector<16x16xi32>
    %35 = arith.cmpi eq, %4, %34 : vector<16x16xi32>
    %36 = arith.andi %35, %6 : vector<16x16xi1>
    %37 = arith.extui %36 : vector<16x16xi1> to vector<16x16xi32>
    %38 = arith.sitofp %37 : vector<16x16xi32> to vector<16x16xf32>
    %c0_5 = arith.constant 0 : index
    %c0_6 = arith.constant 0 : index
    %c0_7 = arith.constant 0 : index
    %39 = vector.load %arg10[%c0_5, %c0_6, %c0_7] : memref<23x1x16xf32, #tpu.memory_space<vmem>>, vector<1x1x16xf32>
    %40 = vector.shape_cast %39 : vector<1x1x16xf32> to vector<1x16xf32>
    %c0_8 = arith.constant 0 : index
    %c0_9 = arith.constant 0 : index
    %c0_10 = arith.constant 0 : index
    %c0_11 = arith.constant 0 : index
    %41 = vector.load %arg2[%c0_8, %c0_9, %c0_10, %c0_11] : memref<1x6x16x16xf32, #tpu.memory_space<vmem>>, vector<1x1x16x16xf32>
    %42 = vector.shape_cast %41 : vector<1x1x16x16xf32> to vector<16x16xf32>
    %c0_12 = arith.constant 0 : index
    %c1 = arith.constant 1 : index
    %c0_13 = arith.constant 0 : index
    %c0_14 = arith.constant 0 : index
    %43 = vector.load %arg2[%c0_12, %c1, %c0_13, %c0_14] : memref<1x6x16x16xf32, #tpu.memory_space<vmem>>, vector<1x1x16x16xf32>
    %44 = vector.shape_cast %43 : vector<1x1x16x16xf32> to vector<16x16xf32>
    %c0_15 = arith.constant 0 : index
    %c2 = arith.constant 2 : index
    %c0_16 = arith.constant 0 : index
    %c0_17 = arith.constant 0 : index
    %45 = vector.load %arg2[%c0_15, %c2, %c0_16, %c0_17] : memref<1x6x16x16xf32, #tpu.memory_space<vmem>>, vector<1x1x16x16xf32>
    %46 = vector.shape_cast %45 : vector<1x1x16x16xf32> to vector<16x16xf32>
    %c0_18 = arith.constant 0 : index
    %c3 = arith.constant 3 : index
    %c0_19 = arith.constant 0 : index
    %c0_20 = arith.constant 0 : index
    %47 = vector.load %arg2[%c0_18, %c3, %c0_19, %c0_20] : memref<1x6x16x16xf32, #tpu.memory_space<vmem>>, vector<1x1x16x16xf32>
    %48 = vector.shape_cast %47 : vector<1x1x16x16xf32> to vector<16x16xf32>
    %c0_21 = arith.constant 0 : index
    %c4 = arith.constant 4 : index
    %c0_22 = arith.constant 0 : index
    %c0_23 = arith.constant 0 : index
    %49 = vector.load %arg2[%c0_21, %c4, %c0_22, %c0_23] : memref<1x6x16x16xf32, #tpu.memory_space<vmem>>, vector<1x1x16x16xf32>
    %50 = vector.shape_cast %49 : vector<1x1x16x16xf32> to vector<16x16xf32>
    %c0_24 = arith.constant 0 : index
    %c5 = arith.constant 5 : index
    %c0_25 = arith.constant 0 : index
    %c0_26 = arith.constant 0 : index
    %51 = vector.load %arg2[%c0_24, %c5, %c0_25, %c0_26] : memref<1x6x16x16xf32, #tpu.memory_space<vmem>>, vector<1x1x16x16xf32>
    %52 = vector.shape_cast %51 : vector<1x1x16x16xf32> to vector<16x16xf32>
    %53 = arith.maximumf %42, %44 : vector<16x16xf32>
    %54 = arith.maximumf %53, %46 : vector<16x16xf32>
    %55 = arith.maximumf %54, %48 : vector<16x16xf32>
    %56 = arith.maximumf %55, %50 : vector<16x16xf32>
    %57 = arith.maximumf %56, %52 : vector<16x16xf32>
    %58 = arith.subf %42, %57 : vector<16x16xf32>
    %59 = arith.subf %44, %57 : vector<16x16xf32>
    %60 = arith.subf %46, %57 : vector<16x16xf32>
    %61 = arith.subf %48, %57 : vector<16x16xf32>
    %62 = arith.subf %50, %57 : vector<16x16xf32>
    %63 = arith.subf %52, %57 : vector<16x16xf32>
    %64 = math.exp %58 : vector<16x16xf32>
    %65 = math.exp %59 : vector<16x16xf32>
    %66 = arith.addf %64, %65 : vector<16x16xf32>
    %67 = math.exp %60 : vector<16x16xf32>
    %68 = arith.addf %66, %67 : vector<16x16xf32>
    %69 = math.exp %61 : vector<16x16xf32>
    %70 = arith.addf %68, %69 : vector<16x16xf32>
    %71 = math.exp %62 : vector<16x16xf32>
    %72 = arith.addf %70, %71 : vector<16x16xf32>
    %73 = math.exp %63 : vector<16x16xf32>
    %74 = arith.addf %72, %73 : vector<16x16xf32>
    %75 = math.log %74 : vector<16x16xf32>
    %76 = arith.mulf %13, %58 : vector<16x16xf32>
    %77 = arith.mulf %18, %59 : vector<16x16xf32>
    %78 = arith.addf %76, %77 : vector<16x16xf32>
    %79 = arith.mulf %23, %60 : vector<16x16xf32>
    %80 = arith.addf %78, %79 : vector<16x16xf32>
    %81 = arith.mulf %28, %61 : vector<16x16xf32>
    %82 = arith.addf %80, %81 : vector<16x16xf32>
    %83 = arith.mulf %33, %62 : vector<16x16xf32>
    %84 = arith.addf %82, %83 : vector<16x16xf32>
    %85 = arith.mulf %38, %63 : vector<16x16xf32>
    %86 = arith.addf %84, %85 : vector<16x16xf32>
    %87 = arith.subf %75, %86 : vector<16x16xf32>
    %88 = arith.mulf %87, %8 : vector<16x16xf32>
    %cst = arith.constant dense<0.000000e+00> : vector<16xf32>
    %89 = vector.multi_reduction <add>, %88, %cst [0] : vector<16x16xf32> to vector<16xf32>
    %90 = vector.shape_cast %89 : vector<16xf32> to vector<1x16xf32>
    %91 = arith.addf %40, %90 : vector<1x16xf32>
    %c0_27 = arith.constant 0 : index
    %c0_28 = arith.constant 0 : index
    %c0_29 = arith.constant 0 : index
    %92 = vector.load %arg10[%c0_27, %c0_28, %c0_29] : memref<23x1x16xf32, #tpu.memory_space<vmem>>, vector<1x1x16xf32>
    %93 = vector.shape_cast %92 : vector<1x1x16xf32> to vector<1x16xf32>
    %94 = vector.shape_cast %91 : vector<1x16xf32> to vector<1x1x16xf32>
    tpu.vector_store %arg10[%c0_27, %c0_28, %c0_29], %94 {strides = array<i32>} : memref<23x1x16xf32, #tpu.memory_space<vmem>>, vector<1x1x16xf32>,
    %c1_30 = arith.constant 1 : index
    %c0_31 = arith.constant 0 : index
    %c0_32 = arith.constant 0 : index
    %95 = vector.load %arg10[%c1_30, %c0_31, %c0_32] : memref<23x1x16xf32, #tpu.memory_space<vmem>>, vector<1x1x16xf32>
    %96 = vector.shape_cast %95 : vector<1x1x16xf32> to vector<1x16xf32>
    %c0_33 = arith.constant 0 : index
    %c0_34 = arith.constant 0 : index
    %c0_35 = arith.constant 0 : index
    %c0_36 = arith.constant 0 : index
    %97 = vector.load %arg3[%c0_33, %c0_34, %c0_35, %c0_36] : memref<1x6x16x16xf32, #tpu.memory_space<vmem>>, vector<1x1x16x16xf32>
    %98 = vector.shape_cast %97 : vector<1x1x16x16xf32> to vector<16x16xf32>
    %c0_37 = arith.constant 0 : index
    %c1_38 = arith.constant 1 : index
    %c0_39 = arith.constant 0 : index
    %c0_40 = arith.constant 0 : index
    %99 = vector.load %arg3[%c0_37, %c1_38, %c0_39, %c0_40] : memref<1x6x16x16xf32, #tpu.memory_space<vmem>>, vector<1x1x16x16xf32>
    %100 = vector.shape_cast %99 : vector<1x1x16x16xf32> to vector<16x16xf32>
    %c0_41 = arith.constant 0 : index
    %c2_42 = arith.constant 2 : index
    %c0_43 = arith.constant 0 : index
    %c0_44 = arith.constant 0 : index
    %101 = vector.load %arg3[%c0_41, %c2_42, %c0_43, %c0_44] : memref<1x6x16x16xf32, #tpu.memory_space<vmem>>, vector<1x1x16x16xf32>
    %102 = vector.shape_cast %101 : vector<1x1x16x16xf32> to vector<16x16xf32>
    %c0_45 = arith.constant 0 : index
    %c3_46 = arith.constant 3 : index
    %c0_47 = arith.constant 0 : index
    %c0_48 = arith.constant 0 : index
    %103 = vector.load %arg3[%c0_45, %c3_46, %c0_47, %c0_48] : memref<1x6x16x16xf32, #tpu.memory_space<vmem>>, vector<1x1x16x16xf32>
    %104 = vector.shape_cast %103 : vector<1x1x16x16xf32> to vector<16x16xf32>
    %c0_49 = arith.constant 0 : index
    %c4_50 = arith.constant 4 : index
    %c0_51 = arith.constant 0 : index
    %c0_52 = arith.constant 0 : index
    %105 = vector.load %arg3[%c0_49, %c4_50, %c0_51, %c0_52] : memref<1x6x16x16xf32, #tpu.memory_space<vmem>>, vector<1x1x16x16xf32>
    %106 = vector.shape_cast %105 : vector<1x1x16x16xf32> to vector<16x16xf32>
    %c0_53 = arith.constant 0 : index
    %c5_54 = arith.constant 5 : index
    %c0_55 = arith.constant 0 : index
    %c0_56 = arith.constant 0 : index
    %107 = vector.load %arg3[%c0_53, %c5_54, %c0_55, %c0_56] : memref<1x6x16x16xf32, #tpu.memory_space<vmem>>, vector<1x1x16x16xf32>
    %108 = vector.shape_cast %107 : vector<1x1x16x16xf32> to vector<16x16xf32>
    %109 = arith.maximumf %98, %100 : vector<16x16xf32>
    %110 = arith.maximumf %109, %102 : vector<16x16xf32>
    %111 = arith.maximumf %110, %104 : vector<16x16xf32>
    %112 = arith.maximumf %111, %106 : vector<16x16xf32>
    %113 = arith.maximumf %112, %108 : vector<16x16xf32>
    %114 = arith.subf %98, %113 : vector<16x16xf32>
    %115 = arith.subf %100, %113 : vector<16x16xf32>
    %116 = arith.subf %102, %113 : vector<16x16xf32>
    %117 = arith.subf %104, %113 : vector<16x16xf32>
    %118 = arith.subf %106, %113 : vector<16x16xf32>
    %119 = arith.subf %108, %113 : vector<16x16xf32>
    %120 = math.exp %114 : vector<16x16xf32>
    %121 = math.exp %115 : vector<16x16xf32>
    %122 = arith.addf %120, %121 : vector<16x16xf32>
    %123 = math.exp %116 : vector<16x16xf32>
    %124 = arith.addf %122, %123 : vector<16x16xf32>
    %125 = math.exp %117 : vector<16x16xf32>
    %126 = arith.addf %124, %125 : vector<16x16xf32>
    %127 = math.exp %118 : vector<16x16xf32>
    %128 = arith.addf %126, %127 : vector<16x16xf32>
    %129 = math.exp %119 : vector<16x16xf32>
    %130 = arith.addf %128, %129 : vector<16x16xf32>
    %131 = math.log %130 : vector<16x16xf32>
    %132 = arith.mulf %13, %114 : vector<16x16xf32>
    %133 = arith.mulf %18, %115 : vector<16x16xf32>
    %134 = arith.addf %132, %133 : vector<16x16xf32>
    %135 = arith.mulf %23, %116 : vector<16x16xf32>
    %136 = arith.addf %134, %135 : vector<16x16xf32>
    %137 = arith.mulf %28, %117 : vector<16x16xf32>
    %138 = arith.addf %136, %137 : vector<16x16xf32>
    %139 = arith.mulf %33, %118 : vector<16x16xf32>
    %140 = arith.addf %138, %139 : vector<16x16xf32>
    %141 = arith.mulf %38, %119 : vector<16x16xf32>
    %142 = arith.addf %140, %141 : vector<16x16xf32>
    %143 = arith.subf %131, %142 : vector<16x16xf32>
    %144 = arith.mulf %143, %8 : vector<16x16xf32>
    %cst_57 = arith.constant dense<0.000000e+00> : vector<16xf32>
    %145 = vector.multi_reduction <add>, %144, %cst_57 [0] : vector<16x16xf32> to vector<16xf32>
    %146 = vector.shape_cast %145 : vector<16xf32> to vector<1x16xf32>
    %147 = arith.addf %96, %146 : vector<1x16xf32>
    %c1_58 = arith.constant 1 : index
    %c0_59 = arith.constant 0 : index
    %c0_60 = arith.constant 0 : index
    %148 = vector.load %arg10[%c1_58, %c0_59, %c0_60] : memref<23x1x16xf32, #tpu.memory_space<vmem>>, vector<1x1x16xf32>
    %149 = vector.shape_cast %148 : vector<1x1x16xf32> to vector<1x16xf32>
    %150 = vector.shape_cast %147 : vector<1x16xf32> to vector<1x1x16xf32>
    tpu.vector_store %arg10[%c1_58, %c0_59, %c0_60], %150 {strides = array<i32>} : memref<23x1x16xf32, #tpu.memory_space<vmem>>, vector<1x1x16xf32>,
    %c2_61 = arith.constant 2 : index
    %c0_62 = arith.constant 0 : index
    %c0_63 = arith.constant 0 : index
    %151 = vector.load %arg10[%c2_61, %c0_62, %c0_63] : memref<23x1x16xf32, #tpu.memory_space<vmem>>, vector<1x1x16xf32>
    %152 = vector.shape_cast %151 : vector<1x1x16xf32> to vector<1x16xf32>
    %cst_64 = arith.constant dense<0.000000e+00> : vector<16xf32>
    %153 = vector.multi_reduction <add>, %8, %cst_64 [0] : vector<16x16xf32> to vector<16xf32>
    %154 = vector.shape_cast %153 : vector<16xf32> to vector<1x16xf32>
    %155 = arith.addf %152, %154 : vector<1x16xf32>
    %c2_65 = arith.constant 2 : index
    %c0_66 = arith.constant 0 : index
    %c0_67 = arith.constant 0 : index
    %156 = vector.load %arg10[%c2_65, %c0_66, %c0_67] : memref<23x1x16xf32, #tpu.memory_space<vmem>>, vector<1x1x16xf32>
    %157 = vector.shape_cast %156 : vector<1x1x16xf32> to vector<1x16xf32>
    %158 = vector.shape_cast %155 : vector<1x16xf32> to vector<1x1x16xf32>
    tpu.vector_store %arg10[%c2_65, %c0_66, %c0_67], %158 {strides = array<i32>} : memref<23x1x16xf32, #tpu.memory_space<vmem>>, vector<1x1x16xf32>,
    %c0_68 = arith.constant 0 : index
    %c0_69 = arith.constant 0 : index
    %159 = vector.load %arg7[%c0_68, %c0_69] : memref<16x8xbf16, #tpu.memory_space<vmem>>, vector<16x8xbf16>
    %c0_70 = arith.constant 0 : index
    %c0_71 = arith.constant 0 : index
    %160 = vector.load %arg8[%c0_70, %c0_71] : memref<8x16xbf16, #tpu.memory_space<vmem>>, vector<8x16xbf16>
    %c0_72 = arith.constant 0 : index
    %c0_73 = arith.constant 0 : index
    %c0_74 = arith.constant 0 : index
    %c0_75 = arith.constant 0 : index
    %161 = vector.load %arg5[%c0_72, %c0_73, %c0_74, %c0_75] : memref<1x6x8x8xbf16, #tpu.memory_space<vmem>>, vector<1x1x8x8xbf16>
    %162 = vector.shape_cast %161 : vector<1x1x8x8xbf16> to vector<8x8xbf16>
    %cst_76 = arith.constant dense<0.000000e+00> : vector<16x8xf32>
    %163 = tpu.matmul %159, %162, %cst_76 {dimension_numbers = #tpu.dot_dimension_numbers<[1], [0], [0], [1], [0, 0, 1, 1], [], []>} : vector<16x8xbf16>, vector<8x8xbf16>, vector<16x8xf32> -> vector<16x8xf32>
    %164 = arith.truncf %163 : vector<16x8xf32> to vector<16x8xbf16>
    %cst_77 = arith.constant dense<0.000000e+00> : vector<16x16xf32>
    %165 = tpu.matmul %164, %160, %cst_77 {dimension_numbers = #tpu.dot_dimension_numbers<[1], [0], [0], [1], [0, 0, 1, 1], [], []>} : vector<16x8xbf16>, vector<8x16xbf16>, vector<16x16xf32> -> vector<16x16xf32>
    %c0_78 = arith.constant 0 : index
    %c1_79 = arith.constant 1 : index
    %c0_80 = arith.constant 0 : index
    %c0_81 = arith.constant 0 : index
    %166 = vector.load %arg5[%c0_78, %c1_79, %c0_80, %c0_81] : memref<1x6x8x8xbf16, #tpu.memory_space<vmem>>, vector<1x1x8x8xbf16>
    %167 = vector.shape_cast %166 : vector<1x1x8x8xbf16> to vector<8x8xbf16>
    %cst_82 = arith.constant dense<0.000000e+00> : vector<16x8xf32>
    %168 = tpu.matmul %159, %167, %cst_82 {dimension_numbers = #tpu.dot_dimension_numbers<[1], [0], [0], [1], [0, 0, 1, 1], [], []>} : vector<16x8xbf16>, vector<8x8xbf16>, vector<16x8xf32> -> vector<16x8xf32>
    %169 = arith.truncf %168 : vector<16x8xf32> to vector<16x8xbf16>
    %cst_83 = arith.constant dense<0.000000e+00> : vector<16x16xf32>
    %170 = tpu.matmul %169, %160, %cst_83 {dimension_numbers = #tpu.dot_dimension_numbers<[1], [0], [0], [1], [0, 0, 1, 1], [], []>} : vector<16x8xbf16>, vector<8x16xbf16>, vector<16x16xf32> -> vector<16x16xf32>
    %c0_84 = arith.constant 0 : index
    %c2_85 = arith.constant 2 : index
    %c0_86 = arith.constant 0 : index
    %c0_87 = arith.constant 0 : index
    %171 = vector.load %arg5[%c0_84, %c2_85, %c0_86, %c0_87] : memref<1x6x8x8xbf16, #tpu.memory_space<vmem>>, vector<1x1x8x8xbf16>
    %172 = vector.shape_cast %171 : vector<1x1x8x8xbf16> to vector<8x8xbf16>
    %cst_88 = arith.constant dense<0.000000e+00> : vector<16x8xf32>
    %173 = tpu.matmul %159, %172, %cst_88 {dimension_numbers = #tpu.dot_dimension_numbers<[1], [0], [0], [1], [0, 0, 1, 1], [], []>} : vector<16x8xbf16>, vector<8x8xbf16>, vector<16x8xf32> -> vector<16x8xf32>
    %174 = arith.truncf %173 : vector<16x8xf32> to vector<16x8xbf16>
    %cst_89 = arith.constant dense<0.000000e+00> : vector<16x16xf32>
    %175 = tpu.matmul %174, %160, %cst_89 {dimension_numbers = #tpu.dot_dimension_numbers<[1], [0], [0], [1], [0, 0, 1, 1], [], []>} : vector<16x8xbf16>, vector<8x16xbf16>, vector<16x16xf32> -> vector<16x16xf32>
    %c0_90 = arith.constant 0 : index
    %c3_91 = arith.constant 3 : index
    %c0_92 = arith.constant 0 : index
    %c0_93 = arith.constant 0 : index
    %176 = vector.load %arg5[%c0_90, %c3_91, %c0_92, %c0_93] : memref<1x6x8x8xbf16, #tpu.memory_space<vmem>>, vector<1x1x8x8xbf16>
    %177 = vector.shape_cast %176 : vector<1x1x8x8xbf16> to vector<8x8xbf16>
    %cst_94 = arith.constant dense<0.000000e+00> : vector<16x8xf32>
    %178 = tpu.matmul %159, %177, %cst_94 {dimension_numbers = #tpu.dot_dimension_numbers<[1], [0], [0], [1], [0, 0, 1, 1], [], []>} : vector<16x8xbf16>, vector<8x8xbf16>, vector<16x8xf32> -> vector<16x8xf32>
    %179 = arith.truncf %178 : vector<16x8xf32> to vector<16x8xbf16>
    %cst_95 = arith.constant dense<0.000000e+00> : vector<16x16xf32>
    %180 = tpu.matmul %179, %160, %cst_95 {dimension_numbers = #tpu.dot_dimension_numbers<[1], [0], [0], [1], [0, 0, 1, 1], [], []>} : vector<16x8xbf16>, vector<8x16xbf16>, vector<16x16xf32> -> vector<16x16xf32>
    %c0_96 = arith.constant 0 : index
    %c4_97 = arith.constant 4 : index
    %c0_98 = arith.constant 0 : index
    %c0_99 = arith.constant 0 : index
    %181 = vector.load %arg5[%c0_96, %c4_97, %c0_98, %c0_99] : memref<1x6x8x8xbf16, #tpu.memory_space<vmem>>, vector<1x1x8x8xbf16>
    %182 = vector.shape_cast %181 : vector<1x1x8x8xbf16> to vector<8x8xbf16>
    %cst_100 = arith.constant dense<0.000000e+00> : vector<16x8xf32>
    %183 = tpu.matmul %159, %182, %cst_100 {dimension_numbers = #tpu.dot_dimension_numbers<[1], [0], [0], [1], [0, 0, 1, 1], [], []>} : vector<16x8xbf16>, vector<8x8xbf16>, vector<16x8xf32> -> vector<16x8xf32>
    %184 = arith.truncf %183 : vector<16x8xf32> to vector<16x8xbf16>
    %cst_101 = arith.constant dense<0.000000e+00> : vector<16x16xf32>
    %185 = tpu.matmul %184, %160, %cst_101 {dimension_numbers = #tpu.dot_dimension_numbers<[1], [0], [0], [1], [0, 0, 1, 1], [], []>} : vector<16x8xbf16>, vector<8x16xbf16>, vector<16x16xf32> -> vector<16x16xf32>
    %c0_102 = arith.constant 0 : index
    %c5_103 = arith.constant 5 : index
    %c0_104 = arith.constant 0 : index
    %c0_105 = arith.constant 0 : index
    %186 = vector.load %arg5[%c0_102, %c5_103, %c0_104, %c0_105] : memref<1x6x8x8xbf16, #tpu.memory_space<vmem>>, vector<1x1x8x8xbf16>
    %187 = vector.shape_cast %186 : vector<1x1x8x8xbf16> to vector<8x8xbf16>
    %cst_106 = arith.constant dense<0.000000e+00> : vector<16x8xf32>
    %188 = tpu.matmul %159, %187, %cst_106 {dimension_numbers = #tpu.dot_dimension_numbers<[1], [0], [0], [1], [0, 0, 1, 1], [], []>} : vector<16x8xbf16>, vector<8x8xbf16>, vector<16x8xf32> -> vector<16x8xf32>
    %189 = arith.truncf %188 : vector<16x8xf32> to vector<16x8xbf16>
    %cst_107 = arith.constant dense<0.000000e+00> : vector<16x16xf32>
    %190 = tpu.matmul %189, %160, %cst_107 {dimension_numbers = #tpu.dot_dimension_numbers<[1], [0], [0], [1], [0, 0, 1, 1], [], []>} : vector<16x8xbf16>, vector<8x16xbf16>, vector<16x16xf32> -> vector<16x16xf32>
    %191 = arith.maximumf %165, %170 : vector<16x16xf32>
    %192 = arith.maximumf %191, %175 : vector<16x16xf32>
    %193 = arith.maximumf %192, %180 : vector<16x16xf32>
    %194 = arith.maximumf %193, %185 : vector<16x16xf32>
    %195 = arith.maximumf %194, %190 : vector<16x16xf32>
    %196 = arith.subf %165, %195 : vector<16x16xf32>
    %197 = math.exp %196 : vector<16x16xf32>
    %198 = arith.subf %170, %195 : vector<16x16xf32>
    %199 = math.exp %198 : vector<16x16xf32>
    %200 = arith.subf %175, %195 : vector<16x16xf32>
    %201 = math.exp %200 : vector<16x16xf32>
    %202 = arith.subf %180, %195 : vector<16x16xf32>
    %203 = math.exp %202 : vector<16x16xf32>
    %204 = arith.subf %185, %195 : vector<16x16xf32>
    %205 = math.exp %204 : vector<16x16xf32>
    %206 = arith.subf %190, %195 : vector<16x16xf32>
    %207 = math.exp %206 : vector<16x16xf32>
    %208 = arith.addf %197, %199 : vector<16x16xf32>
    %209 = arith.addf %208, %201 : vector<16x16xf32>
    %210 = arith.addf %209, %203 : vector<16x16xf32>
    %211 = arith.addf %210, %205 : vector<16x16xf32>
    %212 = arith.addf %211, %207 : vector<16x16xf32>
    %213 = tpu.reciprocal %212 {approx = true} : vector<16x16xf32> -> vector<16x16xf32>
    %214 = arith.mulf %197, %213 : vector<16x16xf32>
    %215 = arith.mulf %214, %8 : vector<16x16xf32>
    %c5_108 = arith.constant 5 : index
    %c0_109 = arith.constant 0 : index
    %c0_110 = arith.constant 0 : index
    %216 = vector.load %arg10[%c5_108, %c0_109, %c0_110] : memref<23x1x16xf32, #tpu.memory_space<vmem>>, vector<1x1x16xf32>
    %217 = vector.shape_cast %216 : vector<1x1x16xf32> to vector<1x16xf32>
    %218 = arith.mulf %215, %13 : vector<16x16xf32>
    %cst_111 = arith.constant dense<0.000000e+00> : vector<16xf32>
    %219 = vector.multi_reduction <add>, %218, %cst_111 [0] : vector<16x16xf32> to vector<16xf32>
    %220 = vector.shape_cast %219 : vector<16xf32> to vector<1x16xf32>
    %221 = arith.addf %217, %220 : vector<1x16xf32>
    %c5_112 = arith.constant 5 : index
    %c0_113 = arith.constant 0 : index
    %c0_114 = arith.constant 0 : index
    %222 = vector.load %arg10[%c5_112, %c0_113, %c0_114] : memref<23x1x16xf32, #tpu.memory_space<vmem>>, vector<1x1x16xf32>
    %223 = vector.shape_cast %222 : vector<1x1x16xf32> to vector<1x16xf32>
    %224 = vector.shape_cast %221 : vector<1x16xf32> to vector<1x1x16xf32>
    tpu.vector_store %arg10[%c5_112, %c0_113, %c0_114], %224 {strides = array<i32>} : memref<23x1x16xf32, #tpu.memory_space<vmem>>, vector<1x1x16xf32>,
    %c11 = arith.constant 11 : index
    %c0_115 = arith.constant 0 : index
    %c0_116 = arith.constant 0 : index
    %225 = vector.load %arg10[%c11, %c0_115, %c0_116] : memref<23x1x16xf32, #tpu.memory_space<vmem>>, vector<1x1x16xf32>
    %226 = vector.shape_cast %225 : vector<1x1x16xf32> to vector<1x16xf32>
    %cst_117 = arith.constant dense<0.000000e+00> : vector<16xf32>
    %227 = vector.multi_reduction <add>, %215, %cst_117 [0] : vector<16x16xf32> to vector<16xf32>
    %228 = vector.shape_cast %227 : vector<16xf32> to vector<1x16xf32>
    %229 = arith.addf %226, %228 : vector<1x16xf32>
    %c11_118 = arith.constant 11 : index
    %c0_119 = arith.constant 0 : index
    %c0_120 = arith.constant 0 : index
    %230 = vector.load %arg10[%c11_118, %c0_119, %c0_120] : memref<23x1x16xf32, #tpu.memory_space<vmem>>, vector<1x1x16xf32>
    %231 = vector.shape_cast %230 : vector<1x1x16xf32> to vector<1x16xf32>
    %232 = vector.shape_cast %229 : vector<1x16xf32> to vector<1x1x16xf32>
    tpu.vector_store %arg10[%c11_118, %c0_119, %c0_120], %232 {strides = array<i32>} : memref<23x1x16xf32, #tpu.memory_space<vmem>>, vector<1x1x16xf32>,
    %c17 = arith.constant 17 : index
    %c0_121 = arith.constant 0 : index
    %c0_122 = arith.constant 0 : index
    %233 = vector.load %arg10[%c17, %c0_121, %c0_122] : memref<23x1x16xf32, #tpu.memory_space<vmem>>, vector<1x1x16xf32>
    %234 = vector.shape_cast %233 : vector<1x1x16xf32> to vector<1x16xf32>
    %cst_123 = arith.constant dense<0.000000e+00> : vector<16xf32>
    %235 = vector.multi_reduction <add>, %13, %cst_123 [0] : vector<16x16xf32> to vector<16xf32>
    %236 = vector.shape_cast %235 : vector<16xf32> to vector<1x16xf32>
    %237 = arith.addf %234, %236 : vector<1x16xf32>
    %c17_124 = arith.constant 17 : index
    %c0_125 = arith.constant 0 : index
    %c0_126 = arith.constant 0 : index
    %238 = vector.load %arg10[%c17_124, %c0_125, %c0_126] : memref<23x1x16xf32, #tpu.memory_space<vmem>>, vector<1x1x16xf32>
    %239 = vector.shape_cast %238 : vector<1x1x16xf32> to vector<1x16xf32>
    %240 = vector.shape_cast %237 : vector<1x16xf32> to vector<1x1x16xf32>
    tpu.vector_store %arg10[%c17_124, %c0_125, %c0_126], %240 {strides = array<i32>} : memref<23x1x16xf32, #tpu.memory_space<vmem>>, vector<1x1x16xf32>,
    %241 = arith.mulf %199, %213 : vector<16x16xf32>
    %242 = arith.mulf %241, %8 : vector<16x16xf32>
    %c6 = arith.constant 6 : index
    %c0_127 = arith.constant 0 : index
    %c0_128 = arith.constant 0 : index
    %243 = vector.load %arg10[%c6, %c0_127, %c0_128] : memref<23x1x16xf32, #tpu.memory_space<vmem>>, vector<1x1x16xf32>
    %244 = vector.shape_cast %243 : vector<1x1x16xf32> to vector<1x16xf32>
    %245 = arith.mulf %242, %18 : vector<16x16xf32>
    %cst_129 = arith.constant dense<0.000000e+00> : vector<16xf32>
    %246 = vector.multi_reduction <add>, %245, %cst_129 [0] : vector<16x16xf32> to vector<16xf32>
    %247 = vector.shape_cast %246 : vector<16xf32> to vector<1x16xf32>
    %248 = arith.addf %244, %247 : vector<1x16xf32>
    %c6_130 = arith.constant 6 : index
    %c0_131 = arith.constant 0 : index
    %c0_132 = arith.constant 0 : index
    %249 = vector.load %arg10[%c6_130, %c0_131, %c0_132] : memref<23x1x16xf32, #tpu.memory_space<vmem>>, vector<1x1x16xf32>
    %250 = vector.shape_cast %249 : vector<1x1x16xf32> to vector<1x16xf32>
    %251 = vector.shape_cast %248 : vector<1x16xf32> to vector<1x1x16xf32>
    tpu.vector_store %arg10[%c6_130, %c0_131, %c0_132], %251 {strides = array<i32>} : memref<23x1x16xf32, #tpu.memory_space<vmem>>, vector<1x1x16xf32>,
    %c12 = arith.constant 12 : index
    %c0_133 = arith.constant 0 : index
    %c0_134 = arith.constant 0 : index
    %252 = vector.load %arg10[%c12, %c0_133, %c0_134] : memref<23x1x16xf32, #tpu.memory_space<vmem>>, vector<1x1x16xf32>
    %253 = vector.shape_cast %252 : vector<1x1x16xf32> to vector<1x16xf32>
    %cst_135 = arith.constant dense<0.000000e+00> : vector<16xf32>
    %254 = vector.multi_reduction <add>, %242, %cst_135 [0] : vector<16x16xf32> to vector<16xf32>
    %255 = vector.shape_cast %254 : vector<16xf32> to vector<1x16xf32>
    %256 = arith.addf %253, %255 : vector<1x16xf32>
    %c12_136 = arith.constant 12 : index
    %c0_137 = arith.constant 0 : index
    %c0_138 = arith.constant 0 : index
    %257 = vector.load %arg10[%c12_136, %c0_137, %c0_138] : memref<23x1x16xf32, #tpu.memory_space<vmem>>, vector<1x1x16xf32>
    %258 = vector.shape_cast %257 : vector<1x1x16xf32> to vector<1x16xf32>
    %259 = vector.shape_cast %256 : vector<1x16xf32> to vector<1x1x16xf32>
    tpu.vector_store %arg10[%c12_136, %c0_137, %c0_138], %259 {strides = array<i32>} : memref<23x1x16xf32, #tpu.memory_space<vmem>>, vector<1x1x16xf32>,
    %c18 = arith.constant 18 : index
    %c0_139 = arith.constant 0 : index
    %c0_140 = arith.constant 0 : index
    %260 = vector.load %arg10[%c18, %c0_139, %c0_140] : memref<23x1x16xf32, #tpu.memory_space<vmem>>, vector<1x1x16xf32>
    %261 = vector.shape_cast %260 : vector<1x1x16xf32> to vector<1x16xf32>
    %cst_141 = arith.constant dense<0.000000e+00> : vector<16xf32>
    %262 = vector.multi_reduction <add>, %18, %cst_141 [0] : vector<16x16xf32> to vector<16xf32>
    %263 = vector.shape_cast %262 : vector<16xf32> to vector<1x16xf32>
    %264 = arith.addf %261, %263 : vector<1x16xf32>
    %c18_142 = arith.constant 18 : index
    %c0_143 = arith.constant 0 : index
    %c0_144 = arith.constant 0 : index
    %265 = vector.load %arg10[%c18_142, %c0_143, %c0_144] : memref<23x1x16xf32, #tpu.memory_space<vmem>>, vector<1x1x16xf32>
    %266 = vector.shape_cast %265 : vector<1x1x16xf32> to vector<1x16xf32>
    %267 = vector.shape_cast %264 : vector<1x16xf32> to vector<1x1x16xf32>
    tpu.vector_store %arg10[%c18_142, %c0_143, %c0_144], %267 {strides = array<i32>} : memref<23x1x16xf32, #tpu.memory_space<vmem>>, vector<1x1x16xf32>,
    %268 = arith.mulf %201, %213 : vector<16x16xf32>
    %269 = arith.mulf %268, %8 : vector<16x16xf32>
    %c7 = arith.constant 7 : index
    %c0_145 = arith.constant 0 : index
    %c0_146 = arith.constant 0 : index
    %270 = vector.load %arg10[%c7, %c0_145, %c0_146] : memref<23x1x16xf32, #tpu.memory_space<vmem>>, vector<1x1x16xf32>
    %271 = vector.shape_cast %270 : vector<1x1x16xf32> to vector<1x16xf32>
    %272 = arith.mulf %269, %23 : vector<16x16xf32>
    %cst_147 = arith.constant dense<0.000000e+00> : vector<16xf32>
    %273 = vector.multi_reduction <add>, %272, %cst_147 [0] : vector<16x16xf32> to vector<16xf32>
    %274 = vector.shape_cast %273 : vector<16xf32> to vector<1x16xf32>
    %275 = arith.addf %271, %274 : vector<1x16xf32>
    %c7_148 = arith.constant 7 : index
    %c0_149 = arith.constant 0 : index
    %c0_150 = arith.constant 0 : index
    %276 = vector.load %arg10[%c7_148, %c0_149, %c0_150] : memref<23x1x16xf32, #tpu.memory_space<vmem>>, vector<1x1x16xf32>
    %277 = vector.shape_cast %276 : vector<1x1x16xf32> to vector<1x16xf32>
    %278 = vector.shape_cast %275 : vector<1x16xf32> to vector<1x1x16xf32>
    tpu.vector_store %arg10[%c7_148, %c0_149, %c0_150], %278 {strides = array<i32>} : memref<23x1x16xf32, #tpu.memory_space<vmem>>, vector<1x1x16xf32>,
    %c13 = arith.constant 13 : index
    %c0_151 = arith.constant 0 : index
    %c0_152 = arith.constant 0 : index
    %279 = vector.load %arg10[%c13, %c0_151, %c0_152] : memref<23x1x16xf32, #tpu.memory_space<vmem>>, vector<1x1x16xf32>
    %280 = vector.shape_cast %279 : vector<1x1x16xf32> to vector<1x16xf32>
    %cst_153 = arith.constant dense<0.000000e+00> : vector<16xf32>
    %281 = vector.multi_reduction <add>, %269, %cst_153 [0] : vector<16x16xf32> to vector<16xf32>
    %282 = vector.shape_cast %281 : vector<16xf32> to vector<1x16xf32>
    %283 = arith.addf %280, %282 : vector<1x16xf32>
    %c13_154 = arith.constant 13 : index
    %c0_155 = arith.constant 0 : index
    %c0_156 = arith.constant 0 : index
    %284 = vector.load %arg10[%c13_154, %c0_155, %c0_156] : memref<23x1x16xf32, #tpu.memory_space<vmem>>, vector<1x1x16xf32>
    %285 = vector.shape_cast %284 : vector<1x1x16xf32> to vector<1x16xf32>
    %286 = vector.shape_cast %283 : vector<1x16xf32> to vector<1x1x16xf32>
    tpu.vector_store %arg10[%c13_154, %c0_155, %c0_156], %286 {strides = array<i32>} : memref<23x1x16xf32, #tpu.memory_space<vmem>>, vector<1x1x16xf32>,
    %c19 = arith.constant 19 : index
    %c0_157 = arith.constant 0 : index
    %c0_158 = arith.constant 0 : index
    %287 = vector.load %arg10[%c19, %c0_157, %c0_158] : memref<23x1x16xf32, #tpu.memory_space<vmem>>, vector<1x1x16xf32>
    %288 = vector.shape_cast %287 : vector<1x1x16xf32> to vector<1x16xf32>
    %cst_159 = arith.constant dense<0.000000e+00> : vector<16xf32>
    %289 = vector.multi_reduction <add>, %23, %cst_159 [0] : vector<16x16xf32> to vector<16xf32>
    %290 = vector.shape_cast %289 : vector<16xf32> to vector<1x16xf32>
    %291 = arith.addf %288, %290 : vector<1x16xf32>
    %c19_160 = arith.constant 19 : index
    %c0_161 = arith.constant 0 : index
    %c0_162 = arith.constant 0 : index
    %292 = vector.load %arg10[%c19_160, %c0_161, %c0_162] : memref<23x1x16xf32, #tpu.memory_space<vmem>>, vector<1x1x16xf32>
    %293 = vector.shape_cast %292 : vector<1x1x16xf32> to vector<1x16xf32>
    %294 = vector.shape_cast %291 : vector<1x16xf32> to vector<1x1x16xf32>
    tpu.vector_store %arg10[%c19_160, %c0_161, %c0_162], %294 {strides = array<i32>} : memref<23x1x16xf32, #tpu.memory_space<vmem>>, vector<1x1x16xf32>,
    %295 = arith.mulf %203, %213 : vector<16x16xf32>
    %296 = arith.mulf %295, %8 : vector<16x16xf32>
    %c8 = arith.constant 8 : index
    %c0_163 = arith.constant 0 : index
    %c0_164 = arith.constant 0 : index
    %297 = vector.load %arg10[%c8, %c0_163, %c0_164] : memref<23x1x16xf32, #tpu.memory_space<vmem>>, vector<1x1x16xf32>
    %298 = vector.shape_cast %297 : vector<1x1x16xf32> to vector<1x16xf32>
    %299 = arith.mulf %296, %28 : vector<16x16xf32>
    %cst_165 = arith.constant dense<0.000000e+00> : vector<16xf32>
    %300 = vector.multi_reduction <add>, %299, %cst_165 [0] : vector<16x16xf32> to vector<16xf32>
    %301 = vector.shape_cast %300 : vector<16xf32> to vector<1x16xf32>
    %302 = arith.addf %298, %301 : vector<1x16xf32>
    %c8_166 = arith.constant 8 : index
    %c0_167 = arith.constant 0 : index
    %c0_168 = arith.constant 0 : index
    %303 = vector.load %arg10[%c8_166, %c0_167, %c0_168] : memref<23x1x16xf32, #tpu.memory_space<vmem>>, vector<1x1x16xf32>
    %304 = vector.shape_cast %303 : vector<1x1x16xf32> to vector<1x16xf32>
    %305 = vector.shape_cast %302 : vector<1x16xf32> to vector<1x1x16xf32>
    tpu.vector_store %arg10[%c8_166, %c0_167, %c0_168], %305 {strides = array<i32>} : memref<23x1x16xf32, #tpu.memory_space<vmem>>, vector<1x1x16xf32>,
    %c14 = arith.constant 14 : index
    %c0_169 = arith.constant 0 : index
    %c0_170 = arith.constant 0 : index
    %306 = vector.load %arg10[%c14, %c0_169, %c0_170] : memref<23x1x16xf32, #tpu.memory_space<vmem>>, vector<1x1x16xf32>
    %307 = vector.shape_cast %306 : vector<1x1x16xf32> to vector<1x16xf32>
    %cst_171 = arith.constant dense<0.000000e+00> : vector<16xf32>
    %308 = vector.multi_reduction <add>, %296, %cst_171 [0] : vector<16x16xf32> to vector<16xf32>
    %309 = vector.shape_cast %308 : vector<16xf32> to vector<1x16xf32>
    %310 = arith.addf %307, %309 : vector<1x16xf32>
    %c14_172 = arith.constant 14 : index
    %c0_173 = arith.constant 0 : index
    %c0_174 = arith.constant 0 : index
    %311 = vector.load %arg10[%c14_172, %c0_173, %c0_174] : memref<23x1x16xf32, #tpu.memory_space<vmem>>, vector<1x1x16xf32>
    %312 = vector.shape_cast %311 : vector<1x1x16xf32> to vector<1x16xf32>
    %313 = vector.shape_cast %310 : vector<1x16xf32> to vector<1x1x16xf32>
    tpu.vector_store %arg10[%c14_172, %c0_173, %c0_174], %313 {strides = array<i32>} : memref<23x1x16xf32, #tpu.memory_space<vmem>>, vector<1x1x16xf32>,
    %c20 = arith.constant 20 : index
    %c0_175 = arith.constant 0 : index
    %c0_176 = arith.constant 0 : index
    %314 = vector.load %arg10[%c20, %c0_175, %c0_176] : memref<23x1x16xf32, #tpu.memory_space<vmem>>, vector<1x1x16xf32>
    %315 = vector.shape_cast %314 : vector<1x1x16xf32> to vector<1x16xf32>
    %cst_177 = arith.constant dense<0.000000e+00> : vector<16xf32>
    %316 = vector.multi_reduction <add>, %28, %cst_177 [0] : vector<16x16xf32> to vector<16xf32>
    %317 = vector.shape_cast %316 : vector<16xf32> to vector<1x16xf32>
    %318 = arith.addf %315, %317 : vector<1x16xf32>
    %c20_178 = arith.constant 20 : index
    %c0_179 = arith.constant 0 : index
    %c0_180 = arith.constant 0 : index
    %319 = vector.load %arg10[%c20_178, %c0_179, %c0_180] : memref<23x1x16xf32, #tpu.memory_space<vmem>>, vector<1x1x16xf32>
    %320 = vector.shape_cast %319 : vector<1x1x16xf32> to vector<1x16xf32>
    %321 = vector.shape_cast %318 : vector<1x16xf32> to vector<1x1x16xf32>
    tpu.vector_store %arg10[%c20_178, %c0_179, %c0_180], %321 {strides = array<i32>} : memref<23x1x16xf32, #tpu.memory_space<vmem>>, vector<1x1x16xf32>,
    %322 = arith.mulf %205, %213 : vector<16x16xf32>
    %323 = arith.mulf %322, %8 : vector<16x16xf32>
    %c9 = arith.constant 9 : index
    %c0_181 = arith.constant 0 : index
    %c0_182 = arith.constant 0 : index
    %324 = vector.load %arg10[%c9, %c0_181, %c0_182] : memref<23x1x16xf32, #tpu.memory_space<vmem>>, vector<1x1x16xf32>
    %325 = vector.shape_cast %324 : vector<1x1x16xf32> to vector<1x16xf32>
    %326 = arith.mulf %323, %33 : vector<16x16xf32>
    %cst_183 = arith.constant dense<0.000000e+00> : vector<16xf32>
    %327 = vector.multi_reduction <add>, %326, %cst_183 [0] : vector<16x16xf32> to vector<16xf32>
    %328 = vector.shape_cast %327 : vector<16xf32> to vector<1x16xf32>
    %329 = arith.addf %325, %328 : vector<1x16xf32>
    %c9_184 = arith.constant 9 : index
    %c0_185 = arith.constant 0 : index
    %c0_186 = arith.constant 0 : index
    %330 = vector.load %arg10[%c9_184, %c0_185, %c0_186] : memref<23x1x16xf32, #tpu.memory_space<vmem>>, vector<1x1x16xf32>
    %331 = vector.shape_cast %330 : vector<1x1x16xf32> to vector<1x16xf32>
    %332 = vector.shape_cast %329 : vector<1x16xf32> to vector<1x1x16xf32>
    tpu.vector_store %arg10[%c9_184, %c0_185, %c0_186], %332 {strides = array<i32>} : memref<23x1x16xf32, #tpu.memory_space<vmem>>, vector<1x1x16xf32>,
    %c15 = arith.constant 15 : index
    %c0_187 = arith.constant 0 : index
    %c0_188 = arith.constant 0 : index
    %333 = vector.load %arg10[%c15, %c0_187, %c0_188] : memref<23x1x16xf32, #tpu.memory_space<vmem>>, vector<1x1x16xf32>
    %334 = vector.shape_cast %333 : vector<1x1x16xf32> to vector<1x16xf32>
    %cst_189 = arith.constant dense<0.000000e+00> : vector<16xf32>
    %335 = vector.multi_reduction <add>, %323, %cst_189 [0] : vector<16x16xf32> to vector<16xf32>
    %336 = vector.shape_cast %335 : vector<16xf32> to vector<1x16xf32>
    %337 = arith.addf %334, %336 : vector<1x16xf32>
    %c15_190 = arith.constant 15 : index
    %c0_191 = arith.constant 0 : index
    %c0_192 = arith.constant 0 : index
    %338 = vector.load %arg10[%c15_190, %c0_191, %c0_192] : memref<23x1x16xf32, #tpu.memory_space<vmem>>, vector<1x1x16xf32>
    %339 = vector.shape_cast %338 : vector<1x1x16xf32> to vector<1x16xf32>
    %340 = vector.shape_cast %337 : vector<1x16xf32> to vector<1x1x16xf32>
    tpu.vector_store %arg10[%c15_190, %c0_191, %c0_192], %340 {strides = array<i32>} : memref<23x1x16xf32, #tpu.memory_space<vmem>>, vector<1x1x16xf32>,
    %c21 = arith.constant 21 : index
    %c0_193 = arith.constant 0 : index
    %c0_194 = arith.constant 0 : index
    %341 = vector.load %arg10[%c21, %c0_193, %c0_194] : memref<23x1x16xf32, #tpu.memory_space<vmem>>, vector<1x1x16xf32>
    %342 = vector.shape_cast %341 : vector<1x1x16xf32> to vector<1x16xf32>
    %cst_195 = arith.constant dense<0.000000e+00> : vector<16xf32>
    %343 = vector.multi_reduction <add>, %33, %cst_195 [0] : vector<16x16xf32> to vector<16xf32>
    %344 = vector.shape_cast %343 : vector<16xf32> to vector<1x16xf32>
    %345 = arith.addf %342, %344 : vector<1x16xf32>
    %c21_196 = arith.constant 21 : index
    %c0_197 = arith.constant 0 : index
    %c0_198 = arith.constant 0 : index
    %346 = vector.load %arg10[%c21_196, %c0_197, %c0_198] : memref<23x1x16xf32, #tpu.memory_space<vmem>>, vector<1x1x16xf32>
    %347 = vector.shape_cast %346 : vector<1x1x16xf32> to vector<1x16xf32>
    %348 = vector.shape_cast %345 : vector<1x16xf32> to vector<1x1x16xf32>
    tpu.vector_store %arg10[%c21_196, %c0_197, %c0_198], %348 {strides = array<i32>} : memref<23x1x16xf32, #tpu.memory_space<vmem>>, vector<1x1x16xf32>,
    %349 = arith.mulf %207, %213 : vector<16x16xf32>
    %350 = arith.mulf %349, %8 : vector<16x16xf32>
    %c10 = arith.constant 10 : index
    %c0_199 = arith.constant 0 : index
    %c0_200 = arith.constant 0 : index
    %351 = vector.load %arg10[%c10, %c0_199, %c0_200] : memref<23x1x16xf32, #tpu.memory_space<vmem>>, vector<1x1x16xf32>
    %352 = vector.shape_cast %351 : vector<1x1x16xf32> to vector<1x16xf32>
    %353 = arith.mulf %350, %38 : vector<16x16xf32>
    %cst_201 = arith.constant dense<0.000000e+00> : vector<16xf32>
    %354 = vector.multi_reduction <add>, %353, %cst_201 [0] : vector<16x16xf32> to vector<16xf32>
    %355 = vector.shape_cast %354 : vector<16xf32> to vector<1x16xf32>
    %356 = arith.addf %352, %355 : vector<1x16xf32>
    %c10_202 = arith.constant 10 : index
    %c0_203 = arith.constant 0 : index
    %c0_204 = arith.constant 0 : index
    %357 = vector.load %arg10[%c10_202, %c0_203, %c0_204] : memref<23x1x16xf32, #tpu.memory_space<vmem>>, vector<1x1x16xf32>
    %358 = vector.shape_cast %357 : vector<1x1x16xf32> to vector<1x16xf32>
    %359 = vector.shape_cast %356 : vector<1x16xf32> to vector<1x1x16xf32>
    tpu.vector_store %arg10[%c10_202, %c0_203, %c0_204], %359 {strides = array<i32>} : memref<23x1x16xf32, #tpu.memory_space<vmem>>, vector<1x1x16xf32>,
    %c16 = arith.constant 16 : index
    %c0_205 = arith.constant 0 : index
    %c0_206 = arith.constant 0 : index
    %360 = vector.load %arg10[%c16, %c0_205, %c0_206] : memref<23x1x16xf32, #tpu.memory_space<vmem>>, vector<1x1x16xf32>
    %361 = vector.shape_cast %360 : vector<1x1x16xf32> to vector<1x16xf32>
    %cst_207 = arith.constant dense<0.000000e+00> : vector<16xf32>
    %362 = vector.multi_reduction <add>, %350, %cst_207 [0] : vector<16x16xf32> to vector<16xf32>
    %363 = vector.shape_cast %362 : vector<16xf32> to vector<1x16xf32>
    %364 = arith.addf %361, %363 : vector<1x16xf32>
    %c16_208 = arith.constant 16 : index
    %c0_209 = arith.constant 0 : index
    %c0_210 = arith.constant 0 : index
    %365 = vector.load %arg10[%c16_208, %c0_209, %c0_210] : memref<23x1x16xf32, #tpu.memory_space<vmem>>, vector<1x1x16xf32>
    %366 = vector.shape_cast %365 : vector<1x1x16xf32> to vector<1x16xf32>
    %367 = vector.shape_cast %364 : vector<1x16xf32> to vector<1x1x16xf32>
    tpu.vector_store %arg10[%c16_208, %c0_209, %c0_210], %367 {strides = array<i32>} : memref<23x1x16xf32, #tpu.memory_space<vmem>>, vector<1x1x16xf32>,
    %c22 = arith.constant 22 : index
    %c0_211 = arith.constant 0 : index
    %c0_212 = arith.constant 0 : index
    %368 = vector.load %arg10[%c22, %c0_211, %c0_212] : memref<23x1x16xf32, #tpu.memory_space<vmem>>, vector<1x1x16xf32>
    %369 = vector.shape_cast %368 : vector<1x1x16xf32> to vector<1x16xf32>
    %cst_213 = arith.constant dense<0.000000e+00> : vector<16xf32>
    %370 = vector.multi_reduction <add>, %38, %cst_213 [0] : vector<16x16xf32> to vector<16xf32>
    %371 = vector.shape_cast %370 : vector<16xf32> to vector<1x16xf32>
    %372 = arith.addf %369, %371 : vector<1x16xf32>
    %c22_214 = arith.constant 22 : index
    %c0_215 = arith.constant 0 : index
    %c0_216 = arith.constant 0 : index
    %373 = vector.load %arg10[%c22_214, %c0_215, %c0_216] : memref<23x1x16xf32, #tpu.memory_space<vmem>>, vector<1x1x16xf32>
    %374 = vector.shape_cast %373 : vector<1x1x16xf32> to vector<1x16xf32>
    %375 = vector.shape_cast %372 : vector<1x16xf32> to vector<1x1x16xf32>
    tpu.vector_store %arg10[%c22_214, %c0_215, %c0_216], %375 {strides = array<i32>} : memref<23x1x16xf32, #tpu.memory_space<vmem>>, vector<1x1x16xf32>,
    %c0_217 = arith.constant 0 : index
    %c0_218 = arith.constant 0 : index
    %c0_219 = arith.constant 0 : index
    %c0_220 = arith.constant 0 : index
    %376 = vector.load %arg6[%c0_217, %c0_218, %c0_219, %c0_220] : memref<1x48x8x8xbf16, #tpu.memory_space<vmem>>, vector<1x1x8x8xbf16>
    %377 = vector.shape_cast %376 : vector<1x1x8x8xbf16> to vector<8x8xbf16>
    %cst_221 = arith.constant dense<0.000000e+00> : vector<16x8xf32>
    %378 = tpu.matmul %159, %377, %cst_221 {dimension_numbers = #tpu.dot_dimension_numbers<[1], [0], [0], [1], [0, 0, 1, 1], [], []>} : vector<16x8xbf16>, vector<8x8xbf16>, vector<16x8xf32> -> vector<16x8xf32>
    %379 = arith.truncf %378 : vector<16x8xf32> to vector<16x8xbf16>
    %cst_222 = arith.constant dense<0.000000e+00> : vector<16x16xf32>
    %380 = tpu.matmul %379, %160, %cst_222 {dimension_numbers = #tpu.dot_dimension_numbers<[1], [0], [0], [1], [0, 0, 1, 1], [], []>} : vector<16x8xbf16>, vector<8x16xbf16>, vector<16x16xf32> -> vector<16x16xf32>
    %c0_223 = arith.constant 0 : index
    %c6_224 = arith.constant 6 : index
    %c0_225 = arith.constant 0 : index
    %c0_226 = arith.constant 0 : index
    %381 = vector.load %arg6[%c0_223, %c6_224, %c0_225, %c0_226] : memref<1x48x8x8xbf16, #tpu.memory_space<vmem>>, vector<1x1x8x8xbf16>
    %382 = vector.shape_cast %381 : vector<1x1x8x8xbf16> to vector<8x8xbf16>
    %cst_227 = arith.constant dense<0.000000e+00> : vector<16x8xf32>
    %383 = tpu.matmul %159, %382, %cst_227 {dimension_numbers = #tpu.dot_dimension_numbers<[1], [0], [0], [1], [0, 0, 1, 1], [], []>} : vector<16x8xbf16>, vector<8x8xbf16>, vector<16x8xf32> -> vector<16x8xf32>
    %384 = arith.truncf %383 : vector<16x8xf32> to vector<16x8xbf16>
    %cst_228 = arith.constant dense<0.000000e+00> : vector<16x16xf32>
    %385 = tpu.matmul %384, %160, %cst_228 {dimension_numbers = #tpu.dot_dimension_numbers<[1], [0], [0], [1], [0, 0, 1, 1], [], []>} : vector<16x8xbf16>, vector<8x16xbf16>, vector<16x16xf32> -> vector<16x16xf32>
    %386 = arith.minimumf %380, %385 : vector<16x16xf32>
    %c0_229 = arith.constant 0 : index
    %c12_230 = arith.constant 12 : index
    %c0_231 = arith.constant 0 : index
    %c0_232 = arith.constant 0 : index
    %387 = vector.load %arg6[%c0_229, %c12_230, %c0_231, %c0_232] : memref<1x48x8x8xbf16, #tpu.memory_space<vmem>>, vector<1x1x8x8xbf16>
    %388 = vector.shape_cast %387 : vector<1x1x8x8xbf16> to vector<8x8xbf16>
    %cst_233 = arith.constant dense<0.000000e+00> : vector<16x8xf32>
    %389 = tpu.matmul %159, %388, %cst_233 {dimension_numbers = #tpu.dot_dimension_numbers<[1], [0], [0], [1], [0, 0, 1, 1], [], []>} : vector<16x8xbf16>, vector<8x8xbf16>, vector<16x8xf32> -> vector<16x8xf32>
    %390 = arith.truncf %389 : vector<16x8xf32> to vector<16x8xbf16>
    %cst_234 = arith.constant dense<0.000000e+00> : vector<16x16xf32>
    %391 = tpu.matmul %390, %160, %cst_234 {dimension_numbers = #tpu.dot_dimension_numbers<[1], [0], [0], [1], [0, 0, 1, 1], [], []>} : vector<16x8xbf16>, vector<8x16xbf16>, vector<16x16xf32> -> vector<16x16xf32>
    %392 = arith.minimumf %386, %391 : vector<16x16xf32>
    %c0_235 = arith.constant 0 : index
    %c18_236 = arith.constant 18 : index
    %c0_237 = arith.constant 0 : index
    %c0_238 = arith.constant 0 : index
    %393 = vector.load %arg6[%c0_235, %c18_236, %c0_237, %c0_238] : memref<1x48x8x8xbf16, #tpu.memory_space<vmem>>, vector<1x1x8x8xbf16>
    %394 = vector.shape_cast %393 : vector<1x1x8x8xbf16> to vector<8x8xbf16>
    %cst_239 = arith.constant dense<0.000000e+00> : vector<16x8xf32>
    %395 = tpu.matmul %159, %394, %cst_239 {dimension_numbers = #tpu.dot_dimension_numbers<[1], [0], [0], [1], [0, 0, 1, 1], [], []>} : vector<16x8xbf16>, vector<8x8xbf16>, vector<16x8xf32> -> vector<16x8xf32>
    %396 = arith.truncf %395 : vector<16x8xf32> to vector<16x8xbf16>
    %cst_240 = arith.constant dense<0.000000e+00> : vector<16x16xf32>
    %397 = tpu.matmul %396, %160, %cst_240 {dimension_numbers = #tpu.dot_dimension_numbers<[1], [0], [0], [1], [0, 0, 1, 1], [], []>} : vector<16x8xbf16>, vector<8x16xbf16>, vector<16x16xf32> -> vector<16x16xf32>
    %398 = arith.minimumf %392, %397 : vector<16x16xf32>
    %c0_241 = arith.constant 0 : index
    %c24 = arith.constant 24 : index
    %c0_242 = arith.constant 0 : index
    %c0_243 = arith.constant 0 : index
    %399 = vector.load %arg6[%c0_241, %c24, %c0_242, %c0_243] : memref<1x48x8x8xbf16, #tpu.memory_space<vmem>>, vector<1x1x8x8xbf16>
    %400 = vector.shape_cast %399 : vector<1x1x8x8xbf16> to vector<8x8xbf16>
    %cst_244 = arith.constant dense<0.000000e+00> : vector<16x8xf32>
    %401 = tpu.matmul %159, %400, %cst_244 {dimension_numbers = #tpu.dot_dimension_numbers<[1], [0], [0], [1], [0, 0, 1, 1], [], []>} : vector<16x8xbf16>, vector<8x8xbf16>, vector<16x8xf32> -> vector<16x8xf32>
    %402 = arith.truncf %401 : vector<16x8xf32> to vector<16x8xbf16>
    %cst_245 = arith.constant dense<0.000000e+00> : vector<16x16xf32>
    %403 = tpu.matmul %402, %160, %cst_245 {dimension_numbers = #tpu.dot_dimension_numbers<[1], [0], [0], [1], [0, 0, 1, 1], [], []>} : vector<16x8xbf16>, vector<8x16xbf16>, vector<16x16xf32> -> vector<16x16xf32>
    %404 = arith.minimumf %398, %403 : vector<16x16xf32>
    %c0_246 = arith.constant 0 : index
    %c30 = arith.constant 30 : index
    %c0_247 = arith.constant 0 : index
    %c0_248 = arith.constant 0 : index
    %405 = vector.load %arg6[%c0_246, %c30, %c0_247, %c0_248] : memref<1x48x8x8xbf16, #tpu.memory_space<vmem>>, vector<1x1x8x8xbf16>
    %406 = vector.shape_cast %405 : vector<1x1x8x8xbf16> to vector<8x8xbf16>
    %cst_249 = arith.constant dense<0.000000e+00> : vector<16x8xf32>
    %407 = tpu.matmul %159, %406, %cst_249 {dimension_numbers = #tpu.dot_dimension_numbers<[1], [0], [0], [1], [0, 0, 1, 1], [], []>} : vector<16x8xbf16>, vector<8x8xbf16>, vector<16x8xf32> -> vector<16x8xf32>
    %408 = arith.truncf %407 : vector<16x8xf32> to vector<16x8xbf16>
    %cst_250 = arith.constant dense<0.000000e+00> : vector<16x16xf32>
    %409 = tpu.matmul %408, %160, %cst_250 {dimension_numbers = #tpu.dot_dimension_numbers<[1], [0], [0], [1], [0, 0, 1, 1], [], []>} : vector<16x8xbf16>, vector<8x16xbf16>, vector<16x16xf32> -> vector<16x16xf32>
    %410 = arith.minimumf %404, %409 : vector<16x16xf32>
    %c0_251 = arith.constant 0 : index
    %c36 = arith.constant 36 : index
    %c0_252 = arith.constant 0 : index
    %c0_253 = arith.constant 0 : index
    %411 = vector.load %arg6[%c0_251, %c36, %c0_252, %c0_253] : memref<1x48x8x8xbf16, #tpu.memory_space<vmem>>, vector<1x1x8x8xbf16>
    %412 = vector.shape_cast %411 : vector<1x1x8x8xbf16> to vector<8x8xbf16>
    %cst_254 = arith.constant dense<0.000000e+00> : vector<16x8xf32>
    %413 = tpu.matmul %159, %412, %cst_254 {dimension_numbers = #tpu.dot_dimension_numbers<[1], [0], [0], [1], [0, 0, 1, 1], [], []>} : vector<16x8xbf16>, vector<8x8xbf16>, vector<16x8xf32> -> vector<16x8xf32>
    %414 = arith.truncf %413 : vector<16x8xf32> to vector<16x8xbf16>
    %cst_255 = arith.constant dense<0.000000e+00> : vector<16x16xf32>
    %415 = tpu.matmul %414, %160, %cst_255 {dimension_numbers = #tpu.dot_dimension_numbers<[1], [0], [0], [1], [0, 0, 1, 1], [], []>} : vector<16x8xbf16>, vector<8x16xbf16>, vector<16x16xf32> -> vector<16x16xf32>
    %416 = arith.minimumf %410, %415 : vector<16x16xf32>
    %c0_256 = arith.constant 0 : index
    %c42 = arith.constant 42 : index
    %c0_257 = arith.constant 0 : index
    %c0_258 = arith.constant 0 : index
    %417 = vector.load %arg6[%c0_256, %c42, %c0_257, %c0_258] : memref<1x48x8x8xbf16, #tpu.memory_space<vmem>>, vector<1x1x8x8xbf16>
    %418 = vector.shape_cast %417 : vector<1x1x8x8xbf16> to vector<8x8xbf16>
    %cst_259 = arith.constant dense<0.000000e+00> : vector<16x8xf32>
    %419 = tpu.matmul %159, %418, %cst_259 {dimension_numbers = #tpu.dot_dimension_numbers<[1], [0], [0], [1], [0, 0, 1, 1], [], []>} : vector<16x8xbf16>, vector<8x8xbf16>, vector<16x8xf32> -> vector<16x8xf32>
    %420 = arith.truncf %419 : vector<16x8xf32> to vector<16x8xbf16>
    %cst_260 = arith.constant dense<0.000000e+00> : vector<16x16xf32>
    %421 = tpu.matmul %420, %160, %cst_260 {dimension_numbers = #tpu.dot_dimension_numbers<[1], [0], [0], [1], [0, 0, 1, 1], [], []>} : vector<16x8xbf16>, vector<8x16xbf16>, vector<16x16xf32> -> vector<16x16xf32>
    %422 = arith.minimumf %416, %421 : vector<16x16xf32>
    %423 = arith.mulf %422, %13 : vector<16x16xf32>
    %cst_261 = arith.constant 1.000000e+00 : f32
    %424 = vector.broadcast %cst_261 : f32 to vector<16x16xf32>
    %425 = arith.subf %424, %13 : vector<16x16xf32>
    %426 = arith.mulf %422, %425 : vector<16x16xf32>
    %427 = arith.mulf %426, %8 : vector<16x16xf32>
    %cst_262 = arith.constant 0.000000e+00 : f32
    %428 = vector.broadcast %cst_262 : f32 to vector<16x16xf32>
    %429 = arith.cmpf one, %427, %428 : vector<16x16xf32>
    %cst_263 = arith.constant 0x7F800000 : f32
    %430 = vector.broadcast %cst_263 : f32 to vector<16x16xf32>
    %431 = arith.select %429, %427, %430 : vector<16x16xi1>, vector<16x16xf32>
    %c0_264 = arith.constant 0 : index
    %c1_265 = arith.constant 1 : index
    %c0_266 = arith.constant 0 : index
    %c0_267 = arith.constant 0 : index
    %432 = vector.load %arg6[%c0_264, %c1_265, %c0_266, %c0_267] : memref<1x48x8x8xbf16, #tpu.memory_space<vmem>>, vector<1x1x8x8xbf16>
    %433 = vector.shape_cast %432 : vector<1x1x8x8xbf16> to vector<8x8xbf16>
    %cst_268 = arith.constant dense<0.000000e+00> : vector<16x8xf32>
    %434 = tpu.matmul %159, %433, %cst_268 {dimension_numbers = #tpu.dot_dimension_numbers<[1], [0], [0], [1], [0, 0, 1, 1], [], []>} : vector<16x8xbf16>, vector<8x8xbf16>, vector<16x8xf32> -> vector<16x8xf32>
    %435 = arith.truncf %434 : vector<16x8xf32> to vector<16x8xbf16>
    %cst_269 = arith.constant dense<0.000000e+00> : vector<16x16xf32>
    %436 = tpu.matmul %435, %160, %cst_269 {dimension_numbers = #tpu.dot_dimension_numbers<[1], [0], [0], [1], [0, 0, 1, 1], [], []>} : vector<16x8xbf16>, vector<8x16xbf16>, vector<16x16xf32> -> vector<16x16xf32>
    %c0_270 = arith.constant 0 : index
    %c7_271 = arith.constant 7 : index
    %c0_272 = arith.constant 0 : index
    %c0_273 = arith.constant 0 : index
    %437 = vector.load %arg6[%c0_270, %c7_271, %c0_272, %c0_273] : memref<1x48x8x8xbf16, #tpu.memory_space<vmem>>, vector<1x1x8x8xbf16>
    %438 = vector.shape_cast %437 : vector<1x1x8x8xbf16> to vector<8x8xbf16>
    %cst_274 = arith.constant dense<0.000000e+00> : vector<16x8xf32>
    %439 = tpu.matmul %159, %438, %cst_274 {dimension_numbers = #tpu.dot_dimension_numbers<[1], [0], [0], [1], [0, 0, 1, 1], [], []>} : vector<16x8xbf16>, vector<8x8xbf16>, vector<16x8xf32> -> vector<16x8xf32>
    %440 = arith.truncf %439 : vector<16x8xf32> to vector<16x8xbf16>
    %cst_275 = arith.constant dense<0.000000e+00> : vector<16x16xf32>
    %441 = tpu.matmul %440, %160, %cst_275 {dimension_numbers = #tpu.dot_dimension_numbers<[1], [0], [0], [1], [0, 0, 1, 1], [], []>} : vector<16x8xbf16>, vector<8x16xbf16>, vector<16x16xf32> -> vector<16x16xf32>
    %442 = arith.minimumf %436, %441 : vector<16x16xf32>
    %c0_276 = arith.constant 0 : index
    %c13_277 = arith.constant 13 : index
    %c0_278 = arith.constant 0 : index
    %c0_279 = arith.constant 0 : index
    %443 = vector.load %arg6[%c0_276, %c13_277, %c0_278, %c0_279] : memref<1x48x8x8xbf16, #tpu.memory_space<vmem>>, vector<1x1x8x8xbf16>
    %444 = vector.shape_cast %443 : vector<1x1x8x8xbf16> to vector<8x8xbf16>
    %cst_280 = arith.constant dense<0.000000e+00> : vector<16x8xf32>
    %445 = tpu.matmul %159, %444, %cst_280 {dimension_numbers = #tpu.dot_dimension_numbers<[1], [0], [0], [1], [0, 0, 1, 1], [], []>} : vector<16x8xbf16>, vector<8x8xbf16>, vector<16x8xf32> -> vector<16x8xf32>
    %446 = arith.truncf %445 : vector<16x8xf32> to vector<16x8xbf16>
    %cst_281 = arith.constant dense<0.000000e+00> : vector<16x16xf32>
    %447 = tpu.matmul %446, %160, %cst_281 {dimension_numbers = #tpu.dot_dimension_numbers<[1], [0], [0], [1], [0, 0, 1, 1], [], []>} : vector<16x8xbf16>, vector<8x16xbf16>, vector<16x16xf32> -> vector<16x16xf32>
    %448 = arith.minimumf %442, %447 : vector<16x16xf32>
    %c0_282 = arith.constant 0 : index
    %c19_283 = arith.constant 19 : index
    %c0_284 = arith.constant 0 : index
    %c0_285 = arith.constant 0 : index
    %449 = vector.load %arg6[%c0_282, %c19_283, %c0_284, %c0_285] : memref<1x48x8x8xbf16, #tpu.memory_space<vmem>>, vector<1x1x8x8xbf16>
    %450 = vector.shape_cast %449 : vector<1x1x8x8xbf16> to vector<8x8xbf16>
    %cst_286 = arith.constant dense<0.000000e+00> : vector<16x8xf32>
    %451 = tpu.matmul %159, %450, %cst_286 {dimension_numbers = #tpu.dot_dimension_numbers<[1], [0], [0], [1], [0, 0, 1, 1], [], []>} : vector<16x8xbf16>, vector<8x8xbf16>, vector<16x8xf32> -> vector<16x8xf32>
    %452 = arith.truncf %451 : vector<16x8xf32> to vector<16x8xbf16>
    %cst_287 = arith.constant dense<0.000000e+00> : vector<16x16xf32>
    %453 = tpu.matmul %452, %160, %cst_287 {dimension_numbers = #tpu.dot_dimension_numbers<[1], [0], [0], [1], [0, 0, 1, 1], [], []>} : vector<16x8xbf16>, vector<8x16xbf16>, vector<16x16xf32> -> vector<16x16xf32>
    %454 = arith.minimumf %448, %453 : vector<16x16xf32>
    %c0_288 = arith.constant 0 : index
    %c25 = arith.constant 25 : index
    %c0_289 = arith.constant 0 : index
    %c0_290 = arith.constant 0 : index
    %455 = vector.load %arg6[%c0_288, %c25, %c0_289, %c0_290] : memref<1x48x8x8xbf16, #tpu.memory_space<vmem>>, vector<1x1x8x8xbf16>
    %456 = vector.shape_cast %455 : vector<1x1x8x8xbf16> to vector<8x8xbf16>
    %cst_291 = arith.constant dense<0.000000e+00> : vector<16x8xf32>
    %457 = tpu.matmul %159, %456, %cst_291 {dimension_numbers = #tpu.dot_dimension_numbers<[1], [0], [0], [1], [0, 0, 1, 1], [], []>} : vector<16x8xbf16>, vector<8x8xbf16>, vector<16x8xf32> -> vector<16x8xf32>
    %458 = arith.truncf %457 : vector<16x8xf32> to vector<16x8xbf16>
    %cst_292 = arith.constant dense<0.000000e+00> : vector<16x16xf32>
    %459 = tpu.matmul %458, %160, %cst_292 {dimension_numbers = #tpu.dot_dimension_numbers<[1], [0], [0], [1], [0, 0, 1, 1], [], []>} : vector<16x8xbf16>, vector<8x16xbf16>, vector<16x16xf32> -> vector<16x16xf32>
    %460 = arith.minimumf %454, %459 : vector<16x16xf32>
    %c0_293 = arith.constant 0 : index
    %c31 = arith.constant 31 : index
    %c0_294 = arith.constant 0 : index
    %c0_295 = arith.constant 0 : index
    %461 = vector.load %arg6[%c0_293, %c31, %c0_294, %c0_295] : memref<1x48x8x8xbf16, #tpu.memory_space<vmem>>, vector<1x1x8x8xbf16>
    %462 = vector.shape_cast %461 : vector<1x1x8x8xbf16> to vector<8x8xbf16>
    %cst_296 = arith.constant dense<0.000000e+00> : vector<16x8xf32>
    %463 = tpu.matmul %159, %462, %cst_296 {dimension_numbers = #tpu.dot_dimension_numbers<[1], [0], [0], [1], [0, 0, 1, 1], [], []>} : vector<16x8xbf16>, vector<8x8xbf16>, vector<16x8xf32> -> vector<16x8xf32>
    %464 = arith.truncf %463 : vector<16x8xf32> to vector<16x8xbf16>
    %cst_297 = arith.constant dense<0.000000e+00> : vector<16x16xf32>
    %465 = tpu.matmul %464, %160, %cst_297 {dimension_numbers = #tpu.dot_dimension_numbers<[1], [0], [0], [1], [0, 0, 1, 1], [], []>} : vector<16x8xbf16>, vector<8x16xbf16>, vector<16x16xf32> -> vector<16x16xf32>
    %466 = arith.minimumf %460, %465 : vector<16x16xf32>
    %c0_298 = arith.constant 0 : index
    %c37 = arith.constant 37 : index
    %c0_299 = arith.constant 0 : index
    %c0_300 = arith.constant 0 : index
    %467 = vector.load %arg6[%c0_298, %c37, %c0_299, %c0_300] : memref<1x48x8x8xbf16, #tpu.memory_space<vmem>>, vector<1x1x8x8xbf16>
    %468 = vector.shape_cast %467 : vector<1x1x8x8xbf16> to vector<8x8xbf16>
    %cst_301 = arith.constant dense<0.000000e+00> : vector<16x8xf32>
    %469 = tpu.matmul %159, %468, %cst_301 {dimension_numbers = #tpu.dot_dimension_numbers<[1], [0], [0], [1], [0, 0, 1, 1], [], []>} : vector<16x8xbf16>, vector<8x8xbf16>, vector<16x8xf32> -> vector<16x8xf32>
    %470 = arith.truncf %469 : vector<16x8xf32> to vector<16x8xbf16>
    %cst_302 = arith.constant dense<0.000000e+00> : vector<16x16xf32>
    %471 = tpu.matmul %470, %160, %cst_302 {dimension_numbers = #tpu.dot_dimension_numbers<[1], [0], [0], [1], [0, 0, 1, 1], [], []>} : vector<16x8xbf16>, vector<8x16xbf16>, vector<16x16xf32> -> vector<16x16xf32>
    %472 = arith.minimumf %466, %471 : vector<16x16xf32>
    %c0_303 = arith.constant 0 : index
    %c43 = arith.constant 43 : index
    %c0_304 = arith.constant 0 : index
    %c0_305 = arith.constant 0 : index
    %473 = vector.load %arg6[%c0_303, %c43, %c0_304, %c0_305] : memref<1x48x8x8xbf16, #tpu.memory_space<vmem>>, vector<1x1x8x8xbf16>
    %474 = vector.shape_cast %473 : vector<1x1x8x8xbf16> to vector<8x8xbf16>
    %cst_306 = arith.constant dense<0.000000e+00> : vector<16x8xf32>
    %475 = tpu.matmul %159, %474, %cst_306 {dimension_numbers = #tpu.dot_dimension_numbers<[1], [0], [0], [1], [0, 0, 1, 1], [], []>} : vector<16x8xbf16>, vector<8x8xbf16>, vector<16x8xf32> -> vector<16x8xf32>
    %476 = arith.truncf %475 : vector<16x8xf32> to vector<16x8xbf16>
    %cst_307 = arith.constant dense<0.000000e+00> : vector<16x16xf32>
    %477 = tpu.matmul %476, %160, %cst_307 {dimension_numbers = #tpu.dot_dimension_numbers<[1], [0], [0], [1], [0, 0, 1, 1], [], []>} : vector<16x8xbf16>, vector<8x16xbf16>, vector<16x16xf32> -> vector<16x16xf32>
    %478 = arith.minimumf %472, %477 : vector<16x16xf32>
    %479 = arith.mulf %478, %18 : vector<16x16xf32>
    %480 = arith.addf %423, %479 : vector<16x16xf32>
    %cst_308 = arith.constant 1.000000e+00 : f32
    %481 = vector.broadcast %cst_308 : f32 to vector<16x16xf32>
    %482 = arith.subf %481, %18 : vector<16x16xf32>
    %483 = arith.mulf %478, %482 : vector<16x16xf32>
    %484 = arith.mulf %483, %8 : vector<16x16xf32>
    %cst_309 = arith.constant 0.000000e+00 : f32
    %485 = vector.broadcast %cst_309 : f32 to vector<16x16xf32>
    %486 = arith.cmpf one, %484, %485 : vector<16x16xf32>
    %cst_310 = arith.constant 0x7F800000 : f32
    %487 = vector.broadcast %cst_310 : f32 to vector<16x16xf32>
    %488 = arith.select %486, %484, %487 : vector<16x16xi1>, vector<16x16xf32>
    %489 = arith.minimumf %431, %488 : vector<16x16xf32>
    %c0_311 = arith.constant 0 : index
    %c2_312 = arith.constant 2 : index
    %c0_313 = arith.constant 0 : index
    %c0_314 = arith.constant 0 : index
    %490 = vector.load %arg6[%c0_311, %c2_312, %c0_313, %c0_314] : memref<1x48x8x8xbf16, #tpu.memory_space<vmem>>, vector<1x1x8x8xbf16>
    %491 = vector.shape_cast %490 : vector<1x1x8x8xbf16> to vector<8x8xbf16>
    %cst_315 = arith.constant dense<0.000000e+00> : vector<16x8xf32>
    %492 = tpu.matmul %159, %491, %cst_315 {dimension_numbers = #tpu.dot_dimension_numbers<[1], [0], [0], [1], [0, 0, 1, 1], [], []>} : vector<16x8xbf16>, vector<8x8xbf16>, vector<16x8xf32> -> vector<16x8xf32>
    %493 = arith.truncf %492 : vector<16x8xf32> to vector<16x8xbf16>
    %cst_316 = arith.constant dense<0.000000e+00> : vector<16x16xf32>
    %494 = tpu.matmul %493, %160, %cst_316 {dimension_numbers = #tpu.dot_dimension_numbers<[1], [0], [0], [1], [0, 0, 1, 1], [], []>} : vector<16x8xbf16>, vector<8x16xbf16>, vector<16x16xf32> -> vector<16x16xf32>
    %c0_317 = arith.constant 0 : index
    %c8_318 = arith.constant 8 : index
    %c0_319 = arith.constant 0 : index
    %c0_320 = arith.constant 0 : index
    %495 = vector.load %arg6[%c0_317, %c8_318, %c0_319, %c0_320] : memref<1x48x8x8xbf16, #tpu.memory_space<vmem>>, vector<1x1x8x8xbf16>
    %496 = vector.shape_cast %495 : vector<1x1x8x8xbf16> to vector<8x8xbf16>
    %cst_321 = arith.constant dense<0.000000e+00> : vector<16x8xf32>
    %497 = tpu.matmul %159, %496, %cst_321 {dimension_numbers = #tpu.dot_dimension_numbers<[1], [0], [0], [1], [0, 0, 1, 1], [], []>} : vector<16x8xbf16>, vector<8x8xbf16>, vector<16x8xf32> -> vector<16x8xf32>
    %498 = arith.truncf %497 : vector<16x8xf32> to vector<16x8xbf16>
    %cst_322 = arith.constant dense<0.000000e+00> : vector<16x16xf32>
    %499 = tpu.matmul %498, %160, %cst_322 {dimension_numbers = #tpu.dot_dimension_numbers<[1], [0], [0], [1], [0, 0, 1, 1], [], []>} : vector<16x8xbf16>, vector<8x16xbf16>, vector<16x16xf32> -> vector<16x16xf32>
    %500 = arith.minimumf %494, %499 : vector<16x16xf32>
    %c0_323 = arith.constant 0 : index
    %c14_324 = arith.constant 14 : index
    %c0_325 = arith.constant 0 : index
    %c0_326 = arith.constant 0 : index
    %501 = vector.load %arg6[%c0_323, %c14_324, %c0_325, %c0_326] : memref<1x48x8x8xbf16, #tpu.memory_space<vmem>>, vector<1x1x8x8xbf16>
    %502 = vector.shape_cast %501 : vector<1x1x8x8xbf16> to vector<8x8xbf16>
    %cst_327 = arith.constant dense<0.000000e+00> : vector<16x8xf32>
    %503 = tpu.matmul %159, %502, %cst_327 {dimension_numbers = #tpu.dot_dimension_numbers<[1], [0], [0], [1], [0, 0, 1, 1], [], []>} : vector<16x8xbf16>, vector<8x8xbf16>, vector<16x8xf32> -> vector<16x8xf32>
    %504 = arith.truncf %503 : vector<16x8xf32> to vector<16x8xbf16>
    %cst_328 = arith.constant dense<0.000000e+00> : vector<16x16xf32>
    %505 = tpu.matmul %504, %160, %cst_328 {dimension_numbers = #tpu.dot_dimension_numbers<[1], [0], [0], [1], [0, 0, 1, 1], [], []>} : vector<16x8xbf16>, vector<8x16xbf16>, vector<16x16xf32> -> vector<16x16xf32>
    %506 = arith.minimumf %500, %505 : vector<16x16xf32>
    %c0_329 = arith.constant 0 : index
    %c20_330 = arith.constant 20 : index
    %c0_331 = arith.constant 0 : index
    %c0_332 = arith.constant 0 : index
    %507 = vector.load %arg6[%c0_329, %c20_330, %c0_331, %c0_332] : memref<1x48x8x8xbf16, #tpu.memory_space<vmem>>, vector<1x1x8x8xbf16>
    %508 = vector.shape_cast %507 : vector<1x1x8x8xbf16> to vector<8x8xbf16>
    %cst_333 = arith.constant dense<0.000000e+00> : vector<16x8xf32>
    %509 = tpu.matmul %159, %508, %cst_333 {dimension_numbers = #tpu.dot_dimension_numbers<[1], [0], [0], [1], [0, 0, 1, 1], [], []>} : vector<16x8xbf16>, vector<8x8xbf16>, vector<16x8xf32> -> vector<16x8xf32>
    %510 = arith.truncf %509 : vector<16x8xf32> to vector<16x8xbf16>
    %cst_334 = arith.constant dense<0.000000e+00> : vector<16x16xf32>
    %511 = tpu.matmul %510, %160, %cst_334 {dimension_numbers = #tpu.dot_dimension_numbers<[1], [0], [0], [1], [0, 0, 1, 1], [], []>} : vector<16x8xbf16>, vector<8x16xbf16>, vector<16x16xf32> -> vector<16x16xf32>
    %512 = arith.minimumf %506, %511 : vector<16x16xf32>
    %c0_335 = arith.constant 0 : index
    %c26 = arith.constant 26 : index
    %c0_336 = arith.constant 0 : index
    %c0_337 = arith.constant 0 : index
    %513 = vector.load %arg6[%c0_335, %c26, %c0_336, %c0_337] : memref<1x48x8x8xbf16, #tpu.memory_space<vmem>>, vector<1x1x8x8xbf16>
    %514 = vector.shape_cast %513 : vector<1x1x8x8xbf16> to vector<8x8xbf16>
    %cst_338 = arith.constant dense<0.000000e+00> : vector<16x8xf32>
    %515 = tpu.matmul %159, %514, %cst_338 {dimension_numbers = #tpu.dot_dimension_numbers<[1], [0], [0], [1], [0, 0, 1, 1], [], []>} : vector<16x8xbf16>, vector<8x8xbf16>, vector<16x8xf32> -> vector<16x8xf32>
    %516 = arith.truncf %515 : vector<16x8xf32> to vector<16x8xbf16>
    %cst_339 = arith.constant dense<0.000000e+00> : vector<16x16xf32>
    %517 = tpu.matmul %516, %160, %cst_339 {dimension_numbers = #tpu.dot_dimension_numbers<[1], [0], [0], [1], [0, 0, 1, 1], [], []>} : vector<16x8xbf16>, vector<8x16xbf16>, vector<16x16xf32> -> vector<16x16xf32>
    %518 = arith.minimumf %512, %517 : vector<16x16xf32>
    %c0_340 = arith.constant 0 : index
    %c32 = arith.constant 32 : index
    %c0_341 = arith.constant 0 : index
    %c0_342 = arith.constant 0 : index
    %519 = vector.load %arg6[%c0_340, %c32, %c0_341, %c0_342] : memref<1x48x8x8xbf16, #tpu.memory_space<vmem>>, vector<1x1x8x8xbf16>
    %520 = vector.shape_cast %519 : vector<1x1x8x8xbf16> to vector<8x8xbf16>
    %cst_343 = arith.constant dense<0.000000e+00> : vector<16x8xf32>
    %521 = tpu.matmul %159, %520, %cst_343 {dimension_numbers = #tpu.dot_dimension_numbers<[1], [0], [0], [1], [0, 0, 1, 1], [], []>} : vector<16x8xbf16>, vector<8x8xbf16>, vector<16x8xf32> -> vector<16x8xf32>
    %522 = arith.truncf %521 : vector<16x8xf32> to vector<16x8xbf16>
    %cst_344 = arith.constant dense<0.000000e+00> : vector<16x16xf32>
    %523 = tpu.matmul %522, %160, %cst_344 {dimension_numbers = #tpu.dot_dimension_numbers<[1], [0], [0], [1], [0, 0, 1, 1], [], []>} : vector<16x8xbf16>, vector<8x16xbf16>, vector<16x16xf32> -> vector<16x16xf32>
    %524 = arith.minimumf %518, %523 : vector<16x16xf32>
    %c0_345 = arith.constant 0 : index
    %c38 = arith.constant 38 : index
    %c0_346 = arith.constant 0 : index
    %c0_347 = arith.constant 0 : index
    %525 = vector.load %arg6[%c0_345, %c38, %c0_346, %c0_347] : memref<1x48x8x8xbf16, #tpu.memory_space<vmem>>, vector<1x1x8x8xbf16>
    %526 = vector.shape_cast %525 : vector<1x1x8x8xbf16> to vector<8x8xbf16>
    %cst_348 = arith.constant dense<0.000000e+00> : vector<16x8xf32>
    %527 = tpu.matmul %159, %526, %cst_348 {dimension_numbers = #tpu.dot_dimension_numbers<[1], [0], [0], [1], [0, 0, 1, 1], [], []>} : vector<16x8xbf16>, vector<8x8xbf16>, vector<16x8xf32> -> vector<16x8xf32>
    %528 = arith.truncf %527 : vector<16x8xf32> to vector<16x8xbf16>
    %cst_349 = arith.constant dense<0.000000e+00> : vector<16x16xf32>
    %529 = tpu.matmul %528, %160, %cst_349 {dimension_numbers = #tpu.dot_dimension_numbers<[1], [0], [0], [1], [0, 0, 1, 1], [], []>} : vector<16x8xbf16>, vector<8x16xbf16>, vector<16x16xf32> -> vector<16x16xf32>
    %530 = arith.minimumf %524, %529 : vector<16x16xf32>
    %c0_350 = arith.constant 0 : index
    %c44 = arith.constant 44 : index
    %c0_351 = arith.constant 0 : index
    %c0_352 = arith.constant 0 : index
    %531 = vector.load %arg6[%c0_350, %c44, %c0_351, %c0_352] : memref<1x48x8x8xbf16, #tpu.memory_space<vmem>>, vector<1x1x8x8xbf16>
    %532 = vector.shape_cast %531 : vector<1x1x8x8xbf16> to vector<8x8xbf16>
    %cst_353 = arith.constant dense<0.000000e+00> : vector<16x8xf32>
    %533 = tpu.matmul %159, %532, %cst_353 {dimension_numbers = #tpu.dot_dimension_numbers<[1], [0], [0], [1], [0, 0, 1, 1], [], []>} : vector<16x8xbf16>, vector<8x8xbf16>, vector<16x8xf32> -> vector<16x8xf32>
    %534 = arith.truncf %533 : vector<16x8xf32> to vector<16x8xbf16>
    %cst_354 = arith.constant dense<0.000000e+00> : vector<16x16xf32>
    %535 = tpu.matmul %534, %160, %cst_354 {dimension_numbers = #tpu.dot_dimension_numbers<[1], [0], [0], [1], [0, 0, 1, 1], [], []>} : vector<16x8xbf16>, vector<8x16xbf16>, vector<16x16xf32> -> vector<16x16xf32>
    %536 = arith.minimumf %530, %535 : vector<16x16xf32>
    %537 = arith.mulf %536, %23 : vector<16x16xf32>
    %538 = arith.addf %480, %537 : vector<16x16xf32>
    %cst_355 = arith.constant 1.000000e+00 : f32
    %539 = vector.broadcast %cst_355 : f32 to vector<16x16xf32>
    %540 = arith.subf %539, %23 : vector<16x16xf32>
    %541 = arith.mulf %536, %540 : vector<16x16xf32>
    %542 = arith.mulf %541, %8 : vector<16x16xf32>
    %cst_356 = arith.constant 0.000000e+00 : f32
    %543 = vector.broadcast %cst_356 : f32 to vector<16x16xf32>
    %544 = arith.cmpf one, %542, %543 : vector<16x16xf32>
    %cst_357 = arith.constant 0x7F800000 : f32
    %545 = vector.broadcast %cst_357 : f32 to vector<16x16xf32>
    %546 = arith.select %544, %542, %545 : vector<16x16xi1>, vector<16x16xf32>
    %547 = arith.minimumf %489, %546 : vector<16x16xf32>
    %c0_358 = arith.constant 0 : index
    %c3_359 = arith.constant 3 : index
    %c0_360 = arith.constant 0 : index
    %c0_361 = arith.constant 0 : index
    %548 = vector.load %arg6[%c0_358, %c3_359, %c0_360, %c0_361] : memref<1x48x8x8xbf16, #tpu.memory_space<vmem>>, vector<1x1x8x8xbf16>
    %549 = vector.shape_cast %548 : vector<1x1x8x8xbf16> to vector<8x8xbf16>
    %cst_362 = arith.constant dense<0.000000e+00> : vector<16x8xf32>
    %550 = tpu.matmul %159, %549, %cst_362 {dimension_numbers = #tpu.dot_dimension_numbers<[1], [0], [0], [1], [0, 0, 1, 1], [], []>} : vector<16x8xbf16>, vector<8x8xbf16>, vector<16x8xf32> -> vector<16x8xf32>
    %551 = arith.truncf %550 : vector<16x8xf32> to vector<16x8xbf16>
    %cst_363 = arith.constant dense<0.000000e+00> : vector<16x16xf32>
    %552 = tpu.matmul %551, %160, %cst_363 {dimension_numbers = #tpu.dot_dimension_numbers<[1], [0], [0], [1], [0, 0, 1, 1], [], []>} : vector<16x8xbf16>, vector<8x16xbf16>, vector<16x16xf32> -> vector<16x16xf32>
    %c0_364 = arith.constant 0 : index
    %c9_365 = arith.constant 9 : index
    %c0_366 = arith.constant 0 : index
    %c0_367 = arith.constant 0 : index
    %553 = vector.load %arg6[%c0_364, %c9_365, %c0_366, %c0_367] : memref<1x48x8x8xbf16, #tpu.memory_space<vmem>>, vector<1x1x8x8xbf16>
    %554 = vector.shape_cast %553 : vector<1x1x8x8xbf16> to vector<8x8xbf16>
    %cst_368 = arith.constant dense<0.000000e+00> : vector<16x8xf32>
    %555 = tpu.matmul %159, %554, %cst_368 {dimension_numbers = #tpu.dot_dimension_numbers<[1], [0], [0], [1], [0, 0, 1, 1], [], []>} : vector<16x8xbf16>, vector<8x8xbf16>, vector<16x8xf32> -> vector<16x8xf32>
    %556 = arith.truncf %555 : vector<16x8xf32> to vector<16x8xbf16>
    %cst_369 = arith.constant dense<0.000000e+00> : vector<16x16xf32>
    %557 = tpu.matmul %556, %160, %cst_369 {dimension_numbers = #tpu.dot_dimension_numbers<[1], [0], [0], [1], [0, 0, 1, 1], [], []>} : vector<16x8xbf16>, vector<8x16xbf16>, vector<16x16xf32> -> vector<16x16xf32>
    %558 = arith.minimumf %552, %557 : vector<16x16xf32>
    %c0_370 = arith.constant 0 : index
    %c15_371 = arith.constant 15 : index
    %c0_372 = arith.constant 0 : index
    %c0_373 = arith.constant 0 : index
    %559 = vector.load %arg6[%c0_370, %c15_371, %c0_372, %c0_373] : memref<1x48x8x8xbf16, #tpu.memory_space<vmem>>, vector<1x1x8x8xbf16>
    %560 = vector.shape_cast %559 : vector<1x1x8x8xbf16> to vector<8x8xbf16>
    %cst_374 = arith.constant dense<0.000000e+00> : vector<16x8xf32>
    %561 = tpu.matmul %159, %560, %cst_374 {dimension_numbers = #tpu.dot_dimension_numbers<[1], [0], [0], [1], [0, 0, 1, 1], [], []>} : vector<16x8xbf16>, vector<8x8xbf16>, vector<16x8xf32> -> vector<16x8xf32>
    %562 = arith.truncf %561 : vector<16x8xf32> to vector<16x8xbf16>
    %cst_375 = arith.constant dense<0.000000e+00> : vector<16x16xf32>
    %563 = tpu.matmul %562, %160, %cst_375 {dimension_numbers = #tpu.dot_dimension_numbers<[1], [0], [0], [1], [0, 0, 1, 1], [], []>} : vector<16x8xbf16>, vector<8x16xbf16>, vector<16x16xf32> -> vector<16x16xf32>
    %564 = arith.minimumf %558, %563 : vector<16x16xf32>
    %c0_376 = arith.constant 0 : index
    %c21_377 = arith.constant 21 : index
    %c0_378 = arith.constant 0 : index
    %c0_379 = arith.constant 0 : index
    %565 = vector.load %arg6[%c0_376, %c21_377, %c0_378, %c0_379] : memref<1x48x8x8xbf16, #tpu.memory_space<vmem>>, vector<1x1x8x8xbf16>
    %566 = vector.shape_cast %565 : vector<1x1x8x8xbf16> to vector<8x8xbf16>
    %cst_380 = arith.constant dense<0.000000e+00> : vector<16x8xf32>
    %567 = tpu.matmul %159, %566, %cst_380 {dimension_numbers = #tpu.dot_dimension_numbers<[1], [0], [0], [1], [0, 0, 1, 1], [], []>} : vector<16x8xbf16>, vector<8x8xbf16>, vector<16x8xf32> -> vector<16x8xf32>
    %568 = arith.truncf %567 : vector<16x8xf32> to vector<16x8xbf16>
    %cst_381 = arith.constant dense<0.000000e+00> : vector<16x16xf32>
    %569 = tpu.matmul %568, %160, %cst_381 {dimension_numbers = #tpu.dot_dimension_numbers<[1], [0], [0], [1], [0, 0, 1, 1], [], []>} : vector<16x8xbf16>, vector<8x16xbf16>, vector<16x16xf32> -> vector<16x16xf32>
    %570 = arith.minimumf %564, %569 : vector<16x16xf32>
    %c0_382 = arith.constant 0 : index
    %c27 = arith.constant 27 : index
    %c0_383 = arith.constant 0 : index
    %c0_384 = arith.constant 0 : index
    %571 = vector.load %arg6[%c0_382, %c27, %c0_383, %c0_384] : memref<1x48x8x8xbf16, #tpu.memory_space<vmem>>, vector<1x1x8x8xbf16>
    %572 = vector.shape_cast %571 : vector<1x1x8x8xbf16> to vector<8x8xbf16>
    %cst_385 = arith.constant dense<0.000000e+00> : vector<16x8xf32>
    %573 = tpu.matmul %159, %572, %cst_385 {dimension_numbers = #tpu.dot_dimension_numbers<[1], [0], [0], [1], [0, 0, 1, 1], [], []>} : vector<16x8xbf16>, vector<8x8xbf16>, vector<16x8xf32> -> vector<16x8xf32>
    %574 = arith.truncf %573 : vector<16x8xf32> to vector<16x8xbf16>
    %cst_386 = arith.constant dense<0.000000e+00> : vector<16x16xf32>
    %575 = tpu.matmul %574, %160, %cst_386 {dimension_numbers = #tpu.dot_dimension_numbers<[1], [0], [0], [1], [0, 0, 1, 1], [], []>} : vector<16x8xbf16>, vector<8x16xbf16>, vector<16x16xf32> -> vector<16x16xf32>
    %576 = arith.minimumf %570, %575 : vector<16x16xf32>
    %c0_387 = arith.constant 0 : index
    %c33 = arith.constant 33 : index
    %c0_388 = arith.constant 0 : index
    %c0_389 = arith.constant 0 : index
    %577 = vector.load %arg6[%c0_387, %c33, %c0_388, %c0_389] : memref<1x48x8x8xbf16, #tpu.memory_space<vmem>>, vector<1x1x8x8xbf16>
    %578 = vector.shape_cast %577 : vector<1x1x8x8xbf16> to vector<8x8xbf16>
    %cst_390 = arith.constant dense<0.000000e+00> : vector<16x8xf32>
    %579 = tpu.matmul %159, %578, %cst_390 {dimension_numbers = #tpu.dot_dimension_numbers<[1], [0], [0], [1], [0, 0, 1, 1], [], []>} : vector<16x8xbf16>, vector<8x8xbf16>, vector<16x8xf32> -> vector<16x8xf32>
    %580 = arith.truncf %579 : vector<16x8xf32> to vector<16x8xbf16>
    %cst_391 = arith.constant dense<0.000000e+00> : vector<16x16xf32>
    %581 = tpu.matmul %580, %160, %cst_391 {dimension_numbers = #tpu.dot_dimension_numbers<[1], [0], [0], [1], [0, 0, 1, 1], [], []>} : vector<16x8xbf16>, vector<8x16xbf16>, vector<16x16xf32> -> vector<16x16xf32>
    %582 = arith.minimumf %576, %581 : vector<16x16xf32>
    %c0_392 = arith.constant 0 : index
    %c39 = arith.constant 39 : index
    %c0_393 = arith.constant 0 : index
    %c0_394 = arith.constant 0 : index
    %583 = vector.load %arg6[%c0_392, %c39, %c0_393, %c0_394] : memref<1x48x8x8xbf16, #tpu.memory_space<vmem>>, vector<1x1x8x8xbf16>
    %584 = vector.shape_cast %583 : vector<1x1x8x8xbf16> to vector<8x8xbf16>
    %cst_395 = arith.constant dense<0.000000e+00> : vector<16x8xf32>
    %585 = tpu.matmul %159, %584, %cst_395 {dimension_numbers = #tpu.dot_dimension_numbers<[1], [0], [0], [1], [0, 0, 1, 1], [], []>} : vector<16x8xbf16>, vector<8x8xbf16>, vector<16x8xf32> -> vector<16x8xf32>
    %586 = arith.truncf %585 : vector<16x8xf32> to vector<16x8xbf16>
    %cst_396 = arith.constant dense<0.000000e+00> : vector<16x16xf32>
    %587 = tpu.matmul %586, %160, %cst_396 {dimension_numbers = #tpu.dot_dimension_numbers<[1], [0], [0], [1], [0, 0, 1, 1], [], []>} : vector<16x8xbf16>, vector<8x16xbf16>, vector<16x16xf32> -> vector<16x16xf32>
    %588 = arith.minimumf %582, %587 : vector<16x16xf32>
    %c0_397 = arith.constant 0 : index
    %c45 = arith.constant 45 : index
    %c0_398 = arith.constant 0 : index
    %c0_399 = arith.constant 0 : index
    %589 = vector.load %arg6[%c0_397, %c45, %c0_398, %c0_399] : memref<1x48x8x8xbf16, #tpu.memory_space<vmem>>, vector<1x1x8x8xbf16>
    %590 = vector.shape_cast %589 : vector<1x1x8x8xbf16> to vector<8x8xbf16>
    %cst_400 = arith.constant dense<0.000000e+00> : vector<16x8xf32>
    %591 = tpu.matmul %159, %590, %cst_400 {dimension_numbers = #tpu.dot_dimension_numbers<[1], [0], [0], [1], [0, 0, 1, 1], [], []>} : vector<16x8xbf16>, vector<8x8xbf16>, vector<16x8xf32> -> vector<16x8xf32>
    %592 = arith.truncf %591 : vector<16x8xf32> to vector<16x8xbf16>
    %cst_401 = arith.constant dense<0.000000e+00> : vector<16x16xf32>
    %593 = tpu.matmul %592, %160, %cst_401 {dimension_numbers = #tpu.dot_dimension_numbers<[1], [0], [0], [1], [0, 0, 1, 1], [], []>} : vector<16x8xbf16>, vector<8x16xbf16>, vector<16x16xf32> -> vector<16x16xf32>
    %594 = arith.minimumf %588, %593 : vector<16x16xf32>
    %595 = arith.mulf %594, %28 : vector<16x16xf32>
    %596 = arith.addf %538, %595 : vector<16x16xf32>
    %cst_402 = arith.constant 1.000000e+00 : f32
    %597 = vector.broadcast %cst_402 : f32 to vector<16x16xf32>
    %598 = arith.subf %597, %28 : vector<16x16xf32>
    %599 = arith.mulf %594, %598 : vector<16x16xf32>
    %600 = arith.mulf %599, %8 : vector<16x16xf32>
    %cst_403 = arith.constant 0.000000e+00 : f32
    %601 = vector.broadcast %cst_403 : f32 to vector<16x16xf32>
    %602 = arith.cmpf one, %600, %601 : vector<16x16xf32>
    %cst_404 = arith.constant 0x7F800000 : f32
    %603 = vector.broadcast %cst_404 : f32 to vector<16x16xf32>
    %604 = arith.select %602, %600, %603 : vector<16x16xi1>, vector<16x16xf32>
    %605 = arith.minimumf %547, %604 : vector<16x16xf32>
    %c0_405 = arith.constant 0 : index
    %c4_406 = arith.constant 4 : index
    %c0_407 = arith.constant 0 : index
    %c0_408 = arith.constant 0 : index
    %606 = vector.load %arg6[%c0_405, %c4_406, %c0_407, %c0_408] : memref<1x48x8x8xbf16, #tpu.memory_space<vmem>>, vector<1x1x8x8xbf16>
    %607 = vector.shape_cast %606 : vector<1x1x8x8xbf16> to vector<8x8xbf16>
    %cst_409 = arith.constant dense<0.000000e+00> : vector<16x8xf32>
    %608 = tpu.matmul %159, %607, %cst_409 {dimension_numbers = #tpu.dot_dimension_numbers<[1], [0], [0], [1], [0, 0, 1, 1], [], []>} : vector<16x8xbf16>, vector<8x8xbf16>, vector<16x8xf32> -> vector<16x8xf32>
    %609 = arith.truncf %608 : vector<16x8xf32> to vector<16x8xbf16>
    %cst_410 = arith.constant dense<0.000000e+00> : vector<16x16xf32>
    %610 = tpu.matmul %609, %160, %cst_410 {dimension_numbers = #tpu.dot_dimension_numbers<[1], [0], [0], [1], [0, 0, 1, 1], [], []>} : vector<16x8xbf16>, vector<8x16xbf16>, vector<16x16xf32> -> vector<16x16xf32>
    %c0_411 = arith.constant 0 : index
    %c10_412 = arith.constant 10 : index
    %c0_413 = arith.constant 0 : index
    %c0_414 = arith.constant 0 : index
    %611 = vector.load %arg6[%c0_411, %c10_412, %c0_413, %c0_414] : memref<1x48x8x8xbf16, #tpu.memory_space<vmem>>, vector<1x1x8x8xbf16>
    %612 = vector.shape_cast %611 : vector<1x1x8x8xbf16> to vector<8x8xbf16>
    %cst_415 = arith.constant dense<0.000000e+00> : vector<16x8xf32>
    %613 = tpu.matmul %159, %612, %cst_415 {dimension_numbers = #tpu.dot_dimension_numbers<[1], [0], [0], [1], [0, 0, 1, 1], [], []>} : vector<16x8xbf16>, vector<8x8xbf16>, vector<16x8xf32> -> vector<16x8xf32>
    %614 = arith.truncf %613 : vector<16x8xf32> to vector<16x8xbf16>
    %cst_416 = arith.constant dense<0.000000e+00> : vector<16x16xf32>
    %615 = tpu.matmul %614, %160, %cst_416 {dimension_numbers = #tpu.dot_dimension_numbers<[1], [0], [0], [1], [0, 0, 1, 1], [], []>} : vector<16x8xbf16>, vector<8x16xbf16>, vector<16x16xf32> -> vector<16x16xf32>
    %616 = arith.minimumf %610, %615 : vector<16x16xf32>
    %c0_417 = arith.constant 0 : index
    %c16_418 = arith.constant 16 : index
    %c0_419 = arith.constant 0 : index
    %c0_420 = arith.constant 0 : index
    %617 = vector.load %arg6[%c0_417, %c16_418, %c0_419, %c0_420] : memref<1x48x8x8xbf16, #tpu.memory_space<vmem>>, vector<1x1x8x8xbf16>
    %618 = vector.shape_cast %617 : vector<1x1x8x8xbf16> to vector<8x8xbf16>
    %cst_421 = arith.constant dense<0.000000e+00> : vector<16x8xf32>
    %619 = tpu.matmul %159, %618, %cst_421 {dimension_numbers = #tpu.dot_dimension_numbers<[1], [0], [0], [1], [0, 0, 1, 1], [], []>} : vector<16x8xbf16>, vector<8x8xbf16>, vector<16x8xf32> -> vector<16x8xf32>
    %620 = arith.truncf %619 : vector<16x8xf32> to vector<16x8xbf16>
    %cst_422 = arith.constant dense<0.000000e+00> : vector<16x16xf32>
    %621 = tpu.matmul %620, %160, %cst_422 {dimension_numbers = #tpu.dot_dimension_numbers<[1], [0], [0], [1], [0, 0, 1, 1], [], []>} : vector<16x8xbf16>, vector<8x16xbf16>, vector<16x16xf32> -> vector<16x16xf32>
    %622 = arith.minimumf %616, %621 : vector<16x16xf32>
    %c0_423 = arith.constant 0 : index
    %c22_424 = arith.constant 22 : index
    %c0_425 = arith.constant 0 : index
    %c0_426 = arith.constant 0 : index
    %623 = vector.load %arg6[%c0_423, %c22_424, %c0_425, %c0_426] : memref<1x48x8x8xbf16, #tpu.memory_space<vmem>>, vector<1x1x8x8xbf16>
    %624 = vector.shape_cast %623 : vector<1x1x8x8xbf16> to vector<8x8xbf16>
    %cst_427 = arith.constant dense<0.000000e+00> : vector<16x8xf32>
    %625 = tpu.matmul %159, %624, %cst_427 {dimension_numbers = #tpu.dot_dimension_numbers<[1], [0], [0], [1], [0, 0, 1, 1], [], []>} : vector<16x8xbf16>, vector<8x8xbf16>, vector<16x8xf32> -> vector<16x8xf32>
    %626 = arith.truncf %625 : vector<16x8xf32> to vector<16x8xbf16>
    %cst_428 = arith.constant dense<0.000000e+00> : vector<16x16xf32>
    %627 = tpu.matmul %626, %160, %cst_428 {dimension_numbers = #tpu.dot_dimension_numbers<[1], [0], [0], [1], [0, 0, 1, 1], [], []>} : vector<16x8xbf16>, vector<8x16xbf16>, vector<16x16xf32> -> vector<16x16xf32>
    %628 = arith.minimumf %622, %627 : vector<16x16xf32>
    %c0_429 = arith.constant 0 : index
    %c28 = arith.constant 28 : index
    %c0_430 = arith.constant 0 : index
    %c0_431 = arith.constant 0 : index
    %629 = vector.load %arg6[%c0_429, %c28, %c0_430, %c0_431] : memref<1x48x8x8xbf16, #tpu.memory_space<vmem>>, vector<1x1x8x8xbf16>
    %630 = vector.shape_cast %629 : vector<1x1x8x8xbf16> to vector<8x8xbf16>
    %cst_432 = arith.constant dense<0.000000e+00> : vector<16x8xf32>
    %631 = tpu.matmul %159, %630, %cst_432 {dimension_numbers = #tpu.dot_dimension_numbers<[1], [0], [0], [1], [0, 0, 1, 1], [], []>} : vector<16x8xbf16>, vector<8x8xbf16>, vector<16x8xf32> -> vector<16x8xf32>
    %632 = arith.truncf %631 : vector<16x8xf32> to vector<16x8xbf16>
    %cst_433 = arith.constant dense<0.000000e+00> : vector<16x16xf32>
    %633 = tpu.matmul %632, %160, %cst_433 {dimension_numbers = #tpu.dot_dimension_numbers<[1], [0], [0], [1], [0, 0, 1, 1], [], []>} : vector<16x8xbf16>, vector<8x16xbf16>, vector<16x16xf32> -> vector<16x16xf32>
    %634 = arith.minimumf %628, %633 : vector<16x16xf32>
    %c0_434 = arith.constant 0 : index
    %c34 = arith.constant 34 : index
    %c0_435 = arith.constant 0 : index
    %c0_436 = arith.constant 0 : index
    %635 = vector.load %arg6[%c0_434, %c34, %c0_435, %c0_436] : memref<1x48x8x8xbf16, #tpu.memory_space<vmem>>, vector<1x1x8x8xbf16>
    %636 = vector.shape_cast %635 : vector<1x1x8x8xbf16> to vector<8x8xbf16>
    %cst_437 = arith.constant dense<0.000000e+00> : vector<16x8xf32>
    %637 = tpu.matmul %159, %636, %cst_437 {dimension_numbers = #tpu.dot_dimension_numbers<[1], [0], [0], [1], [0, 0, 1, 1], [], []>} : vector<16x8xbf16>, vector<8x8xbf16>, vector<16x8xf32> -> vector<16x8xf32>
    %638 = arith.truncf %637 : vector<16x8xf32> to vector<16x8xbf16>
    %cst_438 = arith.constant dense<0.000000e+00> : vector<16x16xf32>
    %639 = tpu.matmul %638, %160, %cst_438 {dimension_numbers = #tpu.dot_dimension_numbers<[1], [0], [0], [1], [0, 0, 1, 1], [], []>} : vector<16x8xbf16>, vector<8x16xbf16>, vector<16x16xf32> -> vector<16x16xf32>
    %640 = arith.minimumf %634, %639 : vector<16x16xf32>
    %c0_439 = arith.constant 0 : index
    %c40 = arith.constant 40 : index
    %c0_440 = arith.constant 0 : index
    %c0_441 = arith.constant 0 : index
    %641 = vector.load %arg6[%c0_439, %c40, %c0_440, %c0_441] : memref<1x48x8x8xbf16, #tpu.memory_space<vmem>>, vector<1x1x8x8xbf16>
    %642 = vector.shape_cast %641 : vector<1x1x8x8xbf16> to vector<8x8xbf16>
    %cst_442 = arith.constant dense<0.000000e+00> : vector<16x8xf32>
    %643 = tpu.matmul %159, %642, %cst_442 {dimension_numbers = #tpu.dot_dimension_numbers<[1], [0], [0], [1], [0, 0, 1, 1], [], []>} : vector<16x8xbf16>, vector<8x8xbf16>, vector<16x8xf32> -> vector<16x8xf32>
    %644 = arith.truncf %643 : vector<16x8xf32> to vector<16x8xbf16>
    %cst_443 = arith.constant dense<0.000000e+00> : vector<16x16xf32>
    %645 = tpu.matmul %644, %160, %cst_443 {dimension_numbers = #tpu.dot_dimension_numbers<[1], [0], [0], [1], [0, 0, 1, 1], [], []>} : vector<16x8xbf16>, vector<8x16xbf16>, vector<16x16xf32> -> vector<16x16xf32>
    %646 = arith.minimumf %640, %645 : vector<16x16xf32>
    %c0_444 = arith.constant 0 : index
    %c46 = arith.constant 46 : index
    %c0_445 = arith.constant 0 : index
    %c0_446 = arith.constant 0 : index
    %647 = vector.load %arg6[%c0_444, %c46, %c0_445, %c0_446] : memref<1x48x8x8xbf16, #tpu.memory_space<vmem>>, vector<1x1x8x8xbf16>
    %648 = vector.shape_cast %647 : vector<1x1x8x8xbf16> to vector<8x8xbf16>
    %cst_447 = arith.constant dense<0.000000e+00> : vector<16x8xf32>
    %649 = tpu.matmul %159, %648, %cst_447 {dimension_numbers = #tpu.dot_dimension_numbers<[1], [0], [0], [1], [0, 0, 1, 1], [], []>} : vector<16x8xbf16>, vector<8x8xbf16>, vector<16x8xf32> -> vector<16x8xf32>
    %650 = arith.truncf %649 : vector<16x8xf32> to vector<16x8xbf16>
    %cst_448 = arith.constant dense<0.000000e+00> : vector<16x16xf32>
    %651 = tpu.matmul %650, %160, %cst_448 {dimension_numbers = #tpu.dot_dimension_numbers<[1], [0], [0], [1], [0, 0, 1, 1], [], []>} : vector<16x8xbf16>, vector<8x16xbf16>, vector<16x16xf32> -> vector<16x16xf32>
    %652 = arith.minimumf %646, %651 : vector<16x16xf32>
    %653 = arith.mulf %652, %33 : vector<16x16xf32>
    %654 = arith.addf %596, %653 : vector<16x16xf32>
    %cst_449 = arith.constant 1.000000e+00 : f32
    %655 = vector.broadcast %cst_449 : f32 to vector<16x16xf32>
    %656 = arith.subf %655, %33 : vector<16x16xf32>
    %657 = arith.mulf %652, %656 : vector<16x16xf32>
    %658 = arith.mulf %657, %8 : vector<16x16xf32>
    %cst_450 = arith.constant 0.000000e+00 : f32
    %659 = vector.broadcast %cst_450 : f32 to vector<16x16xf32>
    %660 = arith.cmpf one, %658, %659 : vector<16x16xf32>
    %cst_451 = arith.constant 0x7F800000 : f32
    %661 = vector.broadcast %cst_451 : f32 to vector<16x16xf32>
    %662 = arith.select %660, %658, %661 : vector<16x16xi1>, vector<16x16xf32>
    %663 = arith.minimumf %605, %662 : vector<16x16xf32>
    %c0_452 = arith.constant 0 : index
    %c5_453 = arith.constant 5 : index
    %c0_454 = arith.constant 0 : index
    %c0_455 = arith.constant 0 : index
    %664 = vector.load %arg6[%c0_452, %c5_453, %c0_454, %c0_455] : memref<1x48x8x8xbf16, #tpu.memory_space<vmem>>, vector<1x1x8x8xbf16>
    %665 = vector.shape_cast %664 : vector<1x1x8x8xbf16> to vector<8x8xbf16>
    %cst_456 = arith.constant dense<0.000000e+00> : vector<16x8xf32>
    %666 = tpu.matmul %159, %665, %cst_456 {dimension_numbers = #tpu.dot_dimension_numbers<[1], [0], [0], [1], [0, 0, 1, 1], [], []>} : vector<16x8xbf16>, vector<8x8xbf16>, vector<16x8xf32> -> vector<16x8xf32>
    %667 = arith.truncf %666 : vector<16x8xf32> to vector<16x8xbf16>
    %cst_457 = arith.constant dense<0.000000e+00> : vector<16x16xf32>
    %668 = tpu.matmul %667, %160, %cst_457 {dimension_numbers = #tpu.dot_dimension_numbers<[1], [0], [0], [1], [0, 0, 1, 1], [], []>} : vector<16x8xbf16>, vector<8x16xbf16>, vector<16x16xf32> -> vector<16x16xf32>
    %c0_458 = arith.constant 0 : index
    %c11_459 = arith.constant 11 : index
    %c0_460 = arith.constant 0 : index
    %c0_461 = arith.constant 0 : index
    %669 = vector.load %arg6[%c0_458, %c11_459, %c0_460, %c0_461] : memref<1x48x8x8xbf16, #tpu.memory_space<vmem>>, vector<1x1x8x8xbf16>
    %670 = vector.shape_cast %669 : vector<1x1x8x8xbf16> to vector<8x8xbf16>
    %cst_462 = arith.constant dense<0.000000e+00> : vector<16x8xf32>
    %671 = tpu.matmul %159, %670, %cst_462 {dimension_numbers = #tpu.dot_dimension_numbers<[1], [0], [0], [1], [0, 0, 1, 1], [], []>} : vector<16x8xbf16>, vector<8x8xbf16>, vector<16x8xf32> -> vector<16x8xf32>
    %672 = arith.truncf %671 : vector<16x8xf32> to vector<16x8xbf16>
    %cst_463 = arith.constant dense<0.000000e+00> : vector<16x16xf32>
    %673 = tpu.matmul %672, %160, %cst_463 {dimension_numbers = #tpu.dot_dimension_numbers<[1], [0], [0], [1], [0, 0, 1, 1], [], []>} : vector<16x8xbf16>, vector<8x16xbf16>, vector<16x16xf32> -> vector<16x16xf32>
    %674 = arith.minimumf %668, %673 : vector<16x16xf32>
    %c0_464 = arith.constant 0 : index
    %c17_465 = arith.constant 17 : index
    %c0_466 = arith.constant 0 : index
    %c0_467 = arith.constant 0 : index
    %675 = vector.load %arg6[%c0_464, %c17_465, %c0_466, %c0_467] : memref<1x48x8x8xbf16, #tpu.memory_space<vmem>>, vector<1x1x8x8xbf16>
    %676 = vector.shape_cast %675 : vector<1x1x8x8xbf16> to vector<8x8xbf16>
    %cst_468 = arith.constant dense<0.000000e+00> : vector<16x8xf32>
    %677 = tpu.matmul %159, %676, %cst_468 {dimension_numbers = #tpu.dot_dimension_numbers<[1], [0], [0], [1], [0, 0, 1, 1], [], []>} : vector<16x8xbf16>, vector<8x8xbf16>, vector<16x8xf32> -> vector<16x8xf32>
    %678 = arith.truncf %677 : vector<16x8xf32> to vector<16x8xbf16>
    %cst_469 = arith.constant dense<0.000000e+00> : vector<16x16xf32>
    %679 = tpu.matmul %678, %160, %cst_469 {dimension_numbers = #tpu.dot_dimension_numbers<[1], [0], [0], [1], [0, 0, 1, 1], [], []>} : vector<16x8xbf16>, vector<8x16xbf16>, vector<16x16xf32> -> vector<16x16xf32>
    %680 = arith.minimumf %674, %679 : vector<16x16xf32>
    %c0_470 = arith.constant 0 : index
    %c23 = arith.constant 23 : index
    %c0_471 = arith.constant 0 : index
    %c0_472 = arith.constant 0 : index
    %681 = vector.load %arg6[%c0_470, %c23, %c0_471, %c0_472] : memref<1x48x8x8xbf16, #tpu.memory_space<vmem>>, vector<1x1x8x8xbf16>
    %682 = vector.shape_cast %681 : vector<1x1x8x8xbf16> to vector<8x8xbf16>
    %cst_473 = arith.constant dense<0.000000e+00> : vector<16x8xf32>
    %683 = tpu.matmul %159, %682, %cst_473 {dimension_numbers = #tpu.dot_dimension_numbers<[1], [0], [0], [1], [0, 0, 1, 1], [], []>} : vector<16x8xbf16>, vector<8x8xbf16>, vector<16x8xf32> -> vector<16x8xf32>
    %684 = arith.truncf %683 : vector<16x8xf32> to vector<16x8xbf16>
    %cst_474 = arith.constant dense<0.000000e+00> : vector<16x16xf32>
    %685 = tpu.matmul %684, %160, %cst_474 {dimension_numbers = #tpu.dot_dimension_numbers<[1], [0], [0], [1], [0, 0, 1, 1], [], []>} : vector<16x8xbf16>, vector<8x16xbf16>, vector<16x16xf32> -> vector<16x16xf32>
    %686 = arith.minimumf %680, %685 : vector<16x16xf32>
    %c0_475 = arith.constant 0 : index
    %c29 = arith.constant 29 : index
    %c0_476 = arith.constant 0 : index
    %c0_477 = arith.constant 0 : index
    %687 = vector.load %arg6[%c0_475, %c29, %c0_476, %c0_477] : memref<1x48x8x8xbf16, #tpu.memory_space<vmem>>, vector<1x1x8x8xbf16>
    %688 = vector.shape_cast %687 : vector<1x1x8x8xbf16> to vector<8x8xbf16>
    %cst_478 = arith.constant dense<0.000000e+00> : vector<16x8xf32>
    %689 = tpu.matmul %159, %688, %cst_478 {dimension_numbers = #tpu.dot_dimension_numbers<[1], [0], [0], [1], [0, 0, 1, 1], [], []>} : vector<16x8xbf16>, vector<8x8xbf16>, vector<16x8xf32> -> vector<16x8xf32>
    %690 = arith.truncf %689 : vector<16x8xf32> to vector<16x8xbf16>
    %cst_479 = arith.constant dense<0.000000e+00> : vector<16x16xf32>
    %691 = tpu.matmul %690, %160, %cst_479 {dimension_numbers = #tpu.dot_dimension_numbers<[1], [0], [0], [1], [0, 0, 1, 1], [], []>} : vector<16x8xbf16>, vector<8x16xbf16>, vector<16x16xf32> -> vector<16x16xf32>
    %692 = arith.minimumf %686, %691 : vector<16x16xf32>
    %c0_480 = arith.constant 0 : index
    %c35 = arith.constant 35 : index
    %c0_481 = arith.constant 0 : index
    %c0_482 = arith.constant 0 : index
    %693 = vector.load %arg6[%c0_480, %c35, %c0_481, %c0_482] : memref<1x48x8x8xbf16, #tpu.memory_space<vmem>>, vector<1x1x8x8xbf16>
    %694 = vector.shape_cast %693 : vector<1x1x8x8xbf16> to vector<8x8xbf16>
    %cst_483 = arith.constant dense<0.000000e+00> : vector<16x8xf32>
    %695 = tpu.matmul %159, %694, %cst_483 {dimension_numbers = #tpu.dot_dimension_numbers<[1], [0], [0], [1], [0, 0, 1, 1], [], []>} : vector<16x8xbf16>, vector<8x8xbf16>, vector<16x8xf32> -> vector<16x8xf32>
    %696 = arith.truncf %695 : vector<16x8xf32> to vector<16x8xbf16>
    %cst_484 = arith.constant dense<0.000000e+00> : vector<16x16xf32>
    %697 = tpu.matmul %696, %160, %cst_484 {dimension_numbers = #tpu.dot_dimension_numbers<[1], [0], [0], [1], [0, 0, 1, 1], [], []>} : vector<16x8xbf16>, vector<8x16xbf16>, vector<16x16xf32> -> vector<16x16xf32>
    %698 = arith.minimumf %692, %697 : vector<16x16xf32>
    %c0_485 = arith.constant 0 : index
    %c41 = arith.constant 41 : index
    %c0_486 = arith.constant 0 : index
    %c0_487 = arith.constant 0 : index
    %699 = vector.load %arg6[%c0_485, %c41, %c0_486, %c0_487] : memref<1x48x8x8xbf16, #tpu.memory_space<vmem>>, vector<1x1x8x8xbf16>
    %700 = vector.shape_cast %699 : vector<1x1x8x8xbf16> to vector<8x8xbf16>
    %cst_488 = arith.constant dense<0.000000e+00> : vector<16x8xf32>
    %701 = tpu.matmul %159, %700, %cst_488 {dimension_numbers = #tpu.dot_dimension_numbers<[1], [0], [0], [1], [0, 0, 1, 1], [], []>} : vector<16x8xbf16>, vector<8x8xbf16>, vector<16x8xf32> -> vector<16x8xf32>
    %702 = arith.truncf %701 : vector<16x8xf32> to vector<16x8xbf16>
    %cst_489 = arith.constant dense<0.000000e+00> : vector<16x16xf32>
    %703 = tpu.matmul %702, %160, %cst_489 {dimension_numbers = #tpu.dot_dimension_numbers<[1], [0], [0], [1], [0, 0, 1, 1], [], []>} : vector<16x8xbf16>, vector<8x16xbf16>, vector<16x16xf32> -> vector<16x16xf32>
    %704 = arith.minimumf %698, %703 : vector<16x16xf32>
    %c0_490 = arith.constant 0 : index
    %c47 = arith.constant 47 : index
    %c0_491 = arith.constant 0 : index
    %c0_492 = arith.constant 0 : index
    %705 = vector.load %arg6[%c0_490, %c47, %c0_491, %c0_492] : memref<1x48x8x8xbf16, #tpu.memory_space<vmem>>, vector<1x1x8x8xbf16>
    %706 = vector.shape_cast %705 : vector<1x1x8x8xbf16> to vector<8x8xbf16>
    %cst_493 = arith.constant dense<0.000000e+00> : vector<16x8xf32>
    %707 = tpu.matmul %159, %706, %cst_493 {dimension_numbers = #tpu.dot_dimension_numbers<[1], [0], [0], [1], [0, 0, 1, 1], [], []>} : vector<16x8xbf16>, vector<8x8xbf16>, vector<16x8xf32> -> vector<16x8xf32>
    %708 = arith.truncf %707 : vector<16x8xf32> to vector<16x8xbf16>
    %cst_494 = arith.constant dense<0.000000e+00> : vector<16x16xf32>
    %709 = tpu.matmul %708, %160, %cst_494 {dimension_numbers = #tpu.dot_dimension_numbers<[1], [0], [0], [1], [0, 0, 1, 1], [], []>} : vector<16x8xbf16>, vector<8x16xbf16>, vector<16x16xf32> -> vector<16x16xf32>
    %710 = arith.minimumf %704, %709 : vector<16x16xf32>
    %711 = arith.mulf %710, %38 : vector<16x16xf32>
    %712 = arith.addf %654, %711 : vector<16x16xf32>
    %cst_495 = arith.constant 1.000000e+00 : f32
    %713 = vector.broadcast %cst_495 : f32 to vector<16x16xf32>
    %714 = arith.subf %713, %38 : vector<16x16xf32>
    %715 = arith.mulf %710, %714 : vector<16x16xf32>
    %716 = arith.mulf %715, %8 : vector<16x16xf32>
    %cst_496 = arith.constant 0.000000e+00 : f32
    %717 = vector.broadcast %cst_496 : f32 to vector<16x16xf32>
    %718 = arith.cmpf one, %716, %717 : vector<16x16xf32>
    %cst_497 = arith.constant 0x7F800000 : f32
    %719 = vector.broadcast %cst_497 : f32 to vector<16x16xf32>
    %720 = arith.select %718, %716, %719 : vector<16x16xi1>, vector<16x16xf32>
    %721 = arith.minimumf %663, %720 : vector<16x16xf32>
    %c3_498 = arith.constant 3 : index
    %c0_499 = arith.constant 0 : index
    %c0_500 = arith.constant 0 : index
    %722 = vector.load %arg10[%c3_498, %c0_499, %c0_500] : memref<23x1x16xf32, #tpu.memory_space<vmem>>, vector<1x1x16xf32>
    %723 = vector.shape_cast %722 : vector<1x1x16xf32> to vector<1x16xf32>
    %cst_501 = arith.constant dense<0.000000e+00> : vector<16xf32>
    %724 = vector.multi_reduction <add>, %712, %cst_501 [0] : vector<16x16xf32> to vector<16xf32>
    %725 = vector.shape_cast %724 : vector<16xf32> to vector<1x16xf32>
    %726 = arith.addf %723, %725 : vector<1x16xf32>
    %c3_502 = arith.constant 3 : index
    %c0_503 = arith.constant 0 : index
    %c0_504 = arith.constant 0 : index
    %727 = vector.load %arg10[%c3_502, %c0_503, %c0_504] : memref<23x1x16xf32, #tpu.memory_space<vmem>>, vector<1x1x16xf32>
    %728 = vector.shape_cast %727 : vector<1x1x16xf32> to vector<1x16xf32>
    %729 = vector.shape_cast %726 : vector<1x16xf32> to vector<1x1x16xf32>
    tpu.vector_store %arg10[%c3_502, %c0_503, %c0_504], %729 {strides = array<i32>} : memref<23x1x16xf32, #tpu.memory_space<vmem>>, vector<1x1x16xf32>,
    %c4_505 = arith.constant 4 : index
    %c0_506 = arith.constant 0 : index
    %c0_507 = arith.constant 0 : index
    %730 = vector.load %arg10[%c4_505, %c0_506, %c0_507] : memref<23x1x16xf32, #tpu.memory_space<vmem>>, vector<1x1x16xf32>
    %731 = vector.shape_cast %730 : vector<1x1x16xf32> to vector<1x16xf32>
    %cst_508 = arith.constant dense<0x7F800000> : vector<16xf32>
    %732 = vector.multi_reduction <minimumf>, %721, %cst_508 [0] : vector<16x16xf32> to vector<16xf32>
    %733 = vector.shape_cast %732 : vector<16xf32> to vector<1x16xf32>
    %734 = arith.minimumf %731, %733 : vector<1x16xf32>
    %c4_509 = arith.constant 4 : index
    %c0_510 = arith.constant 0 : index
    %c0_511 = arith.constant 0 : index
    %735 = vector.load %arg10[%c4_509, %c0_510, %c0_511] : memref<23x1x16xf32, #tpu.memory_space<vmem>>, vector<1x1x16xf32>
    %736 = vector.shape_cast %735 : vector<1x1x16xf32> to vector<1x16xf32>
    %737 = vector.shape_cast %734 : vector<1x16xf32> to vector<1x1x16xf32>
    tpu.vector_store %arg10[%c4_509, %c0_510, %c0_511], %737 {strides = array<i32>} : memref<23x1x16xf32, #tpu.memory_space<vmem>>, vector<1x1x16xf32>,
    %c0_i32_512 = arith.constant 0 : i32
    %738 = arith.cmpi eq, %arg1, %c0_i32_512 : i32
    %739 = arith.extui %738 : i1 to i32
    %c0_i32_513 = arith.constant 0 : i32
    %740 = arith.cmpi ne, %739, %c0_i32_513 : i32
    scf.if %740 {
      %c0_514 = arith.constant 0 : index
      %c0_515 = arith.constant 0 : index
      %c0_516 = arith.constant 0 : index
      %741 = vector.load %arg10[%c0_514, %c0_515, %c0_516] : memref<23x1x16xf32, #tpu.memory_space<vmem>>, vector<1x1x16xf32>
      %742 = vector.shape_cast %741 : vector<1x1x16xf32> to vector<1x16xf32>
      %cst_517 = arith.constant dense<0.000000e+00> : vector<1xf32>
      %743 = vector.multi_reduction <add>, %742, %cst_517 [1] : vector<1x16xf32> to vector<1xf32>
      %744 = vector.shape_cast %743 : vector<1xf32> to vector<1x1xf32>
      %c0_518 = arith.constant 0 : index
      %c0_519 = arith.constant 0 : index
      %c0_520 = arith.constant 0 : index
      %c0_521 = arith.constant 0 : index
      %745 = vector.load %arg9[%c0_518, %c0_519, %c0_520, %c0_521] : memref<1x23x1x1xf32, #tpu.memory_space<vmem>>, vector<1x1x1x1xf32>
      %746 = vector.shape_cast %745 : vector<1x1x1x1xf32> to vector<1x1xf32>
      %747 = vector.shape_cast %744 : vector<1x1xf32> to vector<1x1x1x1xf32>
      tpu.vector_store %arg9[%c0_518, %c0_519, %c0_520, %c0_521], %747 {strides = array<i32>} : memref<1x23x1x1xf32, #tpu.memory_space<vmem>>, vector<1x1x1x1xf32>,
      %c1_522 = arith.constant 1 : index
      %c0_523 = arith.constant 0 : index
      %c0_524 = arith.constant 0 : index
      %748 = vector.load %arg10[%c1_522, %c0_523, %c0_524] : memref<23x1x16xf32, #tpu.memory_space<vmem>>, vector<1x1x16xf32>
      %749 = vector.shape_cast %748 : vector<1x1x16xf32> to vector<1x16xf32>
      %cst_525 = arith.constant dense<0.000000e+00> : vector<1xf32>
      %750 = vector.multi_reduction <add>, %749, %cst_525 [1] : vector<1x16xf32> to vector<1xf32>
      %751 = vector.shape_cast %750 : vector<1xf32> to vector<1x1xf32>
      %c0_526 = arith.constant 0 : index
      %c1_527 = arith.constant 1 : index
      %c0_528 = arith.constant 0 : index
      %c0_529 = arith.constant 0 : index
      %752 = vector.load %arg9[%c0_526, %c1_527, %c0_528, %c0_529] : memref<1x23x1x1xf32, #tpu.memory_space<vmem>>, vector<1x1x1x1xf32>
      %753 = vector.shape_cast %752 : vector<1x1x1x1xf32> to vector<1x1xf32>
      %754 = vector.shape_cast %751 : vector<1x1xf32> to vector<1x1x1x1xf32>
      tpu.vector_store %arg9[%c0_526, %c1_527, %c0_528, %c0_529], %754 {strides = array<i32>} : memref<1x23x1x1xf32, #tpu.memory_space<vmem>>, vector<1x1x1x1xf32>,
      %c2_530 = arith.constant 2 : index
      %c0_531 = arith.constant 0 : index
      %c0_532 = arith.constant 0 : index
      %755 = vector.load %arg10[%c2_530, %c0_531, %c0_532] : memref<23x1x16xf32, #tpu.memory_space<vmem>>, vector<1x1x16xf32>
      %756 = vector.shape_cast %755 : vector<1x1x16xf32> to vector<1x16xf32>
      %cst_533 = arith.constant dense<0.000000e+00> : vector<1xf32>
      %757 = vector.multi_reduction <add>, %756, %cst_533 [1] : vector<1x16xf32> to vector<1xf32>
      %758 = vector.shape_cast %757 : vector<1xf32> to vector<1x1xf32>
      %c0_534 = arith.constant 0 : index
      %c2_535 = arith.constant 2 : index
      %c0_536 = arith.constant 0 : index
      %c0_537 = arith.constant 0 : index
      %759 = vector.load %arg9[%c0_534, %c2_535, %c0_536, %c0_537] : memref<1x23x1x1xf32, #tpu.memory_space<vmem>>, vector<1x1x1x1xf32>
      %760 = vector.shape_cast %759 : vector<1x1x1x1xf32> to vector<1x1xf32>
      %761 = vector.shape_cast %758 : vector<1x1xf32> to vector<1x1x1x1xf32>
      tpu.vector_store %arg9[%c0_534, %c2_535, %c0_536, %c0_537], %761 {strides = array<i32>} : memref<1x23x1x1xf32, #tpu.memory_space<vmem>>, vector<1x1x1x1xf32>,
      %c3_538 = arith.constant 3 : index
      %c0_539 = arith.constant 0 : index
      %c0_540 = arith.constant 0 : index
      %762 = vector.load %arg10[%c3_538, %c0_539, %c0_540] : memref<23x1x16xf32, #tpu.memory_space<vmem>>, vector<1x1x16xf32>
      %763 = vector.shape_cast %762 : vector<1x1x16xf32> to vector<1x16xf32>
      %cst_541 = arith.constant dense<0.000000e+00> : vector<1xf32>
      %764 = vector.multi_reduction <add>, %763, %cst_541 [1] : vector<1x16xf32> to vector<1xf32>
      %765 = vector.shape_cast %764 : vector<1xf32> to vector<1x1xf32>
      %c0_542 = arith.constant 0 : index
      %c3_543 = arith.constant 3 : index
      %c0_544 = arith.constant 0 : index
      %c0_545 = arith.constant 0 : index
      %766 = vector.load %arg9[%c0_542, %c3_543, %c0_544, %c0_545] : memref<1x23x1x1xf32, #tpu.memory_space<vmem>>, vector<1x1x1x1xf32>
      %767 = vector.shape_cast %766 : vector<1x1x1x1xf32> to vector<1x1xf32>
      %768 = vector.shape_cast %765 : vector<1x1xf32> to vector<1x1x1x1xf32>
      tpu.vector_store %arg9[%c0_542, %c3_543, %c0_544, %c0_545], %768 {strides = array<i32>} : memref<1x23x1x1xf32, #tpu.memory_space<vmem>>, vector<1x1x1x1xf32>,
      %c4_546 = arith.constant 4 : index
      %c0_547 = arith.constant 0 : index
      %c0_548 = arith.constant 0 : index
      %769 = vector.load %arg10[%c4_546, %c0_547, %c0_548] : memref<23x1x16xf32, #tpu.memory_space<vmem>>, vector<1x1x16xf32>
      %770 = vector.shape_cast %769 : vector<1x1x16xf32> to vector<1x16xf32>
      %cst_549 = arith.constant dense<0x7F800000> : vector<1xf32>
      %771 = vector.multi_reduction <minimumf>, %770, %cst_549 [1] : vector<1x16xf32> to vector<1xf32>
      %772 = vector.shape_cast %771 : vector<1xf32> to vector<1x1xf32>
      %c0_550 = arith.constant 0 : index
      %c4_551 = arith.constant 4 : index
      %c0_552 = arith.constant 0 : index
      %c0_553 = arith.constant 0 : index
      %773 = vector.load %arg9[%c0_550, %c4_551, %c0_552, %c0_553] : memref<1x23x1x1xf32, #tpu.memory_space<vmem>>, vector<1x1x1x1xf32>
      %774 = vector.shape_cast %773 : vector<1x1x1x1xf32> to vector<1x1xf32>
      %775 = vector.shape_cast %772 : vector<1x1xf32> to vector<1x1x1x1xf32>
      tpu.vector_store %arg9[%c0_550, %c4_551, %c0_552, %c0_553], %775 {strides = array<i32>} : memref<1x23x1x1xf32, #tpu.memory_space<vmem>>, vector<1x1x1x1xf32>,
      %c5_554 = arith.constant 5 : index
      %c0_555 = arith.constant 0 : index
      %c0_556 = arith.constant 0 : index
      %776 = vector.load %arg10[%c5_554, %c0_555, %c0_556] : memref<23x1x16xf32, #tpu.memory_space<vmem>>, vector<1x1x16xf32>
      %777 = vector.shape_cast %776 : vector<1x1x16xf32> to vector<1x16xf32>
      %cst_557 = arith.constant dense<0.000000e+00> : vector<1xf32>
      %778 = vector.multi_reduction <add>, %777, %cst_557 [1] : vector<1x16xf32> to vector<1xf32>
      %779 = vector.shape_cast %778 : vector<1xf32> to vector<1x1xf32>
      %c0_558 = arith.constant 0 : index
      %c5_559 = arith.constant 5 : index
      %c0_560 = arith.constant 0 : index
      %c0_561 = arith.constant 0 : index
      %780 = vector.load %arg9[%c0_558, %c5_559, %c0_560, %c0_561] : memref<1x23x1x1xf32, #tpu.memory_space<vmem>>, vector<1x1x1x1xf32>
      %781 = vector.shape_cast %780 : vector<1x1x1x1xf32> to vector<1x1xf32>
      %782 = vector.shape_cast %779 : vector<1x1xf32> to vector<1x1x1x1xf32>
      tpu.vector_store %arg9[%c0_558, %c5_559, %c0_560, %c0_561], %782 {strides = array<i32>} : memref<1x23x1x1xf32, #tpu.memory_space<vmem>>, vector<1x1x1x1xf32>,
      %c6_562 = arith.constant 6 : index
      %c0_563 = arith.constant 0 : index
      %c0_564 = arith.constant 0 : index
      %783 = vector.load %arg10[%c6_562, %c0_563, %c0_564] : memref<23x1x16xf32, #tpu.memory_space<vmem>>, vector<1x1x16xf32>
      %784 = vector.shape_cast %783 : vector<1x1x16xf32> to vector<1x16xf32>
      %cst_565 = arith.constant dense<0.000000e+00> : vector<1xf32>
      %785 = vector.multi_reduction <add>, %784, %cst_565 [1] : vector<1x16xf32> to vector<1xf32>
      %786 = vector.shape_cast %785 : vector<1xf32> to vector<1x1xf32>
      %c0_566 = arith.constant 0 : index
      %c6_567 = arith.constant 6 : index
      %c0_568 = arith.constant 0 : index
      %c0_569 = arith.constant 0 : index
      %787 = vector.load %arg9[%c0_566, %c6_567, %c0_568, %c0_569] : memref<1x23x1x1xf32, #tpu.memory_space<vmem>>, vector<1x1x1x1xf32>
      %788 = vector.shape_cast %787 : vector<1x1x1x1xf32> to vector<1x1xf32>
      %789 = vector.shape_cast %786 : vector<1x1xf32> to vector<1x1x1x1xf32>
      tpu.vector_store %arg9[%c0_566, %c6_567, %c0_568, %c0_569], %789 {strides = array<i32>} : memref<1x23x1x1xf32, #tpu.memory_space<vmem>>, vector<1x1x1x1xf32>,
      %c7_570 = arith.constant 7 : index
      %c0_571 = arith.constant 0 : index
      %c0_572 = arith.constant 0 : index
      %790 = vector.load %arg10[%c7_570, %c0_571, %c0_572] : memref<23x1x16xf32, #tpu.memory_space<vmem>>, vector<1x1x16xf32>
      %791 = vector.shape_cast %790 : vector<1x1x16xf32> to vector<1x16xf32>
      %cst_573 = arith.constant dense<0.000000e+00> : vector<1xf32>
      %792 = vector.multi_reduction <add>, %791, %cst_573 [1] : vector<1x16xf32> to vector<1xf32>
      %793 = vector.shape_cast %792 : vector<1xf32> to vector<1x1xf32>
      %c0_574 = arith.constant 0 : index
      %c7_575 = arith.constant 7 : index
      %c0_576 = arith.constant 0 : index
      %c0_577 = arith.constant 0 : index
      %794 = vector.load %arg9[%c0_574, %c7_575, %c0_576, %c0_577] : memref<1x23x1x1xf32, #tpu.memory_space<vmem>>, vector<1x1x1x1xf32>
      %795 = vector.shape_cast %794 : vector<1x1x1x1xf32> to vector<1x1xf32>
      %796 = vector.shape_cast %793 : vector<1x1xf32> to vector<1x1x1x1xf32>
      tpu.vector_store %arg9[%c0_574, %c7_575, %c0_576, %c0_577], %796 {strides = array<i32>} : memref<1x23x1x1xf32, #tpu.memory_space<vmem>>, vector<1x1x1x1xf32>,
      %c8_578 = arith.constant 8 : index
      %c0_579 = arith.constant 0 : index
      %c0_580 = arith.constant 0 : index
      %797 = vector.load %arg10[%c8_578, %c0_579, %c0_580] : memref<23x1x16xf32, #tpu.memory_space<vmem>>, vector<1x1x16xf32>
      %798 = vector.shape_cast %797 : vector<1x1x16xf32> to vector<1x16xf32>
      %cst_581 = arith.constant dense<0.000000e+00> : vector<1xf32>
      %799 = vector.multi_reduction <add>, %798, %cst_581 [1] : vector<1x16xf32> to vector<1xf32>
      %800 = vector.shape_cast %799 : vector<1xf32> to vector<1x1xf32>
      %c0_582 = arith.constant 0 : index
      %c8_583 = arith.constant 8 : index
      %c0_584 = arith.constant 0 : index
      %c0_585 = arith.constant 0 : index
      %801 = vector.load %arg9[%c0_582, %c8_583, %c0_584, %c0_585] : memref<1x23x1x1xf32, #tpu.memory_space<vmem>>, vector<1x1x1x1xf32>
      %802 = vector.shape_cast %801 : vector<1x1x1x1xf32> to vector<1x1xf32>
      %803 = vector.shape_cast %800 : vector<1x1xf32> to vector<1x1x1x1xf32>
      tpu.vector_store %arg9[%c0_582, %c8_583, %c0_584, %c0_585], %803 {strides = array<i32>} : memref<1x23x1x1xf32, #tpu.memory_space<vmem>>, vector<1x1x1x1xf32>,
      %c9_586 = arith.constant 9 : index
      %c0_587 = arith.constant 0 : index
      %c0_588 = arith.constant 0 : index
      %804 = vector.load %arg10[%c9_586, %c0_587, %c0_588] : memref<23x1x16xf32, #tpu.memory_space<vmem>>, vector<1x1x16xf32>
      %805 = vector.shape_cast %804 : vector<1x1x16xf32> to vector<1x16xf32>
      %cst_589 = arith.constant dense<0.000000e+00> : vector<1xf32>
      %806 = vector.multi_reduction <add>, %805, %cst_589 [1] : vector<1x16xf32> to vector<1xf32>
      %807 = vector.shape_cast %806 : vector<1xf32> to vector<1x1xf32>
      %c0_590 = arith.constant 0 : index
      %c9_591 = arith.constant 9 : index
      %c0_592 = arith.constant 0 : index
      %c0_593 = arith.constant 0 : index
      %808 = vector.load %arg9[%c0_590, %c9_591, %c0_592, %c0_593] : memref<1x23x1x1xf32, #tpu.memory_space<vmem>>, vector<1x1x1x1xf32>
      %809 = vector.shape_cast %808 : vector<1x1x1x1xf32> to vector<1x1xf32>
      %810 = vector.shape_cast %807 : vector<1x1xf32> to vector<1x1x1x1xf32>
      tpu.vector_store %arg9[%c0_590, %c9_591, %c0_592, %c0_593], %810 {strides = array<i32>} : memref<1x23x1x1xf32, #tpu.memory_space<vmem>>, vector<1x1x1x1xf32>,
      %c10_594 = arith.constant 10 : index
      %c0_595 = arith.constant 0 : index
      %c0_596 = arith.constant 0 : index
      %811 = vector.load %arg10[%c10_594, %c0_595, %c0_596] : memref<23x1x16xf32, #tpu.memory_space<vmem>>, vector<1x1x16xf32>
      %812 = vector.shape_cast %811 : vector<1x1x16xf32> to vector<1x16xf32>
      %cst_597 = arith.constant dense<0.000000e+00> : vector<1xf32>
      %813 = vector.multi_reduction <add>, %812, %cst_597 [1] : vector<1x16xf32> to vector<1xf32>
      %814 = vector.shape_cast %813 : vector<1xf32> to vector<1x1xf32>
      %c0_598 = arith.constant 0 : index
      %c10_599 = arith.constant 10 : index
      %c0_600 = arith.constant 0 : index
      %c0_601 = arith.constant 0 : index
      %815 = vector.load %arg9[%c0_598, %c10_599, %c0_600, %c0_601] : memref<1x23x1x1xf32, #tpu.memory_space<vmem>>, vector<1x1x1x1xf32>
      %816 = vector.shape_cast %815 : vector<1x1x1x1xf32> to vector<1x1xf32>
      %817 = vector.shape_cast %814 : vector<1x1xf32> to vector<1x1x1x1xf32>
      tpu.vector_store %arg9[%c0_598, %c10_599, %c0_600, %c0_601], %817 {strides = array<i32>} : memref<1x23x1x1xf32, #tpu.memory_space<vmem>>, vector<1x1x1x1xf32>,
      %c11_602 = arith.constant 11 : index
      %c0_603 = arith.constant 0 : index
      %c0_604 = arith.constant 0 : index
      %818 = vector.load %arg10[%c11_602, %c0_603, %c0_604] : memref<23x1x16xf32, #tpu.memory_space<vmem>>, vector<1x1x16xf32>
      %819 = vector.shape_cast %818 : vector<1x1x16xf32> to vector<1x16xf32>
      %cst_605 = arith.constant dense<0.000000e+00> : vector<1xf32>
      %820 = vector.multi_reduction <add>, %819, %cst_605 [1] : vector<1x16xf32> to vector<1xf32>
      %821 = vector.shape_cast %820 : vector<1xf32> to vector<1x1xf32>
      %c0_606 = arith.constant 0 : index
      %c11_607 = arith.constant 11 : index
      %c0_608 = arith.constant 0 : index
      %c0_609 = arith.constant 0 : index
      %822 = vector.load %arg9[%c0_606, %c11_607, %c0_608, %c0_609] : memref<1x23x1x1xf32, #tpu.memory_space<vmem>>, vector<1x1x1x1xf32>
      %823 = vector.shape_cast %822 : vector<1x1x1x1xf32> to vector<1x1xf32>
      %824 = vector.shape_cast %821 : vector<1x1xf32> to vector<1x1x1x1xf32>
      tpu.vector_store %arg9[%c0_606, %c11_607, %c0_608, %c0_609], %824 {strides = array<i32>} : memref<1x23x1x1xf32, #tpu.memory_space<vmem>>, vector<1x1x1x1xf32>,
      %c12_610 = arith.constant 12 : index
      %c0_611 = arith.constant 0 : index
      %c0_612 = arith.constant 0 : index
      %825 = vector.load %arg10[%c12_610, %c0_611, %c0_612] : memref<23x1x16xf32, #tpu.memory_space<vmem>>, vector<1x1x16xf32>
      %826 = vector.shape_cast %825 : vector<1x1x16xf32> to vector<1x16xf32>
      %cst_613 = arith.constant dense<0.000000e+00> : vector<1xf32>
      %827 = vector.multi_reduction <add>, %826, %cst_613 [1] : vector<1x16xf32> to vector<1xf32>
      %828 = vector.shape_cast %827 : vector<1xf32> to vector<1x1xf32>
      %c0_614 = arith.constant 0 : index
      %c12_615 = arith.constant 12 : index
      %c0_616 = arith.constant 0 : index
      %c0_617 = arith.constant 0 : index
      %829 = vector.load %arg9[%c0_614, %c12_615, %c0_616, %c0_617] : memref<1x23x1x1xf32, #tpu.memory_space<vmem>>, vector<1x1x1x1xf32>
      %830 = vector.shape_cast %829 : vector<1x1x1x1xf32> to vector<1x1xf32>
      %831 = vector.shape_cast %828 : vector<1x1xf32> to vector<1x1x1x1xf32>
      tpu.vector_store %arg9[%c0_614, %c12_615, %c0_616, %c0_617], %831 {strides = array<i32>} : memref<1x23x1x1xf32, #tpu.memory_space<vmem>>, vector<1x1x1x1xf32>,
      %c13_618 = arith.constant 13 : index
      %c0_619 = arith.constant 0 : index
      %c0_620 = arith.constant 0 : index
      %832 = vector.load %arg10[%c13_618, %c0_619, %c0_620] : memref<23x1x16xf32, #tpu.memory_space<vmem>>, vector<1x1x16xf32>
      %833 = vector.shape_cast %832 : vector<1x1x16xf32> to vector<1x16xf32>
      %cst_621 = arith.constant dense<0.000000e+00> : vector<1xf32>
      %834 = vector.multi_reduction <add>, %833, %cst_621 [1] : vector<1x16xf32> to vector<1xf32>
      %835 = vector.shape_cast %834 : vector<1xf32> to vector<1x1xf32>
      %c0_622 = arith.constant 0 : index
      %c13_623 = arith.constant 13 : index
      %c0_624 = arith.constant 0 : index
      %c0_625 = arith.constant 0 : index
      %836 = vector.load %arg9[%c0_622, %c13_623, %c0_624, %c0_625] : memref<1x23x1x1xf32, #tpu.memory_space<vmem>>, vector<1x1x1x1xf32>
      %837 = vector.shape_cast %836 : vector<1x1x1x1xf32> to vector<1x1xf32>
      %838 = vector.shape_cast %835 : vector<1x1xf32> to vector<1x1x1x1xf32>
      tpu.vector_store %arg9[%c0_622, %c13_623, %c0_624, %c0_625], %838 {strides = array<i32>} : memref<1x23x1x1xf32, #tpu.memory_space<vmem>>, vector<1x1x1x1xf32>,
      %c14_626 = arith.constant 14 : index
      %c0_627 = arith.constant 0 : index
      %c0_628 = arith.constant 0 : index
      %839 = vector.load %arg10[%c14_626, %c0_627, %c0_628] : memref<23x1x16xf32, #tpu.memory_space<vmem>>, vector<1x1x16xf32>
      %840 = vector.shape_cast %839 : vector<1x1x16xf32> to vector<1x16xf32>
      %cst_629 = arith.constant dense<0.000000e+00> : vector<1xf32>
      %841 = vector.multi_reduction <add>, %840, %cst_629 [1] : vector<1x16xf32> to vector<1xf32>
      %842 = vector.shape_cast %841 : vector<1xf32> to vector<1x1xf32>
      %c0_630 = arith.constant 0 : index
      %c14_631 = arith.constant 14 : index
      %c0_632 = arith.constant 0 : index
      %c0_633 = arith.constant 0 : index
      %843 = vector.load %arg9[%c0_630, %c14_631, %c0_632, %c0_633] : memref<1x23x1x1xf32, #tpu.memory_space<vmem>>, vector<1x1x1x1xf32>
      %844 = vector.shape_cast %843 : vector<1x1x1x1xf32> to vector<1x1xf32>
      %845 = vector.shape_cast %842 : vector<1x1xf32> to vector<1x1x1x1xf32>
      tpu.vector_store %arg9[%c0_630, %c14_631, %c0_632, %c0_633], %845 {strides = array<i32>} : memref<1x23x1x1xf32, #tpu.memory_space<vmem>>, vector<1x1x1x1xf32>,
      %c15_634 = arith.constant 15 : index
      %c0_635 = arith.constant 0 : index
      %c0_636 = arith.constant 0 : index
      %846 = vector.load %arg10[%c15_634, %c0_635, %c0_636] : memref<23x1x16xf32, #tpu.memory_space<vmem>>, vector<1x1x16xf32>
      %847 = vector.shape_cast %846 : vector<1x1x16xf32> to vector<1x16xf32>
      %cst_637 = arith.constant dense<0.000000e+00> : vector<1xf32>
      %848 = vector.multi_reduction <add>, %847, %cst_637 [1] : vector<1x16xf32> to vector<1xf32>
      %849 = vector.shape_cast %848 : vector<1xf32> to vector<1x1xf32>
      %c0_638 = arith.constant 0 : index
      %c15_639 = arith.constant 15 : index
      %c0_640 = arith.constant 0 : index
      %c0_641 = arith.constant 0 : index
      %850 = vector.load %arg9[%c0_638, %c15_639, %c0_640, %c0_641] : memref<1x23x1x1xf32, #tpu.memory_space<vmem>>, vector<1x1x1x1xf32>
      %851 = vector.shape_cast %850 : vector<1x1x1x1xf32> to vector<1x1xf32>
      %852 = vector.shape_cast %849 : vector<1x1xf32> to vector<1x1x1x1xf32>
      tpu.vector_store %arg9[%c0_638, %c15_639, %c0_640, %c0_641], %852 {strides = array<i32>} : memref<1x23x1x1xf32, #tpu.memory_space<vmem>>, vector<1x1x1x1xf32>,
      %c16_642 = arith.constant 16 : index
      %c0_643 = arith.constant 0 : index
      %c0_644 = arith.constant 0 : index
      %853 = vector.load %arg10[%c16_642, %c0_643, %c0_644] : memref<23x1x16xf32, #tpu.memory_space<vmem>>, vector<1x1x16xf32>
      %854 = vector.shape_cast %853 : vector<1x1x16xf32> to vector<1x16xf32>
      %cst_645 = arith.constant dense<0.000000e+00> : vector<1xf32>
      %855 = vector.multi_reduction <add>, %854, %cst_645 [1] : vector<1x16xf32> to vector<1xf32>
      %856 = vector.shape_cast %855 : vector<1xf32> to vector<1x1xf32>
      %c0_646 = arith.constant 0 : index
      %c16_647 = arith.constant 16 : index
      %c0_648 = arith.constant 0 : index
      %c0_649 = arith.constant 0 : index
      %857 = vector.load %arg9[%c0_646, %c16_647, %c0_648, %c0_649] : memref<1x23x1x1xf32, #tpu.memory_space<vmem>>, vector<1x1x1x1xf32>
      %858 = vector.shape_cast %857 : vector<1x1x1x1xf32> to vector<1x1xf32>
      %859 = vector.shape_cast %856 : vector<1x1xf32> to vector<1x1x1x1xf32>
      tpu.vector_store %arg9[%c0_646, %c16_647, %c0_648, %c0_649], %859 {strides = array<i32>} : memref<1x23x1x1xf32, #tpu.memory_space<vmem>>, vector<1x1x1x1xf32>,
      %c17_650 = arith.constant 17 : index
      %c0_651 = arith.constant 0 : index
      %c0_652 = arith.constant 0 : index
      %860 = vector.load %arg10[%c17_650, %c0_651, %c0_652] : memref<23x1x16xf32, #tpu.memory_space<vmem>>, vector<1x1x16xf32>
      %861 = vector.shape_cast %860 : vector<1x1x16xf32> to vector<1x16xf32>
      %cst_653 = arith.constant dense<0.000000e+00> : vector<1xf32>
      %862 = vector.multi_reduction <add>, %861, %cst_653 [1] : vector<1x16xf32> to vector<1xf32>
      %863 = vector.shape_cast %862 : vector<1xf32> to vector<1x1xf32>
      %c0_654 = arith.constant 0 : index
      %c17_655 = arith.constant 17 : index
      %c0_656 = arith.constant 0 : index
      %c0_657 = arith.constant 0 : index
      %864 = vector.load %arg9[%c0_654, %c17_655, %c0_656, %c0_657] : memref<1x23x1x1xf32, #tpu.memory_space<vmem>>, vector<1x1x1x1xf32>
      %865 = vector.shape_cast %864 : vector<1x1x1x1xf32> to vector<1x1xf32>
      %866 = vector.shape_cast %863 : vector<1x1xf32> to vector<1x1x1x1xf32>
      tpu.vector_store %arg9[%c0_654, %c17_655, %c0_656, %c0_657], %866 {strides = array<i32>} : memref<1x23x1x1xf32, #tpu.memory_space<vmem>>, vector<1x1x1x1xf32>,
      %c18_658 = arith.constant 18 : index
      %c0_659 = arith.constant 0 : index
      %c0_660 = arith.constant 0 : index
      %867 = vector.load %arg10[%c18_658, %c0_659, %c0_660] : memref<23x1x16xf32, #tpu.memory_space<vmem>>, vector<1x1x16xf32>
      %868 = vector.shape_cast %867 : vector<1x1x16xf32> to vector<1x16xf32>
      %cst_661 = arith.constant dense<0.000000e+00> : vector<1xf32>
      %869 = vector.multi_reduction <add>, %868, %cst_661 [1] : vector<1x16xf32> to vector<1xf32>
      %870 = vector.shape_cast %869 : vector<1xf32> to vector<1x1xf32>
      %c0_662 = arith.constant 0 : index
      %c18_663 = arith.constant 18 : index
      %c0_664 = arith.constant 0 : index
      %c0_665 = arith.constant 0 : index
      %871 = vector.load %arg9[%c0_662, %c18_663, %c0_664, %c0_665] : memref<1x23x1x1xf32, #tpu.memory_space<vmem>>, vector<1x1x1x1xf32>
      %872 = vector.shape_cast %871 : vector<1x1x1x1xf32> to vector<1x1xf32>
      %873 = vector.shape_cast %870 : vector<1x1xf32> to vector<1x1x1x1xf32>
      tpu.vector_store %arg9[%c0_662, %c18_663, %c0_664, %c0_665], %873 {strides = array<i32>} : memref<1x23x1x1xf32, #tpu.memory_space<vmem>>, vector<1x1x1x1xf32>,
      %c19_666 = arith.constant 19 : index
      %c0_667 = arith.constant 0 : index
      %c0_668 = arith.constant 0 : index
      %874 = vector.load %arg10[%c19_666, %c0_667, %c0_668] : memref<23x1x16xf32, #tpu.memory_space<vmem>>, vector<1x1x16xf32>
      %875 = vector.shape_cast %874 : vector<1x1x16xf32> to vector<1x16xf32>
      %cst_669 = arith.constant dense<0.000000e+00> : vector<1xf32>
      %876 = vector.multi_reduction <add>, %875, %cst_669 [1] : vector<1x16xf32> to vector<1xf32>
      %877 = vector.shape_cast %876 : vector<1xf32> to vector<1x1xf32>
      %c0_670 = arith.constant 0 : index
      %c19_671 = arith.constant 19 : index
      %c0_672 = arith.constant 0 : index
      %c0_673 = arith.constant 0 : index
      %878 = vector.load %arg9[%c0_670, %c19_671, %c0_672, %c0_673] : memref<1x23x1x1xf32, #tpu.memory_space<vmem>>, vector<1x1x1x1xf32>
      %879 = vector.shape_cast %878 : vector<1x1x1x1xf32> to vector<1x1xf32>
      %880 = vector.shape_cast %877 : vector<1x1xf32> to vector<1x1x1x1xf32>
      tpu.vector_store %arg9[%c0_670, %c19_671, %c0_672, %c0_673], %880 {strides = array<i32>} : memref<1x23x1x1xf32, #tpu.memory_space<vmem>>, vector<1x1x1x1xf32>,
      %c20_674 = arith.constant 20 : index
      %c0_675 = arith.constant 0 : index
      %c0_676 = arith.constant 0 : index
      %881 = vector.load %arg10[%c20_674, %c0_675, %c0_676] : memref<23x1x16xf32, #tpu.memory_space<vmem>>, vector<1x1x16xf32>
      %882 = vector.shape_cast %881 : vector<1x1x16xf32> to vector<1x16xf32>
      %cst_677 = arith.constant dense<0.000000e+00> : vector<1xf32>
      %883 = vector.multi_reduction <add>, %882, %cst_677 [1] : vector<1x16xf32> to vector<1xf32>
      %884 = vector.shape_cast %883 : vector<1xf32> to vector<1x1xf32>
      %c0_678 = arith.constant 0 : index
      %c20_679 = arith.constant 20 : index
      %c0_680 = arith.constant 0 : index
      %c0_681 = arith.constant 0 : index
      %885 = vector.load %arg9[%c0_678, %c20_679, %c0_680, %c0_681] : memref<1x23x1x1xf32, #tpu.memory_space<vmem>>, vector<1x1x1x1xf32>
      %886 = vector.shape_cast %885 : vector<1x1x1x1xf32> to vector<1x1xf32>
      %887 = vector.shape_cast %884 : vector<1x1xf32> to vector<1x1x1x1xf32>
      tpu.vector_store %arg9[%c0_678, %c20_679, %c0_680, %c0_681], %887 {strides = array<i32>} : memref<1x23x1x1xf32, #tpu.memory_space<vmem>>, vector<1x1x1x1xf32>,
      %c21_682 = arith.constant 21 : index
      %c0_683 = arith.constant 0 : index
      %c0_684 = arith.constant 0 : index
      %888 = vector.load %arg10[%c21_682, %c0_683, %c0_684] : memref<23x1x16xf32, #tpu.memory_space<vmem>>, vector<1x1x16xf32>
      %889 = vector.shape_cast %888 : vector<1x1x16xf32> to vector<1x16xf32>
      %cst_685 = arith.constant dense<0.000000e+00> : vector<1xf32>
      %890 = vector.multi_reduction <add>, %889, %cst_685 [1] : vector<1x16xf32> to vector<1xf32>
      %891 = vector.shape_cast %890 : vector<1xf32> to vector<1x1xf32>
      %c0_686 = arith.constant 0 : index
      %c21_687 = arith.constant 21 : index
      %c0_688 = arith.constant 0 : index
      %c0_689 = arith.constant 0 : index
      %892 = vector.load %arg9[%c0_686, %c21_687, %c0_688, %c0_689] : memref<1x23x1x1xf32, #tpu.memory_space<vmem>>, vector<1x1x1x1xf32>
      %893 = vector.shape_cast %892 : vector<1x1x1x1xf32> to vector<1x1xf32>
      %894 = vector.shape_cast %891 : vector<1x1xf32> to vector<1x1x1x1xf32>
      tpu.vector_store %arg9[%c0_686, %c21_687, %c0_688, %c0_689], %894 {strides = array<i32>} : memref<1x23x1x1xf32, #tpu.memory_space<vmem>>, vector<1x1x1x1xf32>,
      %c22_690 = arith.constant 22 : index
      %c0_691 = arith.constant 0 : index
      %c0_692 = arith.constant 0 : index
      %895 = vector.load %arg10[%c22_690, %c0_691, %c0_692] : memref<23x1x16xf32, #tpu.memory_space<vmem>>, vector<1x1x16xf32>
      %896 = vector.shape_cast %895 : vector<1x1x16xf32> to vector<1x16xf32>
      %cst_693 = arith.constant dense<0.000000e+00> : vector<1xf32>
      %897 = vector.multi_reduction <add>, %896, %cst_693 [1] : vector<1x16xf32> to vector<1xf32>
      %898 = vector.shape_cast %897 : vector<1xf32> to vector<1x1xf32>
      %c0_694 = arith.constant 0 : index
      %c22_695 = arith.constant 22 : index
      %c0_696 = arith.constant 0 : index
      %c0_697 = arith.constant 0 : index
      %899 = vector.load %arg9[%c0_694, %c22_695, %c0_696, %c0_697] : memref<1x23x1x1xf32, #tpu.memory_space<vmem>>, vector<1x1x1x1xf32>
      %900 = vector.shape_cast %899 : vector<1x1x1x1xf32> to vector<1x1xf32>
      %901 = vector.shape_cast %898 : vector<1x1xf32> to vector<1x1x1x1xf32>
      tpu.vector_store %arg9[%c0_694, %c22_695, %c0_696, %c0_697], %901 {strides = array<i32>} : memref<1x23x1x1xf32, #tpu.memory_space<vmem>>, vector<1x1x1x1xf32>,
    } else {
    }
    return
  }
  func.func @transform_0(%arg0: i32, %arg1: i32) -> (i32, i32, i32, i32) {
    %c0_i32 = arith.constant 0 : i32
    %c0_i32_0 = arith.constant 0 : i32
    %c0_i32_1 = arith.constant 0 : i32
    return %arg0, %c0_i32, %arg1, %c0_i32_0 : i32, i32, i32, i32
  }
  func.func @transform_1(%arg0: i32, %arg1: i32) -> (i32, i32, i32, i32) {
    %c0_i32 = arith.constant 0 : i32
    %c0_i32_0 = arith.constant 0 : i32
    %c0_i32_1 = arith.constant 0 : i32
    return %arg0, %c0_i32, %arg1, %c0_i32_0 : i32, i32, i32, i32
  }
  func.func @transform_2(%arg0: i32, %arg1: i32) -> (i32, i32, i32, i32) {
    %c0_i32 = arith.constant 0 : i32
    %c0_i32_0 = arith.constant 0 : i32
    %c0_i32_1 = arith.constant 0 : i32
    return %arg0, %c0_i32, %arg1, %c0_i32_0 : i32, i32, i32, i32
  }
  func.func @transform_3(%arg0: i32, %arg1: i32) -> (i32, i32, i32, i32) {
    %c0_i32 = arith.constant 0 : i32
    %c0_i32_0 = arith.constant 0 : i32
    %c0_i32_1 = arith.constant 0 : i32
    %c0_i32_2 = arith.constant 0 : i32
    return %arg0, %c0_i32, %c0_i32_0, %c0_i32_1 : i32, i32, i32, i32
  }
  func.func @transform_4(%arg0: i32, %arg1: i32) -> (i32, i32, i32, i32) {
    %c0_i32 = arith.constant 0 : i32
    %c0_i32_0 = arith.constant 0 : i32
    %c0_i32_1 = arith.constant 0 : i32
    %c0_i32_2 = arith.constant 0 : i32
    return %arg0, %c0_i32, %c0_i32_0, %c0_i32_1 : i32, i32, i32, i32
  }
  func.func @transform_5(%arg0: i32, %arg1: i32) -> (i32, i32) {
    %c0_i32 = arith.constant 0 : i32
    %c0_i32_0 = arith.constant 0 : i32
    return %arg1, %c0_i32 : i32, i32
  }
  func.func @transform_6(%arg0: i32, %arg1: i32) -> (i32, i32) {
    %c0_i32 = arith.constant 0 : i32
    %c0_i32_0 = arith.constant 0 : i32
    %c0_i32_1 = arith.constant 0 : i32
    return %c0_i32, %c0_i32_0 : i32, i32
  }
  func.func @transform_7(%arg0: i32, %arg1: i32) -> (i32, i32, i32, i32) {
    %c0_i32 = arith.constant 0 : i32
    %c0_i32_0 = arith.constant 0 : i32
    %c0_i32_1 = arith.constant 0 : i32
    %c0_i32_2 = arith.constant 0 : i32
    return %arg0, %c0_i32, %c0_i32_0, %c0_i32_1 : i32, i32, i32, i32
  }
}

</mosaic_0001>

<llo_original>
// kernel: local_center_loss_forward.1
$region0: #{local_center_loss_forward.1}
  #allocation0 [shape = 'u32[]', space=smem, size = 0x4, offset = 0x4, fixed_abs, tag = 'smem constant byte address 0x4 - core index']
  #allocation1 [shape = 'u32[144,128]{1,0:T(1,128)}', space=vmem, size = 0x12000, scoped, tag = 'internal scratch']
  #allocation2 [shape = 'f32[23,1,16]{2,1,0:T(1,128)}', space=vmem, size = 0x2e00, scoped, tag = 'scratch operand']
  %s0 = inlined_call_operand.vmem [shape: f32[2,6,16,16], index: 0, kind: input, shape index: {}]
  %s1 = inlined_call_operand.vmem [shape: f32[2,6,16,16], index: 1, kind: input, shape index: {}]
  %s2 = inlined_call_operand.vmem [shape: s32[2,1,16,16], index: 2, kind: input, shape index: {}]
  %s3 = inlined_call_operand.vmem [shape: bf16[2,6,8,8], index: 3, kind: input, shape index: {}]
  %s4 = inlined_call_operand.vmem [shape: bf16[2,48,8,8], index: 4, kind: input, shape index: {}]
  %s5 = inlined_call_operand.vmem [shape: bf16[16,8], index: 5, kind: input, shape index: {}]
  %s6 = inlined_call_operand.vmem [shape: bf16[8,16], index: 6, kind: input, shape index: {}]
  %s7 = inlined_call_operand.vmem [shape: f32[2,23,1,1], index: 7, kind: output, shape index: {}]
  %s8 = sld [smem:[#allocation0]]
  $region69: #{local_center_loss_forward.1} parent=0
    _
  %s10 = ssub.s32 1, %s8
  %s11 = scalar_select 0, %s10, %s8
  loop: start=0, step=1, limit=4
  $region2: #{local_center_loss_forward.1} parent=0 // loop_pre_header
    _
  $region3: #{local_center_loss_forward.1} parent=0 // loop_header
    %s13 = sphi 0, %s17
    %p14 = scmp.ge.s32.totalorder %s13, 4
    %s20 = sphi 0, %s32
    %s21 = sphi 0, %s28
    %s22 = sphi 0, %s20
    %s23 = sphi 0, %s21
    %s24 = sphi 0, %s22
    %s25 = sphi 0, %s23
    %s37 = sphi 0, %s39
    %s40 = sphi 0, %s37
    %s41 = sphi 0, %s40
    %s57 = sphi 0, %s41
    %s65 = sphi 0, %s67
    %s68 = sphi 0, %s65
    %s69 = sphi 0, %s68
    %s85 = sphi 0, %s69
    %s93 = sphi 0, %s95
    %s96 = sphi 0, %s93
    %s97 = sphi 0, %s96
    %s113 = sphi 0, %s97
    %s119 = sphi 0, %s121
    %s122 = sphi 0, %s119
    %s123 = sphi 0, %s122
    %s139 = sphi 0, %s123
    %s145 = sphi 0, %s147
    %s148 = sphi 0, %s145
    %s149 = sphi 0, %s148
    %s165 = sphi 0, %s149
    %s171 = sphi 0, %s173
    %s174 = sphi 0, %s171
    %s175 = sphi 0, %s174
    %s191 = sphi 0, %s175
    %s195 = sphi 0, %s195
    %s197 = sphi 0, %s195
    %s198 = sphi 0, %s197
    %s212 = sphi 0, %s198
    %s218 = sphi 0, %s220
    %s221 = sphi 0, %s218
    %s222 = sphi 0, %s221
    %s238 = sphi 0, %s222
  $region4: #{local_center_loss_forward.1} parent=0 // loop_header_branch
    %16 = sbr.rel (%p14) target = $region8
  $region5: #{local_center_loss_forward.1} parent=0 // loop_body
    %s18 = ssub.s32 %s13, 1
    %s19 = ssub.s32 %s13, 2
    %s26 = sadd.s32 1, %s21
    %p27 = scmp.ge.s32.totalorder %s26, 1
    %s28 = scalar_select %p27, 0, %s26
    %s29 = sadd.s32 1, %s20
    %s30 = scalar_select %p27, %s29, %s20
    %p31 = scmp.ge.s32.totalorder %s30, 2
    %s32 = scalar_select %p31, 0, %s30
    %s33 = ssub.s32 %s20, %s32
    %s34 = ssub.s32 %s21, %s28
    %s35 = sor.u32 %s33, %s34
    %p36 = scmp.eq.s32.totalorder %s35, 0
    %s38 = sadd.s32 %s37, 1
    %s39 = scalar_select %p36, %s37, %s38
    %p42 = pneg %p36
    %p43 = scmp.eq.s32.totalorder %s13, 1
    %p44 = por %p42, %p43
    %p45 = scmp.ne.s32.totalorder %s37, %s40
    %p46 = scmp.eq.s32.totalorder %s13, 0
    %p47 = por %p45, %p46
    %p48 = scmp.ne.s32.totalorder %s37, %s40
    %p49 = scmp.eq.s32.totalorder %s18, 1
    %p50 = por %p48, %p49
    %p51 = scmp.ne.s32.totalorder %s40, %s41
    %p52 = scmp.eq.s32.totalorder %s18, 0
    %p53 = por %p51, %p52
    %p54 = scmp.ne.s32.totalorder %s40, %s41
    %p55 = scmp.eq.s32.totalorder %s19, 1
    %p56 = por %p54, %p55
    %p58 = scmp.ne.s32.totalorder %s41, %s57
    %p59 = scmp.eq.s32.totalorder %s19, 0
    %p60 = por %p58, %p59
    %s61 = ssub.s32 %s20, %s32
    %s62 = ssub.s32 %s21, %s28
    %s63 = sor.u32 %s61, %s62
    %p64 = scmp.eq.s32.totalorder %s63, 0
    %s66 = sadd.s32 %s65, 1
    %s67 = scalar_select %p64, %s65, %s66
    %p70 = pneg %p64
    %p71 = scmp.eq.s32.totalorder %s13, 1
    %p72 = por %p70, %p71
    %p73 = scmp.ne.s32.totalorder %s65, %s68
    %p74 = scmp.eq.s32.totalorder %s13, 0
    %p75 = por %p73, %p74
    %p76 = scmp.ne.s32.totalorder %s65, %s68
    %p77 = scmp.eq.s32.totalorder %s18, 1
    %p78 = por %p76, %p77
    %p79 = scmp.ne.s32.totalorder %s68, %s69
    %p80 = scmp.eq.s32.totalorder %s18, 0
    %p81 = por %p79, %p80
    %p82 = scmp.ne.s32.totalorder %s68, %s69
    %p83 = scmp.eq.s32.totalorder %s19, 1
    %p84 = por %p82, %p83
    %p86 = scmp.ne.s32.totalorder %s69, %s85
    %p87 = scmp.eq.s32.totalorder %s19, 0
    %p88 = por %p86, %p87
    %s89 = ssub.s32 %s20, %s32
    %s90 = ssub.s32 %s21, %s28
    %s91 = sor.u32 %s89, %s90
    %p92 = scmp.eq.s32.totalorder %s91, 0
    %s94 = sadd.s32 %s93, 1
    %s95 = scalar_select %p92, %s93, %s94
    %p98 = pneg %p92
    %p99 = scmp.eq.s32.totalorder %s13, 1
    %p100 = por %p98, %p99
    %p101 = scmp.ne.s32.totalorder %s93, %s96
    %p102 = scmp.eq.s32.totalorder %s13, 0
    %p103 = por %p101, %p102
    %p104 = scmp.ne.s32.totalorder %s93, %s96
    %p105 = scmp.eq.s32.totalorder %s18, 1
    %p106 = por %p104, %p105
    %p107 = scmp.ne.s32.totalorder %s96, %s97
    %p108 = scmp.eq.s32.totalorder %s18, 0
    %p109 = por %p107, %p108
    %p110 = scmp.ne.s32.totalorder %s96, %s97
    %p111 = scmp.eq.s32.totalorder %s19, 1
    %p112 = por %p110, %p111
    %p114 = scmp.ne.s32.totalorder %s97, %s113
    %p115 = scmp.eq.s32.totalorder %s19, 0
    %p116 = por %p114, %p115
    %s117 = ssub.s32 %s20, %s32
    %p118 = scmp.eq.s32.totalorder %s117, 0
    %s120 = sadd.s32 %s119, 1
    %s121 = scalar_select %p118, %s119, %s120
    %p124 = pneg %p118
    %p125 = scmp.eq.s32.totalorder %s13, 1
    %p126 = por %p124, %p125
    %p127 = scmp.ne.s32.totalorder %s119, %s122
    %p128 = scmp.eq.s32.totalorder %s13, 0
    %p129 = por %p127, %p128
    %p130 = scmp.ne.s32.totalorder %s119, %s122
    %p131 = scmp.eq.s32.totalorder %s18, 1
    %p132 = por %p130, %p131
    %p133 = scmp.ne.s32.totalorder %s122, %s123
    %p134 = scmp.eq.s32.totalorder %s18, 0
    %p135 = por %p133, %p134
    %p136 = scmp.ne.s32.totalorder %s122, %s123
    %p137 = scmp.eq.s32.totalorder %s19, 1
    %p138 = por %p136, %p137
    %p140 = scmp.ne.s32.totalorder %s123, %s139
    %p141 = scmp.eq.s32.totalorder %s19, 0
    %p142 = por %p140, %p141
    %s143 = ssub.s32 %s20, %s32
    %p144 = scmp.eq.s32.totalorder %s143, 0
    %s146 = sadd.s32 %s145, 1
    %s147 = scalar_select %p144, %s145, %s146
    %p150 = pneg %p144
    %p151 = scmp.eq.s32.totalorder %s13, 1
    %p152 = por %p150, %p151
    %p153 = scmp.ne.s32.totalorder %s145, %s148
    %p154 = scmp.eq.s32.totalorder %s13, 0
    %p155 = por %p153, %p154
    %p156 = scmp.ne.s32.totalorder %s145, %s148
    %p157 = scmp.eq.s32.totalorder %s18, 1
    %p158 = por %p156, %p157
    %p159 = scmp.ne.s32.totalorder %s148, %s149
    %p160 = scmp.eq.s32.totalorder %s18, 0
    %p161 = por %p159, %p160
    %p162 = scmp.ne.s32.totalorder %s148, %s149
    %p163 = scmp.eq.s32.totalorder %s19, 1
    %p164 = por %p162, %p163
    %p166 = scmp.ne.s32.totalorder %s149, %s165
    %p167 = scmp.eq.s32.totalorder %s19, 0
    %p168 = por %p166, %p167
    %s169 = ssub.s32 %s21, %s28
    %p170 = scmp.eq.s32.totalorder %s169, 0
    %s172 = sadd.s32 %s171, 1
    %s173 = scalar_select %p170, %s171, %s172
    %p176 = pneg %p170
    %p177 = scmp.eq.s32.totalorder %s13, 1
    %p178 = por %p176, %p177
    %p179 = scmp.ne.s32.totalorder %s171, %s174
    %p180 = scmp.eq.s32.totalorder %s13, 0
    %p181 = por %p179, %p180
    %p182 = scmp.ne.s32.totalorder %s171, %s174
    %p183 = scmp.eq.s32.totalorder %s18, 1
    %p184 = por %p182, %p183
    %p185 = scmp.ne.s32.totalorder %s174, %s175
    %p186 = scmp.eq.s32.totalorder %s18, 0
    %p187 = por %p185, %p186
    %p188 = scmp.ne.s32.totalorder %s174, %s175
    %p189 = scmp.eq.s32.totalorder %s19, 1
    %p190 = por %p188, %p189
    %p192 = scmp.ne.s32.totalorder %s175, %s191
    %p193 = scmp.eq.s32.totalorder %s19, 0
    %p194 = por %p192, %p193
    %s196 = sadd.s32 %s195, 1
    %p199 = scmp.eq.s32.totalorder %s13, 1
    %p200 = scmp.ne.s32.totalorder %s195, %s197
    %p201 = scmp.eq.s32.totalorder %s13, 0
    %p202 = por %p200, %p201
    %p203 = scmp.ne.s32.totalorder %s195, %s197
    %p204 = scmp.eq.s32.totalorder %s18, 1
    %p205 = por %p203, %p204
    %p206 = scmp.ne.s32.totalorder %s197, %s198
    %p207 = scmp.eq.s32.totalorder %s18, 0
    %p208 = por %p206, %p207
    %p209 = scmp.ne.s32.totalorder %s197, %s198
    %p210 = scmp.eq.s32.totalorder %s19, 1
    %p211 = por %p209, %p210
    %p213 = scmp.ne.s32.totalorder %s198, %s212
    %p214 = scmp.eq.s32.totalorder %s19, 0
    %p215 = por %p213, %p214
    %s216 = ssub.s32 %s20, %s32
    %p217 = scmp.eq.s32.totalorder %s216, 0
    %s219 = sadd.s32 %s218, 1
    %s220 = scalar_select %p217, %s218, %s219
    %p223 = pneg %p217
    %p224 = scmp.eq.s32.totalorder %s13, 1
    %p225 = por %p223, %p224
    %p226 = scmp.ne.s32.totalorder %s218, %s221
    %p227 = scmp.eq.s32.totalorder %s13, 0
    %p228 = por %p226, %p227
    %p229 = scmp.ne.s32.totalorder %s218, %s221
    %p230 = scmp.eq.s32.totalorder %s18, 1
    %p231 = por %p229, %p230
    %p232 = scmp.ne.s32.totalorder %s221, %s222
    %p233 = scmp.eq.s32.totalorder %s18, 0
    %p234 = por %p232, %p233
    %p235 = scmp.ne.s32.totalorder %s221, %s222
    %p236 = scmp.eq.s32.totalorder %s19, 1
    %p237 = por %p235, %p236
    %p239 = scmp.ne.s32.totalorder %s222, %s238
    %p240 = scmp.eq.s32.totalorder %s19, 0
    %p241 = por %p239, %p240
    %p242 = scmp.le.s32.totalorder 1, %s13
    %p243 = scmp.lt.s32.totalorder %s13, 3
    %p244 = pnand %p242, %p243
    %p245 = pneg %p244
    // Predicated region
    $region9: #{local_center_loss_forward.1} parent=5 // pred_check
      _
    $region10: #{local_center_loss_forward.1} parent=5 // pred_check_branch
      %247 = sbr.rel (%p244) target = $region12
    $region11: #{local_center_loss_forward.1} parent=5 // pred_region
      %s248 = ssub.s32 %s13, 1
      // Predicated region
      $region13: #{local_center_loss_forward.1} parent=11 // pred_check
        %p249 = pneg %p187
      $region14: #{local_center_loss_forward.1} parent=11 // pred_check_branch
        %251 = sbr.rel (%p249) target = $region16
      $region15: #{local_center_loss_forward.1} parent=11 // pred_region
        %s252 = smul.u32 2, %s23
        %p253 = scmp.lt.s32.totalorder %s252, 1
        %s254 = scalar_select %p253, %s252, 1
        %s255 = smul.addr %s254, 4
        %s256 = scalar_lea.vmem %s5, %s255
        %s257 = smul.u32 2, %s23
      $region16: #{local_center_loss_forward.1} parent=11 // pred_fallthru
        _
      // Predicated region
      $region17: #{local_center_loss_forward.1} parent=11 // pred_check
        %p258 = pneg %p208
      $region18: #{local_center_loss_forward.1} parent=11 // pred_check_branch
        %260 = sbr.rel (%p258) target = $region20
      $region19: #{local_center_loss_forward.1} parent=11 // pred_region
        _
      $region20: #{local_center_loss_forward.1} parent=11 // pred_fallthru
        _
    $region12: #{local_center_loss_forward.1} parent=5 // pred_fallthru
      _
    %p261 = scmp.lt.s32.totalorder %s13, 2
    // Predicated region
    $region21: #{local_center_loss_forward.1} parent=5 // pred_check
      %p262 = pneg %p261
    $region22: #{local_center_loss_forward.1} parent=5 // pred_check_branch
      %264 = sbr.rel (%p262) target = $region24
    $region23: #{local_center_loss_forward.1} parent=5 // pred_region
      // Predicated region
      $region25: #{local_center_loss_forward.1} parent=23 // pred_check
        %p265 = pneg %p47
      $region26: #{local_center_loss_forward.1} parent=23 // pred_check_branch
        %267 = sbr.rel (%p265) target = $region28
      $region27: #{local_center_loss_forward.1} parent=23 // pred_region
        %s268 = smul.u32 2, %s21
        %p269 = scmp.lt.s32.totalorder %s20, 1
        %s270 = scalar_select %p269, %s20, 1
        %p271 = scmp.lt.s32.totalorder %s268, 1
        %s272 = scalar_select %p271, %s268, 1
        %s273 = smul.addr %s270, 12
        %s274 = sadd.s32 %s272, %s273
        %s275 = smul.addr %s274, 8
        %s276 = scalar_lea.vmem %s0, %s275
        %s277 = smul.u32 2, %s21
      $region28: #{local_center_loss_forward.1} parent=23 // pred_fallthru
        _
      // Predicated region
      $region29: #{local_center_loss_forward.1} parent=23 // pred_check
        %p278 = pneg %p75
      $region30: #{local_center_loss_forward.1} parent=23 // pred_check_branch
        %280 = sbr.rel (%p278) target = $region32
      $region31: #{local_center_loss_forward.1} parent=23 // pred_region
        %s281 = smul.u32 2, %s21
        %p282 = scmp.lt.s32.totalorder %s20, 1
        %s283 = scalar_select %p282, %s20, 1
        %p284 = scmp.lt.s32.totalorder %s281, 1
        %s285 = scalar_select %p284, %s281, 1
        %s286 = smul.addr %s283, 12
        %s287 = sadd.s32 %s285, %s286
        %s288 = smul.addr %s287, 8
        %s289 = scalar_lea.vmem %s1, %s288
        %s290 = smul.u32 2, %s21
      $region32: #{local_center_loss_forward.1} parent=23 // pred_fallthru
        _
      // Predicated region
      $region33: #{local_center_loss_forward.1} parent=23 // pred_check
        %p291 = pneg %p103
      $region34: #{local_center_loss_forward.1} parent=23 // pred_check_branch
        %293 = sbr.rel (%p291) target = $region36
      $region35: #{local_center_loss_forward.1} parent=23 // pred_region
        %s294 = smul.u32 2, %s21
        %p295 = scmp.lt.s32.totalorder %s20, 1
        %s296 = scalar_select %p295, %s20, 1
        %p297 = scmp.lt.s32.totalorder %s294, 1
        %s298 = scalar_select %p297, %s294, 1
        %s299 = smul.addr %s296, 2
        %s300 = sadd.s32 %s298, %s299
        %s301 = smul.addr %s300, 8
        %s302 = scalar_lea.vmem %s2, %s301
        %s303 = smul.u32 2, %s21
      $region36: #{local_center_loss_forward.1} parent=23 // pred_fallthru
        _
      // Predicated region
      $region37: #{local_center_loss_forward.1} parent=23 // pred_check
        %p304 = pneg %p129
      $region38: #{local_center_loss_forward.1} parent=23 // pred_check_branch
        %306 = sbr.rel (%p304) target = $region40
      $region39: #{local_center_loss_forward.1} parent=23 // pred_region
        %p307 = scmp.lt.s32.totalorder %s20, 1
        %s308 = scalar_select %p307, %s20, 1
        %s309 = smul.addr %s308, 6
        %s310 = smul.addr %s309, 4
        %s311 = scalar_lea.vmem %s3, %s310
      $region40: #{local_center_loss_forward.1} parent=23 // pred_fallthru
        _
      // Predicated region
      $region41: #{local_center_loss_forward.1} parent=23 // pred_check
        %p312 = pneg %p155
      $region42: #{local_center_loss_forward.1} parent=23 // pred_check_branch
        %314 = sbr.rel (%p312) target = $region44
      $region43: #{local_center_loss_forward.1} parent=23 // pred_region
        %p315 = scmp.lt.s32.totalorder %s20, 1
        %s316 = scalar_select %p315, %s20, 1
        %s317 = smul.addr %s316, 48
        %s318 = smul.addr %s317, 4
        %s319 = scalar_lea.vmem %s4, %s318
      $region44: #{local_center_loss_forward.1} parent=23 // pred_fallthru
        _
    $region24: #{local_center_loss_forward.1} parent=5 // pred_fallthru
      _
    %p320 = scmp.le.s32.totalorder 1, %s13
    %p321 = scmp.lt.s32.totalorder %s13, 3
    %p322 = pnand %p320, %p321
    %p323 = pneg %p322
    // Predicated region
    $region45: #{local_center_loss_forward.1} parent=5 // pred_check
      _
    $region46: #{local_center_loss_forward.1} parent=5 // pred_check_branch
      %325 = sbr.rel (%p322) target = $region48
    $region47: #{local_center_loss_forward.1} parent=5 // pred_region
      %s326 = ssub.s32 %s13, 1
      %s327 = smul.u32 2, %s23
      %p328 = scmp.lt.s32.totalorder %s22, 1
      %s329 = scalar_select %p328, %s22, 1
      %p330 = scmp.lt.s32.totalorder %s327, 1
      %s331 = scalar_select %p330, %s327, 1
      %s332 = smul.addr %s329, 12
      %s333 = sadd.s32 %s331, %s332
      %s334 = smul.addr %s333, 8
      %s335 = scalar_lea.vmem %s0, %s334
      %p336 = pneg %p53
      %p337 = pneg %p50
      %s338 = smul.u32 2, %s23
      %p339 = scmp.lt.s32.totalorder %s22, 1
      %s340 = scalar_select %p339, %s22, 1
      %p341 = scmp.lt.s32.totalorder %s338, 1
      %s342 = scalar_select %p341, %s338, 1
      %s343 = smul.addr %s340, 12
      %s344 = sadd.s32 %s342, %s343
      %s345 = smul.addr %s344, 8
      %s346 = scalar_lea.vmem %s1, %s345
      %p347 = pneg %p81
      %p348 = pneg %p78
      %s349 = smul.u32 2, %s23
      %p350 = scmp.lt.s32.totalorder %s22, 1
      %s351 = scalar_select %p350, %s22, 1
      %p352 = scmp.lt.s32.totalorder %s349, 1
      %s353 = scalar_select %p352, %s349, 1
      %s354 = smul.addr %s351, 2
      %s355 = sadd.s32 %s353, %s354
      %s356 = smul.addr %s355, 8
      %s357 = scalar_lea.vmem %s2, %s356
      %p358 = pneg %p109
      %p359 = pneg %p106
      %p360 = scmp.lt.s32.totalorder %s22, 1
      %s361 = scalar_select %p360, %s22, 1
      %s362 = smul.addr %s361, 6
      %s363 = smul.addr %s362, 4
      %s364 = scalar_lea.vmem %s3, %s363
      %p365 = pneg %p135
      %p366 = pneg %p132
      %p367 = scmp.lt.s32.totalorder %s22, 1
      %s368 = scalar_select %p367, %s22, 1
      %s369 = smul.addr %s368, 48
      %s370 = smul.addr %s369, 4
      %s371 = scalar_lea.vmem %s4, %s370
      %p372 = pneg %p161
      %p373 = pneg %p158
      %s374 = smul.u32 2, %s23
      %p375 = scmp.lt.s32.totalorder %s374, 1
      %s376 = scalar_select %p375, %s374, 1
      %s377 = smul.addr %s376, 4
      %s378 = scalar_lea.vmem %s5, %s377
      %p379 = pneg %p187
      %p380 = pneg %p184
      %p381 = pneg %p208
      %p382 = pneg %p205
      %p383 = pneg %p234
      %p384 = pneg %p231
      %p385 = scmp.lt.s32.totalorder %s22, 1
      %s386 = scalar_select %p385, %s22, 1
      %s387 = smul.addr %s386, 23
      %s388 = scalar_lea.vmem %s7, %s387
      %s389 = smul.u32 2, %s23
      %p390 = scmp.lt.s32.totalorder %s22, 1
      %s391 = scalar_select %p390, %s22, 1
      %p392 = scmp.lt.s32.totalorder %s389, 1
      %s393 = scalar_select %p392, %s389, 1
      %s394 = smul.addr %s391, 12
      %s395 = sadd.s32 %s393, %s394
      %s396 = smul.addr %s395, 8
      %s397 = scalar_lea.vmem %s0, %s396
      %s398 = smul.u32 2, %s23
      %s399 = smul.u32 2, %s23
      %p400 = scmp.lt.s32.totalorder %s22, 1
      %s401 = scalar_select %p400, %s22, 1
      %p402 = scmp.lt.s32.totalorder %s399, 1
      %s403 = scalar_select %p402, %s399, 1
      %s404 = smul.addr %s401, 12
      %s405 = sadd.s32 %s403, %s404
      %s406 = smul.addr %s405, 8
      %s407 = scalar_lea.vmem %s1, %s406
      %s408 = smul.u32 2, %s23
      %s409 = smul.u32 2, %s23
      %p410 = scmp.lt.s32.totalorder %s22, 1
      %s411 = scalar_select %p410, %s22, 1
      %p412 = scmp.lt.s32.totalorder %s409, 1
      %s413 = scalar_select %p412, %s409, 1
      %s414 = smul.addr %s411, 2
      %s415 = sadd.s32 %s413, %s414
      %s416 = smul.addr %s415, 8
      %s417 = scalar_lea.vmem %s2, %s416
      %s418 = smul.u32 2, %s23
      %p419 = scmp.lt.s32.totalorder %s22, 1
      %s420 = scalar_select %p419, %s22, 1
      %s421 = smul.addr %s420, 6
      %s422 = smul.addr %s421, 4
      %s423 = scalar_lea.vmem %s3, %s422
      %p424 = scmp.lt.s32.totalorder %s22, 1
      %s425 = scalar_select %p424, %s22, 1
      %s426 = smul.addr %s425, 48
      %s427 = smul.addr %s426, 4
      %s428 = scalar_lea.vmem %s4, %s427
      %s429 = smul.u32 2, %s23
      %p430 = scmp.lt.s32.totalorder %s429, 1
      %s431 = scalar_select %p430, %s429, 1
      %s432 = smul.addr %s431, 4
      %s433 = scalar_lea.vmem %s5, %s432
      %s434 = smul.u32 2, %s23
      %p435 = scmp.lt.s32.totalorder %s22, 1
      %s436 = scalar_select %p435, %s22, 1
      %s437 = smul.addr %s436, 23
      %s438 = scalar_lea.vmem %s7, %s437
      %p440 = scmp.eq.s32.totalorder %s23, 0
      // Predicated region
      $region49: #{local_center_loss_forward.1} parent=47 // pred_check
        %p441 = pneg %p440
      $region50: #{local_center_loss_forward.1} parent=47 // pred_check_branch
        %443 = sbr.rel (%p441) target = $region52
      $region51: #{local_center_loss_forward.1} parent=47 // pred_region
        %vm444 = vcmask 122880
        %445 = vst.msk [vmem:[#allocation2] sm:$0x1] %vm444, 0.0
        %446 = vst.msk [vmem:[#allocation2 + $0x1] sm:$0x1] %vm444, 0.0
        %447 = vst.msk [vmem:[#allocation2 + $0x2] sm:$0x1] %vm444, 0.0
        %448 = vst.msk [vmem:[#allocation2 + $0x3] sm:$0x1] %vm444, 0.0
        %449 = vst.msk [vmem:[#allocation2 + $0x4] sm:$0x1] %vm444, 0.0
        %450 = vst.msk [vmem:[#allocation2 + $0x5] sm:$0x1] %vm444, 0.0
        %451 = vst.msk [vmem:[#allocation2 + $0x6] sm:$0x1] %vm444, 0.0
        %452 = vst.msk [vmem:[#allocation2 + $0x7] sm:$0x1] %vm444, 0.0
        %453 = vst.msk [vmem:[#allocation2 + $0x8] sm:$0x1] %vm444, 0.0
        %454 = vst.msk [vmem:[#allocation2 + $0x9] sm:$0x1] %vm444, 0.0
        %455 = vst.msk [vmem:[#allocation2 + $0xa] sm:$0x1] %vm444, 0.0
        %456 = vst.msk [vmem:[#allocation2 + $0xb] sm:$0x1] %vm444, 0.0
        %457 = vst.msk [vmem:[#allocation2 + $0xc] sm:$0x1] %vm444, 0.0
        %458 = vst.msk [vmem:[#allocation2 + $0xd] sm:$0x1] %vm444, 0.0
        %459 = vst.msk [vmem:[#allocation2 + $0xe] sm:$0x1] %vm444, 0.0
        %460 = vst.msk [vmem:[#allocation2 + $0xf] sm:$0x1] %vm444, 0.0
        %461 = vst.msk [vmem:[#allocation2 + $0x10] sm:$0x1] %vm444, 0.0
        %462 = vst.msk [vmem:[#allocation2 + $0x11] sm:$0x1] %vm444, 0.0
        %463 = vst.msk [vmem:[#allocation2 + $0x12] sm:$0x1] %vm444, 0.0
        %464 = vst.msk [vmem:[#allocation2 + $0x13] sm:$0x1] %vm444, 0.0
        %465 = vst.msk [vmem:[#allocation2 + $0x14] sm:$0x1] %vm444, 0.0
        %466 = vst.msk [vmem:[#allocation2 + $0x15] sm:$0x1] %vm444, 0.0
        %467 = vst.msk [vmem:[#allocation2 + $0x16] sm:$0x1] %vm444, 0.0
        %s468 = scalar_lea.vmem [#allocation2], 4
        %469 = vst.msk [vmem:[%s468] sm:$0x1] %vm444, inf
      $region52: #{local_center_loss_forward.1} parent=47 // pred_fallthru
        _
      %v470 = vld [vmem:[%s417] sm:$0xff]
      %v471 = vld [vmem:[%s417 + $0x8] sm:$0xff]
      %vm472 = vcmp.ne.s32.totalorder %v470, 6
      %vm473 = vcmp.ne.s32.totalorder %v471, 6
      %v474 = vsel %vm472, 1, 0
      %v475 = vsel %vm473, 1, 0
      %v476 = vcvt.s32.f32 %v474
      %v477 = vcvt.s32.f32 %v475
      %vm478 = vcmp.eq.s32.totalorder %v470, 0
      %vm479 = vcmp.eq.s32.totalorder %v471, 0
      %vm480 = vmand %vm478, %vm472
      %vm481 = vmand %vm479, %vm473
      %v482 = vsel %vm480, 1, 0
      %v483 = vsel %vm481, 1, 0
      %v484 = vcvt.s32.f32 %v482
      %v485 = vcvt.s32.f32 %v483
      %vm486 = vcmp.eq.s32.totalorder %v470, 1
      %vm487 = vcmp.eq.s32.totalorder %v471, 1
      %vm488 = vmand %vm486, %vm472
      %vm489 = vmand %vm487, %vm473
      %v490 = vsel %vm488, 1, 0
      %v491 = vsel %vm489, 1, 0
      %v492 = vcvt.s32.f32 %v490
      %v493 = vcvt.s32.f32 %v491
      %vm494 = vcmp.eq.s32.totalorder %v470, 2
      %vm495 = vcmp.eq.s32.totalorder %v471, 2
      %vm496 = vmand %vm494, %vm472
      %vm497 = vmand %vm495, %vm473
      %v498 = vsel %vm496, 1, 0
      %v499 = vsel %vm497, 1, 0
      %v500 = vcvt.s32.f32 %v498
      %v501 = vcvt.s32.f32 %v499
      %vm502 = vcmp.eq.s32.totalorder %v470, 3
      %vm503 = vcmp.eq.s32.totalorder %v471, 3
      %vm504 = vmand %vm502, %vm472
      %vm505 = vmand %vm503, %vm473
      %v506 = vsel %vm504, 1, 0
      %v507 = vsel %vm505, 1, 0
      %v508 = vcvt.s32.f32 %v506
      %v509 = vcvt.s32.f32 %v507
      %vm510 = vcmp.eq.s32.totalorder %v470, 4
      %vm511 = vcmp.eq.s32.totalorder %v471, 4
      %vm512 = vmand %vm510, %vm472
      %vm513 = vmand %vm511, %vm473
      %v514 = vsel %vm512, 1, 0
      %v515 = vsel %vm513, 1, 0
      %v516 = vcvt.s32.f32 %v514
      %v517 = vcvt.s32.f32 %v515
      %vm518 = vcmp.eq.s32.totalorder %v470, 5
      %vm519 = vcmp.eq.s32.totalorder %v471, 5
      %vm520 = vmand %vm518, %vm472
      %vm521 = vmand %vm519, %vm473
      %v522 = vsel %vm520, 1, 0
      %v523 = vsel %vm521, 1, 0
      %v524 = vcvt.s32.f32 %v522
      %v525 = vcvt.s32.f32 %v523
      %v526 = vld [vmem:[#allocation2] sm:$0x1]
      %v527 = vld [vmem:[%s397] sm:$0xff]
      %v528 = vld [vmem:[%s397 + $0x8] sm:$0xff]
      %s529 = scalar_lea.vmem %s397, 16
      %v530 = vld [vmem:[%s529] sm:$0xff]
      %v531 = vld [vmem:[%s529 + $0x8] sm:$0xff]
      %s532 = scalar_lea.vmem %s397, 32
      %v533 = vld [vmem:[%s532] sm:$0xff]
      %v534 = vld [vmem:[%s532 + $0x8] sm:$0xff]
      %s535 = scalar_lea.vmem %s397, 48
      %v536 = vld [vmem:[%s535] sm:$0xff]
      %v537 = vld [vmem:[%s535 + $0x8] sm:$0xff]
      %s538 = scalar_lea.vmem %s397, 64
      %v539 = vld [vmem:[%s538] sm:$0xff]
      %v540 = vld [vmem:[%s538 + $0x8] sm:$0xff]
      %s541 = scalar_lea.vmem %s397, 80
      %v542 = vld [vmem:[%s541] sm:$0xff]
      %v543 = vld [vmem:[%s541 + $0x8] sm:$0xff]
      %v544 = vmax.f32 %v527, %v530
      %v545 = vmax.f32 %v528, %v531
      %v546 = vmax.f32 %v544, %v533
      %v547 = vmax.f32 %v545, %v534
      %v548 = vmax.f32 %v546, %v536
      %v549 = vmax.f32 %v547, %v537
      %v550 = vmax.f32 %v548, %v539
      %v551 = vmax.f32 %v549, %v540
      %v552 = vmax.f32 %v550, %v542
      %v553 = vmax.f32 %v551, %v543
      %v554 = vsub.f32 %v527, %v552
      %v555 = vsub.f32 %v528, %v553
      %v556 = vsub.f32 %v530, %v552
      %v557 = vsub.f32 %v531, %v553
      %v558 = vsub.f32 %v533, %v552
      %v559 = vsub.f32 %v534, %v553
      %v560 = vsub.f32 %v536, %v552
      %v561 = vsub.f32 %v537, %v553
      %v562 = vsub.f32 %v539, %v552
      %v563 = vsub.f32 %v540, %v553
      %v564 = vsub.f32 %v542, %v552
      %v565 = vsub.f32 %v543, %v553
      %v566 = vmul.f32 %v554, 1.442695
      %v567 = vpow.pop %v566
      %v568 = vmul.f32 %v555, 1.442695
      %v569 = vpow.pop %v568
      %v570 = vmul.f32 %v556, 1.442695
      %v571 = vpow.pop %v570
      %v572 = vmul.f32 %v557, 1.442695
      %v573 = vpow.pop %v572
      %v574 = vadd.f32 %v567, %v571
      %v575 = vadd.f32 %v569, %v573
      %v576 = vmul.f32 %v558, 1.442695
      %v577 = vpow.pop %v576
      %v578 = vmul.f32 %v559, 1.442695
      %v579 = vpow.pop %v578
      %v580 = vadd.f32 %v574, %v577
      %v581 = vadd.f32 %v575, %v579
      %v582 = vmul.f32 %v560, 1.442695
      %v583 = vpow.pop %v582
      %v584 = vmul.f32 %v561, 1.442695
      %v585 = vpow.pop %v584
      %v586 = vadd.f32 %v580, %v583
      %v587 = vadd.f32 %v581, %v585
      %v588 = vmul.f32 %v562, 1.442695
      %v589 = vpow.pop %v588
      %v590 = vmul.f32 %v563, 1.442695
      %v591 = vpow.pop %v590
      %v592 = vadd.f32 %v586, %v589
      %v593 = vadd.f32 %v587, %v591
      %v594 = vmul.f32 %v564, 1.442695
      %v595 = vpow.pop %v594
      %v596 = vmul.f32 %v565, 1.442695
      %v597 = vpow.pop %v596
      %v598 = vadd.f32 %v592, %v595
      %v599 = vadd.f32 %v593, %v597
      %v600 = vlog2.pop %v598
      %v601 = vmul.f32 %v600, 0.6931472
      %v602 = vlog2.pop %v599
      %v603 = vmul.f32 %v602, 0.6931472
      %v604 = vmul.f32 %v484, %v554
      %v605 = vmul.f32 %v485, %v555
      %v606 = vmul.f32 %v492, %v556
      %v607 = vmul.f32 %v493, %v557
      %v608 = vadd.f32 %v604, %v606
      %v609 = vadd.f32 %v605, %v607
      %v610 = vmul.f32 %v500, %v558
      %v611 = vmul.f32 %v501, %v559
      %v612 = vadd.f32 %v608, %v610
      %v613 = vadd.f32 %v609, %v611
      %v614 = vmul.f32 %v508, %v560
      %v615 = vmul.f32 %v509, %v561
      %v616 = vadd.f32 %v612, %v614
      %v617 = vadd.f32 %v613, %v615
      %v618 = vmul.f32 %v516, %v562
      %v619 = vmul.f32 %v517, %v563
      %v620 = vadd.f32 %v616, %v618
      %v621 = vadd.f32 %v617, %v619
      %v622 = vmul.f32 %v524, %v564
      %v623 = vmul.f32 %v525, %v565
      %v624 = vadd.f32 %v620, %v622
      %v625 = vadd.f32 %v621, %v623
      %v626 = vsub.f32 %v601, %v624
      %v627 = vsub.f32 %v603, %v625
      %v628 = vmul.f32 %v626, %v476
      %v629 = vmul.f32 %v627, %v477
      %vm630 = vcmask 130048
      %v631 = vsel %vm630, %v628, 0.0
      %v632 = vsel %vm630, %v629, 0.0
      %v633 = vadd.f32 %v631, %v632
      %v634 = vrot.slane %v633, 4
      %v635 = vadd.f32 %v633, %v634
      %v636 = vrot.slane %v635, 2
      %v637 = vadd.f32 %v635, %v636
      %v638 = vrot.slane %v637, 1
      %v639 = vadd.f32 %v637, %v638
      %v640 = vadd.f32 %v526, %v639
      %vm641 = vcmask 122880
      %642 = vst.msk [vmem:[#allocation2] sm:$0x1] %vm641, %v640
      %s643 = scalar_lea.vmem [#allocation2], 1
      %v644 = vld [vmem:[%s643] sm:$0x1]
      %v645 = vld [vmem:[%s407] sm:$0xff]
      %v646 = vld [vmem:[%s407 + $0x8] sm:$0xff]
      %s647 = scalar_lea.vmem %s407, 16
      %v648 = vld [vmem:[%s647] sm:$0xff]
      %v649 = vld [vmem:[%s647 + $0x8] sm:$0xff]
      %s650 = scalar_lea.vmem %s407, 32
      %v651 = vld [vmem:[%s650] sm:$0xff]
      %v652 = vld [vmem:[%s650 + $0x8] sm:$0xff]
      %s653 = scalar_lea.vmem %s407, 48
      %v654 = vld [vmem:[%s653] sm:$0xff]
      %v655 = vld [vmem:[%s653 + $0x8] sm:$0xff]
      %s656 = scalar_lea.vmem %s407, 64
      %v657 = vld [vmem:[%s656] sm:$0xff]
      %v658 = vld [vmem:[%s656 + $0x8] sm:$0xff]
      %s659 = scalar_lea.vmem %s407, 80
      %v660 = vld [vmem:[%s659] sm:$0xff]
      %v661 = vld [vmem:[%s659 + $0x8] sm:$0xff]
      %v662 = vmax.f32 %v645, %v648
      %v663 = vmax.f32 %v646, %v649
      %v664 = vmax.f32 %v662, %v651
      %v665 = vmax.f32 %v663, %v652
      %v666 = vmax.f32 %v664, %v654
      %v667 = vmax.f32 %v665, %v655
      %v668 = vmax.f32 %v666, %v657
      %v669 = vmax.f32 %v667, %v658
      %v670 = vmax.f32 %v668, %v660
      %v671 = vmax.f32 %v669, %v661
      %v672 = vsub.f32 %v645, %v670
      %v673 = vsub.f32 %v646, %v671
      %v674 = vsub.f32 %v648, %v670
      %v675 = vsub.f32 %v649, %v671
      %v676 = vsub.f32 %v651, %v670
      %v677 = vsub.f32 %v652, %v671
      %v678 = vsub.f32 %v654, %v670
      %v679 = vsub.f32 %v655, %v671
      %v680 = vsub.f32 %v657, %v670
      %v681 = vsub.f32 %v658, %v671
      %v682 = vsub.f32 %v660, %v670
      %v683 = vsub.f32 %v661, %v671
      %v684 = vmul.f32 %v672, 1.442695
      %v685 = vpow.pop %v684
      %v686 = vmul.f32 %v673, 1.442695
      %v687 = vpow.pop %v686
      %v688 = vmul.f32 %v674, 1.442695
      %v689 = vpow.pop %v688
      %v690 = vmul.f32 %v675, 1.442695
      %v691 = vpow.pop %v690
      %v692 = vadd.f32 %v685, %v689
      %v693 = vadd.f32 %v687, %v691
      %v694 = vmul.f32 %v676, 1.442695
      %v695 = vpow.pop %v694
      %v696 = vmul.f32 %v677, 1.442695
      %v697 = vpow.pop %v696
      %v698 = vadd.f32 %v692, %v695
      %v699 = vadd.f32 %v693, %v697
      %v700 = vmul.f32 %v678, 1.442695
      %v701 = vpow.pop %v700
      %v702 = vmul.f32 %v679, 1.442695
      %v703 = vpow.pop %v702
      %v704 = vadd.f32 %v698, %v701
      %v705 = vadd.f32 %v699, %v703
      %v706 = vmul.f32 %v680, 1.442695
      %v707 = vpow.pop %v706
      %v708 = vmul.f32 %v681, 1.442695
      %v709 = vpow.pop %v708
      %v710 = vadd.f32 %v704, %v707
      %v711 = vadd.f32 %v705, %v709
      %v712 = vmul.f32 %v682, 1.442695
      %v713 = vpow.pop %v712
      %v714 = vmul.f32 %v683, 1.442695
      %v715 = vpow.pop %v714
      %v716 = vadd.f32 %v710, %v713
      %v717 = vadd.f32 %v711, %v715
      %v718 = vlog2.pop %v716
      %v719 = vmul.f32 %v718, 0.6931472
      %v720 = vlog2.pop %v717
      %v721 = vmul.f32 %v720, 0.6931472
      %v722 = vmul.f32 %v484, %v672
      %v723 = vmul.f32 %v485, %v673
      %v724 = vmul.f32 %v492, %v674
      %v725 = vmul.f32 %v493, %v675
      %v726 = vadd.f32 %v722, %v724
      %v727 = vadd.f32 %v723, %v725
      %v728 = vmul.f32 %v500, %v676
      %v729 = vmul.f32 %v501, %v677
      %v730 = vadd.f32 %v726, %v728
      %v731 = vadd.f32 %v727, %v729
      %v732 = vmul.f32 %v508, %v678
      %v733 = vmul.f32 %v509, %v679
      %v734 = vadd.f32 %v730, %v732
      %v735 = vadd.f32 %v731, %v733
      %v736 = vmul.f32 %v516, %v680
      %v737 = vmul.f32 %v517, %v681
      %v738 = vadd.f32 %v734, %v736
      %v739 = vadd.f32 %v735, %v737
      %v740 = vmul.f32 %v524, %v682
      %v741 = vmul.f32 %v525, %v683
      %v742 = vadd.f32 %v738, %v740
      %v743 = vadd.f32 %v739, %v741
      %v744 = vsub.f32 %v719, %v742
      %v745 = vsub.f32 %v721, %v743
      %v746 = vmul.f32 %v744, %v476
      %v747 = vmul.f32 %v745, %v477
      %v748 = vsel %vm630, %v746, 0.0
      %v749 = vsel %vm630, %v747, 0.0
      %v750 = vadd.f32 %v748, %v749
      %v751 = vrot.slane %v750, 4
      %v752 = vadd.f32 %v750, %v751
      %v753 = vrot.slane %v752, 2
      %v754 = vadd.f32 %v752, %v753
      %v755 = vrot.slane %v754, 1
      %v756 = vadd.f32 %v754, %v755
      %v757 = vadd.f32 %v644, %v756
      %758 = vst.msk [vmem:[%s643] sm:$0x1] %vm641, %v757
      %s759 = scalar_lea.vmem [#allocation2], 2
      %v760 = vld [vmem:[%s759] sm:$0x1]
      %v761 = vsel %vm630, %v476, 0.0
      %v762 = vsel %vm630, %v477, 0.0
      %v763 = vadd.f32 %v761, %v762
      %v764 = vrot.slane %v763, 4
      %v765 = vadd.f32 %v763, %v764
      %v766 = vrot.slane %v765, 2
      %v767 = vadd.f32 %v765, %v766
      %v768 = vrot.slane %v767, 1
      %v769 = vadd.f32 %v767, %v768
      %v770 = vadd.f32 %v760, %v769
      %771 = vst.msk [vmem:[%s759] sm:$0x1] %vm641, %v770
      %v772 = vld [vmem:[%s433] sm:$0xf]
      %v773 = vld [vmem:[%s433 + $0x4] sm:$0xf]
      %v774 = vld [vmem:[%s6] sm:$0xf]
      %v775 = vld [vmem:[%s423] sm:$0xf]
      %v778 = vunpack.c.l.b16 %v772
      %v779 = vunpack.c.l.b16 %v773
      %v780 = vpack.c.b16 %v779, %v778
      %vm781 = vcmask 64512
      %v783 = vsel %vm781, %v780, 0
      %vm785 = vcmask 1043456
      %v787 = vsel %vm785, %v775, 0
      %789 = vmatprep.subr.bf16.mxu0 0
      %790 = vmatpush1.bf16.msra.mxu0 %v787
      %791 = vmatprep.subr.bf16.mxu0 0
      %792 = vmatpush1.bf16.msra.mxu0 0
      %793 = vmatprep.subr.bf16.mxu0 0
      %794 = vmatpush1.bf16.msra.mxu0 0
      %795 = vmatprep.subr.bf16.mxu0 0
      %796 = vmatpush1.bf16.msra.mxu0 0
      %797 = vmatprep.subr.bf16.mxu0 0
      %798 = vmatpush1.bf16.msra.mxu0 0
      %799 = vmatprep.subr.bf16.mxu0 0
      %800 = vmatpush1.bf16.msra.mxu0 0
      %801 = vmatprep.subr.bf16.mxu0 0
      %802 = vmatpush1.bf16.msra.mxu0 0
      %803 = vmatprep.subr.bf16.mxu0 0
      %804 = vmatpush1.bf16.msra.mxu0 0
      %805 = vmatprep.subr.bf16.mxu0 0
      %806 = vmatpush1.bf16.msra.mxu0 0
      %807 = vmatprep.subr.bf16.mxu0 0
      %808 = vmatpush1.bf16.msra.mxu0 0
      %809 = vmatprep.subr.bf16.mxu0 0
      %810 = vmatpush1.bf16.msra.mxu0 0
      %811 = vmatprep.subr.bf16.mxu0 0
      %812 = vmatpush1.bf16.msra.mxu0 0
      %813 = vmatprep.subr.bf16.mxu0 0
      %814 = vmatpush1.bf16.msra.mxu0 0
      %815 = vmatprep.subr.bf16.mxu0 0
      %816 = vmatpush1.bf16.msra.mxu0 0
      %817 = vmatprep.subr.bf16.mxu0 0
      %818 = vmatpush1.bf16.msra.mxu0 0
      %819 = vmatprep.subr.bf16.mxu0 0
      %820 = vmatpush1.bf16.msra.mxu0 0
      %821 = vmatprep.mubr.bf16.mxu0 0
      %822 = vmatmul.mubr.bf16.gmra.mrb[0].mxu0 %v783
      %v823 = vpop.f32.mrb[0].mxu0
      %v824 = vadd.f32 0.0, %v823
      %v825 = vpop.f32.mrb[0].mxu0
      %v826 = vpop.f32.mrb[0].mxu0
      %v827 = vadd.f32 0.0, %v826
      %v828 = vpop.f32.mrb[0].mxu0
      %829 = vdwg.mxu0
      %v830 = vpack.c.bf16 %v827, %v824
      %v832 = vsel %vm781, %v830, 0
      %v835 = vsel %vm785, %v774, 0
      %837 = vmatprep.subr.bf16.mxu0 0
      %838 = vmatpush1.bf16.msra.mxu0 %v835
      %839 = vmatprep.subr.bf16.mxu0 0
      %840 = vmatpush1.bf16.msra.mxu0 0
      %841 = vmatprep.subr.bf16.mxu0 0
      %842 = vmatpush1.bf16.msra.mxu0 0
      %843 = vmatprep.subr.bf16.mxu0 0
      %844 = vmatpush1.bf16.msra.mxu0 0
      %845 = vmatprep.subr.bf16.mxu0 0
      %846 = vmatpush1.bf16.msra.mxu0 0
      %847 = vmatprep.subr.bf16.mxu0 0
      %848 = vmatpush1.bf16.msra.mxu0 0
      %849 = vmatprep.subr.bf16.mxu0 0
      %850 = vmatpush1.bf16.msra.mxu0 0
      %851 = vmatprep.subr.bf16.mxu0 0
      %852 = vmatpush1.bf16.msra.mxu0 0
      %853 = vmatprep.subr.bf16.mxu0 0
      %854 = vmatpush1.bf16.msra.mxu0 0
      %855 = vmatprep.subr.bf16.mxu0 0
      %856 = vmatpush1.bf16.msra.mxu0 0
      %857 = vmatprep.subr.bf16.mxu0 0
      %858 = vmatpush1.bf16.msra.mxu0 0
      %859 = vmatprep.subr.bf16.mxu0 0
      %860 = vmatpush1.bf16.msra.mxu0 0
      %861 = vmatprep.subr.bf16.mxu0 0
      %862 = vmatpush1.bf16.msra.mxu0 0
      %863 = vmatprep.subr.bf16.mxu0 0
      %864 = vmatpush1.bf16.msra.mxu0 0
      %865 = vmatprep.subr.bf16.mxu0 0
      %866 = vmatpush1.bf16.msra.mxu0 0
      %867 = vmatprep.subr.bf16.mxu0 0
      %868 = vmatpush1.bf16.msra.mxu0 0
      %869 = vmatprep.mubr.bf16.mxu0 0
      %870 = vmatmul.mubr.bf16.gmra.mrb[0].mxu0 %v832
      %v871 = vpop.f32.mrb[0].mxu0
      %v872 = vadd.f32 0.0, %v871
      %v873 = vpop.f32.mrb[0].mxu0
      %v874 = vpop.f32.mrb[0].mxu0
      %v875 = vadd.f32 0.0, %v874
      %v876 = vpop.f32.mrb[0].mxu0
      %877 = vdwg.mxu0
      %s878 = scalar_lea.vmem %s423, 4
      %v879 = vld [vmem:[%s878] sm:$0xf]
      %v881 = vsel %vm785, %v879, 0
      %883 = vmatprep.subr.bf16.mxu0 0
      %884 = vmatpush1.bf16.msra.mxu0 %v881
      %885 = vmatprep.subr.bf16.mxu0 0
      %886 = vmatpush1.bf16.msra.mxu0 0
      %887 = vmatprep.subr.bf16.mxu0 0
      %888 = vmatpush1.bf16.msra.mxu0 0
      %889 = vmatprep.subr.bf16.mxu0 0
      %890 = vmatpush1.bf16.msra.mxu0 0
      %891 = vmatprep.subr.bf16.mxu0 0
      %892 = vmatpush1.bf16.msra.mxu0 0
      %893 = vmatprep.subr.bf16.mxu0 0
      %894 = vmatpush1.bf16.msra.mxu0 0
      %895 = vmatprep.subr.bf16.mxu0 0
      %896 = vmatpush1.bf16.msra.mxu0 0
      %897 = vmatprep.subr.bf16.mxu0 0
      %898 = vmatpush1.bf16.msra.mxu0 0
      %899 = vmatprep.subr.bf16.mxu0 0
      %900 = vmatpush1.bf16.msra.mxu0 0
      %901 = vmatprep.subr.bf16.mxu0 0
      %902 = vmatpush1.bf16.msra.mxu0 0
      %903 = vmatprep.subr.bf16.mxu0 0
      %904 = vmatpush1.bf16.msra.mxu0 0
      %905 = vmatprep.subr.bf16.mxu0 0
      %906 = vmatpush1.bf16.msra.mxu0 0
      %907 = vmatprep.subr.bf16.mxu0 0
      %908 = vmatpush1.bf16.msra.mxu0 0
      %909 = vmatprep.subr.bf16.mxu0 0
      %910 = vmatpush1.bf16.msra.mxu0 0
      %911 = vmatprep.subr.bf16.mxu0 0
      %912 = vmatpush1.bf16.msra.mxu0 0
      %913 = vmatprep.subr.bf16.mxu0 0
      %914 = vmatpush1.bf16.msra.mxu0 0
      %915 = vmatprep.mubr.bf16.mxu0 0
      %916 = vmatmul.mubr.bf16.gmra.mrb[0].mxu0 %v783
      %v917 = vpop.f32.mrb[0].mxu0
      %v918 = vadd.f32 0.0, %v917
      %v919 = vpop.f32.mrb[0].mxu0
      %v920 = vpop.f32.mrb[0].mxu0
      %v921 = vadd.f32 0.0, %v920
      %v922 = vpop.f32.mrb[0].mxu0
      %923 = vdwg.mxu0
      %v924 = vpack.c.bf16 %v921, %v918
      %v926 = vsel %vm781, %v924, 0
      %928 = vmatprep.subr.bf16.mxu0 0
      %929 = vmatpush1.bf16.msra.mxu0 %v835
      %930 = vmatprep.subr.bf16.mxu0 0
      %931 = vmatpush1.bf16.msra.mxu0 0
      %932 = vmatprep.subr.bf16.mxu0 0
      %933 = vmatpush1.bf16.msra.mxu0 0
      %934 = vmatprep.subr.bf16.mxu0 0
      %935 = vmatpush1.bf16.msra.mxu0 0
      %936 = vmatprep.subr.bf16.mxu0 0
      %937 = vmatpush1.bf16.msra.mxu0 0
      %938 = vmatprep.subr.bf16.mxu0 0
      %939 = vmatpush1.bf16.msra.mxu0 0
      %940 = vmatprep.subr.bf16.mxu0 0
      %941 = vmatpush1.bf16.msra.mxu0 0
      %942 = vmatprep.subr.bf16.mxu0 0
      %943 = vmatpush1.bf16.msra.mxu0 0
      %944 = vmatprep.subr.bf16.mxu0 0
      %945 = vmatpush1.bf16.msra.mxu0 0
      %946 = vmatprep.subr.bf16.mxu0 0
      %947 = vmatpush1.bf16.msra.mxu0 0
      %948 = vmatprep.subr.bf16.mxu0 0
      %949 = vmatpush1.bf16.msra.mxu0 0
      %950 = vmatprep.subr.bf16.mxu0 0
      %951 = vmatpush1.bf16.msra.mxu0 0
      %952 = vmatprep.subr.bf16.mxu0 0
      %953 = vmatpush1.bf16.msra.mxu0 0
      %954 = vmatprep.subr.bf16.mxu0 0
      %955 = vmatpush1.bf16.msra.mxu0 0
      %956 = vmatprep.subr.bf16.mxu0 0
      %957 = vmatpush1.bf16.msra.mxu0 0
      %958 = vmatprep.subr.bf16.mxu0 0
      %959 = vmatpush1.bf16.msra.mxu0 0
      %960 = vmatprep.mubr.bf16.mxu0 0
      %961 = vmatmul.mubr.bf16.gmra.mrb[0].mxu0 %v926
      %v962 = vpop.f32.mrb[0].mxu0
      %v963 = vadd.f32 0.0, %v962
      %v964 = vpop.f32.mrb[0].mxu0
      %v965 = vpop.f32.mrb[0].mxu0
      %v966 = vadd.f32 0.0, %v965
      %v967 = vpop.f32.mrb[0].mxu0
      %968 = vdwg.mxu0
      %s969 = scalar_lea.vmem %s423, 8
      %v970 = vld [vmem:[%s969] sm:$0xf]
      %v972 = vsel %vm785, %v970, 0
      %974 = vmatprep.subr.bf16.mxu0 0
      %975 = vmatpush1.bf16.msra.mxu0 %v972
      %976 = vmatprep.subr.bf16.mxu0 0
      %977 = vmatpush1.bf16.msra.mxu0 0
      %978 = vmatprep.subr.bf16.mxu0 0
      %979 = vmatpush1.bf16.msra.mxu0 0
      %980 = vmatprep.subr.bf16.mxu0 0
      %981 = vmatpush1.bf16.msra.mxu0 0
      %982 = vmatprep.subr.bf16.mxu0 0
      %983 = vmatpush1.bf16.msra.mxu0 0
      %984 = vmatprep.subr.bf16.mxu0 0
      %985 = vmatpush1.bf16.msra.mxu0 0
      %986 = vmatprep.subr.bf16.mxu0 0
      %987 = vmatpush1.bf16.msra.mxu0 0
      %988 = vmatprep.subr.bf16.mxu0 0
      %989 = vmatpush1.bf16.msra.mxu0 0
      %990 = vmatprep.subr.bf16.mxu0 0
      %991 = vmatpush1.bf16.msra.mxu0 0
      %992 = vmatprep.subr.bf16.mxu0 0
      %993 = vmatpush1.bf16.msra.mxu0 0
      %994 = vmatprep.subr.bf16.mxu0 0
      %995 = vmatpush1.bf16.msra.mxu0 0
      %996 = vmatprep.subr.bf16.mxu0 0
      %997 = vmatpush1.bf16.msra.mxu0 0
      %998 = vmatprep.subr.bf16.mxu0 0
      %999 = vmatpush1.bf16.msra.mxu0 0
      %1000 = vmatprep.subr.bf16.mxu0 0
      %1001 = vmatpush1.bf16.msra.mxu0 0
      %1002 = vmatprep.subr.bf16.mxu0 0
      %1003 = vmatpush1.bf16.msra.mxu0 0
      %1004 = vmatprep.subr.bf16.mxu0 0
      %1005 = vmatpush1.bf16.msra.mxu0 0
      %1006 = vmatprep.mubr.bf16.mxu0 0
      %1007 = vmatmul.mubr.bf16.gmra.mrb[0].mxu0 %v783
      %v1008 = vpop.f32.mrb[0].mxu0
      %v1009 = vadd.f32 0.0, %v1008
      %v1010 = vpop.f32.mrb[0].mxu0
      %v1011 = vpop.f32.mrb[0].mxu0
      %v1012 = vadd.f32 0.0, %v1011
      %v1013 = vpop.f32.mrb[0].mxu0
      %1014 = vdwg.mxu0
      %v1015 = vpack.c.bf16 %v1012, %v1009
      %v1017 = vsel %vm781, %v1015, 0
      %1019 = vmatprep.subr.bf16.mxu0 0
      %1020 = vmatpush1.bf16.msra.mxu0 %v835
      %1021 = vmatprep.subr.bf16.mxu0 0
      %1022 = vmatpush1.bf16.msra.mxu0 0
      %1023 = vmatprep.subr.bf16.mxu0 0
      %1024 = vmatpush1.bf16.msra.mxu0 0
      %1025 = vmatprep.subr.bf16.mxu0 0
      %1026 = vmatpush1.bf16.msra.mxu0 0
      %1027 = vmatprep.subr.bf16.mxu0 0
      %1028 = vmatpush1.bf16.msra.mxu0 0
      %1029 = vmatprep.subr.bf16.mxu0 0
      %1030 = vmatpush1.bf16.msra.mxu0 0
      %1031 = vmatprep.subr.bf16.mxu0 0
      %1032 = vmatpush1.bf16.msra.mxu0 0
      %1033 = vmatprep.subr.bf16.mxu0 0
      %1034 = vmatpush1.bf16.msra.mxu0 0
      %1035 = vmatprep.subr.bf16.mxu0 0
      %1036 = vmatpush1.bf16.msra.mxu0 0
      %1037 = vmatprep.subr.bf16.mxu0 0
      %1038 = vmatpush1.bf16.msra.mxu0 0
      %1039 = vmatprep.subr.bf16.mxu0 0
      %1040 = vmatpush1.bf16.msra.mxu0 0
      %1041 = vmatprep.subr.bf16.mxu0 0
      %1042 = vmatpush1.bf16.msra.mxu0 0
      %1043 = vmatprep.subr.bf16.mxu0 0
      %1044 = vmatpush1.bf16.msra.mxu0 0
      %1045 = vmatprep.subr.bf16.mxu0 0
      %1046 = vmatpush1.bf16.msra.mxu0 0
      %1047 = vmatprep.subr.bf16.mxu0 0
      %1048 = vmatpush1.bf16.msra.mxu0 0
      %1049 = vmatprep.subr.bf16.mxu0 0
      %1050 = vmatpush1.bf16.msra.mxu0 0
      %1051 = vmatprep.mubr.bf16.mxu0 0
      %1052 = vmatmul.mubr.bf16.gmra.mrb[0].mxu0 %v1017
      %v1053 = vpop.f32.mrb[0].mxu0
      %v1054 = vadd.f32 0.0, %v1053
      %v1055 = vpop.f32.mrb[0].mxu0
      %v1056 = vpop.f32.mrb[0].mxu0
      %v1057 = vadd.f32 0.0, %v1056
      %v1058 = vpop.f32.mrb[0].mxu0
      %1059 = vdwg.mxu0
      %s1060 = scalar_lea.vmem %s423, 12
      %v1061 = vld [vmem:[%s1060] sm:$0xf]
      %v1063 = vsel %vm785, %v1061, 0
      %1065 = vmatprep.subr.bf16.mxu0 0
      %1066 = vmatpush1.bf16.msra.mxu0 %v1063
      %1067 = vmatprep.subr.bf16.mxu0 0
      %1068 = vmatpush1.bf16.msra.mxu0 0
      %1069 = vmatprep.subr.bf16.mxu0 0
      %1070 = vmatpush1.bf16.msra.mxu0 0
      %1071 = vmatprep.subr.bf16.mxu0 0
      %1072 = vmatpush1.bf16.msra.mxu0 0
      %1073 = vmatprep.subr.bf16.mxu0 0
      %1074 = vmatpush1.bf16.msra.mxu0 0
      %1075 = vmatprep.subr.bf16.mxu0 0
      %1076 = vmatpush1.bf16.msra.mxu0 0
      %1077 = vmatprep.subr.bf16.mxu0 0
      %1078 = vmatpush1.bf16.msra.mxu0 0
      %1079 = vmatprep.subr.bf16.mxu0 0
      %1080 = vmatpush1.bf16.msra.mxu0 0
      %1081 = vmatprep.subr.bf16.mxu0 0
      %1082 = vmatpush1.bf16.msra.mxu0 0
      %1083 = vmatprep.subr.bf16.mxu0 0
      %1084 = vmatpush1.bf16.msra.mxu0 0
      %1085 = vmatprep.subr.bf16.mxu0 0
      %1086 = vmatpush1.bf16.msra.mxu0 0
      %1087 = vmatprep.subr.bf16.mxu0 0
      %1088 = vmatpush1.bf16.msra.mxu0 0
      %1089 = vmatprep.subr.bf16.mxu0 0
      %1090 = vmatpush1.bf16.msra.mxu0 0
      %1091 = vmatprep.subr.bf16.mxu0 0
      %1092 = vmatpush1.bf16.msra.mxu0 0
      %1093 = vmatprep.subr.bf16.mxu0 0
      %1094 = vmatpush1.bf16.msra.mxu0 0
      %1095 = vmatprep.subr.bf16.mxu0 0
      %1096 = vmatpush1.bf16.msra.mxu0 0
      %1097 = vmatprep.mubr.bf16.mxu0 0
      %1098 = vmatmul.mubr.bf16.gmra.mrb[0].mxu0 %v783
      %v1099 = vpop.f32.mrb[0].mxu0
      %v1100 = vadd.f32 0.0, %v1099
      %v1101 = vpop.f32.mrb[0].mxu0
      %v1102 = vpop.f32.mrb[0].mxu0
      %v1103 = vadd.f32 0.0, %v1102
      %v1104 = vpop.f32.mrb[0].mxu0
      %1105 = vdwg.mxu0
      %v1106 = vpack.c.bf16 %v1103, %v1100
      %v1108 = vsel %vm781, %v1106, 0
      %1110 = vmatprep.subr.bf16.mxu0 0
      %1111 = vmatpush1.bf16.msra.mxu0 %v835
      %1112 = vmatprep.subr.bf16.mxu0 0
      %1113 = vmatpush1.bf16.msra.mxu0 0
      %1114 = vmatprep.subr.bf16.mxu0 0
      %1115 = vmatpush1.bf16.msra.mxu0 0
      %1116 = vmatprep.subr.bf16.mxu0 0
      %1117 = vmatpush1.bf16.msra.mxu0 0
      %1118 = vmatprep.subr.bf16.mxu0 0
      %1119 = vmatpush1.bf16.msra.mxu0 0
      %1120 = vmatprep.subr.bf16.mxu0 0
      %1121 = vmatpush1.bf16.msra.mxu0 0
      %1122 = vmatprep.subr.bf16.mxu0 0
      %1123 = vmatpush1.bf16.msra.mxu0 0
      %1124 = vmatprep.subr.bf16.mxu0 0
      %1125 = vmatpush1.bf16.msra.mxu0 0
      %1126 = vmatprep.subr.bf16.mxu0 0
      %1127 = vmatpush1.bf16.msra.mxu0 0
      %1128 = vmatprep.subr.bf16.mxu0 0
      %1129 = vmatpush1.bf16.msra.mxu0 0
      %1130 = vmatprep.subr.bf16.mxu0 0
      %1131 = vmatpush1.bf16.msra.mxu0 0
      %1132 = vmatprep.subr.bf16.mxu0 0
      %1133 = vmatpush1.bf16.msra.mxu0 0
      %1134 = vmatprep.subr.bf16.mxu0 0
      %1135 = vmatpush1.bf16.msra.mxu0 0
      %1136 = vmatprep.subr.bf16.mxu0 0
      %1137 = vmatpush1.bf16.msra.mxu0 0
      %1138 = vmatprep.subr.bf16.mxu0 0
      %1139 = vmatpush1.bf16.msra.mxu0 0
      %1140 = vmatprep.subr.bf16.mxu0 0
      %1141 = vmatpush1.bf16.msra.mxu0 0
      %1142 = vmatprep.mubr.bf16.mxu0 0
      %1143 = vmatmul.mubr.bf16.gmra.mrb[0].mxu0 %v1108
      %v1144 = vpop.f32.mrb[0].mxu0
      %v1145 = vadd.f32 0.0, %v1144
      %v1146 = vpop.f32.mrb[0].mxu0
      %v1147 = vpop.f32.mrb[0].mxu0
      %v1148 = vadd.f32 0.0, %v1147
      %v1149 = vpop.f32.mrb[0].mxu0
      %1150 = vdwg.mxu0
      %s1151 = scalar_lea.vmem %s423, 16
      %v1152 = vld [vmem:[%s1151] sm:$0xf]
      %v1154 = vsel %vm785, %v1152, 0
      %1156 = vmatprep.subr.bf16.mxu0 0
      %1157 = vmatpush1.bf16.msra.mxu0 %v1154
      %1158 = vmatprep.subr.bf16.mxu0 0
      %1159 = vmatpush1.bf16.msra.mxu0 0
      %1160 = vmatprep.subr.bf16.mxu0 0
      %1161 = vmatpush1.bf16.msra.mxu0 0
      %1162 = vmatprep.subr.bf16.mxu0 0
      %1163 = vmatpush1.bf16.msra.mxu0 0
      %1164 = vmatprep.subr.bf16.mxu0 0
      %1165 = vmatpush1.bf16.msra.mxu0 0
      %1166 = vmatprep.subr.bf16.mxu0 0
      %1167 = vmatpush1.bf16.msra.mxu0 0
      %1168 = vmatprep.subr.bf16.mxu0 0
      %1169 = vmatpush1.bf16.msra.mxu0 0
      %1170 = vmatprep.subr.bf16.mxu0 0
      %1171 = vmatpush1.bf16.msra.mxu0 0
      %1172 = vmatprep.subr.bf16.mxu0 0
      %1173 = vmatpush1.bf16.msra.mxu0 0
      %1174 = vmatprep.subr.bf16.mxu0 0
      %1175 = vmatpush1.bf16.msra.mxu0 0
      %1176 = vmatprep.subr.bf16.mxu0 0
      %1177 = vmatpush1.bf16.msra.mxu0 0
      %1178 = vmatprep.subr.bf16.mxu0 0
      %1179 = vmatpush1.bf16.msra.mxu0 0
      %1180 = vmatprep.subr.bf16.mxu0 0
      %1181 = vmatpush1.bf16.msra.mxu0 0
      %1182 = vmatprep.subr.bf16.mxu0 0
      %1183 = vmatpush1.bf16.msra.mxu0 0
      %1184 = vmatprep.subr.bf16.mxu0 0
      %1185 = vmatpush1.bf16.msra.mxu0 0
      %1186 = vmatprep.subr.bf16.mxu0 0
      %1187 = vmatpush1.bf16.msra.mxu0 0
      %1188 = vmatprep.mubr.bf16.mxu0 0
      %1189 = vmatmul.mubr.bf16.gmra.mrb[0].mxu0 %v783
      %v1190 = vpop.f32.mrb[0].mxu0
      %v1191 = vadd.f32 0.0, %v1190
      %v1192 = vpop.f32.mrb[0].mxu0
      %v1193 = vpop.f32.mrb[0].mxu0
      %v1194 = vadd.f32 0.0, %v1193
      %v1195 = vpop.f32.mrb[0].mxu0
      %1196 = vdwg.mxu0
      %v1197 = vpack.c.bf16 %v1194, %v1191
      %v1199 = vsel %vm781, %v1197, 0
      %1201 = vmatprep.subr.bf16.mxu0 0
      %1202 = vmatpush1.bf16.msra.mxu0 %v835
      %1203 = vmatprep.subr.bf16.mxu0 0
      %1204 = vmatpush1.bf16.msra.mxu0 0
      %1205 = vmatprep.subr.bf16.mxu0 0
      %1206 = vmatpush1.bf16.msra.mxu0 0
      %1207 = vmatprep.subr.bf16.mxu0 0
      %1208 = vmatpush1.bf16.msra.mxu0 0
      %1209 = vmatprep.subr.bf16.mxu0 0
      %1210 = vmatpush1.bf16.msra.mxu0 0
      %1211 = vmatprep.subr.bf16.mxu0 0
      %1212 = vmatpush1.bf16.msra.mxu0 0
      %1213 = vmatprep.subr.bf16.mxu0 0
      %1214 = vmatpush1.bf16.msra.mxu0 0
      %1215 = vmatprep.subr.bf16.mxu0 0
      %1216 = vmatpush1.bf16.msra.mxu0 0
      %1217 = vmatprep.subr.bf16.mxu0 0
      %1218 = vmatpush1.bf16.msra.mxu0 0
      %1219 = vmatprep.subr.bf16.mxu0 0
      %1220 = vmatpush1.bf16.msra.mxu0 0
      %1221 = vmatprep.subr.bf16.mxu0 0
      %1222 = vmatpush1.bf16.msra.mxu0 0
      %1223 = vmatprep.subr.bf16.mxu0 0
      %1224 = vmatpush1.bf16.msra.mxu0 0
      %1225 = vmatprep.subr.bf16.mxu0 0
      %1226 = vmatpush1.bf16.msra.mxu0 0
      %1227 = vmatprep.subr.bf16.mxu0 0
      %1228 = vmatpush1.bf16.msra.mxu0 0
      %1229 = vmatprep.subr.bf16.mxu0 0
      %1230 = vmatpush1.bf16.msra.mxu0 0
      %1231 = vmatprep.subr.bf16.mxu0 0
      %1232 = vmatpush1.bf16.msra.mxu0 0
      %1233 = vmatprep.mubr.bf16.mxu0 0
      %1234 = vmatmul.mubr.bf16.gmra.mrb[0].mxu0 %v1199
      %v1235 = vpop.f32.mrb[0].mxu0
      %v1236 = vadd.f32 0.0, %v1235
      %v1237 = vpop.f32.mrb[0].mxu0
      %v1238 = vpop.f32.mrb[0].mxu0
      %v1239 = vadd.f32 0.0, %v1238
      %v1240 = vpop.f32.mrb[0].mxu0
      %1241 = vdwg.mxu0
      %s1242 = scalar_lea.vmem %s423, 20
      %v1243 = vld [vmem:[%s1242] sm:$0xf]
      %v1245 = vsel %vm785, %v1243, 0
      %1247 = vmatprep.subr.bf16.mxu0 0
      %1248 = vmatpush1.bf16.msra.mxu0 %v1245
      %1249 = vmatprep.subr.bf16.mxu0 0
      %1250 = vmatpush1.bf16.msra.mxu0 0
      %1251 = vmatprep.subr.bf16.mxu0 0
      %1252 = vmatpush1.bf16.msra.mxu0 0
      %1253 = vmatprep.subr.bf16.mxu0 0
      %1254 = vmatpush1.bf16.msra.mxu0 0
      %1255 = vmatprep.subr.bf16.mxu0 0
      %1256 = vmatpush1.bf16.msra.mxu0 0
      %1257 = vmatprep.subr.bf16.mxu0 0
      %1258 = vmatpush1.bf16.msra.mxu0 0
      %1259 = vmatprep.subr.bf16.mxu0 0
      %1260 = vmatpush1.bf16.msra.mxu0 0
      %1261 = vmatprep.subr.bf16.mxu0 0
      %1262 = vmatpush1.bf16.msra.mxu0 0
      %1263 = vmatprep.subr.bf16.mxu0 0
      %1264 = vmatpush1.bf16.msra.mxu0 0
      %1265 = vmatprep.subr.bf16.mxu0 0
      %1266 = vmatpush1.bf16.msra.mxu0 0
      %1267 = vmatprep.subr.bf16.mxu0 0
      %1268 = vmatpush1.bf16.msra.mxu0 0
      %1269 = vmatprep.subr.bf16.mxu0 0
      %1270 = vmatpush1.bf16.msra.mxu0 0
      %1271 = vmatprep.subr.bf16.mxu0 0
      %1272 = vmatpush1.bf16.msra.mxu0 0
      %1273 = vmatprep.subr.bf16.mxu0 0
      %1274 = vmatpush1.bf16.msra.mxu0 0
      %1275 = vmatprep.subr.bf16.mxu0 0
      %1276 = vmatpush1.bf16.msra.mxu0 0
      %1277 = vmatprep.subr.bf16.mxu0 0
      %1278 = vmatpush1.bf16.msra.mxu0 0
      %1279 = vmatprep.mubr.bf16.mxu0 0
      %1280 = vmatmul.mubr.bf16.gmra.mrb[0].mxu0 %v783
      %v1281 = vpop.f32.mrb[0].mxu0
      %v1282 = vadd.f32 0.0, %v1281
      %v1283 = vpop.f32.mrb[0].mxu0
      %v1284 = vpop.f32.mrb[0].mxu0
      %v1285 = vadd.f32 0.0, %v1284
      %v1286 = vpop.f32.mrb[0].mxu0
      %1287 = vdwg.mxu0
      %v1288 = vpack.c.bf16 %v1285, %v1282
      %v1290 = vsel %vm781, %v1288, 0
      %1292 = vmatprep.subr.bf16.mxu0 0
      %1293 = vmatpush1.bf16.msra.mxu0 %v835
      %1294 = vmatprep.subr.bf16.mxu0 0
      %1295 = vmatpush1.bf16.msra.mxu0 0
      %1296 = vmatprep.subr.bf16.mxu0 0
      %1297 = vmatpush1.bf16.msra.mxu0 0
      %1298 = vmatprep.subr.bf16.mxu0 0
      %1299 = vmatpush1.bf16.msra.mxu0 0
      %1300 = vmatprep.subr.bf16.mxu0 0
      %1301 = vmatpush1.bf16.msra.mxu0 0
      %1302 = vmatprep.subr.bf16.mxu0 0
      %1303 = vmatpush1.bf16.msra.mxu0 0
      %1304 = vmatprep.subr.bf16.mxu0 0
      %1305 = vmatpush1.bf16.msra.mxu0 0
      %1306 = vmatprep.subr.bf16.mxu0 0
      %1307 = vmatpush1.bf16.msra.mxu0 0
      %1308 = vmatprep.subr.bf16.mxu0 0
      %1309 = vmatpush1.bf16.msra.mxu0 0
      %1310 = vmatprep.subr.bf16.mxu0 0
      %1311 = vmatpush1.bf16.msra.mxu0 0
      %1312 = vmatprep.subr.bf16.mxu0 0
      %1313 = vmatpush1.bf16.msra.mxu0 0
      %1314 = vmatprep.subr.bf16.mxu0 0
      %1315 = vmatpush1.bf16.msra.mxu0 0
      %1316 = vmatprep.subr.bf16.mxu0 0
      %1317 = vmatpush1.bf16.msra.mxu0 0
      %1318 = vmatprep.subr.bf16.mxu0 0
      %1319 = vmatpush1.bf16.msra.mxu0 0
      %1320 = vmatprep.subr.bf16.mxu0 0
      %1321 = vmatpush1.bf16.msra.mxu0 0
      %1322 = vmatprep.subr.bf16.mxu0 0
      %1323 = vmatpush1.bf16.msra.mxu0 0
      %1324 = vmatprep.mubr.bf16.mxu0 0
      %1325 = vmatmul.mubr.bf16.gmra.mrb[0].mxu0 %v1290
      %v1326 = vpop.f32.mrb[0].mxu0
      %v1327 = vadd.f32 0.0, %v1326
      %v1328 = vpop.f32.mrb[0].mxu0
      %v1329 = vpop.f32.mrb[0].mxu0
      %v1330 = vadd.f32 0.0, %v1329
      %v1331 = vpop.f32.mrb[0].mxu0
      %1332 = vdwg.mxu0
      %v1333 = vmax.f32 %v872, %v963
      %v1334 = vmax.f32 %v875, %v966
      %v1335 = vmax.f32 %v1333, %v1054
      %v1336 = vmax.f32 %v1334, %v1057
      %v1337 = vmax.f32 %v1335, %v1145
      %v1338 = vmax.f32 %v1336, %v1148
      %v1339 = vmax.f32 %v1337, %v1236
      %v1340 = vmax.f32 %v1338, %v1239
      %v1341 = vmax.f32 %v1339, %v1327
      %v1342 = vmax.f32 %v1340, %v1330
      %v1343 = vsub.f32 %v872, %v1341
      %v1344 = vsub.f32 %v875, %v1342
      %v1345 = vmul.f32 %v1343, 1.442695
      %v1346 = vpow.pop %v1345
      %v1347 = vmul.f32 %v1344, 1.442695
      %v1348 = vpow.pop %v1347
      %v1349 = vsub.f32 %v963, %v1341
      %v1350 = vsub.f32 %v966, %v1342
      %v1351 = vmul.f32 %v1349, 1.442695
      %v1352 = vpow.pop %v1351
      %v1353 = vmul.f32 %v1350, 1.442695
      %v1354 = vpow.pop %v1353
      %v1355 = vsub.f32 %v1054, %v1341
      %v1356 = vsub.f32 %v1057, %v1342
      %v1357 = vmul.f32 %v1355, 1.442695
      %v1358 = vpow.pop %v1357
      %v1359 = vmul.f32 %v1356, 1.442695
      %v1360 = vpow.pop %v1359
      %v1361 = vsub.f32 %v1145, %v1341
      %v1362 = vsub.f32 %v1148, %v1342
      %v1363 = vmul.f32 %v1361, 1.442695
      %v1364 = vpow.pop %v1363
      %v1365 = vmul.f32 %v1362, 1.442695
      %v1366 = vpow.pop %v1365
      %v1367 = vsub.f32 %v1236, %v1341
      %v1368 = vsub.f32 %v1239, %v1342
      %v1369 = vmul.f32 %v1367, 1.442695
      %v1370 = vpow.pop %v1369
      %v1371 = vmul.f32 %v1368, 1.442695
      %v1372 = vpow.pop %v1371
      %v1373 = vsub.f32 %v1327, %v1341
      %v1374 = vsub.f32 %v1330, %v1342
      %v1375 = vmul.f32 %v1373, 1.442695
      %v1376 = vpow.pop %v1375
      %v1377 = vmul.f32 %v1374, 1.442695
      %v1378 = vpow.pop %v1377
      %v1379 = vadd.f32 %v1346, %v1352
      %v1380 = vadd.f32 %v1348, %v1354
      %v1381 = vadd.f32 %v1379, %v1358
      %v1382 = vadd.f32 %v1380, %v1360
      %v1383 = vadd.f32 %v1381, %v1364
      %v1384 = vadd.f32 %v1382, %v1366
      %v1385 = vadd.f32 %v1383, %v1370
      %v1386 = vadd.f32 %v1384, %v1372
      %v1387 = vadd.f32 %v1385, %v1376
      %v1388 = vadd.f32 %v1386, %v1378
      %v1389 = vrcp.pop %v1387
      %v1390 = vrcp.pop %v1388
      %v1391 = vmul.f32 %v1346, %v1389
      %v1392 = vmul.f32 %v1348, %v1390
      %v1393 = vmul.f32 %v1391, %v476
      %v1394 = vmul.f32 %v1392, %v477
      %s1395 = scalar_lea.vmem [#allocation2], 5
      %v1396 = vld [vmem:[%s1395] sm:$0x1]
      %v1397 = vmul.f32 %v1393, %v484
      %v1398 = vmul.f32 %v1394, %v485
      %v1399 = vsel %vm630, %v1397, 0.0
      %v1400 = vsel %vm630, %v1398, 0.0
      %v1401 = vadd.f32 %v1399, %v1400
      %v1402 = vrot.slane %v1401, 4
      %v1403 = vadd.f32 %v1401, %v1402
      %v1404 = vrot.slane %v1403, 2
      %v1405 = vadd.f32 %v1403, %v1404
      %v1406 = vrot.slane %v1405, 1
      %v1407 = vadd.f32 %v1405, %v1406
      %v1408 = vadd.f32 %v1396, %v1407
      %1409 = vst.msk [vmem:[%s1395] sm:$0x1] %vm641, %v1408
      %s1410 = scalar_lea.vmem [#allocation2], 11
      %v1411 = vld [vmem:[%s1410] sm:$0x1]
      %v1412 = vsel %vm630, %v1393, 0.0
      %v1413 = vsel %vm630, %v1394, 0.0
      %v1414 = vadd.f32 %v1412, %v1413
      %v1415 = vrot.slane %v1414, 4
      %v1416 = vadd.f32 %v1414, %v1415
      %v1417 = vrot.slane %v1416, 2
      %v1418 = vadd.f32 %v1416, %v1417
      %v1419 = vrot.slane %v1418, 1
      %v1420 = vadd.f32 %v1418, %v1419
      %v1421 = vadd.f32 %v1411, %v1420
      %1422 = vst.msk [vmem:[%s1410] sm:$0x1] %vm641, %v1421
      %s1423 = scalar_lea.vmem [#allocation2], 17
      %v1424 = vld [vmem:[%s1423] sm:$0x1]
      %v1425 = vsel %vm630, %v484, 0.0
      %v1426 = vsel %vm630, %v485, 0.0
      %v1427 = vadd.f32 %v1425, %v1426
      %v1428 = vrot.slane %v1427, 4
      %v1429 = vadd.f32 %v1427, %v1428
      %v1430 = vrot.slane %v1429, 2
      %v1431 = vadd.f32 %v1429, %v1430
      %v1432 = vrot.slane %v1431, 1
      %v1433 = vadd.f32 %v1431, %v1432
      %v1434 = vadd.f32 %v1424, %v1433
      %1435 = vst.msk [vmem:[%s1423] sm:$0x1] %vm641, %v1434
      %v1436 = vmul.f32 %v1352, %v1389
      %v1437 = vmul.f32 %v1354, %v1390
      %v1438 = vmul.f32 %v1436, %v476
      %v1439 = vmul.f32 %v1437, %v477
      %s1440 = scalar_lea.vmem [#allocation2], 6
      %v1441 = vld [vmem:[%s1440] sm:$0x1]
      %v1442 = vmul.f32 %v1438, %v492
      %v1443 = vmul.f32 %v1439, %v493
      %v1444 = vsel %vm630, %v1442, 0.0
      %v1445 = vsel %vm630, %v1443, 0.0
      %v1446 = vadd.f32 %v1444, %v1445
      %v1447 = vrot.slane %v1446, 4
      %v1448 = vadd.f32 %v1446, %v1447
      %v1449 = vrot.slane %v1448, 2
      %v1450 = vadd.f32 %v1448, %v1449
      %v1451 = vrot.slane %v1450, 1
      %v1452 = vadd.f32 %v1450, %v1451
      %v1453 = vadd.f32 %v1441, %v1452
      %1454 = vst.msk [vmem:[%s1440] sm:$0x1] %vm641, %v1453
      %s1455 = scalar_lea.vmem [#allocation2], 12
      %v1456 = vld [vmem:[%s1455] sm:$0x1]
      %v1457 = vsel %vm630, %v1438, 0.0
      %v1458 = vsel %vm630, %v1439, 0.0
      %v1459 = vadd.f32 %v1457, %v1458
      %v1460 = vrot.slane %v1459, 4
      %v1461 = vadd.f32 %v1459, %v1460
      %v1462 = vrot.slane %v1461, 2
      %v1463 = vadd.f32 %v1461, %v1462
      %v1464 = vrot.slane %v1463, 1
      %v1465 = vadd.f32 %v1463, %v1464
      %v1466 = vadd.f32 %v1456, %v1465
      %1467 = vst.msk [vmem:[%s1455] sm:$0x1] %vm641, %v1466
      %s1468 = scalar_lea.vmem [#allocation2], 18
      %v1469 = vld [vmem:[%s1468] sm:$0x1]
      %v1470 = vsel %vm630, %v492, 0.0
      %v1471 = vsel %vm630, %v493, 0.0
      %v1472 = vadd.f32 %v1470, %v1471
      %v1473 = vrot.slane %v1472, 4
      %v1474 = vadd.f32 %v1472, %v1473
      %v1475 = vrot.slane %v1474, 2
      %v1476 = vadd.f32 %v1474, %v1475
      %v1477 = vrot.slane %v1476, 1
      %v1478 = vadd.f32 %v1476, %v1477
      %v1479 = vadd.f32 %v1469, %v1478
      %1480 = vst.msk [vmem:[%s1468] sm:$0x1] %vm641, %v1479
      %v1481 = vmul.f32 %v1358, %v1389
      %v1482 = vmul.f32 %v1360, %v1390
      %v1483 = vmul.f32 %v1481, %v476
      %v1484 = vmul.f32 %v1482, %v477
      %s1485 = scalar_lea.vmem [#allocation2], 7
      %v1486 = vld [vmem:[%s1485] sm:$0x1]
      %v1487 = vmul.f32 %v1483, %v500
      %v1488 = vmul.f32 %v1484, %v501
      %v1489 = vsel %vm630, %v1487, 0.0
      %v1490 = vsel %vm630, %v1488, 0.0
      %v1491 = vadd.f32 %v1489, %v1490
      %v1492 = vrot.slane %v1491, 4
      %v1493 = vadd.f32 %v1491, %v1492
      %v1494 = vrot.slane %v1493, 2
      %v1495 = vadd.f32 %v1493, %v1494
      %v1496 = vrot.slane %v1495, 1
      %v1497 = vadd.f32 %v1495, %v1496
      %v1498 = vadd.f32 %v1486, %v1497
      %1499 = vst.msk [vmem:[%s1485] sm:$0x1] %vm641, %v1498
      %s1500 = scalar_lea.vmem [#allocation2], 13
      %v1501 = vld [vmem:[%s1500] sm:$0x1]
      %v1502 = vsel %vm630, %v1483, 0.0
      %v1503 = vsel %vm630, %v1484, 0.0
      %v1504 = vadd.f32 %v1502, %v1503
      %v1505 = vrot.slane %v1504, 4
      %v1506 = vadd.f32 %v1504, %v1505
      %v1507 = vrot.slane %v1506, 2
      %v1508 = vadd.f32 %v1506, %v1507
      %v1509 = vrot.slane %v1508, 1
      %v1510 = vadd.f32 %v1508, %v1509
      %v1511 = vadd.f32 %v1501, %v1510
      %1512 = vst.msk [vmem:[%s1500] sm:$0x1] %vm641, %v1511
      %s1513 = scalar_lea.vmem [#allocation2], 19
      %v1514 = vld [vmem:[%s1513] sm:$0x1]
      %v1515 = vsel %vm630, %v500, 0.0
      %v1516 = vsel %vm630, %v501, 0.0
      %v1517 = vadd.f32 %v1515, %v1516
      %v1518 = vrot.slane %v1517, 4
      %v1519 = vadd.f32 %v1517, %v1518
      %v1520 = vrot.slane %v1519, 2
      %v1521 = vadd.f32 %v1519, %v1520
      %v1522 = vrot.slane %v1521, 1
      %v1523 = vadd.f32 %v1521, %v1522
      %v1524 = vadd.f32 %v1514, %v1523
      %1525 = vst.msk [vmem:[%s1513] sm:$0x1] %vm641, %v1524
      %v1526 = vmul.f32 %v1364, %v1389
      %v1527 = vmul.f32 %v1366, %v1390
      %v1528 = vmul.f32 %v1526, %v476
      %v1529 = vmul.f32 %v1527, %v477
      %s1530 = scalar_lea.vmem [#allocation2], 8
      %v1531 = vld [vmem:[%s1530] sm:$0x1]
      %v1532 = vmul.f32 %v1528, %v508
      %v1533 = vmul.f32 %v1529, %v509
      %v1534 = vsel %vm630, %v1532, 0.0
      %v1535 = vsel %vm630, %v1533, 0.0
      %v1536 = vadd.f32 %v1534, %v1535
      %v1537 = vrot.slane %v1536, 4
      %v1538 = vadd.f32 %v1536, %v1537
      %v1539 = vrot.slane %v1538, 2
      %v1540 = vadd.f32 %v1538, %v1539
      %v1541 = vrot.slane %v1540, 1
      %v1542 = vadd.f32 %v1540, %v1541
      %v1543 = vadd.f32 %v1531, %v1542
      %1544 = vst.msk [vmem:[%s1530] sm:$0x1] %vm641, %v1543
      %s1545 = scalar_lea.vmem [#allocation2], 14
      %v1546 = vld [vmem:[%s1545] sm:$0x1]
      %v1547 = vsel %vm630, %v1528, 0.0
      %v1548 = vsel %vm630, %v1529, 0.0
      %v1549 = vadd.f32 %v1547, %v1548
      %v1550 = vrot.slane %v1549, 4
      %v1551 = vadd.f32 %v1549, %v1550
      %v1552 = vrot.slane %v1551, 2
      %v1553 = vadd.f32 %v1551, %v1552
      %v1554 = vrot.slane %v1553, 1
      %v1555 = vadd.f32 %v1553, %v1554
      %v1556 = vadd.f32 %v1546, %v1555
      %1557 = vst.msk [vmem:[%s1545] sm:$0x1] %vm641, %v1556
      %s1558 = scalar_lea.vmem [#allocation2], 20
      %v1559 = vld [vmem:[%s1558] sm:$0x1]
      %v1560 = vsel %vm630, %v508, 0.0
      %v1561 = vsel %vm630, %v509, 0.0
      %v1562 = vadd.f32 %v1560, %v1561
      %v1563 = vrot.slane %v1562, 4
      %v1564 = vadd.f32 %v1562, %v1563
      %v1565 = vrot.slane %v1564, 2
      %v1566 = vadd.f32 %v1564, %v1565
      %v1567 = vrot.slane %v1566, 1
      %v1568 = vadd.f32 %v1566, %v1567
      %v1569 = vadd.f32 %v1559, %v1568
      %1570 = vst.msk [vmem:[%s1558] sm:$0x1] %vm641, %v1569
      %v1571 = vmul.f32 %v1370, %v1389
      %v1572 = vmul.f32 %v1372, %v1390
      %v1573 = vmul.f32 %v1571, %v476
      %v1574 = vmul.f32 %v1572, %v477
      %s1575 = scalar_lea.vmem [#allocation2], 9
      %v1576 = vld [vmem:[%s1575] sm:$0x1]
      %v1577 = vmul.f32 %v1573, %v516
      %v1578 = vmul.f32 %v1574, %v517
      %v1579 = vsel %vm630, %v1577, 0.0
      %v1580 = vsel %vm630, %v1578, 0.0
      %v1581 = vadd.f32 %v1579, %v1580
      %v1582 = vrot.slane %v1581, 4
      %v1583 = vadd.f32 %v1581, %v1582
      %v1584 = vrot.slane %v1583, 2
      %v1585 = vadd.f32 %v1583, %v1584
      %v1586 = vrot.slane %v1585, 1
      %v1587 = vadd.f32 %v1585, %v1586
      %v1588 = vadd.f32 %v1576, %v1587
      %1589 = vst.msk [vmem:[%s1575] sm:$0x1] %vm641, %v1588
      %s1590 = scalar_lea.vmem [#allocation2], 15
      %v1591 = vld [vmem:[%s1590] sm:$0x1]
      %v1592 = vsel %vm630, %v1573, 0.0
      %v1593 = vsel %vm630, %v1574, 0.0
      %v1594 = vadd.f32 %v1592, %v1593
      %v1595 = vrot.slane %v1594, 4
      %v1596 = vadd.f32 %v1594, %v1595
      %v1597 = vrot.slane %v1596, 2
      %v1598 = vadd.f32 %v1596, %v1597
      %v1599 = vrot.slane %v1598, 1
      %v1600 = vadd.f32 %v1598, %v1599
      %v1601 = vadd.f32 %v1591, %v1600
      %1602 = vst.msk [vmem:[%s1590] sm:$0x1] %vm641, %v1601
      %s1603 = scalar_lea.vmem [#allocation2], 21
      %v1604 = vld [vmem:[%s1603] sm:$0x1]
      %v1605 = vsel %vm630, %v516, 0.0
      %v1606 = vsel %vm630, %v517, 0.0
      %v1607 = vadd.f32 %v1605, %v1606
      %v1608 = vrot.slane %v1607, 4
      %v1609 = vadd.f32 %v1607, %v1608
      %v1610 = vrot.slane %v1609, 2
      %v1611 = vadd.f32 %v1609, %v1610
      %v1612 = vrot.slane %v1611, 1
      %v1613 = vadd.f32 %v1611, %v1612
      %v1614 = vadd.f32 %v1604, %v1613
      %1615 = vst.msk [vmem:[%s1603] sm:$0x1] %vm641, %v1614
      %v1616 = vmul.f32 %v1376, %v1389
      %v1617 = vmul.f32 %v1378, %v1390
      %v1618 = vmul.f32 %v1616, %v476
      %v1619 = vmul.f32 %v1617, %v477
      %s1620 = scalar_lea.vmem [#allocation2], 10
      %v1621 = vld [vmem:[%s1620] sm:$0x1]
      %v1622 = vmul.f32 %v1618, %v524
      %v1623 = vmul.f32 %v1619, %v525
      %v1624 = vsel %vm630, %v1622, 0.0
      %v1625 = vsel %vm630, %v1623, 0.0
      %v1626 = vadd.f32 %v1624, %v1625
      %v1627 = vrot.slane %v1626, 4
      %v1628 = vadd.f32 %v1626, %v1627
      %v1629 = vrot.slane %v1628, 2
      %v1630 = vadd.f32 %v1628, %v1629
      %v1631 = vrot.slane %v1630, 1
      %v1632 = vadd.f32 %v1630, %v1631
      %v1633 = vadd.f32 %v1621, %v1632
      %1634 = vst.msk [vmem:[%s1620] sm:$0x1] %vm641, %v1633
      %s1635 = scalar_lea.vmem [#allocation2], 16
      %v1636 = vld [vmem:[%s1635] sm:$0x1]
      %v1637 = vsel %vm630, %v1618, 0.0
      %v1638 = vsel %vm630, %v1619, 0.0
      %v1639 = vadd.f32 %v1637, %v1638
      %v1640 = vrot.slane %v1639, 4
      %v1641 = vadd.f32 %v1639, %v1640
      %v1642 = vrot.slane %v1641, 2
      %v1643 = vadd.f32 %v1641, %v1642
      %v1644 = vrot.slane %v1643, 1
      %v1645 = vadd.f32 %v1643, %v1644
      %v1646 = vadd.f32 %v1636, %v1645
      %1647 = vst.msk [vmem:[%s1635] sm:$0x1] %vm641, %v1646
      %s1648 = scalar_lea.vmem [#allocation2], 22
      %v1649 = vld [vmem:[%s1648] sm:$0x1]
      %v1650 = vsel %vm630, %v524, 0.0
      %v1651 = vsel %vm630, %v525, 0.0
      %v1652 = vadd.f32 %v1650, %v1651
      %v1653 = vrot.slane %v1652, 4
      %v1654 = vadd.f32 %v1652, %v1653
      %v1655 = vrot.slane %v1654, 2
      %v1656 = vadd.f32 %v1654, %v1655
      %v1657 = vrot.slane %v1656, 1
      %v1658 = vadd.f32 %v1656, %v1657
      %v1659 = vadd.f32 %v1649, %v1658
      %1660 = vst.msk [vmem:[%s1648] sm:$0x1] %vm641, %v1659
      %v1661 = vld [vmem:[%s428] sm:$0xf]
      %v1663 = vsel %vm785, %v1661, 0
      %1665 = vmatprep.subr.bf16.mxu0 0
      %1666 = vmatpush1.bf16.msra.mxu0 %v1663
      %1667 = vmatprep.subr.bf16.mxu0 0
      %1668 = vmatpush1.bf16.msra.mxu0 0
      %1669 = vmatprep.subr.bf16.mxu0 0
      %1670 = vmatpush1.bf16.msra.mxu0 0
      %1671 = vmatprep.subr.bf16.mxu0 0
      %1672 = vmatpush1.bf16.msra.mxu0 0
      %1673 = vmatprep.subr.bf16.mxu0 0
      %1674 = vmatpush1.bf16.msra.mxu0 0
      %1675 = vmatprep.subr.bf16.mxu0 0
      %1676 = vmatpush1.bf16.msra.mxu0 0
      %1677 = vmatprep.subr.bf16.mxu0 0
      %1678 = vmatpush1.bf16.msra.mxu0 0
      %1679 = vmatprep.subr.bf16.mxu0 0
      %1680 = vmatpush1.bf16.msra.mxu0 0
      %1681 = vmatprep.subr.bf16.mxu0 0
      %1682 = vmatpush1.bf16.msra.mxu0 0
      %1683 = vmatprep.subr.bf16.mxu0 0
      %1684 = vmatpush1.bf16.msra.mxu0 0
      %1685 = vmatprep.subr.bf16.mxu0 0
      %1686 = vmatpush1.bf16.msra.mxu0 0
      %1687 = vmatprep.subr.bf16.mxu0 0
      %1688 = vmatpush1.bf16.msra.mxu0 0
      %1689 = vmatprep.subr.bf16.mxu0 0
      %1690 = vmatpush1.bf16.msra.mxu0 0
      %1691 = vmatprep.subr.bf16.mxu0 0
      %1692 = vmatpush1.bf16.msra.mxu0 0
      %1693 = vmatprep.subr.bf16.mxu0 0
      %1694 = vmatpush1.bf16.msra.mxu0 0
      %1695 = vmatprep.subr.bf16.mxu0 0
      %1696 = vmatpush1.bf16.msra.mxu0 0
      %1697 = vmatprep.mubr.bf16.mxu0 0
      %1698 = vmatmul.mubr.bf16.gmra.mrb[0].mxu0 %v783
      %v1699 = vpop.f32.mrb[0].mxu0
      %v1700 = vadd.f32 0.0, %v1699
      %v1701 = vpop.f32.mrb[0].mxu0
      %v1702 = vpop.f32.mrb[0].mxu0
      %v1703 = vadd.f32 0.0, %v1702
      %v1704 = vpop.f32.mrb[0].mxu0
      %1705 = vdwg.mxu0
      %v1706 = vpack.c.bf16 %v1703, %v1700
      %v1708 = vsel %vm781, %v1706, 0
      %1710 = vmatprep.subr.bf16.mxu0 0
      %1711 = vmatpush1.bf16.msra.mxu0 %v835
      %1712 = vmatprep.subr.bf16.mxu0 0
      %1713 = vmatpush1.bf16.msra.mxu0 0
      %1714 = vmatprep.subr.bf16.mxu0 0
      %1715 = vmatpush1.bf16.msra.mxu0 0
      %1716 = vmatprep.subr.bf16.mxu0 0
      %1717 = vmatpush1.bf16.msra.mxu0 0
      %1718 = vmatprep.subr.bf16.mxu0 0
      %1719 = vmatpush1.bf16.msra.mxu0 0
      %1720 = vmatprep.subr.bf16.mxu0 0
      %1721 = vmatpush1.bf16.msra.mxu0 0
      %1722 = vmatprep.subr.bf16.mxu0 0
      %1723 = vmatpush1.bf16.msra.mxu0 0
      %1724 = vmatprep.subr.bf16.mxu0 0
      %1725 = vmatpush1.bf16.msra.mxu0 0
      %1726 = vmatprep.subr.bf16.mxu0 0
      %1727 = vmatpush1.bf16.msra.mxu0 0
      %1728 = vmatprep.subr.bf16.mxu0 0
      %1729 = vmatpush1.bf16.msra.mxu0 0
      %1730 = vmatprep.subr.bf16.mxu0 0
      %1731 = vmatpush1.bf16.msra.mxu0 0
      %1732 = vmatprep.subr.bf16.mxu0 0
      %1733 = vmatpush1.bf16.msra.mxu0 0
      %1734 = vmatprep.subr.bf16.mxu0 0
      %1735 = vmatpush1.bf16.msra.mxu0 0
      %1736 = vmatprep.subr.bf16.mxu0 0
      %1737 = vmatpush1.bf16.msra.mxu0 0
      %1738 = vmatprep.subr.bf16.mxu0 0
      %1739 = vmatpush1.bf16.msra.mxu0 0
      %1740 = vmatprep.subr.bf16.mxu0 0
      %1741 = vmatpush1.bf16.msra.mxu0 0
      %1742 = vmatprep.mubr.bf16.mxu0 0
      %1743 = vmatmul.mubr.bf16.gmra.mrb[0].mxu0 %v1708
      %v1744 = vpop.f32.mrb[0].mxu0
      %v1745 = vadd.f32 0.0, %v1744
      %v1746 = vpop.f32.mrb[0].mxu0
      %v1747 = vpop.f32.mrb[0].mxu0
      %v1748 = vadd.f32 0.0, %v1747
      %v1749 = vpop.f32.mrb[0].mxu0
      %1750 = vdwg.mxu0
      %s1751 = scalar_lea.vmem %s428, 24
      %v1752 = vld [vmem:[%s1751] sm:$0xf]
      %v1754 = vsel %vm785, %v1752, 0
      %1756 = vmatprep.subr.bf16.mxu0 0
      %1757 = vmatpush1.bf16.msra.mxu0 %v1754
      %1758 = vmatprep.subr.bf16.mxu0 0
      %1759 = vmatpush1.bf16.msra.mxu0 0
      %1760 = vmatprep.subr.bf16.mxu0 0
      %1761 = vmatpush1.bf16.msra.mxu0 0
      %1762 = vmatprep.subr.bf16.mxu0 0
      %1763 = vmatpush1.bf16.msra.mxu0 0
      %1764 = vmatprep.subr.bf16.mxu0 0
      %1765 = vmatpush1.bf16.msra.mxu0 0
      %1766 = vmatprep.subr.bf16.mxu0 0
      %1767 = vmatpush1.bf16.msra.mxu0 0
      %1768 = vmatprep.subr.bf16.mxu0 0
      %1769 = vmatpush1.bf16.msra.mxu0 0
      %1770 = vmatprep.subr.bf16.mxu0 0
      %1771 = vmatpush1.bf16.msra.mxu0 0
      %1772 = vmatprep.subr.bf16.mxu0 0
      %1773 = vmatpush1.bf16.msra.mxu0 0
      %1774 = vmatprep.subr.bf16.mxu0 0
      %1775 = vmatpush1.bf16.msra.mxu0 0
      %1776 = vmatprep.subr.bf16.mxu0 0
      %1777 = vmatpush1.bf16.msra.mxu0 0
      %1778 = vmatprep.subr.bf16.mxu0 0
      %1779 = vmatpush1.bf16.msra.mxu0 0
      %1780 = vmatprep.subr.bf16.mxu0 0
      %1781 = vmatpush1.bf16.msra.mxu0 0
      %1782 = vmatprep.subr.bf16.mxu0 0
      %1783 = vmatpush1.bf16.msra.mxu0 0
      %1784 = vmatprep.subr.bf16.mxu0 0
      %1785 = vmatpush1.bf16.msra.mxu0 0
      %1786 = vmatprep.subr.bf16.mxu0 0
      %1787 = vmatpush1.bf16.msra.mxu0 0
      %1788 = vmatprep.mubr.bf16.mxu0 0
      %1789 = vmatmul.mubr.bf16.gmra.mrb[0].mxu0 %v783
      %v1790 = vpop.f32.mrb[0].mxu0
      %v1791 = vadd.f32 0.0, %v1790
      %v1792 = vpop.f32.mrb[0].mxu0
      %v1793 = vpop.f32.mrb[0].mxu0
      %v1794 = vadd.f32 0.0, %v1793
      %v1795 = vpop.f32.mrb[0].mxu0
      %1796 = vdwg.mxu0
      %v1797 = vpack.c.bf16 %v1794, %v1791
      %v1799 = vsel %vm781, %v1797, 0
      %1801 = vmatprep.subr.bf16.mxu0 0
      %1802 = vmatpush1.bf16.msra.mxu0 %v835
      %1803 = vmatprep.subr.bf16.mxu0 0
      %1804 = vmatpush1.bf16.msra.mxu0 0
      %1805 = vmatprep.subr.bf16.mxu0 0
      %1806 = vmatpush1.bf16.msra.mxu0 0
      %1807 = vmatprep.subr.bf16.mxu0 0
      %1808 = vmatpush1.bf16.msra.mxu0 0
      %1809 = vmatprep.subr.bf16.mxu0 0
      %1810 = vmatpush1.bf16.msra.mxu0 0
      %1811 = vmatprep.subr.bf16.mxu0 0
      %1812 = vmatpush1.bf16.msra.mxu0 0
      %1813 = vmatprep.subr.bf16.mxu0 0
      %1814 = vmatpush1.bf16.msra.mxu0 0
      %1815 = vmatprep.subr.bf16.mxu0 0
      %1816 = vmatpush1.bf16.msra.mxu0 0
      %1817 = vmatprep.subr.bf16.mxu0 0
      %1818 = vmatpush1.bf16.msra.mxu0 0
      %1819 = vmatprep.subr.bf16.mxu0 0
      %1820 = vmatpush1.bf16.msra.mxu0 0
      %1821 = vmatprep.subr.bf16.mxu0 0
      %1822 = vmatpush1.bf16.msra.mxu0 0
      %1823 = vmatprep.subr.bf16.mxu0 0
      %1824 = vmatpush1.bf16.msra.mxu0 0
      %1825 = vmatprep.subr.bf16.mxu0 0
      %1826 = vmatpush1.bf16.msra.mxu0 0
      %1827 = vmatprep.subr.bf16.mxu0 0
      %1828 = vmatpush1.bf16.msra.mxu0 0
      %1829 = vmatprep.subr.bf16.mxu0 0
      %1830 = vmatpush1.bf16.msra.mxu0 0
      %1831 = vmatprep.subr.bf16.mxu0 0
      %1832 = vmatpush1.bf16.msra.mxu0 0
      %1833 = vmatprep.mubr.bf16.mxu0 0
      %1834 = vmatmul.mubr.bf16.gmra.mrb[0].mxu0 %v1799
      %v1835 = vpop.f32.mrb[0].mxu0
      %v1836 = vadd.f32 0.0, %v1835
      %v1837 = vpop.f32.mrb[0].mxu0
      %v1838 = vpop.f32.mrb[0].mxu0
      %v1839 = vadd.f32 0.0, %v1838
      %v1840 = vpop.f32.mrb[0].mxu0
      %1841 = vdwg.mxu0
      %v1842 = vmin.f32 %v1745, %v1836
      %v1843 = vmin.f32 %v1748, %v1839
      %s1844 = scalar_lea.vmem %s428, 48
      %v1845 = vld [vmem:[%s1844] sm:$0xf]
      %v1847 = vsel %vm785, %v1845, 0
      %1849 = vmatprep.subr.bf16.mxu0 0
      %1850 = vmatpush1.bf16.msra.mxu0 %v1847
      %1851 = vmatprep.subr.bf16.mxu0 0
      %1852 = vmatpush1.bf16.msra.mxu0 0
      %1853 = vmatprep.subr.bf16.mxu0 0
      %1854 = vmatpush1.bf16.msra.mxu0 0
      %1855 = vmatprep.subr.bf16.mxu0 0
      %1856 = vmatpush1.bf16.msra.mxu0 0
      %1857 = vmatprep.subr.bf16.mxu0 0
      %1858 = vmatpush1.bf16.msra.mxu0 0
      %1859 = vmatprep.subr.bf16.mxu0 0
      %1860 = vmatpush1.bf16.msra.mxu0 0
      %1861 = vmatprep.subr.bf16.mxu0 0
      %1862 = vmatpush1.bf16.msra.mxu0 0
      %1863 = vmatprep.subr.bf16.mxu0 0
      %1864 = vmatpush1.bf16.msra.mxu0 0
      %1865 = vmatprep.subr.bf16.mxu0 0
      %1866 = vmatpush1.bf16.msra.mxu0 0
      %1867 = vmatprep.subr.bf16.mxu0 0
      %1868 = vmatpush1.bf16.msra.mxu0 0
      %1869 = vmatprep.subr.bf16.mxu0 0
      %1870 = vmatpush1.bf16.msra.mxu0 0
      %1871 = vmatprep.subr.bf16.mxu0 0
      %1872 = vmatpush1.bf16.msra.mxu0 0
      %1873 = vmatprep.subr.bf16.mxu0 0
      %1874 = vmatpush1.bf16.msra.mxu0 0
      %1875 = vmatprep.subr.bf16.mxu0 0
      %1876 = vmatpush1.bf16.msra.mxu0 0
      %1877 = vmatprep.subr.bf16.mxu0 0
      %1878 = vmatpush1.bf16.msra.mxu0 0
      %1879 = vmatprep.subr.bf16.mxu0 0
      %1880 = vmatpush1.bf16.msra.mxu0 0
      %1881 = vmatprep.mubr.bf16.mxu0 0
      %1882 = vmatmul.mubr.bf16.gmra.mrb[0].mxu0 %v783
      %v1883 = vpop.f32.mrb[0].mxu0
      %v1884 = vadd.f32 0.0, %v1883
      %v1885 = vpop.f32.mrb[0].mxu0
      %v1886 = vpop.f32.mrb[0].mxu0
      %v1887 = vadd.f32 0.0, %v1886
      %v1888 = vpop.f32.mrb[0].mxu0
      %1889 = vdwg.mxu0
      %v1890 = vpack.c.bf16 %v1887, %v1884
      %v1892 = vsel %vm781, %v1890, 0
      %1894 = vmatprep.subr.bf16.mxu0 0
      %1895 = vmatpush1.bf16.msra.mxu0 %v835
      %1896 = vmatprep.subr.bf16.mxu0 0
      %1897 = vmatpush1.bf16.msra.mxu0 0
      %1898 = vmatprep.subr.bf16.mxu0 0
      %1899 = vmatpush1.bf16.msra.mxu0 0
      %1900 = vmatprep.subr.bf16.mxu0 0
      %1901 = vmatpush1.bf16.msra.mxu0 0
      %1902 = vmatprep.subr.bf16.mxu0 0
      %1903 = vmatpush1.bf16.msra.mxu0 0
      %1904 = vmatprep.subr.bf16.mxu0 0
      %1905 = vmatpush1.bf16.msra.mxu0 0
      %1906 = vmatprep.subr.bf16.mxu0 0
      %1907 = vmatpush1.bf16.msra.mxu0 0
      %1908 = vmatprep.subr.bf16.mxu0 0
      %1909 = vmatpush1.bf16.msra.mxu0 0
      %1910 = vmatprep.subr.bf16.mxu0 0
      %1911 = vmatpush1.bf16.msra.mxu0 0
      %1912 = vmatprep.subr.bf16.mxu0 0
      %1913 = vmatpush1.bf16.msra.mxu0 0
      %1914 = vmatprep.subr.bf16.mxu0 0
      %1915 = vmatpush1.bf16.msra.mxu0 0
      %1916 = vmatprep.subr.bf16.mxu0 0
      %1917 = vmatpush1.bf16.msra.mxu0 0
      %1918 = vmatprep.subr.bf16.mxu0 0
      %1919 = vmatpush1.bf16.msra.mxu0 0
      %1920 = vmatprep.subr.bf16.mxu0 0
      %1921 = vmatpush1.bf16.msra.mxu0 0
      %1922 = vmatprep.subr.bf16.mxu0 0
      %1923 = vmatpush1.bf16.msra.mxu0 0
      %1924 = vmatprep.subr.bf16.mxu0 0
      %1925 = vmatpush1.bf16.msra.mxu0 0
      %1926 = vmatprep.mubr.bf16.mxu0 0
      %1927 = vmatmul.mubr.bf16.gmra.mrb[0].mxu0 %v1892
      %v1928 = vpop.f32.mrb[0].mxu0
      %v1929 = vadd.f32 0.0, %v1928
      %v1930 = vpop.f32.mrb[0].mxu0
      %v1931 = vpop.f32.mrb[0].mxu0
      %v1932 = vadd.f32 0.0, %v1931
      %v1933 = vpop.f32.mrb[0].mxu0
      %1934 = vdwg.mxu0
      %v1935 = vmin.f32 %v1842, %v1929
      %v1936 = vmin.f32 %v1843, %v1932
      %s1937 = scalar_lea.vmem %s428, 72
      %v1938 = vld [vmem:[%s1937] sm:$0xf]
      %v1940 = vsel %vm785, %v1938, 0
      %1942 = vmatprep.subr.bf16.mxu0 0
      %1943 = vmatpush1.bf16.msra.mxu0 %v1940
      %1944 = vmatprep.subr.bf16.mxu0 0
      %1945 = vmatpush1.bf16.msra.mxu0 0
      %1946 = vmatprep.subr.bf16.mxu0 0
      %1947 = vmatpush1.bf16.msra.mxu0 0
      %1948 = vmatprep.subr.bf16.mxu0 0
      %1949 = vmatpush1.bf16.msra.mxu0 0
      %1950 = vmatprep.subr.bf16.mxu0 0
      %1951 = vmatpush1.bf16.msra.mxu0 0
      %1952 = vmatprep.subr.bf16.mxu0 0
      %1953 = vmatpush1.bf16.msra.mxu0 0
      %1954 = vmatprep.subr.bf16.mxu0 0
      %1955 = vmatpush1.bf16.msra.mxu0 0
      %1956 = vmatprep.subr.bf16.mxu0 0
      %1957 = vmatpush1.bf16.msra.mxu0 0
      %1958 = vmatprep.subr.bf16.mxu0 0
      %1959 = vmatpush1.bf16.msra.mxu0 0
      %1960 = vmatprep.subr.bf16.mxu0 0
      %1961 = vmatpush1.bf16.msra.mxu0 0
      %1962 = vmatprep.subr.bf16.mxu0 0
      %1963 = vmatpush1.bf16.msra.mxu0 0
      %1964 = vmatprep.subr.bf16.mxu0 0
      %1965 = vmatpush1.bf16.msra.mxu0 0
      %1966 = vmatprep.subr.bf16.mxu0 0
      %1967 = vmatpush1.bf16.msra.mxu0 0
      %1968 = vmatprep.subr.bf16.mxu0 0
      %1969 = vmatpush1.bf16.msra.mxu0 0
      %1970 = vmatprep.subr.bf16.mxu0 0
      %1971 = vmatpush1.bf16.msra.mxu0 0
      %1972 = vmatprep.subr.bf16.mxu0 0
      %1973 = vmatpush1.bf16.msra.mxu0 0
      %1974 = vmatprep.mubr.bf16.mxu0 0
      %1975 = vmatmul.mubr.bf16.gmra.mrb[0].mxu0 %v783
      %v1976 = vpop.f32.mrb[0].mxu0
      %v1977 = vadd.f32 0.0, %v1976
      %v1978 = vpop.f32.mrb[0].mxu0
      %v1979 = vpop.f32.mrb[0].mxu0
      %v1980 = vadd.f32 0.0, %v1979
      %v1981 = vpop.f32.mrb[0].mxu0
      %1982 = vdwg.mxu0
      %v1983 = vpack.c.bf16 %v1980, %v1977
      %v1985 = vsel %vm781, %v1983, 0
      %1987 = vmatprep.subr.bf16.mxu0 0
      %1988 = vmatpush1.bf16.msra.mxu0 %v835
      %1989 = vmatprep.subr.bf16.mxu0 0
      %1990 = vmatpush1.bf16.msra.mxu0 0
      %1991 = vmatprep.subr.bf16.mxu0 0
      %1992 = vmatpush1.bf16.msra.mxu0 0
      %1993 = vmatprep.subr.bf16.mxu0 0
      %1994 = vmatpush1.bf16.msra.mxu0 0
      %1995 = vmatprep.subr.bf16.mxu0 0
      %1996 = vmatpush1.bf16.msra.mxu0 0
      %1997 = vmatprep.subr.bf16.mxu0 0
      %1998 = vmatpush1.bf16.msra.mxu0 0
      %1999 = vmatprep.subr.bf16.mxu0 0
      %2000 = vmatpush1.bf16.msra.mxu0 0
      %2001 = vmatprep.subr.bf16.mxu0 0
      %2002 = vmatpush1.bf16.msra.mxu0 0
      %2003 = vmatprep.subr.bf16.mxu0 0
      %2004 = vmatpush1.bf16.msra.mxu0 0
      %2005 = vmatprep.subr.bf16.mxu0 0
      %2006 = vmatpush1.bf16.msra.mxu0 0
      %2007 = vmatprep.subr.bf16.mxu0 0
      %2008 = vmatpush1.bf16.msra.mxu0 0
      %2009 = vmatprep.subr.bf16.mxu0 0
      %2010 = vmatpush1.bf16.msra.mxu0 0
      %2011 = vmatprep.subr.bf16.mxu0 0
      %2012 = vmatpush1.bf16.msra.mxu0 0
      %2013 = vmatprep.subr.bf16.mxu0 0
      %2014 = vmatpush1.bf16.msra.mxu0 0
      %2015 = vmatprep.subr.bf16.mxu0 0
      %2016 = vmatpush1.bf16.msra.mxu0 0
      %2017 = vmatprep.subr.bf16.mxu0 0
      %2018 = vmatpush1.bf16.msra.mxu0 0
      %2019 = vmatprep.mubr.bf16.mxu0 0
      %2020 = vmatmul.mubr.bf16.gmra.mrb[0].mxu0 %v1985
      %v2021 = vpop.f32.mrb[0].mxu0
      %v2022 = vadd.f32 0.0, %v2021
      %v2023 = vpop.f32.mrb[0].mxu0
      %v2024 = vpop.f32.mrb[0].mxu0
      %v2025 = vadd.f32 0.0, %v2024
      %v2026 = vpop.f32.mrb[0].mxu0
      %2027 = vdwg.mxu0
      %v2028 = vmin.f32 %v1935, %v2022
      %v2029 = vmin.f32 %v1936, %v2025
      %s2030 = scalar_lea.vmem %s428, 96
      %v2031 = vld [vmem:[%s2030] sm:$0xf]
      %v2033 = vsel %vm785, %v2031, 0
      %2035 = vmatprep.subr.bf16.mxu0 0
      %2036 = vmatpush1.bf16.msra.mxu0 %v2033
      %2037 = vmatprep.subr.bf16.mxu0 0
      %2038 = vmatpush1.bf16.msra.mxu0 0
      %2039 = vmatprep.subr.bf16.mxu0 0
      %2040 = vmatpush1.bf16.msra.mxu0 0
      %2041 = vmatprep.subr.bf16.mxu0 0
      %2042 = vmatpush1.bf16.msra.mxu0 0
      %2043 = vmatprep.subr.bf16.mxu0 0
      %2044 = vmatpush1.bf16.msra.mxu0 0
      %2045 = vmatprep.subr.bf16.mxu0 0
      %2046 = vmatpush1.bf16.msra.mxu0 0
      %2047 = vmatprep.subr.bf16.mxu0 0
      %2048 = vmatpush1.bf16.msra.mxu0 0
      %2049 = vmatprep.subr.bf16.mxu0 0
      %2050 = vmatpush1.bf16.msra.mxu0 0
      %2051 = vmatprep.subr.bf16.mxu0 0
      %2052 = vmatpush1.bf16.msra.mxu0 0
      %2053 = vmatprep.subr.bf16.mxu0 0
      %2054 = vmatpush1.bf16.msra.mxu0 0
      %2055 = vmatprep.subr.bf16.mxu0 0
      %2056 = vmatpush1.bf16.msra.mxu0 0
      %2057 = vmatprep.subr.bf16.mxu0 0
      %2058 = vmatpush1.bf16.msra.mxu0 0
      %2059 = vmatprep.subr.bf16.mxu0 0
      %2060 = vmatpush1.bf16.msra.mxu0 0
      %2061 = vmatprep.subr.bf16.mxu0 0
      %2062 = vmatpush1.bf16.msra.mxu0 0
      %2063 = vmatprep.subr.bf16.mxu0 0
      %2064 = vmatpush1.bf16.msra.mxu0 0
      %2065 = vmatprep.subr.bf16.mxu0 0
      %2066 = vmatpush1.bf16.msra.mxu0 0
      %2067 = vmatprep.mubr.bf16.mxu0 0
      %2068 = vmatmul.mubr.bf16.gmra.mrb[0].mxu0 %v783
      %v2069 = vpop.f32.mrb[0].mxu0
      %v2070 = vadd.f32 0.0, %v2069
      %v2071 = vpop.f32.mrb[0].mxu0
      %v2072 = vpop.f32.mrb[0].mxu0
      %v2073 = vadd.f32 0.0, %v2072
      %v2074 = vpop.f32.mrb[0].mxu0
      %2075 = vdwg.mxu0
      %v2076 = vpack.c.bf16 %v2073, %v2070
      %v2078 = vsel %vm781, %v2076, 0
      %2080 = vmatprep.subr.bf16.mxu0 0
      %2081 = vmatpush1.bf16.msra.mxu0 %v835
      %2082 = vmatprep.subr.bf16.mxu0 0
      %2083 = vmatpush1.bf16.msra.mxu0 0
      %2084 = vmatprep.subr.bf16.mxu0 0
      %2085 = vmatpush1.bf16.msra.mxu0 0
      %2086 = vmatprep.subr.bf16.mxu0 0
      %2087 = vmatpush1.bf16.msra.mxu0 0
      %2088 = vmatprep.subr.bf16.mxu0 0
      %2089 = vmatpush1.bf16.msra.mxu0 0
      %2090 = vmatprep.subr.bf16.mxu0 0
      %2091 = vmatpush1.bf16.msra.mxu0 0
      %2092 = vmatprep.subr.bf16.mxu0 0
      %2093 = vmatpush1.bf16.msra.mxu0 0
      %2094 = vmatprep.subr.bf16.mxu0 0
      %2095 = vmatpush1.bf16.msra.mxu0 0
      %2096 = vmatprep.subr.bf16.mxu0 0
      %2097 = vmatpush1.bf16.msra.mxu0 0
      %2098 = vmatprep.subr.bf16.mxu0 0
      %2099 = vmatpush1.bf16.msra.mxu0 0
      %2100 = vmatprep.subr.bf16.mxu0 0
      %2101 = vmatpush1.bf16.msra.mxu0 0
      %2102 = vmatprep.subr.bf16.mxu0 0
      %2103 = vmatpush1.bf16.msra.mxu0 0
      %2104 = vmatprep.subr.bf16.mxu0 0
      %2105 = vmatpush1.bf16.msra.mxu0 0
      %2106 = vmatprep.subr.bf16.mxu0 0
      %2107 = vmatpush1.bf16.msra.mxu0 0
      %2108 = vmatprep.subr.bf16.mxu0 0
      %2109 = vmatpush1.bf16.msra.mxu0 0
      %2110 = vmatprep.subr.bf16.mxu0 0
      %2111 = vmatpush1.bf16.msra.mxu0 0
      %2112 = vmatprep.mubr.bf16.mxu0 0
      %2113 = vmatmul.mubr.bf16.gmra.mrb[0].mxu0 %v2078
      %v2114 = vpop.f32.mrb[0].mxu0
      %v2115 = vadd.f32 0.0, %v2114
      %v2116 = vpop.f32.mrb[0].mxu0
      %v2117 = vpop.f32.mrb[0].mxu0
      %v2118 = vadd.f32 0.0, %v2117
      %v2119 = vpop.f32.mrb[0].mxu0
      %2120 = vdwg.mxu0
      %v2121 = vmin.f32 %v2028, %v2115
      %v2122 = vmin.f32 %v2029, %v2118
      %s2123 = scalar_lea.vmem %s428, 120
      %v2124 = vld [vmem:[%s2123] sm:$0xf]
      %v2126 = vsel %vm785, %v2124, 0
      %2128 = vmatprep.subr.bf16.mxu0 0
      %2129 = vmatpush1.bf16.msra.mxu0 %v2126
      %2130 = vmatprep.subr.bf16.mxu0 0
      %2131 = vmatpush1.bf16.msra.mxu0 0
      %2132 = vmatprep.subr.bf16.mxu0 0
      %2133 = vmatpush1.bf16.msra.mxu0 0
      %2134 = vmatprep.subr.bf16.mxu0 0
      %2135 = vmatpush1.bf16.msra.mxu0 0
      %2136 = vmatprep.subr.bf16.mxu0 0
      %2137 = vmatpush1.bf16.msra.mxu0 0
      %2138 = vmatprep.subr.bf16.mxu0 0
      %2139 = vmatpush1.bf16.msra.mxu0 0
      %2140 = vmatprep.subr.bf16.mxu0 0
      %2141 = vmatpush1.bf16.msra.mxu0 0
      %2142 = vmatprep.subr.bf16.mxu0 0
      %2143 = vmatpush1.bf16.msra.mxu0 0
      %2144 = vmatprep.subr.bf16.mxu0 0
      %2145 = vmatpush1.bf16.msra.mxu0 0
      %2146 = vmatprep.subr.bf16.mxu0 0
      %2147 = vmatpush1.bf16.msra.mxu0 0
      %2148 = vmatprep.subr.bf16.mxu0 0
      %2149 = vmatpush1.bf16.msra.mxu0 0
      %2150 = vmatprep.subr.bf16.mxu0 0
      %2151 = vmatpush1.bf16.msra.mxu0 0
      %2152 = vmatprep.subr.bf16.mxu0 0
      %2153 = vmatpush1.bf16.msra.mxu0 0
      %2154 = vmatprep.subr.bf16.mxu0 0
      %2155 = vmatpush1.bf16.msra.mxu0 0
      %2156 = vmatprep.subr.bf16.mxu0 0
      %2157 = vmatpush1.bf16.msra.mxu0 0
      %2158 = vmatprep.subr.bf16.mxu0 0
      %2159 = vmatpush1.bf16.msra.mxu0 0
      %2160 = vmatprep.mubr.bf16.mxu0 0
      %2161 = vmatmul.mubr.bf16.gmra.mrb[0].mxu0 %v783
      %v2162 = vpop.f32.mrb[0].mxu0
      %v2163 = vadd.f32 0.0, %v2162
      %v2164 = vpop.f32.mrb[0].mxu0
      %v2165 = vpop.f32.mrb[0].mxu0
      %v2166 = vadd.f32 0.0, %v2165
      %v2167 = vpop.f32.mrb[0].mxu0
      %2168 = vdwg.mxu0
      %v2169 = vpack.c.bf16 %v2166, %v2163
      %v2171 = vsel %vm781, %v2169, 0
      %2173 = vmatprep.subr.bf16.mxu0 0
      %2174 = vmatpush1.bf16.msra.mxu0 %v835
      %2175 = vmatprep.subr.bf16.mxu0 0
      %2176 = vmatpush1.bf16.msra.mxu0 0
      %2177 = vmatprep.subr.bf16.mxu0 0
      %2178 = vmatpush1.bf16.msra.mxu0 0
      %2179 = vmatprep.subr.bf16.mxu0 0
      %2180 = vmatpush1.bf16.msra.mxu0 0
      %2181 = vmatprep.subr.bf16.mxu0 0
      %2182 = vmatpush1.bf16.msra.mxu0 0
      %2183 = vmatprep.subr.bf16.mxu0 0
      %2184 = vmatpush1.bf16.msra.mxu0 0
      %2185 = vmatprep.subr.bf16.mxu0 0
      %2186 = vmatpush1.bf16.msra.mxu0 0
      %2187 = vmatprep.subr.bf16.mxu0 0
      %2188 = vmatpush1.bf16.msra.mxu0 0
      %2189 = vmatprep.subr.bf16.mxu0 0
      %2190 = vmatpush1.bf16.msra.mxu0 0
      %2191 = vmatprep.subr.bf16.mxu0 0
      %2192 = vmatpush1.bf16.msra.mxu0 0
      %2193 = vmatprep.subr.bf16.mxu0 0
      %2194 = vmatpush1.bf16.msra.mxu0 0
      %2195 = vmatprep.subr.bf16.mxu0 0
      %2196 = vmatpush1.bf16.msra.mxu0 0
      %2197 = vmatprep.subr.bf16.mxu0 0
      %2198 = vmatpush1.bf16.msra.mxu0 0
      %2199 = vmatprep.subr.bf16.mxu0 0
      %2200 = vmatpush1.bf16.msra.mxu0 0
      %2201 = vmatprep.subr.bf16.mxu0 0
      %2202 = vmatpush1.bf16.msra.mxu0 0
      %2203 = vmatprep.subr.bf16.mxu0 0
      %2204 = vmatpush1.bf16.msra.mxu0 0
      %2205 = vmatprep.mubr.bf16.mxu0 0
      %2206 = vmatmul.mubr.bf16.gmra.mrb[0].mxu0 %v2171
      %v2207 = vpop.f32.mrb[0].mxu0
      %v2208 = vadd.f32 0.0, %v2207
      %v2209 = vpop.f32.mrb[0].mxu0
      %v2210 = vpop.f32.mrb[0].mxu0
      %v2211 = vadd.f32 0.0, %v2210
      %v2212 = vpop.f32.mrb[0].mxu0
      %2213 = vdwg.mxu0
      %v2214 = vmin.f32 %v2121, %v2208
      %v2215 = vmin.f32 %v2122, %v2211
      %s2216 = scalar_lea.vmem %s428, 144
      %v2217 = vld [vmem:[%s2216] sm:$0xf]
      %v2219 = vsel %vm785, %v2217, 0
      %2221 = vmatprep.subr.bf16.mxu0 0
      %2222 = vmatpush1.bf16.msra.mxu0 %v2219
      %2223 = vmatprep.subr.bf16.mxu0 0
      %2224 = vmatpush1.bf16.msra.mxu0 0
      %2225 = vmatprep.subr.bf16.mxu0 0
      %2226 = vmatpush1.bf16.msra.mxu0 0
      %2227 = vmatprep.subr.bf16.mxu0 0
      %2228 = vmatpush1.bf16.msra.mxu0 0
      %2229 = vmatprep.subr.bf16.mxu0 0
      %2230 = vmatpush1.bf16.msra.mxu0 0
      %2231 = vmatprep.subr.bf16.mxu0 0
      %2232 = vmatpush1.bf16.msra.mxu0 0
      %2233 = vmatprep.subr.bf16.mxu0 0
      %2234 = vmatpush1.bf16.msra.mxu0 0
      %2235 = vmatprep.subr.bf16.mxu0 0
      %2236 = vmatpush1.bf16.msra.mxu0 0
      %2237 = vmatprep.subr.bf16.mxu0 0
      %2238 = vmatpush1.bf16.msra.mxu0 0
      %2239 = vmatprep.subr.bf16.mxu0 0
      %2240 = vmatpush1.bf16.msra.mxu0 0
      %2241 = vmatprep.subr.bf16.mxu0 0
      %2242 = vmatpush1.bf16.msra.mxu0 0
      %2243 = vmatprep.subr.bf16.mxu0 0
      %2244 = vmatpush1.bf16.msra.mxu0 0
      %2245 = vmatprep.subr.bf16.mxu0 0
      %2246 = vmatpush1.bf16.msra.mxu0 0
      %2247 = vmatprep.subr.bf16.mxu0 0
      %2248 = vmatpush1.bf16.msra.mxu0 0
      %2249 = vmatprep.subr.bf16.mxu0 0
      %2250 = vmatpush1.bf16.msra.mxu0 0
      %2251 = vmatprep.subr.bf16.mxu0 0
      %2252 = vmatpush1.bf16.msra.mxu0 0
      %2253 = vmatprep.mubr.bf16.mxu0 0
      %2254 = vmatmul.mubr.bf16.gmra.mrb[0].mxu0 %v783
      %v2255 = vpop.f32.mrb[0].mxu0
      %v2256 = vadd.f32 0.0, %v2255
      %v2257 = vpop.f32.mrb[0].mxu0
      %v2258 = vpop.f32.mrb[0].mxu0
      %v2259 = vadd.f32 0.0, %v2258
      %v2260 = vpop.f32.mrb[0].mxu0
      %2261 = vdwg.mxu0
      %v2262 = vpack.c.bf16 %v2259, %v2256
      %v2264 = vsel %vm781, %v2262, 0
      %2266 = vmatprep.subr.bf16.mxu0 0
      %2267 = vmatpush1.bf16.msra.mxu0 %v835
      %2268 = vmatprep.subr.bf16.mxu0 0
      %2269 = vmatpush1.bf16.msra.mxu0 0
      %2270 = vmatprep.subr.bf16.mxu0 0
      %2271 = vmatpush1.bf16.msra.mxu0 0
      %2272 = vmatprep.subr.bf16.mxu0 0
      %2273 = vmatpush1.bf16.msra.mxu0 0
      %2274 = vmatprep.subr.bf16.mxu0 0
      %2275 = vmatpush1.bf16.msra.mxu0 0
      %2276 = vmatprep.subr.bf16.mxu0 0
      %2277 = vmatpush1.bf16.msra.mxu0 0
      %2278 = vmatprep.subr.bf16.mxu0 0
      %2279 = vmatpush1.bf16.msra.mxu0 0
      %2280 = vmatprep.subr.bf16.mxu0 0
      %2281 = vmatpush1.bf16.msra.mxu0 0
      %2282 = vmatprep.subr.bf16.mxu0 0
      %2283 = vmatpush1.bf16.msra.mxu0 0
      %2284 = vmatprep.subr.bf16.mxu0 0
      %2285 = vmatpush1.bf16.msra.mxu0 0
      %2286 = vmatprep.subr.bf16.mxu0 0
      %2287 = vmatpush1.bf16.msra.mxu0 0
      %2288 = vmatprep.subr.bf16.mxu0 0
      %2289 = vmatpush1.bf16.msra.mxu0 0
      %2290 = vmatprep.subr.bf16.mxu0 0
      %2291 = vmatpush1.bf16.msra.mxu0 0
      %2292 = vmatprep.subr.bf16.mxu0 0
      %2293 = vmatpush1.bf16.msra.mxu0 0
      %2294 = vmatprep.subr.bf16.mxu0 0
      %2295 = vmatpush1.bf16.msra.mxu0 0
      %2296 = vmatprep.subr.bf16.mxu0 0
      %2297 = vmatpush1.bf16.msra.mxu0 0
      %2298 = vmatprep.mubr.bf16.mxu0 0
      %2299 = vmatmul.mubr.bf16.gmra.mrb[0].mxu0 %v2264
      %v2300 = vpop.f32.mrb[0].mxu0
      %v2301 = vadd.f32 0.0, %v2300
      %v2302 = vpop.f32.mrb[0].mxu0
      %v2303 = vpop.f32.mrb[0].mxu0
      %v2304 = vadd.f32 0.0, %v2303
      %v2305 = vpop.f32.mrb[0].mxu0
      %2306 = vdwg.mxu0
      %v2307 = vmin.f32 %v2214, %v2301
      %v2308 = vmin.f32 %v2215, %v2304
      %s2309 = scalar_lea.vmem %s428, 168
      %v2310 = vld [vmem:[%s2309] sm:$0xf]
      %v2312 = vsel %vm785, %v2310, 0
      %2314 = vmatprep.subr.bf16.mxu0 0
      %2315 = vmatpush1.bf16.msra.mxu0 %v2312
      %2316 = vmatprep.subr.bf16.mxu0 0
      %2317 = vmatpush1.bf16.msra.mxu0 0
      %2318 = vmatprep.subr.bf16.mxu0 0
      %2319 = vmatpush1.bf16.msra.mxu0 0
      %2320 = vmatprep.subr.bf16.mxu0 0
      %2321 = vmatpush1.bf16.msra.mxu0 0
      %2322 = vmatprep.subr.bf16.mxu0 0
      %2323 = vmatpush1.bf16.msra.mxu0 0
      %2324 = vmatprep.subr.bf16.mxu0 0
      %2325 = vmatpush1.bf16.msra.mxu0 0
      %2326 = vmatprep.subr.bf16.mxu0 0
      %2327 = vmatpush1.bf16.msra.mxu0 0
      %2328 = vmatprep.subr.bf16.mxu0 0
      %2329 = vmatpush1.bf16.msra.mxu0 0
      %2330 = vmatprep.subr.bf16.mxu0 0
      %2331 = vmatpush1.bf16.msra.mxu0 0
      %2332 = vmatprep.subr.bf16.mxu0 0
      %2333 = vmatpush1.bf16.msra.mxu0 0
      %2334 = vmatprep.subr.bf16.mxu0 0
      %2335 = vmatpush1.bf16.msra.mxu0 0
      %2336 = vmatprep.subr.bf16.mxu0 0
      %2337 = vmatpush1.bf16.msra.mxu0 0
      %2338 = vmatprep.subr.bf16.mxu0 0
      %2339 = vmatpush1.bf16.msra.mxu0 0
      %2340 = vmatprep.subr.bf16.mxu0 0
      %2341 = vmatpush1.bf16.msra.mxu0 0
      %2342 = vmatprep.subr.bf16.mxu0 0
      %2343 = vmatpush1.bf16.msra.mxu0 0
      %2344 = vmatprep.subr.bf16.mxu0 0
      %2345 = vmatpush1.bf16.msra.mxu0 0
      %2346 = vmatprep.mubr.bf16.mxu0 0
      %2347 = vmatmul.mubr.bf16.gmra.mrb[0].mxu0 %v783
      %v2348 = vpop.f32.mrb[0].mxu0
      %v2349 = vadd.f32 0.0, %v2348
      %v2350 = vpop.f32.mrb[0].mxu0
      %v2351 = vpop.f32.mrb[0].mxu0
      %v2352 = vadd.f32 0.0, %v2351
      %v2353 = vpop.f32.mrb[0].mxu0
      %2354 = vdwg.mxu0
      %v2355 = vpack.c.bf16 %v2352, %v2349
      %v2357 = vsel %vm781, %v2355, 0
      %2359 = vmatprep.subr.bf16.mxu0 0
      %2360 = vmatpush1.bf16.msra.mxu0 %v835
      %2361 = vmatprep.subr.bf16.mxu0 0
      %2362 = vmatpush1.bf16.msra.mxu0 0
      %2363 = vmatprep.subr.bf16.mxu0 0
      %2364 = vmatpush1.bf16.msra.mxu0 0
      %2365 = vmatprep.subr.bf16.mxu0 0
      %2366 = vmatpush1.bf16.msra.mxu0 0
      %2367 = vmatprep.subr.bf16.mxu0 0
      %2368 = vmatpush1.bf16.msra.mxu0 0
      %2369 = vmatprep.subr.bf16.mxu0 0
      %2370 = vmatpush1.bf16.msra.mxu0 0
      %2371 = vmatprep.subr.bf16.mxu0 0
      %2372 = vmatpush1.bf16.msra.mxu0 0
      %2373 = vmatprep.subr.bf16.mxu0 0
      %2374 = vmatpush1.bf16.msra.mxu0 0
      %2375 = vmatprep.subr.bf16.mxu0 0
      %2376 = vmatpush1.bf16.msra.mxu0 0
      %2377 = vmatprep.subr.bf16.mxu0 0
      %2378 = vmatpush1.bf16.msra.mxu0 0
      %2379 = vmatprep.subr.bf16.mxu0 0
      %2380 = vmatpush1.bf16.msra.mxu0 0
      %2381 = vmatprep.subr.bf16.mxu0 0
      %2382 = vmatpush1.bf16.msra.mxu0 0
      %2383 = vmatprep.subr.bf16.mxu0 0
      %2384 = vmatpush1.bf16.msra.mxu0 0
      %2385 = vmatprep.subr.bf16.mxu0 0
      %2386 = vmatpush1.bf16.msra.mxu0 0
      %2387 = vmatprep.subr.bf16.mxu0 0
      %2388 = vmatpush1.bf16.msra.mxu0 0
      %2389 = vmatprep.subr.bf16.mxu0 0
      %2390 = vmatpush1.bf16.msra.mxu0 0
      %2391 = vmatprep.mubr.bf16.mxu0 0
      %2392 = vmatmul.mubr.bf16.gmra.mrb[0].mxu0 %v2357
      %v2393 = vpop.f32.mrb[0].mxu0
      %v2394 = vadd.f32 0.0, %v2393
      %v2395 = vpop.f32.mrb[0].mxu0
      %v2396 = vpop.f32.mrb[0].mxu0
      %v2397 = vadd.f32 0.0, %v2396
      %v2398 = vpop.f32.mrb[0].mxu0
      %2399 = vdwg.mxu0
      %v2400 = vmin.f32 %v2307, %v2394
      %v2401 = vmin.f32 %v2308, %v2397
      %v2402 = vmul.f32 %v2400, %v484
      %v2403 = vmul.f32 %v2401, %v485
      %v2404 = vsub.f32 1.0, %v484
      %v2405 = vsub.f32 1.0, %v485
      %v2406 = vmul.f32 %v2400, %v2404
      %v2407 = vmul.f32 %v2401, %v2405
      %v2408 = vmul.f32 %v2406, %v476
      %v2409 = vmul.f32 %v2407, %v477
      %vm2410 = vcmp.ne.f32.partialorder %v2408, 0.0
      %vm2411 = vcmp.ne.f32.partialorder %v2409, 0.0
      %v2412 = vsel %vm2410, %v2408, inf
      %v2413 = vsel %vm2411, %v2409, inf
      %s2414 = scalar_lea.vmem %s428, 4
      %v2415 = vld [vmem:[%s2414] sm:$0xf]
      %v2417 = vsel %vm785, %v2415, 0
      %2419 = vmatprep.subr.bf16.mxu0 0
      %2420 = vmatpush1.bf16.msra.mxu0 %v2417
      %2421 = vmatprep.subr.bf16.mxu0 0
      %2422 = vmatpush1.bf16.msra.mxu0 0
      %2423 = vmatprep.subr.bf16.mxu0 0
      %2424 = vmatpush1.bf16.msra.mxu0 0
      %2425 = vmatprep.subr.bf16.mxu0 0
      %2426 = vmatpush1.bf16.msra.mxu0 0
      %2427 = vmatprep.subr.bf16.mxu0 0
      %2428 = vmatpush1.bf16.msra.mxu0 0
      %2429 = vmatprep.subr.bf16.mxu0 0
      %2430 = vmatpush1.bf16.msra.mxu0 0
      %2431 = vmatprep.subr.bf16.mxu0 0
      %2432 = vmatpush1.bf16.msra.mxu0 0
      %2433 = vmatprep.subr.bf16.mxu0 0
      %2434 = vmatpush1.bf16.msra.mxu0 0
      %2435 = vmatprep.subr.bf16.mxu0 0
      %2436 = vmatpush1.bf16.msra.mxu0 0
      %2437 = vmatprep.subr.bf16.mxu0 0
      %2438 = vmatpush1.bf16.msra.mxu0 0
      %2439 = vmatprep.subr.bf16.mxu0 0
      %2440 = vmatpush1.bf16.msra.mxu0 0
      %2441 = vmatprep.subr.bf16.mxu0 0
      %2442 = vmatpush1.bf16.msra.mxu0 0
      %2443 = vmatprep.subr.bf16.mxu0 0
      %2444 = vmatpush1.bf16.msra.mxu0 0
      %2445 = vmatprep.subr.bf16.mxu0 0
      %2446 = vmatpush1.bf16.msra.mxu0 0
      %2447 = vmatprep.subr.bf16.mxu0 0
      %2448 = vmatpush1.bf16.msra.mxu0 0
      %2449 = vmatprep.subr.bf16.mxu0 0
      %2450 = vmatpush1.bf16.msra.mxu0 0
      %2451 = vmatprep.mubr.bf16.mxu0 0
      %2452 = vmatmul.mubr.bf16.gmra.mrb[0].mxu0 %v783
      %v2453 = vpop.f32.mrb[0].mxu0
      %v2454 = vadd.f32 0.0, %v2453
      %v2455 = vpop.f32.mrb[0].mxu0
      %v2456 = vpop.f32.mrb[0].mxu0
      %v2457 = vadd.f32 0.0, %v2456
      %v2458 = vpop.f32.mrb[0].mxu0
      %2459 = vdwg.mxu0
      %v2460 = vpack.c.bf16 %v2457, %v2454
      %v2462 = vsel %vm781, %v2460, 0
      %2464 = vmatprep.subr.bf16.mxu0 0
      %2465 = vmatpush1.bf16.msra.mxu0 %v835
      %2466 = vmatprep.subr.bf16.mxu0 0
      %2467 = vmatpush1.bf16.msra.mxu0 0
      %2468 = vmatprep.subr.bf16.mxu0 0
      %2469 = vmatpush1.bf16.msra.mxu0 0
      %2470 = vmatprep.subr.bf16.mxu0 0
      %2471 = vmatpush1.bf16.msra.mxu0 0
      %2472 = vmatprep.subr.bf16.mxu0 0
      %2473 = vmatpush1.bf16.msra.mxu0 0
      %2474 = vmatprep.subr.bf16.mxu0 0
      %2475 = vmatpush1.bf16.msra.mxu0 0
      %2476 = vmatprep.subr.bf16.mxu0 0
      %2477 = vmatpush1.bf16.msra.mxu0 0
      %2478 = vmatprep.subr.bf16.mxu0 0
      %2479 = vmatpush1.bf16.msra.mxu0 0
      %2480 = vmatprep.subr.bf16.mxu0 0
      %2481 = vmatpush1.bf16.msra.mxu0 0
      %2482 = vmatprep.subr.bf16.mxu0 0
      %2483 = vmatpush1.bf16.msra.mxu0 0
      %2484 = vmatprep.subr.bf16.mxu0 0
      %2485 = vmatpush1.bf16.msra.mxu0 0
      %2486 = vmatprep.subr.bf16.mxu0 0
      %2487 = vmatpush1.bf16.msra.mxu0 0
      %2488 = vmatprep.subr.bf16.mxu0 0
      %2489 = vmatpush1.bf16.msra.mxu0 0
      %2490 = vmatprep.subr.bf16.mxu0 0
      %2491 = vmatpush1.bf16.msra.mxu0 0
      %2492 = vmatprep.subr.bf16.mxu0 0
      %2493 = vmatpush1.bf16.msra.mxu0 0
      %2494 = vmatprep.subr.bf16.mxu0 0
      %2495 = vmatpush1.bf16.msra.mxu0 0
      %2496 = vmatprep.mubr.bf16.mxu0 0
      %2497 = vmatmul.mubr.bf16.gmra.mrb[0].mxu0 %v2462
      %v2498 = vpop.f32.mrb[0].mxu0
      %v2499 = vadd.f32 0.0, %v2498
      %v2500 = vpop.f32.mrb[0].mxu0
      %v2501 = vpop.f32.mrb[0].mxu0
      %v2502 = vadd.f32 0.0, %v2501
      %v2503 = vpop.f32.mrb[0].mxu0
      %2504 = vdwg.mxu0
      %s2505 = scalar_lea.vmem %s428, 28
      %v2506 = vld [vmem:[%s2505] sm:$0xf]
      %v2508 = vsel %vm785, %v2506, 0
      %2510 = vmatprep.subr.bf16.mxu0 0
      %2511 = vmatpush1.bf16.msra.mxu0 %v2508
      %2512 = vmatprep.subr.bf16.mxu0 0
      %2513 = vmatpush1.bf16.msra.mxu0 0
      %2514 = vmatprep.subr.bf16.mxu0 0
      %2515 = vmatpush1.bf16.msra.mxu0 0
      %2516 = vmatprep.subr.bf16.mxu0 0
      %2517 = vmatpush1.bf16.msra.mxu0 0
      %2518 = vmatprep.subr.bf16.mxu0 0
      %2519 = vmatpush1.bf16.msra.mxu0 0
      %2520 = vmatprep.subr.bf16.mxu0 0
      %2521 = vmatpush1.bf16.msra.mxu0 0
      %2522 = vmatprep.subr.bf16.mxu0 0
      %2523 = vmatpush1.bf16.msra.mxu0 0
      %2524 = vmatprep.subr.bf16.mxu0 0
      %2525 = vmatpush1.bf16.msra.mxu0 0
      %2526 = vmatprep.subr.bf16.mxu0 0
      %2527 = vmatpush1.bf16.msra.mxu0 0
      %2528 = vmatprep.subr.bf16.mxu0 0
      %2529 = vmatpush1.bf16.msra.mxu0 0
      %2530 = vmatprep.subr.bf16.mxu0 0
      %2531 = vmatpush1.bf16.msra.mxu0 0
      %2532 = vmatprep.subr.bf16.mxu0 0
      %2533 = vmatpush1.bf16.msra.mxu0 0
      %2534 = vmatprep.subr.bf16.mxu0 0
      %2535 = vmatpush1.bf16.msra.mxu0 0
      %2536 = vmatprep.subr.bf16.mxu0 0
      %2537 = vmatpush1.bf16.msra.mxu0 0
      %2538 = vmatprep.subr.bf16.mxu0 0
      %2539 = vmatpush1.bf16.msra.mxu0 0
      %2540 = vmatprep.subr.bf16.mxu0 0
      %2541 = vmatpush1.bf16.msra.mxu0 0
      %2542 = vmatprep.mubr.bf16.mxu0 0
      %2543 = vmatmul.mubr.bf16.gmra.mrb[0].mxu0 %v783
      %v2544 = vpop.f32.mrb[0].mxu0
      %v2545 = vadd.f32 0.0, %v2544
      %v2546 = vpop.f32.mrb[0].mxu0
      %v2547 = vpop.f32.mrb[0].mxu0
      %v2548 = vadd.f32 0.0, %v2547
      %v2549 = vpop.f32.mrb[0].mxu0
      %2550 = vdwg.mxu0
      %v2551 = vpack.c.bf16 %v2548, %v2545
      %v2553 = vsel %vm781, %v2551, 0
      %2555 = vmatprep.subr.bf16.mxu0 0
      %2556 = vmatpush1.bf16.msra.mxu0 %v835
      %2557 = vmatprep.subr.bf16.mxu0 0
      %2558 = vmatpush1.bf16.msra.mxu0 0
      %2559 = vmatprep.subr.bf16.mxu0 0
      %2560 = vmatpush1.bf16.msra.mxu0 0
      %2561 = vmatprep.subr.bf16.mxu0 0
      %2562 = vmatpush1.bf16.msra.mxu0 0
      %2563 = vmatprep.subr.bf16.mxu0 0
      %2564 = vmatpush1.bf16.msra.mxu0 0
      %2565 = vmatprep.subr.bf16.mxu0 0
      %2566 = vmatpush1.bf16.msra.mxu0 0
      %2567 = vmatprep.subr.bf16.mxu0 0
      %2568 = vmatpush1.bf16.msra.mxu0 0
      %2569 = vmatprep.subr.bf16.mxu0 0
      %2570 = vmatpush1.bf16.msra.mxu0 0
      %2571 = vmatprep.subr.bf16.mxu0 0
      %2572 = vmatpush1.bf16.msra.mxu0 0
      %2573 = vmatprep.subr.bf16.mxu0 0
      %2574 = vmatpush1.bf16.msra.mxu0 0
      %2575 = vmatprep.subr.bf16.mxu0 0
      %2576 = vmatpush1.bf16.msra.mxu0 0
      %2577 = vmatprep.subr.bf16.mxu0 0
      %2578 = vmatpush1.bf16.msra.mxu0 0
      %2579 = vmatprep.subr.bf16.mxu0 0
      %2580 = vmatpush1.bf16.msra.mxu0 0
      %2581 = vmatprep.subr.bf16.mxu0 0
      %2582 = vmatpush1.bf16.msra.mxu0 0
      %2583 = vmatprep.subr.bf16.mxu0 0
      %2584 = vmatpush1.bf16.msra.mxu0 0
      %2585 = vmatprep.subr.bf16.mxu0 0
      %2586 = vmatpush1.bf16.msra.mxu0 0
      %2587 = vmatprep.mubr.bf16.mxu0 0
      %2588 = vmatmul.mubr.bf16.gmra.mrb[0].mxu0 %v2553
      %v2589 = vpop.f32.mrb[0].mxu0
      %v2590 = vadd.f32 0.0, %v2589
      %v2591 = vpop.f32.mrb[0].mxu0
      %v2592 = vpop.f32.mrb[0].mxu0
      %v2593 = vadd.f32 0.0, %v2592
      %v2594 = vpop.f32.mrb[0].mxu0
      %2595 = vdwg.mxu0
      %v2596 = vmin.f32 %v2499, %v2590
      %v2597 = vmin.f32 %v2502, %v2593
      %s2598 = scalar_lea.vmem %s428, 52
      %v2599 = vld [vmem:[%s2598] sm:$0xf]
      %v2601 = vsel %vm785, %v2599, 0
      %2603 = vmatprep.subr.bf16.mxu0 0
      %2604 = vmatpush1.bf16.msra.mxu0 %v2601
      %2605 = vmatprep.subr.bf16.mxu0 0
      %2606 = vmatpush1.bf16.msra.mxu0 0
      %2607 = vmatprep.subr.bf16.mxu0 0
      %2608 = vmatpush1.bf16.msra.mxu0 0
      %2609 = vmatprep.subr.bf16.mxu0 0
      %2610 = vmatpush1.bf16.msra.mxu0 0
      %2611 = vmatprep.subr.bf16.mxu0 0
      %2612 = vmatpush1.bf16.msra.mxu0 0
      %2613 = vmatprep.subr.bf16.mxu0 0
      %2614 = vmatpush1.bf16.msra.mxu0 0
      %2615 = vmatprep.subr.bf16.mxu0 0
      %2616 = vmatpush1.bf16.msra.mxu0 0
      %2617 = vmatprep.subr.bf16.mxu0 0
      %2618 = vmatpush1.bf16.msra.mxu0 0
      %2619 = vmatprep.subr.bf16.mxu0 0
      %2620 = vmatpush1.bf16.msra.mxu0 0
      %2621 = vmatprep.subr.bf16.mxu0 0
      %2622 = vmatpush1.bf16.msra.mxu0 0
      %2623 = vmatprep.subr.bf16.mxu0 0
      %2624 = vmatpush1.bf16.msra.mxu0 0
      %2625 = vmatprep.subr.bf16.mxu0 0
      %2626 = vmatpush1.bf16.msra.mxu0 0
      %2627 = vmatprep.subr.bf16.mxu0 0
      %2628 = vmatpush1.bf16.msra.mxu0 0
      %2629 = vmatprep.subr.bf16.mxu0 0
      %2630 = vmatpush1.bf16.msra.mxu0 0
      %2631 = vmatprep.subr.bf16.mxu0 0
      %2632 = vmatpush1.bf16.msra.mxu0 0
      %2633 = vmatprep.subr.bf16.mxu0 0
      %2634 = vmatpush1.bf16.msra.mxu0 0
      %2635 = vmatprep.mubr.bf16.mxu0 0
      %2636 = vmatmul.mubr.bf16.gmra.mrb[0].mxu0 %v783
      %v2637 = vpop.f32.mrb[0].mxu0
      %v2638 = vadd.f32 0.0, %v2637
      %v2639 = vpop.f32.mrb[0].mxu0
      %v2640 = vpop.f32.mrb[0].mxu0
      %v2641 = vadd.f32 0.0, %v2640
      %v2642 = vpop.f32.mrb[0].mxu0
      %2643 = vdwg.mxu0
      %v2644 = vpack.c.bf16 %v2641, %v2638
      %v2646 = vsel %vm781, %v2644, 0
      %2648 = vmatprep.subr.bf16.mxu0 0
      %2649 = vmatpush1.bf16.msra.mxu0 %v835
      %2650 = vmatprep.subr.bf16.mxu0 0
      %2651 = vmatpush1.bf16.msra.mxu0 0
      %2652 = vmatprep.subr.bf16.mxu0 0
      %2653 = vmatpush1.bf16.msra.mxu0 0
      %2654 = vmatprep.subr.bf16.mxu0 0
      %2655 = vmatpush1.bf16.msra.mxu0 0
      %2656 = vmatprep.subr.bf16.mxu0 0
      %2657 = vmatpush1.bf16.msra.mxu0 0
      %2658 = vmatprep.subr.bf16.mxu0 0
      %2659 = vmatpush1.bf16.msra.mxu0 0
      %2660 = vmatprep.subr.bf16.mxu0 0
      %2661 = vmatpush1.bf16.msra.mxu0 0
      %2662 = vmatprep.subr.bf16.mxu0 0
      %2663 = vmatpush1.bf16.msra.mxu0 0
      %2664 = vmatprep.subr.bf16.mxu0 0
      %2665 = vmatpush1.bf16.msra.mxu0 0
      %2666 = vmatprep.subr.bf16.mxu0 0
      %2667 = vmatpush1.bf16.msra.mxu0 0
      %2668 = vmatprep.subr.bf16.mxu0 0
      %2669 = vmatpush1.bf16.msra.mxu0 0
      %2670 = vmatprep.subr.bf16.mxu0 0
      %2671 = vmatpush1.bf16.msra.mxu0 0
      %2672 = vmatprep.subr.bf16.mxu0 0
      %2673 = vmatpush1.bf16.msra.mxu0 0
      %2674 = vmatprep.subr.bf16.mxu0 0
      %2675 = vmatpush1.bf16.msra.mxu0 0
      %2676 = vmatprep.subr.bf16.mxu0 0
      %2677 = vmatpush1.bf16.msra.mxu0 0
      %2678 = vmatprep.subr.bf16.mxu0 0
      %2679 = vmatpush1.bf16.msra.mxu0 0
      %2680 = vmatprep.mubr.bf16.mxu0 0
      %2681 = vmatmul.mubr.bf16.gmra.mrb[0].mxu0 %v2646
      %v2682 = vpop.f32.mrb[0].mxu0
      %v2683 = vadd.f32 0.0, %v2682
      %v2684 = vpop.f32.mrb[0].mxu0
      %v2685 = vpop.f32.mrb[0].mxu0
      %v2686 = vadd.f32 0.0, %v2685
      %v2687 = vpop.f32.mrb[0].mxu0
      %2688 = vdwg.mxu0
      %v2689 = vmin.f32 %v2596, %v2683
      %v2690 = vmin.f32 %v2597, %v2686
      %s2691 = scalar_lea.vmem %s428, 76
      %v2692 = vld [vmem:[%s2691] sm:$0xf]
      %v2694 = vsel %vm785, %v2692, 0
      %2696 = vmatprep.subr.bf16.mxu0 0
      %2697 = vmatpush1.bf16.msra.mxu0 %v2694
      %2698 = vmatprep.subr.bf16.mxu0 0
      %2699 = vmatpush1.bf16.msra.mxu0 0
      %2700 = vmatprep.subr.bf16.mxu0 0
      %2701 = vmatpush1.bf16.msra.mxu0 0
      %2702 = vmatprep.subr.bf16.mxu0 0
      %2703 = vmatpush1.bf16.msra.mxu0 0
      %2704 = vmatprep.subr.bf16.mxu0 0
      %2705 = vmatpush1.bf16.msra.mxu0 0
      %2706 = vmatprep.subr.bf16.mxu0 0
      %2707 = vmatpush1.bf16.msra.mxu0 0
      %2708 = vmatprep.subr.bf16.mxu0 0
      %2709 = vmatpush1.bf16.msra.mxu0 0
      %2710 = vmatprep.subr.bf16.mxu0 0
      %2711 = vmatpush1.bf16.msra.mxu0 0
      %2712 = vmatprep.subr.bf16.mxu0 0
      %2713 = vmatpush1.bf16.msra.mxu0 0
      %2714 = vmatprep.subr.bf16.mxu0 0
      %2715 = vmatpush1.bf16.msra.mxu0 0
      %2716 = vmatprep.subr.bf16.mxu0 0
      %2717 = vmatpush1.bf16.msra.mxu0 0
      %2718 = vmatprep.subr.bf16.mxu0 0
      %2719 = vmatpush1.bf16.msra.mxu0 0
      %2720 = vmatprep.subr.bf16.mxu0 0
      %2721 = vmatpush1.bf16.msra.mxu0 0
      %2722 = vmatprep.subr.bf16.mxu0 0
      %2723 = vmatpush1.bf16.msra.mxu0 0
      %2724 = vmatprep.subr.bf16.mxu0 0
      %2725 = vmatpush1.bf16.msra.mxu0 0
      %2726 = vmatprep.subr.bf16.mxu0 0
      %2727 = vmatpush1.bf16.msra.mxu0 0
      %2728 = vmatprep.mubr.bf16.mxu0 0
      %2729 = vmatmul.mubr.bf16.gmra.mrb[0].mxu0 %v783
      %v2730 = vpop.f32.mrb[0].mxu0
      %v2731 = vadd.f32 0.0, %v2730
      %v2732 = vpop.f32.mrb[0].mxu0
      %v2733 = vpop.f32.mrb[0].mxu0
      %v2734 = vadd.f32 0.0, %v2733
      %v2735 = vpop.f32.mrb[0].mxu0
      %2736 = vdwg.mxu0
      %v2737 = vpack.c.bf16 %v2734, %v2731
      %v2739 = vsel %vm781, %v2737, 0
      %2741 = vmatprep.subr.bf16.mxu0 0
      %2742 = vmatpush1.bf16.msra.mxu0 %v835
      %2743 = vmatprep.subr.bf16.mxu0 0
      %2744 = vmatpush1.bf16.msra.mxu0 0
      %2745 = vmatprep.subr.bf16.mxu0 0
      %2746 = vmatpush1.bf16.msra.mxu0 0
      %2747 = vmatprep.subr.bf16.mxu0 0
      %2748 = vmatpush1.bf16.msra.mxu0 0
      %2749 = vmatprep.subr.bf16.mxu0 0
      %2750 = vmatpush1.bf16.msra.mxu0 0
      %2751 = vmatprep.subr.bf16.mxu0 0
      %2752 = vmatpush1.bf16.msra.mxu0 0
      %2753 = vmatprep.subr.bf16.mxu0 0
      %2754 = vmatpush1.bf16.msra.mxu0 0
      %2755 = vmatprep.subr.bf16.mxu0 0
      %2756 = vmatpush1.bf16.msra.mxu0 0
      %2757 = vmatprep.subr.bf16.mxu0 0
      %2758 = vmatpush1.bf16.msra.mxu0 0
      %2759 = vmatprep.subr.bf16.mxu0 0
      %2760 = vmatpush1.bf16.msra.mxu0 0
      %2761 = vmatprep.subr.bf16.mxu0 0
      %2762 = vmatpush1.bf16.msra.mxu0 0
      %2763 = vmatprep.subr.bf16.mxu0 0
      %2764 = vmatpush1.bf16.msra.mxu0 0
      %2765 = vmatprep.subr.bf16.mxu0 0
      %2766 = vmatpush1.bf16.msra.mxu0 0
      %2767 = vmatprep.subr.bf16.mxu0 0
      %2768 = vmatpush1.bf16.msra.mxu0 0
      %2769 = vmatprep.subr.bf16.mxu0 0
      %2770 = vmatpush1.bf16.msra.mxu0 0
      %2771 = vmatprep.subr.bf16.mxu0 0
      %2772 = vmatpush1.bf16.msra.mxu0 0
      %2773 = vmatprep.mubr.bf16.mxu0 0
      %2774 = vmatmul.mubr.bf16.gmra.mrb[0].mxu0 %v2739
      %v2775 = vpop.f32.mrb[0].mxu0
      %v2776 = vadd.f32 0.0, %v2775
      %v2777 = vpop.f32.mrb[0].mxu0
      %v2778 = vpop.f32.mrb[0].mxu0
      %v2779 = vadd.f32 0.0, %v2778
      %v2780 = vpop.f32.mrb[0].mxu0
      %2781 = vdwg.mxu0
      %v2782 = vmin.f32 %v2689, %v2776
      %v2783 = vmin.f32 %v2690, %v2779
      %s2784 = scalar_lea.vmem %s428, 100
      %v2785 = vld [vmem:[%s2784] sm:$0xf]
      %v2787 = vsel %vm785, %v2785, 0
      %2789 = vmatprep.subr.bf16.mxu0 0
      %2790 = vmatpush1.bf16.msra.mxu0 %v2787
      %2791 = vmatprep.subr.bf16.mxu0 0
      %2792 = vmatpush1.bf16.msra.mxu0 0
      %2793 = vmatprep.subr.bf16.mxu0 0
      %2794 = vmatpush1.bf16.msra.mxu0 0
      %2795 = vmatprep.subr.bf16.mxu0 0
      %2796 = vmatpush1.bf16.msra.mxu0 0
      %2797 = vmatprep.subr.bf16.mxu0 0
      %2798 = vmatpush1.bf16.msra.mxu0 0
      %2799 = vmatprep.subr.bf16.mxu0 0
      %2800 = vmatpush1.bf16.msra.mxu0 0
      %2801 = vmatprep.subr.bf16.mxu0 0
      %2802 = vmatpush1.bf16.msra.mxu0 0
      %2803 = vmatprep.subr.bf16.mxu0 0
      %2804 = vmatpush1.bf16.msra.mxu0 0
      %2805 = vmatprep.subr.bf16.mxu0 0
      %2806 = vmatpush1.bf16.msra.mxu0 0
      %2807 = vmatprep.subr.bf16.mxu0 0
      %2808 = vmatpush1.bf16.msra.mxu0 0
      %2809 = vmatprep.subr.bf16.mxu0 0
      %2810 = vmatpush1.bf16.msra.mxu0 0
      %2811 = vmatprep.subr.bf16.mxu0 0
      %2812 = vmatpush1.bf16.msra.mxu0 0
      %2813 = vmatprep.subr.bf16.mxu0 0
      %2814 = vmatpush1.bf16.msra.mxu0 0
      %2815 = vmatprep.subr.bf16.mxu0 0
      %2816 = vmatpush1.bf16.msra.mxu0 0
      %2817 = vmatprep.subr.bf16.mxu0 0
      %2818 = vmatpush1.bf16.msra.mxu0 0
      %2819 = vmatprep.subr.bf16.mxu0 0
      %2820 = vmatpush1.bf16.msra.mxu0 0
      %2821 = vmatprep.mubr.bf16.mxu0 0
      %2822 = vmatmul.mubr.bf16.gmra.mrb[0].mxu0 %v783
      %v2823 = vpop.f32.mrb[0].mxu0
      %v2824 = vadd.f32 0.0, %v2823
      %v2825 = vpop.f32.mrb[0].mxu0
      %v2826 = vpop.f32.mrb[0].mxu0
      %v2827 = vadd.f32 0.0, %v2826
      %v2828 = vpop.f32.mrb[0].mxu0
      %2829 = vdwg.mxu0
      %v2830 = vpack.c.bf16 %v2827, %v2824
      %v2832 = vsel %vm781, %v2830, 0
      %2834 = vmatprep.subr.bf16.mxu0 0
      %2835 = vmatpush1.bf16.msra.mxu0 %v835
      %2836 = vmatprep.subr.bf16.mxu0 0
      %2837 = vmatpush1.bf16.msra.mxu0 0
      %2838 = vmatprep.subr.bf16.mxu0 0
      %2839 = vmatpush1.bf16.msra.mxu0 0
      %2840 = vmatprep.subr.bf16.mxu0 0
      %2841 = vmatpush1.bf16.msra.mxu0 0
      %2842 = vmatprep.subr.bf16.mxu0 0
      %2843 = vmatpush1.bf16.msra.mxu0 0
      %2844 = vmatprep.subr.bf16.mxu0 0
      %2845 = vmatpush1.bf16.msra.mxu0 0
      %2846 = vmatprep.subr.bf16.mxu0 0
      %2847 = vmatpush1.bf16.msra.mxu0 0
      %2848 = vmatprep.subr.bf16.mxu0 0
      %2849 = vmatpush1.bf16.msra.mxu0 0
      %2850 = vmatprep.subr.bf16.mxu0 0
      %2851 = vmatpush1.bf16.msra.mxu0 0
      %2852 = vmatprep.subr.bf16.mxu0 0
      %2853 = vmatpush1.bf16.msra.mxu0 0
      %2854 = vmatprep.subr.bf16.mxu0 0
      %2855 = vmatpush1.bf16.msra.mxu0 0
      %2856 = vmatprep.subr.bf16.mxu0 0
      %2857 = vmatpush1.bf16.msra.mxu0 0
      %2858 = vmatprep.subr.bf16.mxu0 0
      %2859 = vmatpush1.bf16.msra.mxu0 0
      %2860 = vmatprep.subr.bf16.mxu0 0
      %2861 = vmatpush1.bf16.msra.mxu0 0
      %2862 = vmatprep.subr.bf16.mxu0 0
      %2863 = vmatpush1.bf16.msra.mxu0 0
      %2864 = vmatprep.subr.bf16.mxu0 0
      %2865 = vmatpush1.bf16.msra.mxu0 0
      %2866 = vmatprep.mubr.bf16.mxu0 0
      %2867 = vmatmul.mubr.bf16.gmra.mrb[0].mxu0 %v2832
      %v2868 = vpop.f32.mrb[0].mxu0
      %v2869 = vadd.f32 0.0, %v2868
      %v2870 = vpop.f32.mrb[0].mxu0
      %v2871 = vpop.f32.mrb[0].mxu0
      %v2872 = vadd.f32 0.0, %v2871
      %v2873 = vpop.f32.mrb[0].mxu0
      %2874 = vdwg.mxu0
      %v2875 = vmin.f32 %v2782, %v2869
      %v2876 = vmin.f32 %v2783, %v2872
      %s2877 = scalar_lea.vmem %s428, 124
      %v2878 = vld [vmem:[%s2877] sm:$0xf]
      %v2880 = vsel %vm785, %v2878, 0
      %2882 = vmatprep.subr.bf16.mxu0 0
      %2883 = vmatpush1.bf16.msra.mxu0 %v2880
      %2884 = vmatprep.subr.bf16.mxu0 0
      %2885 = vmatpush1.bf16.msra.mxu0 0
      %2886 = vmatprep.subr.bf16.mxu0 0
      %2887 = vmatpush1.bf16.msra.mxu0 0
      %2888 = vmatprep.subr.bf16.mxu0 0
      %2889 = vmatpush1.bf16.msra.mxu0 0
      %2890 = vmatprep.subr.bf16.mxu0 0
      %2891 = vmatpush1.bf16.msra.mxu0 0
      %2892 = vmatprep.subr.bf16.mxu0 0
      %2893 = vmatpush1.bf16.msra.mxu0 0
      %2894 = vmatprep.subr.bf16.mxu0 0
      %2895 = vmatpush1.bf16.msra.mxu0 0
      %2896 = vmatprep.subr.bf16.mxu0 0
      %2897 = vmatpush1.bf16.msra.mxu0 0
      %2898 = vmatprep.subr.bf16.mxu0 0
      %2899 = vmatpush1.bf16.msra.mxu0 0
      %2900 = vmatprep.subr.bf16.mxu0 0
      %2901 = vmatpush1.bf16.msra.mxu0 0
      %2902 = vmatprep.subr.bf16.mxu0 0
      %2903 = vmatpush1.bf16.msra.mxu0 0
      %2904 = vmatprep.subr.bf16.mxu0 0
      %2905 = vmatpush1.bf16.msra.mxu0 0
      %2906 = vmatprep.subr.bf16.mxu0 0
      %2907 = vmatpush1.bf16.msra.mxu0 0
      %2908 = vmatprep.subr.bf16.mxu0 0
      %2909 = vmatpush1.bf16.msra.mxu0 0
      %2910 = vmatprep.subr.bf16.mxu0 0
      %2911 = vmatpush1.bf16.msra.mxu0 0
      %2912 = vmatprep.subr.bf16.mxu0 0
      %2913 = vmatpush1.bf16.msra.mxu0 0
      %2914 = vmatprep.mubr.bf16.mxu0 0
      %2915 = vmatmul.mubr.bf16.gmra.mrb[0].mxu0 %v783
      %v2916 = vpop.f32.mrb[0].mxu0
      %v2917 = vadd.f32 0.0, %v2916
      %v2918 = vpop.f32.mrb[0].mxu0
      %v2919 = vpop.f32.mrb[0].mxu0
      %v2920 = vadd.f32 0.0, %v2919
      %v2921 = vpop.f32.mrb[0].mxu0
      %2922 = vdwg.mxu0
      %v2923 = vpack.c.bf16 %v2920, %v2917
      %v2925 = vsel %vm781, %v2923, 0
      %2927 = vmatprep.subr.bf16.mxu0 0
      %2928 = vmatpush1.bf16.msra.mxu0 %v835
      %2929 = vmatprep.subr.bf16.mxu0 0
      %2930 = vmatpush1.bf16.msra.mxu0 0
      %2931 = vmatprep.subr.bf16.mxu0 0
      %2932 = vmatpush1.bf16.msra.mxu0 0
      %2933 = vmatprep.subr.bf16.mxu0 0
      %2934 = vmatpush1.bf16.msra.mxu0 0
      %2935 = vmatprep.subr.bf16.mxu0 0
      %2936 = vmatpush1.bf16.msra.mxu0 0
      %2937 = vmatprep.subr.bf16.mxu0 0
      %2938 = vmatpush1.bf16.msra.mxu0 0
      %2939 = vmatprep.subr.bf16.mxu0 0
      %2940 = vmatpush1.bf16.msra.mxu0 0
      %2941 = vmatprep.subr.bf16.mxu0 0
      %2942 = vmatpush1.bf16.msra.mxu0 0
      %2943 = vmatprep.subr.bf16.mxu0 0
      %2944 = vmatpush1.bf16.msra.mxu0 0
      %2945 = vmatprep.subr.bf16.mxu0 0
      %2946 = vmatpush1.bf16.msra.mxu0 0
      %2947 = vmatprep.subr.bf16.mxu0 0
      %2948 = vmatpush1.bf16.msra.mxu0 0
      %2949 = vmatprep.subr.bf16.mxu0 0
      %2950 = vmatpush1.bf16.msra.mxu0 0
      %2951 = vmatprep.subr.bf16.mxu0 0
      %2952 = vmatpush1.bf16.msra.mxu0 0
      %2953 = vmatprep.subr.bf16.mxu0 0
      %2954 = vmatpush1.bf16.msra.mxu0 0
      %2955 = vmatprep.subr.bf16.mxu0 0
      %2956 = vmatpush1.bf16.msra.mxu0 0
      %2957 = vmatprep.subr.bf16.mxu0 0
      %2958 = vmatpush1.bf16.msra.mxu0 0
      %2959 = vmatprep.mubr.bf16.mxu0 0
      %2960 = vmatmul.mubr.bf16.gmra.mrb[0].mxu0 %v2925
      %v2961 = vpop.f32.mrb[0].mxu0
      %v2962 = vadd.f32 0.0, %v2961
      %v2963 = vpop.f32.mrb[0].mxu0
      %v2964 = vpop.f32.mrb[0].mxu0
      %v2965 = vadd.f32 0.0, %v2964
      %v2966 = vpop.f32.mrb[0].mxu0
      %2967 = vdwg.mxu0
      %v2968 = vmin.f32 %v2875, %v2962
      %v2969 = vmin.f32 %v2876, %v2965
      %s2970 = scalar_lea.vmem %s428, 148
      %v2971 = vld [vmem:[%s2970] sm:$0xf]
      %v2973 = vsel %vm785, %v2971, 0
      %2975 = vmatprep.subr.bf16.mxu0 0
      %2976 = vmatpush1.bf16.msra.mxu0 %v2973
      %2977 = vmatprep.subr.bf16.mxu0 0
      %2978 = vmatpush1.bf16.msra.mxu0 0
      %2979 = vmatprep.subr.bf16.mxu0 0
      %2980 = vmatpush1.bf16.msra.mxu0 0
      %2981 = vmatprep.subr.bf16.mxu0 0
      %2982 = vmatpush1.bf16.msra.mxu0 0
      %2983 = vmatprep.subr.bf16.mxu0 0
      %2984 = vmatpush1.bf16.msra.mxu0 0
      %2985 = vmatprep.subr.bf16.mxu0 0
      %2986 = vmatpush1.bf16.msra.mxu0 0
      %2987 = vmatprep.subr.bf16.mxu0 0
      %2988 = vmatpush1.bf16.msra.mxu0 0
      %2989 = vmatprep.subr.bf16.mxu0 0
      %2990 = vmatpush1.bf16.msra.mxu0 0
      %2991 = vmatprep.subr.bf16.mxu0 0
      %2992 = vmatpush1.bf16.msra.mxu0 0
      %2993 = vmatprep.subr.bf16.mxu0 0
      %2994 = vmatpush1.bf16.msra.mxu0 0
      %2995 = vmatprep.subr.bf16.mxu0 0
      %2996 = vmatpush1.bf16.msra.mxu0 0
      %2997 = vmatprep.subr.bf16.mxu0 0
      %2998 = vmatpush1.bf16.msra.mxu0 0
      %2999 = vmatprep.subr.bf16.mxu0 0
      %3000 = vmatpush1.bf16.msra.mxu0 0
      %3001 = vmatprep.subr.bf16.mxu0 0
      %3002 = vmatpush1.bf16.msra.mxu0 0
      %3003 = vmatprep.subr.bf16.mxu0 0
      %3004 = vmatpush1.bf16.msra.mxu0 0
      %3005 = vmatprep.subr.bf16.mxu0 0
      %3006 = vmatpush1.bf16.msra.mxu0 0
      %3007 = vmatprep.mubr.bf16.mxu0 0
      %3008 = vmatmul.mubr.bf16.gmra.mrb[0].mxu0 %v783
      %v3009 = vpop.f32.mrb[0].mxu0
      %v3010 = vadd.f32 0.0, %v3009
      %v3011 = vpop.f32.mrb[0].mxu0
      %v3012 = vpop.f32.mrb[0].mxu0
      %v3013 = vadd.f32 0.0, %v3012
      %v3014 = vpop.f32.mrb[0].mxu0
      %3015 = vdwg.mxu0
      %v3016 = vpack.c.bf16 %v3013, %v3010
      %v3018 = vsel %vm781, %v3016, 0
      %3020 = vmatprep.subr.bf16.mxu0 0
      %3021 = vmatpush1.bf16.msra.mxu0 %v835
      %3022 = vmatprep.subr.bf16.mxu0 0
      %3023 = vmatpush1.bf16.msra.mxu0 0
      %3024 = vmatprep.subr.bf16.mxu0 0
      %3025 = vmatpush1.bf16.msra.mxu0 0
      %3026 = vmatprep.subr.bf16.mxu0 0
      %3027 = vmatpush1.bf16.msra.mxu0 0
      %3028 = vmatprep.subr.bf16.mxu0 0
      %3029 = vmatpush1.bf16.msra.mxu0 0
      %3030 = vmatprep.subr.bf16.mxu0 0
      %3031 = vmatpush1.bf16.msra.mxu0 0
      %3032 = vmatprep.subr.bf16.mxu0 0
      %3033 = vmatpush1.bf16.msra.mxu0 0
      %3034 = vmatprep.subr.bf16.mxu0 0
      %3035 = vmatpush1.bf16.msra.mxu0 0
      %3036 = vmatprep.subr.bf16.mxu0 0
      %3037 = vmatpush1.bf16.msra.mxu0 0
      %3038 = vmatprep.subr.bf16.mxu0 0
      %3039 = vmatpush1.bf16.msra.mxu0 0
      %3040 = vmatprep.subr.bf16.mxu0 0
      %3041 = vmatpush1.bf16.msra.mxu0 0
      %3042 = vmatprep.subr.bf16.mxu0 0
      %3043 = vmatpush1.bf16.msra.mxu0 0
      %3044 = vmatprep.subr.bf16.mxu0 0
      %3045 = vmatpush1.bf16.msra.mxu0 0
      %3046 = vmatprep.subr.bf16.mxu0 0
      %3047 = vmatpush1.bf16.msra.mxu0 0
      %3048 = vmatprep.subr.bf16.mxu0 0
      %3049 = vmatpush1.bf16.msra.mxu0 0
      %3050 = vmatprep.subr.bf16.mxu0 0
      %3051 = vmatpush1.bf16.msra.mxu0 0
      %3052 = vmatprep.mubr.bf16.mxu0 0
      %3053 = vmatmul.mubr.bf16.gmra.mrb[0].mxu0 %v3018
      %v3054 = vpop.f32.mrb[0].mxu0
      %v3055 = vadd.f32 0.0, %v3054
      %v3056 = vpop.f32.mrb[0].mxu0
      %v3057 = vpop.f32.mrb[0].mxu0
      %v3058 = vadd.f32 0.0, %v3057
      %v3059 = vpop.f32.mrb[0].mxu0
      %3060 = vdwg.mxu0
      %v3061 = vmin.f32 %v2968, %v3055
      %v3062 = vmin.f32 %v2969, %v3058
      %s3063 = scalar_lea.vmem %s428, 172
      %v3064 = vld [vmem:[%s3063] sm:$0xf]
      %v3066 = vsel %vm785, %v3064, 0
      %3068 = vmatprep.subr.bf16.mxu0 0
      %3069 = vmatpush1.bf16.msra.mxu0 %v3066
      %3070 = vmatprep.subr.bf16.mxu0 0
      %3071 = vmatpush1.bf16.msra.mxu0 0
      %3072 = vmatprep.subr.bf16.mxu0 0
      %3073 = vmatpush1.bf16.msra.mxu0 0
      %3074 = vmatprep.subr.bf16.mxu0 0
      %3075 = vmatpush1.bf16.msra.mxu0 0
      %3076 = vmatprep.subr.bf16.mxu0 0
      %3077 = vmatpush1.bf16.msra.mxu0 0
      %3078 = vmatprep.subr.bf16.mxu0 0
      %3079 = vmatpush1.bf16.msra.mxu0 0
      %3080 = vmatprep.subr.bf16.mxu0 0
      %3081 = vmatpush1.bf16.msra.mxu0 0
      %3082 = vmatprep.subr.bf16.mxu0 0
      %3083 = vmatpush1.bf16.msra.mxu0 0
      %3084 = vmatprep.subr.bf16.mxu0 0
      %3085 = vmatpush1.bf16.msra.mxu0 0
      %3086 = vmatprep.subr.bf16.mxu0 0
      %3087 = vmatpush1.bf16.msra.mxu0 0
      %3088 = vmatprep.subr.bf16.mxu0 0
      %3089 = vmatpush1.bf16.msra.mxu0 0
      %3090 = vmatprep.subr.bf16.mxu0 0
      %3091 = vmatpush1.bf16.msra.mxu0 0
      %3092 = vmatprep.subr.bf16.mxu0 0
      %3093 = vmatpush1.bf16.msra.mxu0 0
      %3094 = vmatprep.subr.bf16.mxu0 0
      %3095 = vmatpush1.bf16.msra.mxu0 0
      %3096 = vmatprep.subr.bf16.mxu0 0
      %3097 = vmatpush1.bf16.msra.mxu0 0
      %3098 = vmatprep.subr.bf16.mxu0 0
      %3099 = vmatpush1.bf16.msra.mxu0 0
      %3100 = vmatprep.mubr.bf16.mxu0 0
      %3101 = vmatmul.mubr.bf16.gmra.mrb[0].mxu0 %v783
      %v3102 = vpop.f32.mrb[0].mxu0
      %v3103 = vadd.f32 0.0, %v3102
      %v3104 = vpop.f32.mrb[0].mxu0
      %v3105 = vpop.f32.mrb[0].mxu0
      %v3106 = vadd.f32 0.0, %v3105
      %v3107 = vpop.f32.mrb[0].mxu0
      %3108 = vdwg.mxu0
      %v3109 = vpack.c.bf16 %v3106, %v3103
      %v3111 = vsel %vm781, %v3109, 0
      %3113 = vmatprep.subr.bf16.mxu0 0
      %3114 = vmatpush1.bf16.msra.mxu0 %v835
      %3115 = vmatprep.subr.bf16.mxu0 0
      %3116 = vmatpush1.bf16.msra.mxu0 0
      %3117 = vmatprep.subr.bf16.mxu0 0
      %3118 = vmatpush1.bf16.msra.mxu0 0
      %3119 = vmatprep.subr.bf16.mxu0 0
      %3120 = vmatpush1.bf16.msra.mxu0 0
      %3121 = vmatprep.subr.bf16.mxu0 0
      %3122 = vmatpush1.bf16.msra.mxu0 0
      %3123 = vmatprep.subr.bf16.mxu0 0
      %3124 = vmatpush1.bf16.msra.mxu0 0
      %3125 = vmatprep.subr.bf16.mxu0 0
      %3126 = vmatpush1.bf16.msra.mxu0 0
      %3127 = vmatprep.subr.bf16.mxu0 0
      %3128 = vmatpush1.bf16.msra.mxu0 0
      %3129 = vmatprep.subr.bf16.mxu0 0
      %3130 = vmatpush1.bf16.msra.mxu0 0
      %3131 = vmatprep.subr.bf16.mxu0 0
      %3132 = vmatpush1.bf16.msra.mxu0 0
      %3133 = vmatprep.subr.bf16.mxu0 0
      %3134 = vmatpush1.bf16.msra.mxu0 0
      %3135 = vmatprep.subr.bf16.mxu0 0
      %3136 = vmatpush1.bf16.msra.mxu0 0
      %3137 = vmatprep.subr.bf16.mxu0 0
      %3138 = vmatpush1.bf16.msra.mxu0 0
      %3139 = vmatprep.subr.bf16.mxu0 0
      %3140 = vmatpush1.bf16.msra.mxu0 0
      %3141 = vmatprep.subr.bf16.mxu0 0
      %3142 = vmatpush1.bf16.msra.mxu0 0
      %3143 = vmatprep.subr.bf16.mxu0 0
      %3144 = vmatpush1.bf16.msra.mxu0 0
      %3145 = vmatprep.mubr.bf16.mxu0 0
      %3146 = vmatmul.mubr.bf16.gmra.mrb[0].mxu0 %v3111
      %v3147 = vpop.f32.mrb[0].mxu0
      %v3148 = vadd.f32 0.0, %v3147
      %v3149 = vpop.f32.mrb[0].mxu0
      %v3150 = vpop.f32.mrb[0].mxu0
      %v3151 = vadd.f32 0.0, %v3150
      %v3152 = vpop.f32.mrb[0].mxu0
      %3153 = vdwg.mxu0
      %v3154 = vmin.f32 %v3061, %v3148
      %v3155 = vmin.f32 %v3062, %v3151
      %v3156 = vmul.f32 %v3154, %v492
      %v3157 = vmul.f32 %v3155, %v493
      %v3158 = vadd.f32 %v2402, %v3156
      %v3159 = vadd.f32 %v2403, %v3157
      %v3160 = vsub.f32 1.0, %v492
      %v3161 = vsub.f32 1.0, %v493
      %v3162 = vmul.f32 %v3154, %v3160
      %v3163 = vmul.f32 %v3155, %v3161
      %v3164 = vmul.f32 %v3162, %v476
      %v3165 = vmul.f32 %v3163, %v477
      %vm3166 = vcmp.ne.f32.partialorder %v3164, 0.0
      %vm3167 = vcmp.ne.f32.partialorder %v3165, 0.0
      %v3168 = vsel %vm3166, %v3164, inf
      %v3169 = vsel %vm3167, %v3165, inf
      %v3170 = vmin.f32 %v2412, %v3168
      %v3171 = vmin.f32 %v2413, %v3169
      %s3172 = scalar_lea.vmem %s428, 8
      %v3173 = vld [vmem:[%s3172] sm:$0xf]
      %v3175 = vsel %vm785, %v3173, 0
      %3177 = vmatprep.subr.bf16.mxu0 0
      %3178 = vmatpush1.bf16.msra.mxu0 %v3175
      %3179 = vmatprep.subr.bf16.mxu0 0
      %3180 = vmatpush1.bf16.msra.mxu0 0
      %3181 = vmatprep.subr.bf16.mxu0 0
      %3182 = vmatpush1.bf16.msra.mxu0 0
      %3183 = vmatprep.subr.bf16.mxu0 0
      %3184 = vmatpush1.bf16.msra.mxu0 0
      %3185 = vmatprep.subr.bf16.mxu0 0
      %3186 = vmatpush1.bf16.msra.mxu0 0
      %3187 = vmatprep.subr.bf16.mxu0 0
      %3188 = vmatpush1.bf16.msra.mxu0 0
      %3189 = vmatprep.subr.bf16.mxu0 0
      %3190 = vmatpush1.bf16.msra.mxu0 0
      %3191 = vmatprep.subr.bf16.mxu0 0
      %3192 = vmatpush1.bf16.msra.mxu0 0
      %3193 = vmatprep.subr.bf16.mxu0 0
      %3194 = vmatpush1.bf16.msra.mxu0 0
      %3195 = vmatprep.subr.bf16.mxu0 0
      %3196 = vmatpush1.bf16.msra.mxu0 0
      %3197 = vmatprep.subr.bf16.mxu0 0
      %3198 = vmatpush1.bf16.msra.mxu0 0
      %3199 = vmatprep.subr.bf16.mxu0 0
      %3200 = vmatpush1.bf16.msra.mxu0 0
      %3201 = vmatprep.subr.bf16.mxu0 0
      %3202 = vmatpush1.bf16.msra.mxu0 0
      %3203 = vmatprep.subr.bf16.mxu0 0
      %3204 = vmatpush1.bf16.msra.mxu0 0
      %3205 = vmatprep.subr.bf16.mxu0 0
      %3206 = vmatpush1.bf16.msra.mxu0 0
      %3207 = vmatprep.subr.bf16.mxu0 0
      %3208 = vmatpush1.bf16.msra.mxu0 0
      %3209 = vmatprep.mubr.bf16.mxu0 0
      %3210 = vmatmul.mubr.bf16.gmra.mrb[0].mxu0 %v783
      %v3211 = vpop.f32.mrb[0].mxu0
      %v3212 = vadd.f32 0.0, %v3211
      %v3213 = vpop.f32.mrb[0].mxu0
      %v3214 = vpop.f32.mrb[0].mxu0
      %v3215 = vadd.f32 0.0, %v3214
      %v3216 = vpop.f32.mrb[0].mxu0
      %3217 = vdwg.mxu0
      %v3218 = vpack.c.bf16 %v3215, %v3212
      %v3220 = vsel %vm781, %v3218, 0
      %3222 = vmatprep.subr.bf16.mxu0 0
      %3223 = vmatpush1.bf16.msra.mxu0 %v835
      %3224 = vmatprep.subr.bf16.mxu0 0
      %3225 = vmatpush1.bf16.msra.mxu0 0
      %3226 = vmatprep.subr.bf16.mxu0 0
      %3227 = vmatpush1.bf16.msra.mxu0 0
      %3228 = vmatprep.subr.bf16.mxu0 0
      %3229 = vmatpush1.bf16.msra.mxu0 0
      %3230 = vmatprep.subr.bf16.mxu0 0
      %3231 = vmatpush1.bf16.msra.mxu0 0
      %3232 = vmatprep.subr.bf16.mxu0 0
      %3233 = vmatpush1.bf16.msra.mxu0 0
      %3234 = vmatprep.subr.bf16.mxu0 0
      %3235 = vmatpush1.bf16.msra.mxu0 0
      %3236 = vmatprep.subr.bf16.mxu0 0
      %3237 = vmatpush1.bf16.msra.mxu0 0
      %3238 = vmatprep.subr.bf16.mxu0 0
      %3239 = vmatpush1.bf16.msra.mxu0 0
      %3240 = vmatprep.subr.bf16.mxu0 0
      %3241 = vmatpush1.bf16.msra.mxu0 0
      %3242 = vmatprep.subr.bf16.mxu0 0
      %3243 = vmatpush1.bf16.msra.mxu0 0
      %3244 = vmatprep.subr.bf16.mxu0 0
      %3245 = vmatpush1.bf16.msra.mxu0 0
      %3246 = vmatprep.subr.bf16.mxu0 0
      %3247 = vmatpush1.bf16.msra.mxu0 0
      %3248 = vmatprep.subr.bf16.mxu0 0
      %3249 = vmatpush1.bf16.msra.mxu0 0
      %3250 = vmatprep.subr.bf16.mxu0 0
      %3251 = vmatpush1.bf16.msra.mxu0 0
      %3252 = vmatprep.subr.bf16.mxu0 0
      %3253 = vmatpush1.bf16.msra.mxu0 0
      %3254 = vmatprep.mubr.bf16.mxu0 0
      %3255 = vmatmul.mubr.bf16.gmra.mrb[0].mxu0 %v3220
      %v3256 = vpop.f32.mrb[0].mxu0
      %v3257 = vadd.f32 0.0, %v3256
      %v3258 = vpop.f32.mrb[0].mxu0
      %v3259 = vpop.f32.mrb[0].mxu0
      %v3260 = vadd.f32 0.0, %v3259
      %v3261 = vpop.f32.mrb[0].mxu0
      %3262 = vdwg.mxu0
      %s3263 = scalar_lea.vmem %s428, 32
      %v3264 = vld [vmem:[%s3263] sm:$0xf]
      %v3266 = vsel %vm785, %v3264, 0
      %3268 = vmatprep.subr.bf16.mxu0 0
      %3269 = vmatpush1.bf16.msra.mxu0 %v3266
      %3270 = vmatprep.subr.bf16.mxu0 0
      %3271 = vmatpush1.bf16.msra.mxu0 0
      %3272 = vmatprep.subr.bf16.mxu0 0
      %3273 = vmatpush1.bf16.msra.mxu0 0
      %3274 = vmatprep.subr.bf16.mxu0 0
      %3275 = vmatpush1.bf16.msra.mxu0 0
      %3276 = vmatprep.subr.bf16.mxu0 0
      %3277 = vmatpush1.bf16.msra.mxu0 0
      %3278 = vmatprep.subr.bf16.mxu0 0
      %3279 = vmatpush1.bf16.msra.mxu0 0
      %3280 = vmatprep.subr.bf16.mxu0 0
      %3281 = vmatpush1.bf16.msra.mxu0 0
      %3282 = vmatprep.subr.bf16.mxu0 0
      %3283 = vmatpush1.bf16.msra.mxu0 0
      %3284 = vmatprep.subr.bf16.mxu0 0
      %3285 = vmatpush1.bf16.msra.mxu0 0
      %3286 = vmatprep.subr.bf16.mxu0 0
      %3287 = vmatpush1.bf16.msra.mxu0 0
      %3288 = vmatprep.subr.bf16.mxu0 0
      %3289 = vmatpush1.bf16.msra.mxu0 0
      %3290 = vmatprep.subr.bf16.mxu0 0
      %3291 = vmatpush1.bf16.msra.mxu0 0
      %3292 = vmatprep.subr.bf16.mxu0 0
      %3293 = vmatpush1.bf16.msra.mxu0 0
      %3294 = vmatprep.subr.bf16.mxu0 0
      %3295 = vmatpush1.bf16.msra.mxu0 0
      %3296 = vmatprep.subr.bf16.mxu0 0
      %3297 = vmatpush1.bf16.msra.mxu0 0
      %3298 = vmatprep.subr.bf16.mxu0 0
      %3299 = vmatpush1.bf16.msra.mxu0 0
      %3300 = vmatprep.mubr.bf16.mxu0 0
      %3301 = vmatmul.mubr.bf16.gmra.mrb[0].mxu0 %v783
      %v3302 = vpop.f32.mrb[0].mxu0
      %v3303 = vadd.f32 0.0, %v3302
      %v3304 = vpop.f32.mrb[0].mxu0
      %v3305 = vpop.f32.mrb[0].mxu0
      %v3306 = vadd.f32 0.0, %v3305
      %v3307 = vpop.f32.mrb[0].mxu0
      %3308 = vdwg.mxu0
      %v3309 = vpack.c.bf16 %v3306, %v3303
      %v3311 = vsel %vm781, %v3309, 0
      %3313 = vmatprep.subr.bf16.mxu0 0
      %3314 = vmatpush1.bf16.msra.mxu0 %v835
      %3315 = vmatprep.subr.bf16.mxu0 0
      %3316 = vmatpush1.bf16.msra.mxu0 0
      %3317 = vmatprep.subr.bf16.mxu0 0
      %3318 = vmatpush1.bf16.msra.mxu0 0
      %3319 = vmatprep.subr.bf16.mxu0 0
      %3320 = vmatpush1.bf16.msra.mxu0 0
      %3321 = vmatprep.subr.bf16.mxu0 0
      %3322 = vmatpush1.bf16.msra.mxu0 0
      %3323 = vmatprep.subr.bf16.mxu0 0
      %3324 = vmatpush1.bf16.msra.mxu0 0
      %3325 = vmatprep.subr.bf16.mxu0 0
      %3326 = vmatpush1.bf16.msra.mxu0 0
      %3327 = vmatprep.subr.bf16.mxu0 0
      %3328 = vmatpush1.bf16.msra.mxu0 0
      %3329 = vmatprep.subr.bf16.mxu0 0
      %3330 = vmatpush1.bf16.msra.mxu0 0
      %3331 = vmatprep.subr.bf16.mxu0 0
      %3332 = vmatpush1.bf16.msra.mxu0 0
      %3333 = vmatprep.subr.bf16.mxu0 0
      %3334 = vmatpush1.bf16.msra.mxu0 0
      %3335 = vmatprep.subr.bf16.mxu0 0
      %3336 = vmatpush1.bf16.msra.mxu0 0
      %3337 = vmatprep.subr.bf16.mxu0 0
      %3338 = vmatpush1.bf16.msra.mxu0 0
      %3339 = vmatprep.subr.bf16.mxu0 0
      %3340 = vmatpush1.bf16.msra.mxu0 0
      %3341 = vmatprep.subr.bf16.mxu0 0
      %3342 = vmatpush1.bf16.msra.mxu0 0
      %3343 = vmatprep.subr.bf16.mxu0 0
      %3344 = vmatpush1.bf16.msra.mxu0 0
      %3345 = vmatprep.mubr.bf16.mxu0 0
      %3346 = vmatmul.mubr.bf16.gmra.mrb[0].mxu0 %v3311
      %v3347 = vpop.f32.mrb[0].mxu0
      %v3348 = vadd.f32 0.0, %v3347
      %v3349 = vpop.f32.mrb[0].mxu0
      %v3350 = vpop.f32.mrb[0].mxu0
      %v3351 = vadd.f32 0.0, %v3350
      %v3352 = vpop.f32.mrb[0].mxu0
      %3353 = vdwg.mxu0
      %v3354 = vmin.f32 %v3257, %v3348
      %v3355 = vmin.f32 %v3260, %v3351
      %s3356 = scalar_lea.vmem %s428, 56
      %v3357 = vld [vmem:[%s3356] sm:$0xf]
      %v3359 = vsel %vm785, %v3357, 0
      %3361 = vmatprep.subr.bf16.mxu0 0
      %3362 = vmatpush1.bf16.msra.mxu0 %v3359
      %3363 = vmatprep.subr.bf16.mxu0 0
      %3364 = vmatpush1.bf16.msra.mxu0 0
      %3365 = vmatprep.subr.bf16.mxu0 0
      %3366 = vmatpush1.bf16.msra.mxu0 0
      %3367 = vmatprep.subr.bf16.mxu0 0
      %3368 = vmatpush1.bf16.msra.mxu0 0
      %3369 = vmatprep.subr.bf16.mxu0 0
      %3370 = vmatpush1.bf16.msra.mxu0 0
      %3371 = vmatprep.subr.bf16.mxu0 0
      %3372 = vmatpush1.bf16.msra.mxu0 0
      %3373 = vmatprep.subr.bf16.mxu0 0
      %3374 = vmatpush1.bf16.msra.mxu0 0
      %3375 = vmatprep.subr.bf16.mxu0 0
      %3376 = vmatpush1.bf16.msra.mxu0 0
      %3377 = vmatprep.subr.bf16.mxu0 0
      %3378 = vmatpush1.bf16.msra.mxu0 0
      %3379 = vmatprep.subr.bf16.mxu0 0
      %3380 = vmatpush1.bf16.msra.mxu0 0
      %3381 = vmatprep.subr.bf16.mxu0 0
      %3382 = vmatpush1.bf16.msra.mxu0 0
      %3383 = vmatprep.subr.bf16.mxu0 0
      %3384 = vmatpush1.bf16.msra.mxu0 0
      %3385 = vmatprep.subr.bf16.mxu0 0
      %3386 = vmatpush1.bf16.msra.mxu0 0
      %3387 = vmatprep.subr.bf16.mxu0 0
      %3388 = vmatpush1.bf16.msra.mxu0 0
      %3389 = vmatprep.subr.bf16.mxu0 0
      %3390 = vmatpush1.bf16.msra.mxu0 0
      %3391 = vmatprep.subr.bf16.mxu0 0
      %3392 = vmatpush1.bf16.msra.mxu0 0
      %3393 = vmatprep.mubr.bf16.mxu0 0
      %3394 = vmatmul.mubr.bf16.gmra.mrb[0].mxu0 %v783
      %v3395 = vpop.f32.mrb[0].mxu0
      %v3396 = vadd.f32 0.0, %v3395
      %v3397 = vpop.f32.mrb[0].mxu0
      %v3398 = vpop.f32.mrb[0].mxu0
      %v3399 = vadd.f32 0.0, %v3398
      %v3400 = vpop.f32.mrb[0].mxu0
      %3401 = vdwg.mxu0
      %v3402 = vpack.c.bf16 %v3399, %v3396
      %v3404 = vsel %vm781, %v3402, 0
      %3406 = vmatprep.subr.bf16.mxu0 0
      %3407 = vmatpush1.bf16.msra.mxu0 %v835
      %3408 = vmatprep.subr.bf16.mxu0 0
      %3409 = vmatpush1.bf16.msra.mxu0 0
      %3410 = vmatprep.subr.bf16.mxu0 0
      %3411 = vmatpush1.bf16.msra.mxu0 0
      %3412 = vmatprep.subr.bf16.mxu0 0
      %3413 = vmatpush1.bf16.msra.mxu0 0
      %3414 = vmatprep.subr.bf16.mxu0 0
      %3415 = vmatpush1.bf16.msra.mxu0 0
      %3416 = vmatprep.subr.bf16.mxu0 0
      %3417 = vmatpush1.bf16.msra.mxu0 0
      %3418 = vmatprep.subr.bf16.mxu0 0
      %3419 = vmatpush1.bf16.msra.mxu0 0
      %3420 = vmatprep.subr.bf16.mxu0 0
      %3421 = vmatpush1.bf16.msra.mxu0 0
      %3422 = vmatprep.subr.bf16.mxu0 0
      %3423 = vmatpush1.bf16.msra.mxu0 0
      %3424 = vmatprep.subr.bf16.mxu0 0
      %3425 = vmatpush1.bf16.msra.mxu0 0
      %3426 = vmatprep.subr.bf16.mxu0 0
      %3427 = vmatpush1.bf16.msra.mxu0 0
      %3428 = vmatprep.subr.bf16.mxu0 0
      %3429 = vmatpush1.bf16.msra.mxu0 0
      %3430 = vmatprep.subr.bf16.mxu0 0
      %3431 = vmatpush1.bf16.msra.mxu0 0
      %3432 = vmatprep.subr.bf16.mxu0 0
      %3433 = vmatpush1.bf16.msra.mxu0 0
      %3434 = vmatprep.subr.bf16.mxu0 0
      %3435 = vmatpush1.bf16.msra.mxu0 0
      %3436 = vmatprep.subr.bf16.mxu0 0
      %3437 = vmatpush1.bf16.msra.mxu0 0
      %3438 = vmatprep.mubr.bf16.mxu0 0
      %3439 = vmatmul.mubr.bf16.gmra.mrb[0].mxu0 %v3404
      %v3440 = vpop.f32.mrb[0].mxu0
      %v3441 = vadd.f32 0.0, %v3440
      %v3442 = vpop.f32.mrb[0].mxu0
      %v3443 = vpop.f32.mrb[0].mxu0
      %v3444 = vadd.f32 0.0, %v3443
      %v3445 = vpop.f32.mrb[0].mxu0
      %3446 = vdwg.mxu0
      %v3447 = vmin.f32 %v3354, %v3441
      %v3448 = vmin.f32 %v3355, %v3444
      %s3449 = scalar_lea.vmem %s428, 80
      %v3450 = vld [vmem:[%s3449] sm:$0xf]
      %v3452 = vsel %vm785, %v3450, 0
      %3454 = vmatprep.subr.bf16.mxu0 0
      %3455 = vmatpush1.bf16.msra.mxu0 %v3452
      %3456 = vmatprep.subr.bf16.mxu0 0
      %3457 = vmatpush1.bf16.msra.mxu0 0
      %3458 = vmatprep.subr.bf16.mxu0 0
      %3459 = vmatpush1.bf16.msra.mxu0 0
      %3460 = vmatprep.subr.bf16.mxu0 0
      %3461 = vmatpush1.bf16.msra.mxu0 0
      %3462 = vmatprep.subr.bf16.mxu0 0
      %3463 = vmatpush1.bf16.msra.mxu0 0
      %3464 = vmatprep.subr.bf16.mxu0 0
      %3465 = vmatpush1.bf16.msra.mxu0 0
      %3466 = vmatprep.subr.bf16.mxu0 0
      %3467 = vmatpush1.bf16.msra.mxu0 0
      %3468 = vmatprep.subr.bf16.mxu0 0
      %3469 = vmatpush1.bf16.msra.mxu0 0
      %3470 = vmatprep.subr.bf16.mxu0 0
      %3471 = vmatpush1.bf16.msra.mxu0 0
      %3472 = vmatprep.subr.bf16.mxu0 0
      %3473 = vmatpush1.bf16.msra.mxu0 0
      %3474 = vmatprep.subr.bf16.mxu0 0
      %3475 = vmatpush1.bf16.msra.mxu0 0
      %3476 = vmatprep.subr.bf16.mxu0 0
      %3477 = vmatpush1.bf16.msra.mxu0 0
      %3478 = vmatprep.subr.bf16.mxu0 0
      %3479 = vmatpush1.bf16.msra.mxu0 0
      %3480 = vmatprep.subr.bf16.mxu0 0
      %3481 = vmatpush1.bf16.msra.mxu0 0
      %3482 = vmatprep.subr.bf16.mxu0 0
      %3483 = vmatpush1.bf16.msra.mxu0 0
      %3484 = vmatprep.subr.bf16.mxu0 0
      %3485 = vmatpush1.bf16.msra.mxu0 0
      %3486 = vmatprep.mubr.bf16.mxu0 0
      %3487 = vmatmul.mubr.bf16.gmra.mrb[0].mxu0 %v783
      %v3488 = vpop.f32.mrb[0].mxu0
      %v3489 = vadd.f32 0.0, %v3488
      %v3490 = vpop.f32.mrb[0].mxu0
      %v3491 = vpop.f32.mrb[0].mxu0
      %v3492 = vadd.f32 0.0, %v3491
      %v3493 = vpop.f32.mrb[0].mxu0
      %3494 = vdwg.mxu0
      %v3495 = vpack.c.bf16 %v3492, %v3489
      %v3497 = vsel %vm781, %v3495, 0
      %3499 = vmatprep.subr.bf16.mxu0 0
      %3500 = vmatpush1.bf16.msra.mxu0 %v835
      %3501 = vmatprep.subr.bf16.mxu0 0
      %3502 = vmatpush1.bf16.msra.mxu0 0
      %3503 = vmatprep.subr.bf16.mxu0 0
      %3504 = vmatpush1.bf16.msra.mxu0 0
      %3505 = vmatprep.subr.bf16.mxu0 0
      %3506 = vmatpush1.bf16.msra.mxu0 0
      %3507 = vmatprep.subr.bf16.mxu0 0
      %3508 = vmatpush1.bf16.msra.mxu0 0
      %3509 = vmatprep.subr.bf16.mxu0 0
      %3510 = vmatpush1.bf16.msra.mxu0 0
      %3511 = vmatprep.subr.bf16.mxu0 0
      %3512 = vmatpush1.bf16.msra.mxu0 0
      %3513 = vmatprep.subr.bf16.mxu0 0
      %3514 = vmatpush1.bf16.msra.mxu0 0
      %3515 = vmatprep.subr.bf16.mxu0 0
      %3516 = vmatpush1.bf16.msra.mxu0 0
      %3517 = vmatprep.subr.bf16.mxu0 0
      %3518 = vmatpush1.bf16.msra.mxu0 0
      %3519 = vmatprep.subr.bf16.mxu0 0
      %3520 = vmatpush1.bf16.msra.mxu0 0
      %3521 = vmatprep.subr.bf16.mxu0 0
      %3522 = vmatpush1.bf16.msra.mxu0 0
      %3523 = vmatprep.subr.bf16.mxu0 0
      %3524 = vmatpush1.bf16.msra.mxu0 0
      %3525 = vmatprep.subr.bf16.mxu0 0
      %3526 = vmatpush1.bf16.msra.mxu0 0
      %3527 = vmatprep.subr.bf16.mxu0 0
      %3528 = vmatpush1.bf16.msra.mxu0 0
      %3529 = vmatprep.subr.bf16.mxu0 0
      %3530 = vmatpush1.bf16.msra.mxu0 0
      %3531 = vmatprep.mubr.bf16.mxu0 0
      %3532 = vmatmul.mubr.bf16.gmra.mrb[0].mxu0 %v3497
      %v3533 = vpop.f32.mrb[0].mxu0
      %v3534 = vadd.f32 0.0, %v3533
      %v3535 = vpop.f32.mrb[0].mxu0
      %v3536 = vpop.f32.mrb[0].mxu0
      %v3537 = vadd.f32 0.0, %v3536
      %v3538 = vpop.f32.mrb[0].mxu0
      %3539 = vdwg.mxu0
      %v3540 = vmin.f32 %v3447, %v3534
      %v3541 = vmin.f32 %v3448, %v3537
      %s3542 = scalar_lea.vmem %s428, 104
      %v3543 = vld [vmem:[%s3542] sm:$0xf]
      %v3545 = vsel %vm785, %v3543, 0
      %3547 = vmatprep.subr.bf16.mxu0 0
      %3548 = vmatpush1.bf16.msra.mxu0 %v3545
      %3549 = vmatprep.subr.bf16.mxu0 0
      %3550 = vmatpush1.bf16.msra.mxu0 0
      %3551 = vmatprep.subr.bf16.mxu0 0
      %3552 = vmatpush1.bf16.msra.mxu0 0
      %3553 = vmatprep.subr.bf16.mxu0 0
      %3554 = vmatpush1.bf16.msra.mxu0 0
      %3555 = vmatprep.subr.bf16.mxu0 0
      %3556 = vmatpush1.bf16.msra.mxu0 0
      %3557 = vmatprep.subr.bf16.mxu0 0
      %3558 = vmatpush1.bf16.msra.mxu0 0
      %3559 = vmatprep.subr.bf16.mxu0 0
      %3560 = vmatpush1.bf16.msra.mxu0 0
      %3561 = vmatprep.subr.bf16.mxu0 0
      %3562 = vmatpush1.bf16.msra.mxu0 0
      %3563 = vmatprep.subr.bf16.mxu0 0
      %3564 = vmatpush1.bf16.msra.mxu0 0
      %3565 = vmatprep.subr.bf16.mxu0 0
      %3566 = vmatpush1.bf16.msra.mxu0 0
      %3567 = vmatprep.subr.bf16.mxu0 0
      %3568 = vmatpush1.bf16.msra.mxu0 0
      %3569 = vmatprep.subr.bf16.mxu0 0
      %3570 = vmatpush1.bf16.msra.mxu0 0
      %3571 = vmatprep.subr.bf16.mxu0 0
      %3572 = vmatpush1.bf16.msra.mxu0 0
      %3573 = vmatprep.subr.bf16.mxu0 0
      %3574 = vmatpush1.bf16.msra.mxu0 0
      %3575 = vmatprep.subr.bf16.mxu0 0
      %3576 = vmatpush1.bf16.msra.mxu0 0
      %3577 = vmatprep.subr.bf16.mxu0 0
      %3578 = vmatpush1.bf16.msra.mxu0 0
      %3579 = vmatprep.mubr.bf16.mxu0 0
      %3580 = vmatmul.mubr.bf16.gmra.mrb[0].mxu0 %v783
      %v3581 = vpop.f32.mrb[0].mxu0
      %v3582 = vadd.f32 0.0, %v3581
      %v3583 = vpop.f32.mrb[0].mxu0
      %v3584 = vpop.f32.mrb[0].mxu0
      %v3585 = vadd.f32 0.0, %v3584
      %v3586 = vpop.f32.mrb[0].mxu0
      %3587 = vdwg.mxu0
      %v3588 = vpack.c.bf16 %v3585, %v3582
      %v3590 = vsel %vm781, %v3588, 0
      %3592 = vmatprep.subr.bf16.mxu0 0
      %3593 = vmatpush1.bf16.msra.mxu0 %v835
      %3594 = vmatprep.subr.bf16.mxu0 0
      %3595 = vmatpush1.bf16.msra.mxu0 0
      %3596 = vmatprep.subr.bf16.mxu0 0
      %3597 = vmatpush1.bf16.msra.mxu0 0
      %3598 = vmatprep.subr.bf16.mxu0 0
      %3599 = vmatpush1.bf16.msra.mxu0 0
      %3600 = vmatprep.subr.bf16.mxu0 0
      %3601 = vmatpush1.bf16.msra.mxu0 0
      %3602 = vmatprep.subr.bf16.mxu0 0
      %3603 = vmatpush1.bf16.msra.mxu0 0
      %3604 = vmatprep.subr.bf16.mxu0 0
      %3605 = vmatpush1.bf16.msra.mxu0 0
      %3606 = vmatprep.subr.bf16.mxu0 0
      %3607 = vmatpush1.bf16.msra.mxu0 0
      %3608 = vmatprep.subr.bf16.mxu0 0
      %3609 = vmatpush1.bf16.msra.mxu0 0
      %3610 = vmatprep.subr.bf16.mxu0 0
      %3611 = vmatpush1.bf16.msra.mxu0 0
      %3612 = vmatprep.subr.bf16.mxu0 0
      %3613 = vmatpush1.bf16.msra.mxu0 0
      %3614 = vmatprep.subr.bf16.mxu0 0
      %3615 = vmatpush1.bf16.msra.mxu0 0
      %3616 = vmatprep.subr.bf16.mxu0 0
      %3617 = vmatpush1.bf16.msra.mxu0 0
      %3618 = vmatprep.subr.bf16.mxu0 0
      %3619 = vmatpush1.bf16.msra.mxu0 0
      %3620 = vmatprep.subr.bf16.mxu0 0
      %3621 = vmatpush1.bf16.msra.mxu0 0
      %3622 = vmatprep.subr.bf16.mxu0 0
      %3623 = vmatpush1.bf16.msra.mxu0 0
      %3624 = vmatprep.mubr.bf16.mxu0 0
      %3625 = vmatmul.mubr.bf16.gmra.mrb[0].mxu0 %v3590
      %v3626 = vpop.f32.mrb[0].mxu0
      %v3627 = vadd.f32 0.0, %v3626
      %v3628 = vpop.f32.mrb[0].mxu0
      %v3629 = vpop.f32.mrb[0].mxu0
      %v3630 = vadd.f32 0.0, %v3629
      %v3631 = vpop.f32.mrb[0].mxu0
      %3632 = vdwg.mxu0
      %v3633 = vmin.f32 %v3540, %v3627
      %v3634 = vmin.f32 %v3541, %v3630
      %s3635 = scalar_lea.vmem %s428, 128
      %v3636 = vld [vmem:[%s3635] sm:$0xf]
      %v3638 = vsel %vm785, %v3636, 0
      %3640 = vmatprep.subr.bf16.mxu0 0
      %3641 = vmatpush1.bf16.msra.mxu0 %v3638
      %3642 = vmatprep.subr.bf16.mxu0 0
      %3643 = vmatpush1.bf16.msra.mxu0 0
      %3644 = vmatprep.subr.bf16.mxu0 0
      %3645 = vmatpush1.bf16.msra.mxu0 0
      %3646 = vmatprep.subr.bf16.mxu0 0
      %3647 = vmatpush1.bf16.msra.mxu0 0
      %3648 = vmatprep.subr.bf16.mxu0 0
      %3649 = vmatpush1.bf16.msra.mxu0 0
      %3650 = vmatprep.subr.bf16.mxu0 0
      %3651 = vmatpush1.bf16.msra.mxu0 0
      %3652 = vmatprep.subr.bf16.mxu0 0
      %3653 = vmatpush1.bf16.msra.mxu0 0
      %3654 = vmatprep.subr.bf16.mxu0 0
      %3655 = vmatpush1.bf16.msra.mxu0 0
      %3656 = vmatprep.subr.bf16.mxu0 0
      %3657 = vmatpush1.bf16.msra.mxu0 0
      %3658 = vmatprep.subr.bf16.mxu0 0
      %3659 = vmatpush1.bf16.msra.mxu0 0
      %3660 = vmatprep.subr.bf16.mxu0 0
      %3661 = vmatpush1.bf16.msra.mxu0 0
      %3662 = vmatprep.subr.bf16.mxu0 0
      %3663 = vmatpush1.bf16.msra.mxu0 0
      %3664 = vmatprep.subr.bf16.mxu0 0
      %3665 = vmatpush1.bf16.msra.mxu0 0
      %3666 = vmatprep.subr.bf16.mxu0 0
      %3667 = vmatpush1.bf16.msra.mxu0 0
      %3668 = vmatprep.subr.bf16.mxu0 0
      %3669 = vmatpush1.bf16.msra.mxu0 0
      %3670 = vmatprep.subr.bf16.mxu0 0
      %3671 = vmatpush1.bf16.msra.mxu0 0
      %3672 = vmatprep.mubr.bf16.mxu0 0
      %3673 = vmatmul.mubr.bf16.gmra.mrb[0].mxu0 %v783
      %v3674 = vpop.f32.mrb[0].mxu0
      %v3675 = vadd.f32 0.0, %v3674
      %v3676 = vpop.f32.mrb[0].mxu0
      %v3677 = vpop.f32.mrb[0].mxu0
      %v3678 = vadd.f32 0.0, %v3677
      %v3679 = vpop.f32.mrb[0].mxu0
      %3680 = vdwg.mxu0
      %v3681 = vpack.c.bf16 %v3678, %v3675
      %v3683 = vsel %vm781, %v3681, 0
      %3685 = vmatprep.subr.bf16.mxu0 0
      %3686 = vmatpush1.bf16.msra.mxu0 %v835
      %3687 = vmatprep.subr.bf16.mxu0 0
      %3688 = vmatpush1.bf16.msra.mxu0 0
      %3689 = vmatprep.subr.bf16.mxu0 0
      %3690 = vmatpush1.bf16.msra.mxu0 0
      %3691 = vmatprep.subr.bf16.mxu0 0
      %3692 = vmatpush1.bf16.msra.mxu0 0
      %3693 = vmatprep.subr.bf16.mxu0 0
      %3694 = vmatpush1.bf16.msra.mxu0 0
      %3695 = vmatprep.subr.bf16.mxu0 0
      %3696 = vmatpush1.bf16.msra.mxu0 0
      %3697 = vmatprep.subr.bf16.mxu0 0
      %3698 = vmatpush1.bf16.msra.mxu0 0
      %3699 = vmatprep.subr.bf16.mxu0 0
      %3700 = vmatpush1.bf16.msra.mxu0 0
      %3701 = vmatprep.subr.bf16.mxu0 0
      %3702 = vmatpush1.bf16.msra.mxu0 0
      %3703 = vmatprep.subr.bf16.mxu0 0
      %3704 = vmatpush1.bf16.msra.mxu0 0
      %3705 = vmatprep.subr.bf16.mxu0 0
      %3706 = vmatpush1.bf16.msra.mxu0 0
      %3707 = vmatprep.subr.bf16.mxu0 0
      %3708 = vmatpush1.bf16.msra.mxu0 0
      %3709 = vmatprep.subr.bf16.mxu0 0
      %3710 = vmatpush1.bf16.msra.mxu0 0
      %3711 = vmatprep.subr.bf16.mxu0 0
      %3712 = vmatpush1.bf16.msra.mxu0 0
      %3713 = vmatprep.subr.bf16.mxu0 0
      %3714 = vmatpush1.bf16.msra.mxu0 0
      %3715 = vmatprep.subr.bf16.mxu0 0
      %3716 = vmatpush1.bf16.msra.mxu0 0
      %3717 = vmatprep.mubr.bf16.mxu0 0
      %3718 = vmatmul.mubr.bf16.gmra.mrb[0].mxu0 %v3683
      %v3719 = vpop.f32.mrb[0].mxu0
      %v3720 = vadd.f32 0.0, %v3719
      %v3721 = vpop.f32.mrb[0].mxu0
      %v3722 = vpop.f32.mrb[0].mxu0
      %v3723 = vadd.f32 0.0, %v3722
      %v3724 = vpop.f32.mrb[0].mxu0
      %3725 = vdwg.mxu0
      %v3726 = vmin.f32 %v3633, %v3720
      %v3727 = vmin.f32 %v3634, %v3723
      %s3728 = scalar_lea.vmem %s428, 152
      %v3729 = vld [vmem:[%s3728] sm:$0xf]
      %v3731 = vsel %vm785, %v3729, 0
      %3733 = vmatprep.subr.bf16.mxu0 0
      %3734 = vmatpush1.bf16.msra.mxu0 %v3731
      %3735 = vmatprep.subr.bf16.mxu0 0
      %3736 = vmatpush1.bf16.msra.mxu0 0
      %3737 = vmatprep.subr.bf16.mxu0 0
      %3738 = vmatpush1.bf16.msra.mxu0 0
      %3739 = vmatprep.subr.bf16.mxu0 0
      %3740 = vmatpush1.bf16.msra.mxu0 0
      %3741 = vmatprep.subr.bf16.mxu0 0
      %3742 = vmatpush1.bf16.msra.mxu0 0
      %3743 = vmatprep.subr.bf16.mxu0 0
      %3744 = vmatpush1.bf16.msra.mxu0 0
      %3745 = vmatprep.subr.bf16.mxu0 0
      %3746 = vmatpush1.bf16.msra.mxu0 0
      %3747 = vmatprep.subr.bf16.mxu0 0
      %3748 = vmatpush1.bf16.msra.mxu0 0
      %3749 = vmatprep.subr.bf16.mxu0 0
      %3750 = vmatpush1.bf16.msra.mxu0 0
      %3751 = vmatprep.subr.bf16.mxu0 0
      %3752 = vmatpush1.bf16.msra.mxu0 0
      %3753 = vmatprep.subr.bf16.mxu0 0
      %3754 = vmatpush1.bf16.msra.mxu0 0
      %3755 = vmatprep.subr.bf16.mxu0 0
      %3756 = vmatpush1.bf16.msra.mxu0 0
      %3757 = vmatprep.subr.bf16.mxu0 0
      %3758 = vmatpush1.bf16.msra.mxu0 0
      %3759 = vmatprep.subr.bf16.mxu0 0
      %3760 = vmatpush1.bf16.msra.mxu0 0
      %3761 = vmatprep.subr.bf16.mxu0 0
      %3762 = vmatpush1.bf16.msra.mxu0 0
      %3763 = vmatprep.subr.bf16.mxu0 0
      %3764 = vmatpush1.bf16.msra.mxu0 0
      %3765 = vmatprep.mubr.bf16.mxu0 0
      %3766 = vmatmul.mubr.bf16.gmra.mrb[0].mxu0 %v783
      %v3767 = vpop.f32.mrb[0].mxu0
      %v3768 = vadd.f32 0.0, %v3767
      %v3769 = vpop.f32.mrb[0].mxu0
      %v3770 = vpop.f32.mrb[0].mxu0
      %v3771 = vadd.f32 0.0, %v3770
      %v3772 = vpop.f32.mrb[0].mxu0
      %3773 = vdwg.mxu0
      %v3774 = vpack.c.bf16 %v3771, %v3768
      %v3776 = vsel %vm781, %v3774, 0
      %3778 = vmatprep.subr.bf16.mxu0 0
      %3779 = vmatpush1.bf16.msra.mxu0 %v835
      %3780 = vmatprep.subr.bf16.mxu0 0
      %3781 = vmatpush1.bf16.msra.mxu0 0
      %3782 = vmatprep.subr.bf16.mxu0 0
      %3783 = vmatpush1.bf16.msra.mxu0 0
      %3784 = vmatprep.subr.bf16.mxu0 0
      %3785 = vmatpush1.bf16.msra.mxu0 0
      %3786 = vmatprep.subr.bf16.mxu0 0
      %3787 = vmatpush1.bf16.msra.mxu0 0
      %3788 = vmatprep.subr.bf16.mxu0 0
      %3789 = vmatpush1.bf16.msra.mxu0 0
      %3790 = vmatprep.subr.bf16.mxu0 0
      %3791 = vmatpush1.bf16.msra.mxu0 0
      %3792 = vmatprep.subr.bf16.mxu0 0
      %3793 = vmatpush1.bf16.msra.mxu0 0
      %3794 = vmatprep.subr.bf16.mxu0 0
      %3795 = vmatpush1.bf16.msra.mxu0 0
      %3796 = vmatprep.subr.bf16.mxu0 0
      %3797 = vmatpush1.bf16.msra.mxu0 0
      %3798 = vmatprep.subr.bf16.mxu0 0
      %3799 = vmatpush1.bf16.msra.mxu0 0
      %3800 = vmatprep.subr.bf16.mxu0 0
      %3801 = vmatpush1.bf16.msra.mxu0 0
      %3802 = vmatprep.subr.bf16.mxu0 0
      %3803 = vmatpush1.bf16.msra.mxu0 0
      %3804 = vmatprep.subr.bf16.mxu0 0
      %3805 = vmatpush1.bf16.msra.mxu0 0
      %3806 = vmatprep.subr.bf16.mxu0 0
      %3807 = vmatpush1.bf16.msra.mxu0 0
      %3808 = vmatprep.subr.bf16.mxu0 0
      %3809 = vmatpush1.bf16.msra.mxu0 0
      %3810 = vmatprep.mubr.bf16.mxu0 0
      %3811 = vmatmul.mubr.bf16.gmra.mrb[0].mxu0 %v3776
      %v3812 = vpop.f32.mrb[0].mxu0
      %v3813 = vadd.f32 0.0, %v3812
      %v3814 = vpop.f32.mrb[0].mxu0
      %v3815 = vpop.f32.mrb[0].mxu0
      %v3816 = vadd.f32 0.0, %v3815
      %v3817 = vpop.f32.mrb[0].mxu0
      %3818 = vdwg.mxu0
      %v3819 = vmin.f32 %v3726, %v3813
      %v3820 = vmin.f32 %v3727, %v3816
      %s3821 = scalar_lea.vmem %s428, 176
      %v3822 = vld [vmem:[%s3821] sm:$0xf]
      %v3824 = vsel %vm785, %v3822, 0
      %3826 = vmatprep.subr.bf16.mxu0 0
      %3827 = vmatpush1.bf16.msra.mxu0 %v3824
      %3828 = vmatprep.subr.bf16.mxu0 0
      %3829 = vmatpush1.bf16.msra.mxu0 0
      %3830 = vmatprep.subr.bf16.mxu0 0
      %3831 = vmatpush1.bf16.msra.mxu0 0
      %3832 = vmatprep.subr.bf16.mxu0 0
      %3833 = vmatpush1.bf16.msra.mxu0 0
      %3834 = vmatprep.subr.bf16.mxu0 0
      %3835 = vmatpush1.bf16.msra.mxu0 0
      %3836 = vmatprep.subr.bf16.mxu0 0
      %3837 = vmatpush1.bf16.msra.mxu0 0
      %3838 = vmatprep.subr.bf16.mxu0 0
      %3839 = vmatpush1.bf16.msra.mxu0 0
      %3840 = vmatprep.subr.bf16.mxu0 0
      %3841 = vmatpush1.bf16.msra.mxu0 0
      %3842 = vmatprep.subr.bf16.mxu0 0
      %3843 = vmatpush1.bf16.msra.mxu0 0
      %3844 = vmatprep.subr.bf16.mxu0 0
      %3845 = vmatpush1.bf16.msra.mxu0 0
      %3846 = vmatprep.subr.bf16.mxu0 0
      %3847 = vmatpush1.bf16.msra.mxu0 0
      %3848 = vmatprep.subr.bf16.mxu0 0
      %3849 = vmatpush1.bf16.msra.mxu0 0
      %3850 = vmatprep.subr.bf16.mxu0 0
      %3851 = vmatpush1.bf16.msra.mxu0 0
      %3852 = vmatprep.subr.bf16.mxu0 0
      %3853 = vmatpush1.bf16.msra.mxu0 0
      %3854 = vmatprep.subr.bf16.mxu0 0
      %3855 = vmatpush1.bf16.msra.mxu0 0
      %3856 = vmatprep.subr.bf16.mxu0 0
      %3857 = vmatpush1.bf16.msra.mxu0 0
      %3858 = vmatprep.mubr.bf16.mxu0 0
      %3859 = vmatmul.mubr.bf16.gmra.mrb[0].mxu0 %v783
      %v3860 = vpop.f32.mrb[0].mxu0
      %v3861 = vadd.f32 0.0, %v3860
      %v3862 = vpop.f32.mrb[0].mxu0
      %v3863 = vpop.f32.mrb[0].mxu0
      %v3864 = vadd.f32 0.0, %v3863
      %v3865 = vpop.f32.mrb[0].mxu0
      %3866 = vdwg.mxu0
      %v3867 = vpack.c.bf16 %v3864, %v3861
      %v3869 = vsel %vm781, %v3867, 0
      %3871 = vmatprep.subr.bf16.mxu0 0
      %3872 = vmatpush1.bf16.msra.mxu0 %v835
      %3873 = vmatprep.subr.bf16.mxu0 0
      %3874 = vmatpush1.bf16.msra.mxu0 0
      %3875 = vmatprep.subr.bf16.mxu0 0
      %3876 = vmatpush1.bf16.msra.mxu0 0
      %3877 = vmatprep.subr.bf16.mxu0 0
      %3878 = vmatpush1.bf16.msra.mxu0 0
      %3879 = vmatprep.subr.bf16.mxu0 0
      %3880 = vmatpush1.bf16.msra.mxu0 0
      %3881 = vmatprep.subr.bf16.mxu0 0
      %3882 = vmatpush1.bf16.msra.mxu0 0
      %3883 = vmatprep.subr.bf16.mxu0 0
      %3884 = vmatpush1.bf16.msra.mxu0 0
      %3885 = vmatprep.subr.bf16.mxu0 0
      %3886 = vmatpush1.bf16.msra.mxu0 0
      %3887 = vmatprep.subr.bf16.mxu0 0
      %3888 = vmatpush1.bf16.msra.mxu0 0
      %3889 = vmatprep.subr.bf16.mxu0 0
      %3890 = vmatpush1.bf16.msra.mxu0 0
      %3891 = vmatprep.subr.bf16.mxu0 0
      %3892 = vmatpush1.bf16.msra.mxu0 0
      %3893 = vmatprep.subr.bf16.mxu0 0
      %3894 = vmatpush1.bf16.msra.mxu0 0
      %3895 = vmatprep.subr.bf16.mxu0 0
      %3896 = vmatpush1.bf16.msra.mxu0 0
      %3897 = vmatprep.subr.bf16.mxu0 0
      %3898 = vmatpush1.bf16.msra.mxu0 0
      %3899 = vmatprep.subr.bf16.mxu0 0
      %3900 = vmatpush1.bf16.msra.mxu0 0
      %3901 = vmatprep.subr.bf16.mxu0 0
      %3902 = vmatpush1.bf16.msra.mxu0 0
      %3903 = vmatprep.mubr.bf16.mxu0 0
      %3904 = vmatmul.mubr.bf16.gmra.mrb[0].mxu0 %v3869
      %v3905 = vpop.f32.mrb[0].mxu0
      %v3906 = vadd.f32 0.0, %v3905
      %v3907 = vpop.f32.mrb[0].mxu0
      %v3908 = vpop.f32.mrb[0].mxu0
      %v3909 = vadd.f32 0.0, %v3908
      %v3910 = vpop.f32.mrb[0].mxu0
      %3911 = vdwg.mxu0
      %v3912 = vmin.f32 %v3819, %v3906
      %v3913 = vmin.f32 %v3820, %v3909
      %v3914 = vmul.f32 %v3912, %v500
      %v3915 = vmul.f32 %v3913, %v501
      %v3916 = vadd.f32 %v3158, %v3914
      %v3917 = vadd.f32 %v3159, %v3915
      %v3918 = vsub.f32 1.0, %v500
      %v3919 = vsub.f32 1.0, %v501
      %v3920 = vmul.f32 %v3912, %v3918
      %v3921 = vmul.f32 %v3913, %v3919
      %v3922 = vmul.f32 %v3920, %v476
      %v3923 = vmul.f32 %v3921, %v477
      %vm3924 = vcmp.ne.f32.partialorder %v3922, 0.0
      %vm3925 = vcmp.ne.f32.partialorder %v3923, 0.0
      %v3926 = vsel %vm3924, %v3922, inf
      %v3927 = vsel %vm3925, %v3923, inf
      %v3928 = vmin.f32 %v3170, %v3926
      %v3929 = vmin.f32 %v3171, %v3927
      %s3930 = scalar_lea.vmem %s428, 12
      %v3931 = vld [vmem:[%s3930] sm:$0xf]
      %v3933 = vsel %vm785, %v3931, 0
      %3935 = vmatprep.subr.bf16.mxu0 0
      %3936 = vmatpush1.bf16.msra.mxu0 %v3933
      %3937 = vmatprep.subr.bf16.mxu0 0
      %3938 = vmatpush1.bf16.msra.mxu0 0
      %3939 = vmatprep.subr.bf16.mxu0 0
      %3940 = vmatpush1.bf16.msra.mxu0 0
      %3941 = vmatprep.subr.bf16.mxu0 0
      %3942 = vmatpush1.bf16.msra.mxu0 0
      %3943 = vmatprep.subr.bf16.mxu0 0
      %3944 = vmatpush1.bf16.msra.mxu0 0
      %3945 = vmatprep.subr.bf16.mxu0 0
      %3946 = vmatpush1.bf16.msra.mxu0 0
      %3947 = vmatprep.subr.bf16.mxu0 0
      %3948 = vmatpush1.bf16.msra.mxu0 0
      %3949 = vmatprep.subr.bf16.mxu0 0
      %3950 = vmatpush1.bf16.msra.mxu0 0
      %3951 = vmatprep.subr.bf16.mxu0 0
      %3952 = vmatpush1.bf16.msra.mxu0 0
      %3953 = vmatprep.subr.bf16.mxu0 0
      %3954 = vmatpush1.bf16.msra.mxu0 0
      %3955 = vmatprep.subr.bf16.mxu0 0
      %3956 = vmatpush1.bf16.msra.mxu0 0
      %3957 = vmatprep.subr.bf16.mxu0 0
      %3958 = vmatpush1.bf16.msra.mxu0 0
      %3959 = vmatprep.subr.bf16.mxu0 0
      %3960 = vmatpush1.bf16.msra.mxu0 0
      %3961 = vmatprep.subr.bf16.mxu0 0
      %3962 = vmatpush1.bf16.msra.mxu0 0
      %3963 = vmatprep.subr.bf16.mxu0 0
      %3964 = vmatpush1.bf16.msra.mxu0 0
      %3965 = vmatprep.subr.bf16.mxu0 0
      %3966 = vmatpush1.bf16.msra.mxu0 0
      %3967 = vmatprep.mubr.bf16.mxu0 0
      %3968 = vmatmul.mubr.bf16.gmra.mrb[0].mxu0 %v783
      %v3969 = vpop.f32.mrb[0].mxu0
      %v3970 = vadd.f32 0.0, %v3969
      %v3971 = vpop.f32.mrb[0].mxu0
      %v3972 = vpop.f32.mrb[0].mxu0
      %v3973 = vadd.f32 0.0, %v3972
      %v3974 = vpop.f32.mrb[0].mxu0
      %3975 = vdwg.mxu0
      %v3976 = vpack.c.bf16 %v3973, %v3970
      %v3978 = vsel %vm781, %v3976, 0
      %3980 = vmatprep.subr.bf16.mxu0 0
      %3981 = vmatpush1.bf16.msra.mxu0 %v835
      %3982 = vmatprep.subr.bf16.mxu0 0
      %3983 = vmatpush1.bf16.msra.mxu0 0
      %3984 = vmatprep.subr.bf16.mxu0 0
      %3985 = vmatpush1.bf16.msra.mxu0 0
      %3986 = vmatprep.subr.bf16.mxu0 0
      %3987 = vmatpush1.bf16.msra.mxu0 0
      %3988 = vmatprep.subr.bf16.mxu0 0
      %3989 = vmatpush1.bf16.msra.mxu0 0
      %3990 = vmatprep.subr.bf16.mxu0 0
      %3991 = vmatpush1.bf16.msra.mxu0 0
      %3992 = vmatprep.subr.bf16.mxu0 0
      %3993 = vmatpush1.bf16.msra.mxu0 0
      %3994 = vmatprep.subr.bf16.mxu0 0
      %3995 = vmatpush1.bf16.msra.mxu0 0
      %3996 = vmatprep.subr.bf16.mxu0 0
      %3997 = vmatpush1.bf16.msra.mxu0 0
      %3998 = vmatprep.subr.bf16.mxu0 0
      %3999 = vmatpush1.bf16.msra.mxu0 0
      %4000 = vmatprep.subr.bf16.mxu0 0
      %4001 = vmatpush1.bf16.msra.mxu0 0
      %4002 = vmatprep.subr.bf16.mxu0 0
      %4003 = vmatpush1.bf16.msra.mxu0 0
      %4004 = vmatprep.subr.bf16.mxu0 0
      %4005 = vmatpush1.bf16.msra.mxu0 0
      %4006 = vmatprep.subr.bf16.mxu0 0
      %4007 = vmatpush1.bf16.msra.mxu0 0
      %4008 = vmatprep.subr.bf16.mxu0 0
      %4009 = vmatpush1.bf16.msra.mxu0 0
      %4010 = vmatprep.subr.bf16.mxu0 0
      %4011 = vmatpush1.bf16.msra.mxu0 0
      %4012 = vmatprep.mubr.bf16.mxu0 0
      %4013 = vmatmul.mubr.bf16.gmra.mrb[0].mxu0 %v3978
      %v4014 = vpop.f32.mrb[0].mxu0
      %v4015 = vadd.f32 0.0, %v4014
      %v4016 = vpop.f32.mrb[0].mxu0
      %v4017 = vpop.f32.mrb[0].mxu0
      %v4018 = vadd.f32 0.0, %v4017
      %v4019 = vpop.f32.mrb[0].mxu0
      %4020 = vdwg.mxu0
      %s4021 = scalar_lea.vmem %s428, 36
      %v4022 = vld [vmem:[%s4021] sm:$0xf]
      %v4024 = vsel %vm785, %v4022, 0
      %4026 = vmatprep.subr.bf16.mxu0 0
      %4027 = vmatpush1.bf16.msra.mxu0 %v4024
      %4028 = vmatprep.subr.bf16.mxu0 0
      %4029 = vmatpush1.bf16.msra.mxu0 0
      %4030 = vmatprep.subr.bf16.mxu0 0
      %4031 = vmatpush1.bf16.msra.mxu0 0
      %4032 = vmatprep.subr.bf16.mxu0 0
      %4033 = vmatpush1.bf16.msra.mxu0 0
      %4034 = vmatprep.subr.bf16.mxu0 0
      %4035 = vmatpush1.bf16.msra.mxu0 0
      %4036 = vmatprep.subr.bf16.mxu0 0
      %4037 = vmatpush1.bf16.msra.mxu0 0
      %4038 = vmatprep.subr.bf16.mxu0 0
      %4039 = vmatpush1.bf16.msra.mxu0 0
      %4040 = vmatprep.subr.bf16.mxu0 0
      %4041 = vmatpush1.bf16.msra.mxu0 0
      %4042 = vmatprep.subr.bf16.mxu0 0
      %4043 = vmatpush1.bf16.msra.mxu0 0
      %4044 = vmatprep.subr.bf16.mxu0 0
      %4045 = vmatpush1.bf16.msra.mxu0 0
      %4046 = vmatprep.subr.bf16.mxu0 0
      %4047 = vmatpush1.bf16.msra.mxu0 0
      %4048 = vmatprep.subr.bf16.mxu0 0
      %4049 = vmatpush1.bf16.msra.mxu0 0
      %4050 = vmatprep.subr.bf16.mxu0 0
      %4051 = vmatpush1.bf16.msra.mxu0 0
      %4052 = vmatprep.subr.bf16.mxu0 0
      %4053 = vmatpush1.bf16.msra.mxu0 0
      %4054 = vmatprep.subr.bf16.mxu0 0
      %4055 = vmatpush1.bf16.msra.mxu0 0
      %4056 = vmatprep.subr.bf16.mxu0 0
      %4057 = vmatpush1.bf16.msra.mxu0 0
      %4058 = vmatprep.mubr.bf16.mxu0 0
      %4059 = vmatmul.mubr.bf16.gmra.mrb[0].mxu0 %v783
      %v4060 = vpop.f32.mrb[0].mxu0
      %v4061 = vadd.f32 0.0, %v4060
      %v4062 = vpop.f32.mrb[0].mxu0
      %v4063 = vpop.f32.mrb[0].mxu0
      %v4064 = vadd.f32 0.0, %v4063
      %v4065 = vpop.f32.mrb[0].mxu0
      %4066 = vdwg.mxu0
      %v4067 = vpack.c.bf16 %v4064, %v4061
      %v4069 = vsel %vm781, %v4067, 0
      %4071 = vmatprep.subr.bf16.mxu0 0
      %4072 = vmatpush1.bf16.msra.mxu0 %v835
      %4073 = vmatprep.subr.bf16.mxu0 0
      %4074 = vmatpush1.bf16.msra.mxu0 0
      %4075 = vmatprep.subr.bf16.mxu0 0
      %4076 = vmatpush1.bf16.msra.mxu0 0
      %4077 = vmatprep.subr.bf16.mxu0 0
      %4078 = vmatpush1.bf16.msra.mxu0 0
      %4079 = vmatprep.subr.bf16.mxu0 0
      %4080 = vmatpush1.bf16.msra.mxu0 0
      %4081 = vmatprep.subr.bf16.mxu0 0
      %4082 = vmatpush1.bf16.msra.mxu0 0
      %4083 = vmatprep.subr.bf16.mxu0 0
      %4084 = vmatpush1.bf16.msra.mxu0 0
      %4085 = vmatprep.subr.bf16.mxu0 0
      %4086 = vmatpush1.bf16.msra.mxu0 0
      %4087 = vmatprep.subr.bf16.mxu0 0
      %4088 = vmatpush1.bf16.msra.mxu0 0
      %4089 = vmatprep.subr.bf16.mxu0 0
      %4090 = vmatpush1.bf16.msra.mxu0 0
      %4091 = vmatprep.subr.bf16.mxu0 0
      %4092 = vmatpush1.bf16.msra.mxu0 0
      %4093 = vmatprep.subr.bf16.mxu0 0
      %4094 = vmatpush1.bf16.msra.mxu0 0
      %4095 = vmatprep.subr.bf16.mxu0 0
      %4096 = vmatpush1.bf16.msra.mxu0 0
      %4097 = vmatprep.subr.bf16.mxu0 0
      %4098 = vmatpush1.bf16.msra.mxu0 0
      %4099 = vmatprep.subr.bf16.mxu0 0
      %4100 = vmatpush1.bf16.msra.mxu0 0
      %4101 = vmatprep.subr.bf16.mxu0 0
      %4102 = vmatpush1.bf16.msra.mxu0 0
      %4103 = vmatprep.mubr.bf16.mxu0 0
      %4104 = vmatmul.mubr.bf16.gmra.mrb[0].mxu0 %v4069
      %v4105 = vpop.f32.mrb[0].mxu0
      %v4106 = vadd.f32 0.0, %v4105
      %v4107 = vpop.f32.mrb[0].mxu0
      %v4108 = vpop.f32.mrb[0].mxu0
      %v4109 = vadd.f32 0.0, %v4108
      %v4110 = vpop.f32.mrb[0].mxu0
      %4111 = vdwg.mxu0
      %v4112 = vmin.f32 %v4015, %v4106
      %v4113 = vmin.f32 %v4018, %v4109
      %s4114 = scalar_lea.vmem %s428, 60
      %v4115 = vld [vmem:[%s4114] sm:$0xf]
      %v4117 = vsel %vm785, %v4115, 0
      %4119 = vmatprep.subr.bf16.mxu0 0
      %4120 = vmatpush1.bf16.msra.mxu0 %v4117
      %4121 = vmatprep.subr.bf16.mxu0 0
      %4122 = vmatpush1.bf16.msra.mxu0 0
      %4123 = vmatprep.subr.bf16.mxu0 0
      %4124 = vmatpush1.bf16.msra.mxu0 0
      %4125 = vmatprep.subr.bf16.mxu0 0
      %4126 = vmatpush1.bf16.msra.mxu0 0
      %4127 = vmatprep.subr.bf16.mxu0 0
      %4128 = vmatpush1.bf16.msra.mxu0 0
      %4129 = vmatprep.subr.bf16.mxu0 0
      %4130 = vmatpush1.bf16.msra.mxu0 0
      %4131 = vmatprep.subr.bf16.mxu0 0
      %4132 = vmatpush1.bf16.msra.mxu0 0
      %4133 = vmatprep.subr.bf16.mxu0 0
      %4134 = vmatpush1.bf16.msra.mxu0 0
      %4135 = vmatprep.subr.bf16.mxu0 0
      %4136 = vmatpush1.bf16.msra.mxu0 0
      %4137 = vmatprep.subr.bf16.mxu0 0
      %4138 = vmatpush1.bf16.msra.mxu0 0
      %4139 = vmatprep.subr.bf16.mxu0 0
      %4140 = vmatpush1.bf16.msra.mxu0 0
      %4141 = vmatprep.subr.bf16.mxu0 0
      %4142 = vmatpush1.bf16.msra.mxu0 0
      %4143 = vmatprep.subr.bf16.mxu0 0
      %4144 = vmatpush1.bf16.msra.mxu0 0
      %4145 = vmatprep.subr.bf16.mxu0 0
      %4146 = vmatpush1.bf16.msra.mxu0 0
      %4147 = vmatprep.subr.bf16.mxu0 0
      %4148 = vmatpush1.bf16.msra.mxu0 0
      %4149 = vmatprep.subr.bf16.mxu0 0
      %4150 = vmatpush1.bf16.msra.mxu0 0
      %4151 = vmatprep.mubr.bf16.mxu0 0
      %4152 = vmatmul.mubr.bf16.gmra.mrb[0].mxu0 %v783
      %v4153 = vpop.f32.mrb[0].mxu0
      %v4154 = vadd.f32 0.0, %v4153
      %v4155 = vpop.f32.mrb[0].mxu0
      %v4156 = vpop.f32.mrb[0].mxu0
      %v4157 = vadd.f32 0.0, %v4156
      %v4158 = vpop.f32.mrb[0].mxu0
      %4159 = vdwg.mxu0
      %v4160 = vpack.c.bf16 %v4157, %v4154
      %v4162 = vsel %vm781, %v4160, 0
      %4164 = vmatprep.subr.bf16.mxu0 0
      %4165 = vmatpush1.bf16.msra.mxu0 %v835
      %4166 = vmatprep.subr.bf16.mxu0 0
      %4167 = vmatpush1.bf16.msra.mxu0 0
      %4168 = vmatprep.subr.bf16.mxu0 0
      %4169 = vmatpush1.bf16.msra.mxu0 0
      %4170 = vmatprep.subr.bf16.mxu0 0
      %4171 = vmatpush1.bf16.msra.mxu0 0
      %4172 = vmatprep.subr.bf16.mxu0 0
      %4173 = vmatpush1.bf16.msra.mxu0 0
      %4174 = vmatprep.subr.bf16.mxu0 0
      %4175 = vmatpush1.bf16.msra.mxu0 0
      %4176 = vmatprep.subr.bf16.mxu0 0
      %4177 = vmatpush1.bf16.msra.mxu0 0
      %4178 = vmatprep.subr.bf16.mxu0 0
      %4179 = vmatpush1.bf16.msra.mxu0 0
      %4180 = vmatprep.subr.bf16.mxu0 0
      %4181 = vmatpush1.bf16.msra.mxu0 0
      %4182 = vmatprep.subr.bf16.mxu0 0
      %4183 = vmatpush1.bf16.msra.mxu0 0
      %4184 = vmatprep.subr.bf16.mxu0 0
      %4185 = vmatpush1.bf16.msra.mxu0 0
      %4186 = vmatprep.subr.bf16.mxu0 0
      %4187 = vmatpush1.bf16.msra.mxu0 0
      %4188 = vmatprep.subr.bf16.mxu0 0
      %4189 = vmatpush1.bf16.msra.mxu0 0
      %4190 = vmatprep.subr.bf16.mxu0 0
      %4191 = vmatpush1.bf16.msra.mxu0 0
      %4192 = vmatprep.subr.bf16.mxu0 0
      %4193 = vmatpush1.bf16.msra.mxu0 0
      %4194 = vmatprep.subr.bf16.mxu0 0
      %4195 = vmatpush1.bf16.msra.mxu0 0
      %4196 = vmatprep.mubr.bf16.mxu0 0
      %4197 = vmatmul.mubr.bf16.gmra.mrb[0].mxu0 %v4162
      %v4198 = vpop.f32.mrb[0].mxu0
      %v4199 = vadd.f32 0.0, %v4198
      %v4200 = vpop.f32.mrb[0].mxu0
      %v4201 = vpop.f32.mrb[0].mxu0
      %v4202 = vadd.f32 0.0, %v4201
      %v4203 = vpop.f32.mrb[0].mxu0
      %4204 = vdwg.mxu0
      %v4205 = vmin.f32 %v4112, %v4199
      %v4206 = vmin.f32 %v4113, %v4202
      %s4207 = scalar_lea.vmem %s428, 84
      %v4208 = vld [vmem:[%s4207] sm:$0xf]
      %v4210 = vsel %vm785, %v4208, 0
      %4212 = vmatprep.subr.bf16.mxu0 0
      %4213 = vmatpush1.bf16.msra.mxu0 %v4210
      %4214 = vmatprep.subr.bf16.mxu0 0
      %4215 = vmatpush1.bf16.msra.mxu0 0
      %4216 = vmatprep.subr.bf16.mxu0 0
      %4217 = vmatpush1.bf16.msra.mxu0 0
      %4218 = vmatprep.subr.bf16.mxu0 0
      %4219 = vmatpush1.bf16.msra.mxu0 0
      %4220 = vmatprep.subr.bf16.mxu0 0
      %4221 = vmatpush1.bf16.msra.mxu0 0
      %4222 = vmatprep.subr.bf16.mxu0 0
      %4223 = vmatpush1.bf16.msra.mxu0 0
      %4224 = vmatprep.subr.bf16.mxu0 0
      %4225 = vmatpush1.bf16.msra.mxu0 0
      %4226 = vmatprep.subr.bf16.mxu0 0
      %4227 = vmatpush1.bf16.msra.mxu0 0
      %4228 = vmatprep.subr.bf16.mxu0 0
      %4229 = vmatpush1.bf16.msra.mxu0 0
      %4230 = vmatprep.subr.bf16.mxu0 0
      %4231 = vmatpush1.bf16.msra.mxu0 0
      %4232 = vmatprep.subr.bf16.mxu0 0
      %4233 = vmatpush1.bf16.msra.mxu0 0
      %4234 = vmatprep.subr.bf16.mxu0 0
      %4235 = vmatpush1.bf16.msra.mxu0 0
      %4236 = vmatprep.subr.bf16.mxu0 0
      %4237 = vmatpush1.bf16.msra.mxu0 0
      %4238 = vmatprep.subr.bf16.mxu0 0
      %4239 = vmatpush1.bf16.msra.mxu0 0
      %4240 = vmatprep.subr.bf16.mxu0 0
      %4241 = vmatpush1.bf16.msra.mxu0 0
      %4242 = vmatprep.subr.bf16.mxu0 0
      %4243 = vmatpush1.bf16.msra.mxu0 0
      %4244 = vmatprep.mubr.bf16.mxu0 0
      %4245 = vmatmul.mubr.bf16.gmra.mrb[0].mxu0 %v783
      %v4246 = vpop.f32.mrb[0].mxu0
      %v4247 = vadd.f32 0.0, %v4246
      %v4248 = vpop.f32.mrb[0].mxu0
      %v4249 = vpop.f32.mrb[0].mxu0
      %v4250 = vadd.f32 0.0, %v4249
      %v4251 = vpop.f32.mrb[0].mxu0
      %4252 = vdwg.mxu0
      %v4253 = vpack.c.bf16 %v4250, %v4247
      %v4255 = vsel %vm781, %v4253, 0
      %4257 = vmatprep.subr.bf16.mxu0 0
      %4258 = vmatpush1.bf16.msra.mxu0 %v835
      %4259 = vmatprep.subr.bf16.mxu0 0
      %4260 = vmatpush1.bf16.msra.mxu0 0
      %4261 = vmatprep.subr.bf16.mxu0 0
      %4262 = vmatpush1.bf16.msra.mxu0 0
      %4263 = vmatprep.subr.bf16.mxu0 0
      %4264 = vmatpush1.bf16.msra.mxu0 0
      %4265 = vmatprep.subr.bf16.mxu0 0
      %4266 = vmatpush1.bf16.msra.mxu0 0
      %4267 = vmatprep.subr.bf16.mxu0 0
      %4268 = vmatpush1.bf16.msra.mxu0 0
      %4269 = vmatprep.subr.bf16.mxu0 0
      %4270 = vmatpush1.bf16.msra.mxu0 0
      %4271 = vmatprep.subr.bf16.mxu0 0
      %4272 = vmatpush1.bf16.msra.mxu0 0
      %4273 = vmatprep.subr.bf16.mxu0 0
      %4274 = vmatpush1.bf16.msra.mxu0 0
      %4275 = vmatprep.subr.bf16.mxu0 0
      %4276 = vmatpush1.bf16.msra.mxu0 0
      %4277 = vmatprep.subr.bf16.mxu0 0
      %4278 = vmatpush1.bf16.msra.mxu0 0
      %4279 = vmatprep.subr.bf16.mxu0 0
      %4280 = vmatpush1.bf16.msra.mxu0 0
      %4281 = vmatprep.subr.bf16.mxu0 0
      %4282 = vmatpush1.bf16.msra.mxu0 0
      %4283 = vmatprep.subr.bf16.mxu0 0
      %4284 = vmatpush1.bf16.msra.mxu0 0
      %4285 = vmatprep.subr.bf16.mxu0 0
      %4286 = vmatpush1.bf16.msra.mxu0 0
      %4287 = vmatprep.subr.bf16.mxu0 0
      %4288 = vmatpush1.bf16.msra.mxu0 0
      %4289 = vmatprep.mubr.bf16.mxu0 0
      %4290 = vmatmul.mubr.bf16.gmra.mrb[0].mxu0 %v4255
      %v4291 = vpop.f32.mrb[0].mxu0
      %v4292 = vadd.f32 0.0, %v4291
      %v4293 = vpop.f32.mrb[0].mxu0
      %v4294 = vpop.f32.mrb[0].mxu0
      %v4295 = vadd.f32 0.0, %v4294
      %v4296 = vpop.f32.mrb[0].mxu0
      %4297 = vdwg.mxu0
      %v4298 = vmin.f32 %v4205, %v4292
      %v4299 = vmin.f32 %v4206, %v4295
      %s4300 = scalar_lea.vmem %s428, 108
      %v4301 = vld [vmem:[%s4300] sm:$0xf]
      %v4303 = vsel %vm785, %v4301, 0
      %4305 = vmatprep.subr.bf16.mxu0 0
      %4306 = vmatpush1.bf16.msra.mxu0 %v4303
      %4307 = vmatprep.subr.bf16.mxu0 0
      %4308 = vmatpush1.bf16.msra.mxu0 0
      %4309 = vmatprep.subr.bf16.mxu0 0
      %4310 = vmatpush1.bf16.msra.mxu0 0
      %4311 = vmatprep.subr.bf16.mxu0 0
      %4312 = vmatpush1.bf16.msra.mxu0 0
      %4313 = vmatprep.subr.bf16.mxu0 0
      %4314 = vmatpush1.bf16.msra.mxu0 0
      %4315 = vmatprep.subr.bf16.mxu0 0
      %4316 = vmatpush1.bf16.msra.mxu0 0
      %4317 = vmatprep.subr.bf16.mxu0 0
      %4318 = vmatpush1.bf16.msra.mxu0 0
      %4319 = vmatprep.subr.bf16.mxu0 0
      %4320 = vmatpush1.bf16.msra.mxu0 0
      %4321 = vmatprep.subr.bf16.mxu0 0
      %4322 = vmatpush1.bf16.msra.mxu0 0
      %4323 = vmatprep.subr.bf16.mxu0 0
      %4324 = vmatpush1.bf16.msra.mxu0 0
      %4325 = vmatprep.subr.bf16.mxu0 0
      %4326 = vmatpush1.bf16.msra.mxu0 0
      %4327 = vmatprep.subr.bf16.mxu0 0
      %4328 = vmatpush1.bf16.msra.mxu0 0
      %4329 = vmatprep.subr.bf16.mxu0 0
      %4330 = vmatpush1.bf16.msra.mxu0 0
      %4331 = vmatprep.subr.bf16.mxu0 0
      %4332 = vmatpush1.bf16.msra.mxu0 0
      %4333 = vmatprep.subr.bf16.mxu0 0
      %4334 = vmatpush1.bf16.msra.mxu0 0
      %4335 = vmatprep.subr.bf16.mxu0 0
      %4336 = vmatpush1.bf16.msra.mxu0 0
      %4337 = vmatprep.mubr.bf16.mxu0 0
      %4338 = vmatmul.mubr.bf16.gmra.mrb[0].mxu0 %v783
      %v4339 = vpop.f32.mrb[0].mxu0
      %v4340 = vadd.f32 0.0, %v4339
      %v4341 = vpop.f32.mrb[0].mxu0
      %v4342 = vpop.f32.mrb[0].mxu0
      %v4343 = vadd.f32 0.0, %v4342
      %v4344 = vpop.f32.mrb[0].mxu0
      %4345 = vdwg.mxu0
      %v4346 = vpack.c.bf16 %v4343, %v4340
      %v4348 = vsel %vm781, %v4346, 0
      %4350 = vmatprep.subr.bf16.mxu0 0
      %4351 = vmatpush1.bf16.msra.mxu0 %v835
      %4352 = vmatprep.subr.bf16.mxu0 0
      %4353 = vmatpush1.bf16.msra.mxu0 0
      %4354 = vmatprep.subr.bf16.mxu0 0
      %4355 = vmatpush1.bf16.msra.mxu0 0
      %4356 = vmatprep.subr.bf16.mxu0 0
      %4357 = vmatpush1.bf16.msra.mxu0 0
      %4358 = vmatprep.subr.bf16.mxu0 0
      %4359 = vmatpush1.bf16.msra.mxu0 0
      %4360 = vmatprep.subr.bf16.mxu0 0
      %4361 = vmatpush1.bf16.msra.mxu0 0
      %4362 = vmatprep.subr.bf16.mxu0 0
      %4363 = vmatpush1.bf16.msra.mxu0 0
      %4364 = vmatprep.subr.bf16.mxu0 0
      %4365 = vmatpush1.bf16.msra.mxu0 0
      %4366 = vmatprep.subr.bf16.mxu0 0
      %4367 = vmatpush1.bf16.msra.mxu0 0
      %4368 = vmatprep.subr.bf16.mxu0 0
      %4369 = vmatpush1.bf16.msra.mxu0 0
      %4370 = vmatprep.subr.bf16.mxu0 0
      %4371 = vmatpush1.bf16.msra.mxu0 0
      %4372 = vmatprep.subr.bf16.mxu0 0
      %4373 = vmatpush1.bf16.msra.mxu0 0
      %4374 = vmatprep.subr.bf16.mxu0 0
      %4375 = vmatpush1.bf16.msra.mxu0 0
      %4376 = vmatprep.subr.bf16.mxu0 0
      %4377 = vmatpush1.bf16.msra.mxu0 0
      %4378 = vmatprep.subr.bf16.mxu0 0
      %4379 = vmatpush1.bf16.msra.mxu0 0
      %4380 = vmatprep.subr.bf16.mxu0 0
      %4381 = vmatpush1.bf16.msra.mxu0 0
      %4382 = vmatprep.mubr.bf16.mxu0 0
      %4383 = vmatmul.mubr.bf16.gmra.mrb[0].mxu0 %v4348
      %v4384 = vpop.f32.mrb[0].mxu0
      %v4385 = vadd.f32 0.0, %v4384
      %v4386 = vpop.f32.mrb[0].mxu0
      %v4387 = vpop.f32.mrb[0].mxu0
      %v4388 = vadd.f32 0.0, %v4387
      %v4389 = vpop.f32.mrb[0].mxu0
      %4390 = vdwg.mxu0
      %v4391 = vmin.f32 %v4298, %v4385
      %v4392 = vmin.f32 %v4299, %v4388
      %s4393 = scalar_lea.vmem %s428, 132
      %v4394 = vld [vmem:[%s4393] sm:$0xf]
      %v4396 = vsel %vm785, %v4394, 0
      %4398 = vmatprep.subr.bf16.mxu0 0
      %4399 = vmatpush1.bf16.msra.mxu0 %v4396
      %4400 = vmatprep.subr.bf16.mxu0 0
      %4401 = vmatpush1.bf16.msra.mxu0 0
      %4402 = vmatprep.subr.bf16.mxu0 0
      %4403 = vmatpush1.bf16.msra.mxu0 0
      %4404 = vmatprep.subr.bf16.mxu0 0
      %4405 = vmatpush1.bf16.msra.mxu0 0
      %4406 = vmatprep.subr.bf16.mxu0 0
      %4407 = vmatpush1.bf16.msra.mxu0 0
      %4408 = vmatprep.subr.bf16.mxu0 0
      %4409 = vmatpush1.bf16.msra.mxu0 0
      %4410 = vmatprep.subr.bf16.mxu0 0
      %4411 = vmatpush1.bf16.msra.mxu0 0
      %4412 = vmatprep.subr.bf16.mxu0 0
      %4413 = vmatpush1.bf16.msra.mxu0 0
      %4414 = vmatprep.subr.bf16.mxu0 0
      %4415 = vmatpush1.bf16.msra.mxu0 0
      %4416 = vmatprep.subr.bf16.mxu0 0
      %4417 = vmatpush1.bf16.msra.mxu0 0
      %4418 = vmatprep.subr.bf16.mxu0 0
      %4419 = vmatpush1.bf16.msra.mxu0 0
      %4420 = vmatprep.subr.bf16.mxu0 0
      %4421 = vmatpush1.bf16.msra.mxu0 0
      %4422 = vmatprep.subr.bf16.mxu0 0
      %4423 = vmatpush1.bf16.msra.mxu0 0
      %4424 = vmatprep.subr.bf16.mxu0 0
      %4425 = vmatpush1.bf16.msra.mxu0 0
      %4426 = vmatprep.subr.bf16.mxu0 0
      %4427 = vmatpush1.bf16.msra.mxu0 0
      %4428 = vmatprep.subr.bf16.mxu0 0
      %4429 = vmatpush1.bf16.msra.mxu0 0
      %4430 = vmatprep.mubr.bf16.mxu0 0
      %4431 = vmatmul.mubr.bf16.gmra.mrb[0].mxu0 %v783
      %v4432 = vpop.f32.mrb[0].mxu0
      %v4433 = vadd.f32 0.0, %v4432
      %v4434 = vpop.f32.mrb[0].mxu0
      %v4435 = vpop.f32.mrb[0].mxu0
      %v4436 = vadd.f32 0.0, %v4435
      %v4437 = vpop.f32.mrb[0].mxu0
      %4438 = vdwg.mxu0
      %v4439 = vpack.c.bf16 %v4436, %v4433
      %v4441 = vsel %vm781, %v4439, 0
      %4443 = vmatprep.subr.bf16.mxu0 0
      %4444 = vmatpush1.bf16.msra.mxu0 %v835
      %4445 = vmatprep.subr.bf16.mxu0 0
      %4446 = vmatpush1.bf16.msra.mxu0 0
      %4447 = vmatprep.subr.bf16.mxu0 0
      %4448 = vmatpush1.bf16.msra.mxu0 0
      %4449 = vmatprep.subr.bf16.mxu0 0
      %4450 = vmatpush1.bf16.msra.mxu0 0
      %4451 = vmatprep.subr.bf16.mxu0 0
      %4452 = vmatpush1.bf16.msra.mxu0 0
      %4453 = vmatprep.subr.bf16.mxu0 0
      %4454 = vmatpush1.bf16.msra.mxu0 0
      %4455 = vmatprep.subr.bf16.mxu0 0
      %4456 = vmatpush1.bf16.msra.mxu0 0
      %4457 = vmatprep.subr.bf16.mxu0 0
      %4458 = vmatpush1.bf16.msra.mxu0 0
      %4459 = vmatprep.subr.bf16.mxu0 0
      %4460 = vmatpush1.bf16.msra.mxu0 0
      %4461 = vmatprep.subr.bf16.mxu0 0
      %4462 = vmatpush1.bf16.msra.mxu0 0
      %4463 = vmatprep.subr.bf16.mxu0 0
      %4464 = vmatpush1.bf16.msra.mxu0 0
      %4465 = vmatprep.subr.bf16.mxu0 0
      %4466 = vmatpush1.bf16.msra.mxu0 0
      %4467 = vmatprep.subr.bf16.mxu0 0
      %4468 = vmatpush1.bf16.msra.mxu0 0
      %4469 = vmatprep.subr.bf16.mxu0 0
      %4470 = vmatpush1.bf16.msra.mxu0 0
      %4471 = vmatprep.subr.bf16.mxu0 0
      %4472 = vmatpush1.bf16.msra.mxu0 0
      %4473 = vmatprep.subr.bf16.mxu0 0
      %4474 = vmatpush1.bf16.msra.mxu0 0
      %4475 = vmatprep.mubr.bf16.mxu0 0
      %4476 = vmatmul.mubr.bf16.gmra.mrb[0].mxu0 %v4441
      %v4477 = vpop.f32.mrb[0].mxu0
      %v4478 = vadd.f32 0.0, %v4477
      %v4479 = vpop.f32.mrb[0].mxu0
      %v4480 = vpop.f32.mrb[0].mxu0
      %v4481 = vadd.f32 0.0, %v4480
      %v4482 = vpop.f32.mrb[0].mxu0
      %4483 = vdwg.mxu0
      %v4484 = vmin.f32 %v4391, %v4478
      %v4485 = vmin.f32 %v4392, %v4481
      %s4486 = scalar_lea.vmem %s428, 156
      %v4487 = vld [vmem:[%s4486] sm:$0xf]
      %v4489 = vsel %vm785, %v4487, 0
      %4491 = vmatprep.subr.bf16.mxu0 0
      %4492 = vmatpush1.bf16.msra.mxu0 %v4489
      %4493 = vmatprep.subr.bf16.mxu0 0
      %4494 = vmatpush1.bf16.msra.mxu0 0
      %4495 = vmatprep.subr.bf16.mxu0 0
      %4496 = vmatpush1.bf16.msra.mxu0 0
      %4497 = vmatprep.subr.bf16.mxu0 0
      %4498 = vmatpush1.bf16.msra.mxu0 0
      %4499 = vmatprep.subr.bf16.mxu0 0
      %4500 = vmatpush1.bf16.msra.mxu0 0
      %4501 = vmatprep.subr.bf16.mxu0 0
      %4502 = vmatpush1.bf16.msra.mxu0 0
      %4503 = vmatprep.subr.bf16.mxu0 0
      %4504 = vmatpush1.bf16.msra.mxu0 0
      %4505 = vmatprep.subr.bf16.mxu0 0
      %4506 = vmatpush1.bf16.msra.mxu0 0
      %4507 = vmatprep.subr.bf16.mxu0 0
      %4508 = vmatpush1.bf16.msra.mxu0 0
      %4509 = vmatprep.subr.bf16.mxu0 0
      %4510 = vmatpush1.bf16.msra.mxu0 0
      %4511 = vmatprep.subr.bf16.mxu0 0
      %4512 = vmatpush1.bf16.msra.mxu0 0
      %4513 = vmatprep.subr.bf16.mxu0 0
      %4514 = vmatpush1.bf16.msra.mxu0 0
      %4515 = vmatprep.subr.bf16.mxu0 0
      %4516 = vmatpush1.bf16.msra.mxu0 0
      %4517 = vmatprep.subr.bf16.mxu0 0
      %4518 = vmatpush1.bf16.msra.mxu0 0
      %4519 = vmatprep.subr.bf16.mxu0 0
      %4520 = vmatpush1.bf16.msra.mxu0 0
      %4521 = vmatprep.subr.bf16.mxu0 0
      %4522 = vmatpush1.bf16.msra.mxu0 0
      %4523 = vmatprep.mubr.bf16.mxu0 0
      %4524 = vmatmul.mubr.bf16.gmra.mrb[0].mxu0 %v783
      %v4525 = vpop.f32.mrb[0].mxu0
      %v4526 = vadd.f32 0.0, %v4525
      %v4527 = vpop.f32.mrb[0].mxu0
      %v4528 = vpop.f32.mrb[0].mxu0
      %v4529 = vadd.f32 0.0, %v4528
      %v4530 = vpop.f32.mrb[0].mxu0
      %4531 = vdwg.mxu0
      %v4532 = vpack.c.bf16 %v4529, %v4526
      %v4534 = vsel %vm781, %v4532, 0
      %4536 = vmatprep.subr.bf16.mxu0 0
      %4537 = vmatpush1.bf16.msra.mxu0 %v835
      %4538 = vmatprep.subr.bf16.mxu0 0
      %4539 = vmatpush1.bf16.msra.mxu0 0
      %4540 = vmatprep.subr.bf16.mxu0 0
      %4541 = vmatpush1.bf16.msra.mxu0 0
      %4542 = vmatprep.subr.bf16.mxu0 0
      %4543 = vmatpush1.bf16.msra.mxu0 0
      %4544 = vmatprep.subr.bf16.mxu0 0
      %4545 = vmatpush1.bf16.msra.mxu0 0
      %4546 = vmatprep.subr.bf16.mxu0 0
      %4547 = vmatpush1.bf16.msra.mxu0 0
      %4548 = vmatprep.subr.bf16.mxu0 0
      %4549 = vmatpush1.bf16.msra.mxu0 0
      %4550 = vmatprep.subr.bf16.mxu0 0
      %4551 = vmatpush1.bf16.msra.mxu0 0
      %4552 = vmatprep.subr.bf16.mxu0 0
      %4553 = vmatpush1.bf16.msra.mxu0 0
      %4554 = vmatprep.subr.bf16.mxu0 0
      %4555 = vmatpush1.bf16.msra.mxu0 0
      %4556 = vmatprep.subr.bf16.mxu0 0
      %4557 = vmatpush1.bf16.msra.mxu0 0
      %4558 = vmatprep.subr.bf16.mxu0 0
      %4559 = vmatpush1.bf16.msra.mxu0 0
      %4560 = vmatprep.subr.bf16.mxu0 0
      %4561 = vmatpush1.bf16.msra.mxu0 0
      %4562 = vmatprep.subr.bf16.mxu0 0
      %4563 = vmatpush1.bf16.msra.mxu0 0
      %4564 = vmatprep.subr.bf16.mxu0 0
      %4565 = vmatpush1.bf16.msra.mxu0 0
      %4566 = vmatprep.subr.bf16.mxu0 0
      %4567 = vmatpush1.bf16.msra.mxu0 0
      %4568 = vmatprep.mubr.bf16.mxu0 0
      %4569 = vmatmul.mubr.bf16.gmra.mrb[0].mxu0 %v4534
      %v4570 = vpop.f32.mrb[0].mxu0
      %v4571 = vadd.f32 0.0, %v4570
      %v4572 = vpop.f32.mrb[0].mxu0
      %v4573 = vpop.f32.mrb[0].mxu0
      %v4574 = vadd.f32 0.0, %v4573
      %v4575 = vpop.f32.mrb[0].mxu0
      %4576 = vdwg.mxu0
      %v4577 = vmin.f32 %v4484, %v4571
      %v4578 = vmin.f32 %v4485, %v4574
      %s4579 = scalar_lea.vmem %s428, 180
      %v4580 = vld [vmem:[%s4579] sm:$0xf]
      %v4582 = vsel %vm785, %v4580, 0
      %4584 = vmatprep.subr.bf16.mxu0 0
      %4585 = vmatpush1.bf16.msra.mxu0 %v4582
      %4586 = vmatprep.subr.bf16.mxu0 0
      %4587 = vmatpush1.bf16.msra.mxu0 0
      %4588 = vmatprep.subr.bf16.mxu0 0
      %4589 = vmatpush1.bf16.msra.mxu0 0
      %4590 = vmatprep.subr.bf16.mxu0 0
      %4591 = vmatpush1.bf16.msra.mxu0 0
      %4592 = vmatprep.subr.bf16.mxu0 0
      %4593 = vmatpush1.bf16.msra.mxu0 0
      %4594 = vmatprep.subr.bf16.mxu0 0
      %4595 = vmatpush1.bf16.msra.mxu0 0
      %4596 = vmatprep.subr.bf16.mxu0 0
      %4597 = vmatpush1.bf16.msra.mxu0 0
      %4598 = vmatprep.subr.bf16.mxu0 0
      %4599 = vmatpush1.bf16.msra.mxu0 0
      %4600 = vmatprep.subr.bf16.mxu0 0
      %4601 = vmatpush1.bf16.msra.mxu0 0
      %4602 = vmatprep.subr.bf16.mxu0 0
      %4603 = vmatpush1.bf16.msra.mxu0 0
      %4604 = vmatprep.subr.bf16.mxu0 0
      %4605 = vmatpush1.bf16.msra.mxu0 0
      %4606 = vmatprep.subr.bf16.mxu0 0
      %4607 = vmatpush1.bf16.msra.mxu0 0
      %4608 = vmatprep.subr.bf16.mxu0 0
      %4609 = vmatpush1.bf16.msra.mxu0 0
      %4610 = vmatprep.subr.bf16.mxu0 0
      %4611 = vmatpush1.bf16.msra.mxu0 0
      %4612 = vmatprep.subr.bf16.mxu0 0
      %4613 = vmatpush1.bf16.msra.mxu0 0
      %4614 = vmatprep.subr.bf16.mxu0 0
      %4615 = vmatpush1.bf16.msra.mxu0 0
      %4616 = vmatprep.mubr.bf16.mxu0 0
      %4617 = vmatmul.mubr.bf16.gmra.mrb[0].mxu0 %v783
      %v4618 = vpop.f32.mrb[0].mxu0
      %v4619 = vadd.f32 0.0, %v4618
      %v4620 = vpop.f32.mrb[0].mxu0
      %v4621 = vpop.f32.mrb[0].mxu0
      %v4622 = vadd.f32 0.0, %v4621
      %v4623 = vpop.f32.mrb[0].mxu0
      %4624 = vdwg.mxu0
      %v4625 = vpack.c.bf16 %v4622, %v4619
      %v4627 = vsel %vm781, %v4625, 0
      %4629 = vmatprep.subr.bf16.mxu0 0
      %4630 = vmatpush1.bf16.msra.mxu0 %v835
      %4631 = vmatprep.subr.bf16.mxu0 0
      %4632 = vmatpush1.bf16.msra.mxu0 0
      %4633 = vmatprep.subr.bf16.mxu0 0
      %4634 = vmatpush1.bf16.msra.mxu0 0
      %4635 = vmatprep.subr.bf16.mxu0 0
      %4636 = vmatpush1.bf16.msra.mxu0 0
      %4637 = vmatprep.subr.bf16.mxu0 0
      %4638 = vmatpush1.bf16.msra.mxu0 0
      %4639 = vmatprep.subr.bf16.mxu0 0
      %4640 = vmatpush1.bf16.msra.mxu0 0
      %4641 = vmatprep.subr.bf16.mxu0 0
      %4642 = vmatpush1.bf16.msra.mxu0 0
      %4643 = vmatprep.subr.bf16.mxu0 0
      %4644 = vmatpush1.bf16.msra.mxu0 0
      %4645 = vmatprep.subr.bf16.mxu0 0
      %4646 = vmatpush1.bf16.msra.mxu0 0
      %4647 = vmatprep.subr.bf16.mxu0 0
      %4648 = vmatpush1.bf16.msra.mxu0 0
      %4649 = vmatprep.subr.bf16.mxu0 0
      %4650 = vmatpush1.bf16.msra.mxu0 0
      %4651 = vmatprep.subr.bf16.mxu0 0
      %4652 = vmatpush1.bf16.msra.mxu0 0
      %4653 = vmatprep.subr.bf16.mxu0 0
      %4654 = vmatpush1.bf16.msra.mxu0 0
      %4655 = vmatprep.subr.bf16.mxu0 0
      %4656 = vmatpush1.bf16.msra.mxu0 0
      %4657 = vmatprep.subr.bf16.mxu0 0
      %4658 = vmatpush1.bf16.msra.mxu0 0
      %4659 = vmatprep.subr.bf16.mxu0 0
      %4660 = vmatpush1.bf16.msra.mxu0 0
      %4661 = vmatprep.mubr.bf16.mxu0 0
      %4662 = vmatmul.mubr.bf16.gmra.mrb[0].mxu0 %v4627
      %v4663 = vpop.f32.mrb[0].mxu0
      %v4664 = vadd.f32 0.0, %v4663
      %v4665 = vpop.f32.mrb[0].mxu0
      %v4666 = vpop.f32.mrb[0].mxu0
      %v4667 = vadd.f32 0.0, %v4666
      %v4668 = vpop.f32.mrb[0].mxu0
      %4669 = vdwg.mxu0
      %v4670 = vmin.f32 %v4577, %v4664
      %v4671 = vmin.f32 %v4578, %v4667
      %v4672 = vmul.f32 %v4670, %v508
      %v4673 = vmul.f32 %v4671, %v509
      %v4674 = vadd.f32 %v3916, %v4672
      %v4675 = vadd.f32 %v3917, %v4673
      %v4676 = vsub.f32 1.0, %v508
      %v4677 = vsub.f32 1.0, %v509
      %v4678 = vmul.f32 %v4670, %v4676
      %v4679 = vmul.f32 %v4671, %v4677
      %v4680 = vmul.f32 %v4678, %v476
      %v4681 = vmul.f32 %v4679, %v477
      %vm4682 = vcmp.ne.f32.partialorder %v4680, 0.0
      %vm4683 = vcmp.ne.f32.partialorder %v4681, 0.0
      %v4684 = vsel %vm4682, %v4680, inf
      %v4685 = vsel %vm4683, %v4681, inf
      %v4686 = vmin.f32 %v3928, %v4684
      %v4687 = vmin.f32 %v3929, %v4685
      %s4688 = scalar_lea.vmem %s428, 16
      %v4689 = vld [vmem:[%s4688] sm:$0xf]
      %v4691 = vsel %vm785, %v4689, 0
      %4693 = vmatprep.subr.bf16.mxu0 0
      %4694 = vmatpush1.bf16.msra.mxu0 %v4691
      %4695 = vmatprep.subr.bf16.mxu0 0
      %4696 = vmatpush1.bf16.msra.mxu0 0
      %4697 = vmatprep.subr.bf16.mxu0 0
      %4698 = vmatpush1.bf16.msra.mxu0 0
      %4699 = vmatprep.subr.bf16.mxu0 0
      %4700 = vmatpush1.bf16.msra.mxu0 0
      %4701 = vmatprep.subr.bf16.mxu0 0
      %4702 = vmatpush1.bf16.msra.mxu0 0
      %4703 = vmatprep.subr.bf16.mxu0 0
      %4704 = vmatpush1.bf16.msra.mxu0 0
      %4705 = vmatprep.subr.bf16.mxu0 0
      %4706 = vmatpush1.bf16.msra.mxu0 0
      %4707 = vmatprep.subr.bf16.mxu0 0
      %4708 = vmatpush1.bf16.msra.mxu0 0
      %4709 = vmatprep.subr.bf16.mxu0 0
      %4710 = vmatpush1.bf16.msra.mxu0 0
      %4711 = vmatprep.subr.bf16.mxu0 0
      %4712 = vmatpush1.bf16.msra.mxu0 0
      %4713 = vmatprep.subr.bf16.mxu0 0
      %4714 = vmatpush1.bf16.msra.mxu0 0
      %4715 = vmatprep.subr.bf16.mxu0 0
      %4716 = vmatpush1.bf16.msra.mxu0 0
      %4717 = vmatprep.subr.bf16.mxu0 0
      %4718 = vmatpush1.bf16.msra.mxu0 0
      %4719 = vmatprep.subr.bf16.mxu0 0
      %4720 = vmatpush1.bf16.msra.mxu0 0
      %4721 = vmatprep.subr.bf16.mxu0 0
      %4722 = vmatpush1.bf16.msra.mxu0 0
      %4723 = vmatprep.subr.bf16.mxu0 0
      %4724 = vmatpush1.bf16.msra.mxu0 0
      %4725 = vmatprep.mubr.bf16.mxu0 0
      %4726 = vmatmul.mubr.bf16.gmra.mrb[0].mxu0 %v783
      %v4727 = vpop.f32.mrb[0].mxu0
      %v4728 = vadd.f32 0.0, %v4727
      %v4729 = vpop.f32.mrb[0].mxu0
      %v4730 = vpop.f32.mrb[0].mxu0
      %v4731 = vadd.f32 0.0, %v4730
      %v4732 = vpop.f32.mrb[0].mxu0
      %4733 = vdwg.mxu0
      %v4734 = vpack.c.bf16 %v4731, %v4728
      %v4736 = vsel %vm781, %v4734, 0
      %4738 = vmatprep.subr.bf16.mxu0 0
      %4739 = vmatpush1.bf16.msra.mxu0 %v835
      %4740 = vmatprep.subr.bf16.mxu0 0
      %4741 = vmatpush1.bf16.msra.mxu0 0
      %4742 = vmatprep.subr.bf16.mxu0 0
      %4743 = vmatpush1.bf16.msra.mxu0 0
      %4744 = vmatprep.subr.bf16.mxu0 0
      %4745 = vmatpush1.bf16.msra.mxu0 0
      %4746 = vmatprep.subr.bf16.mxu0 0
      %4747 = vmatpush1.bf16.msra.mxu0 0
      %4748 = vmatprep.subr.bf16.mxu0 0
      %4749 = vmatpush1.bf16.msra.mxu0 0
      %4750 = vmatprep.subr.bf16.mxu0 0
      %4751 = vmatpush1.bf16.msra.mxu0 0
      %4752 = vmatprep.subr.bf16.mxu0 0
      %4753 = vmatpush1.bf16.msra.mxu0 0
      %4754 = vmatprep.subr.bf16.mxu0 0
      %4755 = vmatpush1.bf16.msra.mxu0 0
      %4756 = vmatprep.subr.bf16.mxu0 0
      %4757 = vmatpush1.bf16.msra.mxu0 0
      %4758 = vmatprep.subr.bf16.mxu0 0
      %4759 = vmatpush1.bf16.msra.mxu0 0
      %4760 = vmatprep.subr.bf16.mxu0 0
      %4761 = vmatpush1.bf16.msra.mxu0 0
      %4762 = vmatprep.subr.bf16.mxu0 0
      %4763 = vmatpush1.bf16.msra.mxu0 0
      %4764 = vmatprep.subr.bf16.mxu0 0
      %4765 = vmatpush1.bf16.msra.mxu0 0
      %4766 = vmatprep.subr.bf16.mxu0 0
      %4767 = vmatpush1.bf16.msra.mxu0 0
      %4768 = vmatprep.subr.bf16.mxu0 0
      %4769 = vmatpush1.bf16.msra.mxu0 0
      %4770 = vmatprep.mubr.bf16.mxu0 0
      %4771 = vmatmul.mubr.bf16.gmra.mrb[0].mxu0 %v4736
      %v4772 = vpop.f32.mrb[0].mxu0
      %v4773 = vadd.f32 0.0, %v4772
      %v4774 = vpop.f32.mrb[0].mxu0
      %v4775 = vpop.f32.mrb[0].mxu0
      %v4776 = vadd.f32 0.0, %v4775
      %v4777 = vpop.f32.mrb[0].mxu0
      %4778 = vdwg.mxu0
      %s4779 = scalar_lea.vmem %s428, 40
      %v4780 = vld [vmem:[%s4779] sm:$0xf]
      %v4782 = vsel %vm785, %v4780, 0
      %4784 = vmatprep.subr.bf16.mxu0 0
      %4785 = vmatpush1.bf16.msra.mxu0 %v4782
      %4786 = vmatprep.subr.bf16.mxu0 0
      %4787 = vmatpush1.bf16.msra.mxu0 0
      %4788 = vmatprep.subr.bf16.mxu0 0
      %4789 = vmatpush1.bf16.msra.mxu0 0
      %4790 = vmatprep.subr.bf16.mxu0 0
      %4791 = vmatpush1.bf16.msra.mxu0 0
      %4792 = vmatprep.subr.bf16.mxu0 0
      %4793 = vmatpush1.bf16.msra.mxu0 0
      %4794 = vmatprep.subr.bf16.mxu0 0
      %4795 = vmatpush1.bf16.msra.mxu0 0
      %4796 = vmatprep.subr.bf16.mxu0 0
      %4797 = vmatpush1.bf16.msra.mxu0 0
      %4798 = vmatprep.subr.bf16.mxu0 0
      %4799 = vmatpush1.bf16.msra.mxu0 0
      %4800 = vmatprep.subr.bf16.mxu0 0
      %4801 = vmatpush1.bf16.msra.mxu0 0
      %4802 = vmatprep.subr.bf16.mxu0 0
      %4803 = vmatpush1.bf16.msra.mxu0 0
      %4804 = vmatprep.subr.bf16.mxu0 0
      %4805 = vmatpush1.bf16.msra.mxu0 0
      %4806 = vmatprep.subr.bf16.mxu0 0
      %4807 = vmatpush1.bf16.msra.mxu0 0
      %4808 = vmatprep.subr.bf16.mxu0 0
      %4809 = vmatpush1.bf16.msra.mxu0 0
      %4810 = vmatprep.subr.bf16.mxu0 0
      %4811 = vmatpush1.bf16.msra.mxu0 0
      %4812 = vmatprep.subr.bf16.mxu0 0
      %4813 = vmatpush1.bf16.msra.mxu0 0
      %4814 = vmatprep.subr.bf16.mxu0 0
      %4815 = vmatpush1.bf16.msra.mxu0 0
      %4816 = vmatprep.mubr.bf16.mxu0 0
      %4817 = vmatmul.mubr.bf16.gmra.mrb[0].mxu0 %v783
      %v4818 = vpop.f32.mrb[0].mxu0
      %v4819 = vadd.f32 0.0, %v4818
      %v4820 = vpop.f32.mrb[0].mxu0
      %v4821 = vpop.f32.mrb[0].mxu0
      %v4822 = vadd.f32 0.0, %v4821
      %v4823 = vpop.f32.mrb[0].mxu0
      %4824 = vdwg.mxu0
      %v4825 = vpack.c.bf16 %v4822, %v4819
      %v4827 = vsel %vm781, %v4825, 0
      %4829 = vmatprep.subr.bf16.mxu0 0
      %4830 = vmatpush1.bf16.msra.mxu0 %v835
      %4831 = vmatprep.subr.bf16.mxu0 0
      %4832 = vmatpush1.bf16.msra.mxu0 0
      %4833 = vmatprep.subr.bf16.mxu0 0
      %4834 = vmatpush1.bf16.msra.mxu0 0
      %4835 = vmatprep.subr.bf16.mxu0 0
      %4836 = vmatpush1.bf16.msra.mxu0 0
      %4837 = vmatprep.subr.bf16.mxu0 0
      %4838 = vmatpush1.bf16.msra.mxu0 0
      %4839 = vmatprep.subr.bf16.mxu0 0
      %4840 = vmatpush1.bf16.msra.mxu0 0
      %4841 = vmatprep.subr.bf16.mxu0 0
      %4842 = vmatpush1.bf16.msra.mxu0 0
      %4843 = vmatprep.subr.bf16.mxu0 0
      %4844 = vmatpush1.bf16.msra.mxu0 0
      %4845 = vmatprep.subr.bf16.mxu0 0
      %4846 = vmatpush1.bf16.msra.mxu0 0
      %4847 = vmatprep.subr.bf16.mxu0 0
      %4848 = vmatpush1.bf16.msra.mxu0 0
      %4849 = vmatprep.subr.bf16.mxu0 0
      %4850 = vmatpush1.bf16.msra.mxu0 0
      %4851 = vmatprep.subr.bf16.mxu0 0
      %4852 = vmatpush1.bf16.msra.mxu0 0
      %4853 = vmatprep.subr.bf16.mxu0 0
      %4854 = vmatpush1.bf16.msra.mxu0 0
      %4855 = vmatprep.subr.bf16.mxu0 0
      %4856 = vmatpush1.bf16.msra.mxu0 0
      %4857 = vmatprep.subr.bf16.mxu0 0
      %4858 = vmatpush1.bf16.msra.mxu0 0
      %4859 = vmatprep.subr.bf16.mxu0 0
      %4860 = vmatpush1.bf16.msra.mxu0 0
      %4861 = vmatprep.mubr.bf16.mxu0 0
      %4862 = vmatmul.mubr.bf16.gmra.mrb[0].mxu0 %v4827
      %v4863 = vpop.f32.mrb[0].mxu0
      %v4864 = vadd.f32 0.0, %v4863
      %v4865 = vpop.f32.mrb[0].mxu0
      %v4866 = vpop.f32.mrb[0].mxu0
      %v4867 = vadd.f32 0.0, %v4866
      %v4868 = vpop.f32.mrb[0].mxu0
      %4869 = vdwg.mxu0
      %v4870 = vmin.f32 %v4773, %v4864
      %v4871 = vmin.f32 %v4776, %v4867
      %s4872 = scalar_lea.vmem %s428, 64
      %v4873 = vld [vmem:[%s4872] sm:$0xf]
      %v4875 = vsel %vm785, %v4873, 0
      %4877 = vmatprep.subr.bf16.mxu0 0
      %4878 = vmatpush1.bf16.msra.mxu0 %v4875
      %4879 = vmatprep.subr.bf16.mxu0 0
      %4880 = vmatpush1.bf16.msra.mxu0 0
      %4881 = vmatprep.subr.bf16.mxu0 0
      %4882 = vmatpush1.bf16.msra.mxu0 0
      %4883 = vmatprep.subr.bf16.mxu0 0
      %4884 = vmatpush1.bf16.msra.mxu0 0
      %4885 = vmatprep.subr.bf16.mxu0 0
      %4886 = vmatpush1.bf16.msra.mxu0 0
      %4887 = vmatprep.subr.bf16.mxu0 0
      %4888 = vmatpush1.bf16.msra.mxu0 0
      %4889 = vmatprep.subr.bf16.mxu0 0
      %4890 = vmatpush1.bf16.msra.mxu0 0
      %4891 = vmatprep.subr.bf16.mxu0 0
      %4892 = vmatpush1.bf16.msra.mxu0 0
      %4893 = vmatprep.subr.bf16.mxu0 0
      %4894 = vmatpush1.bf16.msra.mxu0 0
      %4895 = vmatprep.subr.bf16.mxu0 0
      %4896 = vmatpush1.bf16.msra.mxu0 0
      %4897 = vmatprep.subr.bf16.mxu0 0
      %4898 = vmatpush1.bf16.msra.mxu0 0
      %4899 = vmatprep.subr.bf16.mxu0 0
      %4900 = vmatpush1.bf16.msra.mxu0 0
      %4901 = vmatprep.subr.bf16.mxu0 0
      %4902 = vmatpush1.bf16.msra.mxu0 0
      %4903 = vmatprep.subr.bf16.mxu0 0
      %4904 = vmatpush1.bf16.msra.mxu0 0
      %4905 = vmatprep.subr.bf16.mxu0 0
      %4906 = vmatpush1.bf16.msra.mxu0 0
      %4907 = vmatprep.subr.bf16.mxu0 0
      %4908 = vmatpush1.bf16.msra.mxu0 0
      %4909 = vmatprep.mubr.bf16.mxu0 0
      %4910 = vmatmul.mubr.bf16.gmra.mrb[0].mxu0 %v783
      %v4911 = vpop.f32.mrb[0].mxu0
      %v4912 = vadd.f32 0.0, %v4911
      %v4913 = vpop.f32.mrb[0].mxu0
      %v4914 = vpop.f32.mrb[0].mxu0
      %v4915 = vadd.f32 0.0, %v4914
      %v4916 = vpop.f32.mrb[0].mxu0
      %4917 = vdwg.mxu0
      %v4918 = vpack.c.bf16 %v4915, %v4912
      %v4920 = vsel %vm781, %v4918, 0
      %4922 = vmatprep.subr.bf16.mxu0 0
      %4923 = vmatpush1.bf16.msra.mxu0 %v835
      %4924 = vmatprep.subr.bf16.mxu0 0
      %4925 = vmatpush1.bf16.msra.mxu0 0
      %4926 = vmatprep.subr.bf16.mxu0 0
      %4927 = vmatpush1.bf16.msra.mxu0 0
      %4928 = vmatprep.subr.bf16.mxu0 0
      %4929 = vmatpush1.bf16.msra.mxu0 0
      %4930 = vmatprep.subr.bf16.mxu0 0
      %4931 = vmatpush1.bf16.msra.mxu0 0
      %4932 = vmatprep.subr.bf16.mxu0 0
      %4933 = vmatpush1.bf16.msra.mxu0 0
      %4934 = vmatprep.subr.bf16.mxu0 0
      %4935 = vmatpush1.bf16.msra.mxu0 0
      %4936 = vmatprep.subr.bf16.mxu0 0
      %4937 = vmatpush1.bf16.msra.mxu0 0
      %4938 = vmatprep.subr.bf16.mxu0 0
      %4939 = vmatpush1.bf16.msra.mxu0 0
      %4940 = vmatprep.subr.bf16.mxu0 0
      %4941 = vmatpush1.bf16.msra.mxu0 0
      %4942 = vmatprep.subr.bf16.mxu0 0
      %4943 = vmatpush1.bf16.msra.mxu0 0
      %4944 = vmatprep.subr.bf16.mxu0 0
      %4945 = vmatpush1.bf16.msra.mxu0 0
      %4946 = vmatprep.subr.bf16.mxu0 0
      %4947 = vmatpush1.bf16.msra.mxu0 0
      %4948 = vmatprep.subr.bf16.mxu0 0
      %4949 = vmatpush1.bf16.msra.mxu0 0
      %4950 = vmatprep.subr.bf16.mxu0 0
      %4951 = vmatpush1.bf16.msra.mxu0 0
      %4952 = vmatprep.subr.bf16.mxu0 0
      %4953 = vmatpush1.bf16.msra.mxu0 0
      %4954 = vmatprep.mubr.bf16.mxu0 0
      %4955 = vmatmul.mubr.bf16.gmra.mrb[0].mxu0 %v4920
      %v4956 = vpop.f32.mrb[0].mxu0
      %v4957 = vadd.f32 0.0, %v4956
      %v4958 = vpop.f32.mrb[0].mxu0
      %v4959 = vpop.f32.mrb[0].mxu0
      %v4960 = vadd.f32 0.0, %v4959
      %v4961 = vpop.f32.mrb[0].mxu0
      %4962 = vdwg.mxu0
      %v4963 = vmin.f32 %v4870, %v4957
      %v4964 = vmin.f32 %v4871, %v4960
      %s4965 = scalar_lea.vmem %s428, 88
      %v4966 = vld [vmem:[%s4965] sm:$0xf]
      %v4968 = vsel %vm785, %v4966, 0
      %4970 = vmatprep.subr.bf16.mxu0 0
      %4971 = vmatpush1.bf16.msra.mxu0 %v4968
      %4972 = vmatprep.subr.bf16.mxu0 0
      %4973 = vmatpush1.bf16.msra.mxu0 0
      %4974 = vmatprep.subr.bf16.mxu0 0
      %4975 = vmatpush1.bf16.msra.mxu0 0
      %4976 = vmatprep.subr.bf16.mxu0 0
      %4977 = vmatpush1.bf16.msra.mxu0 0
      %4978 = vmatprep.subr.bf16.mxu0 0
      %4979 = vmatpush1.bf16.msra.mxu0 0
      %4980 = vmatprep.subr.bf16.mxu0 0
      %4981 = vmatpush1.bf16.msra.mxu0 0
      %4982 = vmatprep.subr.bf16.mxu0 0
      %4983 = vmatpush1.bf16.msra.mxu0 0
      %4984 = vmatprep.subr.bf16.mxu0 0
      %4985 = vmatpush1.bf16.msra.mxu0 0
      %4986 = vmatprep.subr.bf16.mxu0 0
      %4987 = vmatpush1.bf16.msra.mxu0 0
      %4988 = vmatprep.subr.bf16.mxu0 0
      %4989 = vmatpush1.bf16.msra.mxu0 0
      %4990 = vmatprep.subr.bf16.mxu0 0
      %4991 = vmatpush1.bf16.msra.mxu0 0
      %4992 = vmatprep.subr.bf16.mxu0 0
      %4993 = vmatpush1.bf16.msra.mxu0 0
      %4994 = vmatprep.subr.bf16.mxu0 0
      %4995 = vmatpush1.bf16.msra.mxu0 0
      %4996 = vmatprep.subr.bf16.mxu0 0
      %4997 = vmatpush1.bf16.msra.mxu0 0
      %4998 = vmatprep.subr.bf16.mxu0 0
      %4999 = vmatpush1.bf16.msra.mxu0 0
      %5000 = vmatprep.subr.bf16.mxu0 0
      %5001 = vmatpush1.bf16.msra.mxu0 0
      %5002 = vmatprep.mubr.bf16.mxu0 0
      %5003 = vmatmul.mubr.bf16.gmra.mrb[0].mxu0 %v783
      %v5004 = vpop.f32.mrb[0].mxu0
      %v5005 = vadd.f32 0.0, %v5004
      %v5006 = vpop.f32.mrb[0].mxu0
      %v5007 = vpop.f32.mrb[0].mxu0
      %v5008 = vadd.f32 0.0, %v5007
      %v5009 = vpop.f32.mrb[0].mxu0
      %5010 = vdwg.mxu0
      %v5011 = vpack.c.bf16 %v5008, %v5005
      %v5013 = vsel %vm781, %v5011, 0
      %5015 = vmatprep.subr.bf16.mxu0 0
      %5016 = vmatpush1.bf16.msra.mxu0 %v835
      %5017 = vmatprep.subr.bf16.mxu0 0
      %5018 = vmatpush1.bf16.msra.mxu0 0
      %5019 = vmatprep.subr.bf16.mxu0 0
      %5020 = vmatpush1.bf16.msra.mxu0 0
      %5021 = vmatprep.subr.bf16.mxu0 0
      %5022 = vmatpush1.bf16.msra.mxu0 0
      %5023 = vmatprep.subr.bf16.mxu0 0
      %5024 = vmatpush1.bf16.msra.mxu0 0
      %5025 = vmatprep.subr.bf16.mxu0 0
      %5026 = vmatpush1.bf16.msra.mxu0 0
      %5027 = vmatprep.subr.bf16.mxu0 0
      %5028 = vmatpush1.bf16.msra.mxu0 0
      %5029 = vmatprep.subr.bf16.mxu0 0
      %5030 = vmatpush1.bf16.msra.mxu0 0
      %5031 = vmatprep.subr.bf16.mxu0 0
      %5032 = vmatpush1.bf16.msra.mxu0 0
      %5033 = vmatprep.subr.bf16.mxu0 0
      %5034 = vmatpush1.bf16.msra.mxu0 0
      %5035 = vmatprep.subr.bf16.mxu0 0
      %5036 = vmatpush1.bf16.msra.mxu0 0
      %5037 = vmatprep.subr.bf16.mxu0 0
      %5038 = vmatpush1.bf16.msra.mxu0 0
      %5039 = vmatprep.subr.bf16.mxu0 0
      %5040 = vmatpush1.bf16.msra.mxu0 0
      %5041 = vmatprep.subr.bf16.mxu0 0
      %5042 = vmatpush1.bf16.msra.mxu0 0
      %5043 = vmatprep.subr.bf16.mxu0 0
      %5044 = vmatpush1.bf16.msra.mxu0 0
      %5045 = vmatprep.subr.bf16.mxu0 0
      %5046 = vmatpush1.bf16.msra.mxu0 0
      %5047 = vmatprep.mubr.bf16.mxu0 0
      %5048 = vmatmul.mubr.bf16.gmra.mrb[0].mxu0 %v5013
      %v5049 = vpop.f32.mrb[0].mxu0
      %v5050 = vadd.f32 0.0, %v5049
      %v5051 = vpop.f32.mrb[0].mxu0
      %v5052 = vpop.f32.mrb[0].mxu0
      %v5053 = vadd.f32 0.0, %v5052
      %v5054 = vpop.f32.mrb[0].mxu0
      %5055 = vdwg.mxu0
      %v5056 = vmin.f32 %v4963, %v5050
      %v5057 = vmin.f32 %v4964, %v5053
      %s5058 = scalar_lea.vmem %s428, 112
      %v5059 = vld [vmem:[%s5058] sm:$0xf]
      %v5061 = vsel %vm785, %v5059, 0
      %5063 = vmatprep.subr.bf16.mxu0 0
      %5064 = vmatpush1.bf16.msra.mxu0 %v5061
      %5065 = vmatprep.subr.bf16.mxu0 0
      %5066 = vmatpush1.bf16.msra.mxu0 0
      %5067 = vmatprep.subr.bf16.mxu0 0
      %5068 = vmatpush1.bf16.msra.mxu0 0
      %5069 = vmatprep.subr.bf16.mxu0 0
      %5070 = vmatpush1.bf16.msra.mxu0 0
      %5071 = vmatprep.subr.bf16.mxu0 0
      %5072 = vmatpush1.bf16.msra.mxu0 0
      %5073 = vmatprep.subr.bf16.mxu0 0
      %5074 = vmatpush1.bf16.msra.mxu0 0
      %5075 = vmatprep.subr.bf16.mxu0 0
      %5076 = vmatpush1.bf16.msra.mxu0 0
      %5077 = vmatprep.subr.bf16.mxu0 0
      %5078 = vmatpush1.bf16.msra.mxu0 0
      %5079 = vmatprep.subr.bf16.mxu0 0
      %5080 = vmatpush1.bf16.msra.mxu0 0
      %5081 = vmatprep.subr.bf16.mxu0 0
      %5082 = vmatpush1.bf16.msra.mxu0 0
      %5083 = vmatprep.subr.bf16.mxu0 0
      %5084 = vmatpush1.bf16.msra.mxu0 0
      %5085 = vmatprep.subr.bf16.mxu0 0
      %5086 = vmatpush1.bf16.msra.mxu0 0
      %5087 = vmatprep.subr.bf16.mxu0 0
      %5088 = vmatpush1.bf16.msra.mxu0 0
      %5089 = vmatprep.subr.bf16.mxu0 0
      %5090 = vmatpush1.bf16.msra.mxu0 0
      %5091 = vmatprep.subr.bf16.mxu0 0
      %5092 = vmatpush1.bf16.msra.mxu0 0
      %5093 = vmatprep.subr.bf16.mxu0 0
      %5094 = vmatpush1.bf16.msra.mxu0 0
      %5095 = vmatprep.mubr.bf16.mxu0 0
      %5096 = vmatmul.mubr.bf16.gmra.mrb[0].mxu0 %v783
      %v5097 = vpop.f32.mrb[0].mxu0
      %v5098 = vadd.f32 0.0, %v5097
      %v5099 = vpop.f32.mrb[0].mxu0
      %v5100 = vpop.f32.mrb[0].mxu0
      %v5101 = vadd.f32 0.0, %v5100
      %v5102 = vpop.f32.mrb[0].mxu0
      %5103 = vdwg.mxu0
      %v5104 = vpack.c.bf16 %v5101, %v5098
      %v5106 = vsel %vm781, %v5104, 0
      %5108 = vmatprep.subr.bf16.mxu0 0
      %5109 = vmatpush1.bf16.msra.mxu0 %v835
      %5110 = vmatprep.subr.bf16.mxu0 0
      %5111 = vmatpush1.bf16.msra.mxu0 0
      %5112 = vmatprep.subr.bf16.mxu0 0
      %5113 = vmatpush1.bf16.msra.mxu0 0
      %5114 = vmatprep.subr.bf16.mxu0 0
      %5115 = vmatpush1.bf16.msra.mxu0 0
      %5116 = vmatprep.subr.bf16.mxu0 0
      %5117 = vmatpush1.bf16.msra.mxu0 0
      %5118 = vmatprep.subr.bf16.mxu0 0
      %5119 = vmatpush1.bf16.msra.mxu0 0
      %5120 = vmatprep.subr.bf16.mxu0 0
      %5121 = vmatpush1.bf16.msra.mxu0 0
      %5122 = vmatprep.subr.bf16.mxu0 0
      %5123 = vmatpush1.bf16.msra.mxu0 0
      %5124 = vmatprep.subr.bf16.mxu0 0
      %5125 = vmatpush1.bf16.msra.mxu0 0
      %5126 = vmatprep.subr.bf16.mxu0 0
      %5127 = vmatpush1.bf16.msra.mxu0 0
      %5128 = vmatprep.subr.bf16.mxu0 0
      %5129 = vmatpush1.bf16.msra.mxu0 0
      %5130 = vmatprep.subr.bf16.mxu0 0
      %5131 = vmatpush1.bf16.msra.mxu0 0
      %5132 = vmatprep.subr.bf16.mxu0 0
      %5133 = vmatpush1.bf16.msra.mxu0 0
      %5134 = vmatprep.subr.bf16.mxu0 0
      %5135 = vmatpush1.bf16.msra.mxu0 0
      %5136 = vmatprep.subr.bf16.mxu0 0
      %5137 = vmatpush1.bf16.msra.mxu0 0
      %5138 = vmatprep.subr.bf16.mxu0 0
      %5139 = vmatpush1.bf16.msra.mxu0 0
      %5140 = vmatprep.mubr.bf16.mxu0 0
      %5141 = vmatmul.mubr.bf16.gmra.mrb[0].mxu0 %v5106
      %v5142 = vpop.f32.mrb[0].mxu0
      %v5143 = vadd.f32 0.0, %v5142
      %v5144 = vpop.f32.mrb[0].mxu0
      %v5145 = vpop.f32.mrb[0].mxu0
      %v5146 = vadd.f32 0.0, %v5145
      %v5147 = vpop.f32.mrb[0].mxu0
      %5148 = vdwg.mxu0
      %v5149 = vmin.f32 %v5056, %v5143
      %v5150 = vmin.f32 %v5057, %v5146
      %s5151 = scalar_lea.vmem %s428, 136
      %v5152 = vld [vmem:[%s5151] sm:$0xf]
      %v5154 = vsel %vm785, %v5152, 0
      %5156 = vmatprep.subr.bf16.mxu0 0
      %5157 = vmatpush1.bf16.msra.mxu0 %v5154
      %5158 = vmatprep.subr.bf16.mxu0 0
      %5159 = vmatpush1.bf16.msra.mxu0 0
      %5160 = vmatprep.subr.bf16.mxu0 0
      %5161 = vmatpush1.bf16.msra.mxu0 0
      %5162 = vmatprep.subr.bf16.mxu0 0
      %5163 = vmatpush1.bf16.msra.mxu0 0
      %5164 = vmatprep.subr.bf16.mxu0 0
      %5165 = vmatpush1.bf16.msra.mxu0 0
      %5166 = vmatprep.subr.bf16.mxu0 0
      %5167 = vmatpush1.bf16.msra.mxu0 0
      %5168 = vmatprep.subr.bf16.mxu0 0
      %5169 = vmatpush1.bf16.msra.mxu0 0
      %5170 = vmatprep.subr.bf16.mxu0 0
      %5171 = vmatpush1.bf16.msra.mxu0 0
      %5172 = vmatprep.subr.bf16.mxu0 0
      %5173 = vmatpush1.bf16.msra.mxu0 0
      %5174 = vmatprep.subr.bf16.mxu0 0
      %5175 = vmatpush1.bf16.msra.mxu0 0
      %5176 = vmatprep.subr.bf16.mxu0 0
      %5177 = vmatpush1.bf16.msra.mxu0 0
      %5178 = vmatprep.subr.bf16.mxu0 0
      %5179 = vmatpush1.bf16.msra.mxu0 0
      %5180 = vmatprep.subr.bf16.mxu0 0
      %5181 = vmatpush1.bf16.msra.mxu0 0
      %5182 = vmatprep.subr.bf16.mxu0 0
      %5183 = vmatpush1.bf16.msra.mxu0 0
      %5184 = vmatprep.subr.bf16.mxu0 0
      %5185 = vmatpush1.bf16.msra.mxu0 0
      %5186 = vmatprep.subr.bf16.mxu0 0
      %5187 = vmatpush1.bf16.msra.mxu0 0
      %5188 = vmatprep.mubr.bf16.mxu0 0
      %5189 = vmatmul.mubr.bf16.gmra.mrb[0].mxu0 %v783
      %v5190 = vpop.f32.mrb[0].mxu0
      %v5191 = vadd.f32 0.0, %v5190
      %v5192 = vpop.f32.mrb[0].mxu0
      %v5193 = vpop.f32.mrb[0].mxu0
      %v5194 = vadd.f32 0.0, %v5193
      %v5195 = vpop.f32.mrb[0].mxu0
      %5196 = vdwg.mxu0
      %v5197 = vpack.c.bf16 %v5194, %v5191
      %v5199 = vsel %vm781, %v5197, 0
      %5201 = vmatprep.subr.bf16.mxu0 0
      %5202 = vmatpush1.bf16.msra.mxu0 %v835
      %5203 = vmatprep.subr.bf16.mxu0 0
      %5204 = vmatpush1.bf16.msra.mxu0 0
      %5205 = vmatprep.subr.bf16.mxu0 0
      %5206 = vmatpush1.bf16.msra.mxu0 0
      %5207 = vmatprep.subr.bf16.mxu0 0
      %5208 = vmatpush1.bf16.msra.mxu0 0
      %5209 = vmatprep.subr.bf16.mxu0 0
      %5210 = vmatpush1.bf16.msra.mxu0 0
      %5211 = vmatprep.subr.bf16.mxu0 0
      %5212 = vmatpush1.bf16.msra.mxu0 0
      %5213 = vmatprep.subr.bf16.mxu0 0
      %5214 = vmatpush1.bf16.msra.mxu0 0
      %5215 = vmatprep.subr.bf16.mxu0 0
      %5216 = vmatpush1.bf16.msra.mxu0 0
      %5217 = vmatprep.subr.bf16.mxu0 0
      %5218 = vmatpush1.bf16.msra.mxu0 0
      %5219 = vmatprep.subr.bf16.mxu0 0
      %5220 = vmatpush1.bf16.msra.mxu0 0
      %5221 = vmatprep.subr.bf16.mxu0 0
      %5222 = vmatpush1.bf16.msra.mxu0 0
      %5223 = vmatprep.subr.bf16.mxu0 0
      %5224 = vmatpush1.bf16.msra.mxu0 0
      %5225 = vmatprep.subr.bf16.mxu0 0
      %5226 = vmatpush1.bf16.msra.mxu0 0
      %5227 = vmatprep.subr.bf16.mxu0 0
      %5228 = vmatpush1.bf16.msra.mxu0 0
      %5229 = vmatprep.subr.bf16.mxu0 0
      %5230 = vmatpush1.bf16.msra.mxu0 0
      %5231 = vmatprep.subr.bf16.mxu0 0
      %5232 = vmatpush1.bf16.msra.mxu0 0
      %5233 = vmatprep.mubr.bf16.mxu0 0
      %5234 = vmatmul.mubr.bf16.gmra.mrb[0].mxu0 %v5199
      %v5235 = vpop.f32.mrb[0].mxu0
      %v5236 = vadd.f32 0.0, %v5235
      %v5237 = vpop.f32.mrb[0].mxu0
      %v5238 = vpop.f32.mrb[0].mxu0
      %v5239 = vadd.f32 0.0, %v5238
      %v5240 = vpop.f32.mrb[0].mxu0
      %5241 = vdwg.mxu0
      %v5242 = vmin.f32 %v5149, %v5236
      %v5243 = vmin.f32 %v5150, %v5239
      %s5244 = scalar_lea.vmem %s428, 160
      %v5245 = vld [vmem:[%s5244] sm:$0xf]
      %v5247 = vsel %vm785, %v5245, 0
      %5249 = vmatprep.subr.bf16.mxu0 0
      %5250 = vmatpush1.bf16.msra.mxu0 %v5247
      %5251 = vmatprep.subr.bf16.mxu0 0
      %5252 = vmatpush1.bf16.msra.mxu0 0
      %5253 = vmatprep.subr.bf16.mxu0 0
      %5254 = vmatpush1.bf16.msra.mxu0 0
      %5255 = vmatprep.subr.bf16.mxu0 0
      %5256 = vmatpush1.bf16.msra.mxu0 0
      %5257 = vmatprep.subr.bf16.mxu0 0
      %5258 = vmatpush1.bf16.msra.mxu0 0
      %5259 = vmatprep.subr.bf16.mxu0 0
      %5260 = vmatpush1.bf16.msra.mxu0 0
      %5261 = vmatprep.subr.bf16.mxu0 0
      %5262 = vmatpush1.bf16.msra.mxu0 0
      %5263 = vmatprep.subr.bf16.mxu0 0
      %5264 = vmatpush1.bf16.msra.mxu0 0
      %5265 = vmatprep.subr.bf16.mxu0 0
      %5266 = vmatpush1.bf16.msra.mxu0 0
      %5267 = vmatprep.subr.bf16.mxu0 0
      %5268 = vmatpush1.bf16.msra.mxu0 0
      %5269 = vmatprep.subr.bf16.mxu0 0
      %5270 = vmatpush1.bf16.msra.mxu0 0
      %5271 = vmatprep.subr.bf16.mxu0 0
      %5272 = vmatpush1.bf16.msra.mxu0 0
      %5273 = vmatprep.subr.bf16.mxu0 0
      %5274 = vmatpush1.bf16.msra.mxu0 0
      %5275 = vmatprep.subr.bf16.mxu0 0
      %5276 = vmatpush1.bf16.msra.mxu0 0
      %5277 = vmatprep.subr.bf16.mxu0 0
      %5278 = vmatpush1.bf16.msra.mxu0 0
      %5279 = vmatprep.subr.bf16.mxu0 0
      %5280 = vmatpush1.bf16.msra.mxu0 0
      %5281 = vmatprep.mubr.bf16.mxu0 0
      %5282 = vmatmul.mubr.bf16.gmra.mrb[0].mxu0 %v783
      %v5283 = vpop.f32.mrb[0].mxu0
      %v5284 = vadd.f32 0.0, %v5283
      %v5285 = vpop.f32.mrb[0].mxu0
      %v5286 = vpop.f32.mrb[0].mxu0
      %v5287 = vadd.f32 0.0, %v5286
      %v5288 = vpop.f32.mrb[0].mxu0
      %5289 = vdwg.mxu0
      %v5290 = vpack.c.bf16 %v5287, %v5284
      %v5292 = vsel %vm781, %v5290, 0
      %5294 = vmatprep.subr.bf16.mxu0 0
      %5295 = vmatpush1.bf16.msra.mxu0 %v835
      %5296 = vmatprep.subr.bf16.mxu0 0
      %5297 = vmatpush1.bf16.msra.mxu0 0
      %5298 = vmatprep.subr.bf16.mxu0 0
      %5299 = vmatpush1.bf16.msra.mxu0 0
      %5300 = vmatprep.subr.bf16.mxu0 0
      %5301 = vmatpush1.bf16.msra.mxu0 0
      %5302 = vmatprep.subr.bf16.mxu0 0
      %5303 = vmatpush1.bf16.msra.mxu0 0
      %5304 = vmatprep.subr.bf16.mxu0 0
      %5305 = vmatpush1.bf16.msra.mxu0 0
      %5306 = vmatprep.subr.bf16.mxu0 0
      %5307 = vmatpush1.bf16.msra.mxu0 0
      %5308 = vmatprep.subr.bf16.mxu0 0
      %5309 = vmatpush1.bf16.msra.mxu0 0
      %5310 = vmatprep.subr.bf16.mxu0 0
      %5311 = vmatpush1.bf16.msra.mxu0 0
      %5312 = vmatprep.subr.bf16.mxu0 0
      %5313 = vmatpush1.bf16.msra.mxu0 0
      %5314 = vmatprep.subr.bf16.mxu0 0
      %5315 = vmatpush1.bf16.msra.mxu0 0
      %5316 = vmatprep.subr.bf16.mxu0 0
      %5317 = vmatpush1.bf16.msra.mxu0 0
      %5318 = vmatprep.subr.bf16.mxu0 0
      %5319 = vmatpush1.bf16.msra.mxu0 0
      %5320 = vmatprep.subr.bf16.mxu0 0
      %5321 = vmatpush1.bf16.msra.mxu0 0
      %5322 = vmatprep.subr.bf16.mxu0 0
      %5323 = vmatpush1.bf16.msra.mxu0 0
      %5324 = vmatprep.subr.bf16.mxu0 0
      %5325 = vmatpush1.bf16.msra.mxu0 0
      %5326 = vmatprep.mubr.bf16.mxu0 0
      %5327 = vmatmul.mubr.bf16.gmra.mrb[0].mxu0 %v5292
      %v5328 = vpop.f32.mrb[0].mxu0
      %v5329 = vadd.f32 0.0, %v5328
      %v5330 = vpop.f32.mrb[0].mxu0
      %v5331 = vpop.f32.mrb[0].mxu0
      %v5332 = vadd.f32 0.0, %v5331
      %v5333 = vpop.f32.mrb[0].mxu0
      %5334 = vdwg.mxu0
      %v5335 = vmin.f32 %v5242, %v5329
      %v5336 = vmin.f32 %v5243, %v5332
      %s5337 = scalar_lea.vmem %s428, 184
      %v5338 = vld [vmem:[%s5337] sm:$0xf]
      %v5340 = vsel %vm785, %v5338, 0
      %5342 = vmatprep.subr.bf16.mxu0 0
      %5343 = vmatpush1.bf16.msra.mxu0 %v5340
      %5344 = vmatprep.subr.bf16.mxu0 0
      %5345 = vmatpush1.bf16.msra.mxu0 0
      %5346 = vmatprep.subr.bf16.mxu0 0
      %5347 = vmatpush1.bf16.msra.mxu0 0
      %5348 = vmatprep.subr.bf16.mxu0 0
      %5349 = vmatpush1.bf16.msra.mxu0 0
      %5350 = vmatprep.subr.bf16.mxu0 0
      %5351 = vmatpush1.bf16.msra.mxu0 0
      %5352 = vmatprep.subr.bf16.mxu0 0
      %5353 = vmatpush1.bf16.msra.mxu0 0
      %5354 = vmatprep.subr.bf16.mxu0 0
      %5355 = vmatpush1.bf16.msra.mxu0 0
      %5356 = vmatprep.subr.bf16.mxu0 0
      %5357 = vmatpush1.bf16.msra.mxu0 0
      %5358 = vmatprep.subr.bf16.mxu0 0
      %5359 = vmatpush1.bf16.msra.mxu0 0
      %5360 = vmatprep.subr.bf16.mxu0 0
      %5361 = vmatpush1.bf16.msra.mxu0 0
      %5362 = vmatprep.subr.bf16.mxu0 0
      %5363 = vmatpush1.bf16.msra.mxu0 0
      %5364 = vmatprep.subr.bf16.mxu0 0
      %5365 = vmatpush1.bf16.msra.mxu0 0
      %5366 = vmatprep.subr.bf16.mxu0 0
      %5367 = vmatpush1.bf16.msra.mxu0 0
      %5368 = vmatprep.subr.bf16.mxu0 0
      %5369 = vmatpush1.bf16.msra.mxu0 0
      %5370 = vmatprep.subr.bf16.mxu0 0
      %5371 = vmatpush1.bf16.msra.mxu0 0
      %5372 = vmatprep.subr.bf16.mxu0 0
      %5373 = vmatpush1.bf16.msra.mxu0 0
      %5374 = vmatprep.mubr.bf16.mxu0 0
      %5375 = vmatmul.mubr.bf16.gmra.mrb[0].mxu0 %v783
      %v5376 = vpop.f32.mrb[0].mxu0
      %v5377 = vadd.f32 0.0, %v5376
      %v5378 = vpop.f32.mrb[0].mxu0
      %v5379 = vpop.f32.mrb[0].mxu0
      %v5380 = vadd.f32 0.0, %v5379
      %v5381 = vpop.f32.mrb[0].mxu0
      %5382 = vdwg.mxu0
      %v5383 = vpack.c.bf16 %v5380, %v5377
      %v5385 = vsel %vm781, %v5383, 0
      %5387 = vmatprep.subr.bf16.mxu0 0
      %5388 = vmatpush1.bf16.msra.mxu0 %v835
      %5389 = vmatprep.subr.bf16.mxu0 0
      %5390 = vmatpush1.bf16.msra.mxu0 0
      %5391 = vmatprep.subr.bf16.mxu0 0
      %5392 = vmatpush1.bf16.msra.mxu0 0
      %5393 = vmatprep.subr.bf16.mxu0 0
      %5394 = vmatpush1.bf16.msra.mxu0 0
      %5395 = vmatprep.subr.bf16.mxu0 0
      %5396 = vmatpush1.bf16.msra.mxu0 0
      %5397 = vmatprep.subr.bf16.mxu0 0
      %5398 = vmatpush1.bf16.msra.mxu0 0
      %5399 = vmatprep.subr.bf16.mxu0 0
      %5400 = vmatpush1.bf16.msra.mxu0 0
      %5401 = vmatprep.subr.bf16.mxu0 0
      %5402 = vmatpush1.bf16.msra.mxu0 0
      %5403 = vmatprep.subr.bf16.mxu0 0
      %5404 = vmatpush1.bf16.msra.mxu0 0
      %5405 = vmatprep.subr.bf16.mxu0 0
      %5406 = vmatpush1.bf16.msra.mxu0 0
      %5407 = vmatprep.subr.bf16.mxu0 0
      %5408 = vmatpush1.bf16.msra.mxu0 0
      %5409 = vmatprep.subr.bf16.mxu0 0
      %5410 = vmatpush1.bf16.msra.mxu0 0
      %5411 = vmatprep.subr.bf16.mxu0 0
      %5412 = vmatpush1.bf16.msra.mxu0 0
      %5413 = vmatprep.subr.bf16.mxu0 0
      %5414 = vmatpush1.bf16.msra.mxu0 0
      %5415 = vmatprep.subr.bf16.mxu0 0
      %5416 = vmatpush1.bf16.msra.mxu0 0
      %5417 = vmatprep.subr.bf16.mxu0 0
      %5418 = vmatpush1.bf16.msra.mxu0 0
      %5419 = vmatprep.mubr.bf16.mxu0 0
      %5420 = vmatmul.mubr.bf16.gmra.mrb[0].mxu0 %v5385
      %v5421 = vpop.f32.mrb[0].mxu0
      %v5422 = vadd.f32 0.0, %v5421
      %v5423 = vpop.f32.mrb[0].mxu0
      %v5424 = vpop.f32.mrb[0].mxu0
      %v5425 = vadd.f32 0.0, %v5424
      %v5426 = vpop.f32.mrb[0].mxu0
      %5427 = vdwg.mxu0
      %v5428 = vmin.f32 %v5335, %v5422
      %v5429 = vmin.f32 %v5336, %v5425
      %v5430 = vmul.f32 %v5428, %v516
      %v5431 = vmul.f32 %v5429, %v517
      %v5432 = vadd.f32 %v4674, %v5430
      %v5433 = vadd.f32 %v4675, %v5431
      %v5434 = vsub.f32 1.0, %v516
      %v5435 = vsub.f32 1.0, %v517
      %v5436 = vmul.f32 %v5428, %v5434
      %v5437 = vmul.f32 %v5429, %v5435
      %v5438 = vmul.f32 %v5436, %v476
      %v5439 = vmul.f32 %v5437, %v477
      %vm5440 = vcmp.ne.f32.partialorder %v5438, 0.0
      %vm5441 = vcmp.ne.f32.partialorder %v5439, 0.0
      %v5442 = vsel %vm5440, %v5438, inf
      %v5443 = vsel %vm5441, %v5439, inf
      %v5444 = vmin.f32 %v4686, %v5442
      %v5445 = vmin.f32 %v4687, %v5443
      %s5446 = scalar_lea.vmem %s428, 20
      %v5447 = vld [vmem:[%s5446] sm:$0xf]
      %v5449 = vsel %vm785, %v5447, 0
      %5451 = vmatprep.subr.bf16.mxu0 0
      %5452 = vmatpush1.bf16.msra.mxu0 %v5449
      %5453 = vmatprep.subr.bf16.mxu0 0
      %5454 = vmatpush1.bf16.msra.mxu0 0
      %5455 = vmatprep.subr.bf16.mxu0 0
      %5456 = vmatpush1.bf16.msra.mxu0 0
      %5457 = vmatprep.subr.bf16.mxu0 0
      %5458 = vmatpush1.bf16.msra.mxu0 0
      %5459 = vmatprep.subr.bf16.mxu0 0
      %5460 = vmatpush1.bf16.msra.mxu0 0
      %5461 = vmatprep.subr.bf16.mxu0 0
      %5462 = vmatpush1.bf16.msra.mxu0 0
      %5463 = vmatprep.subr.bf16.mxu0 0
      %5464 = vmatpush1.bf16.msra.mxu0 0
      %5465 = vmatprep.subr.bf16.mxu0 0
      %5466 = vmatpush1.bf16.msra.mxu0 0
      %5467 = vmatprep.subr.bf16.mxu0 0
      %5468 = vmatpush1.bf16.msra.mxu0 0
      %5469 = vmatprep.subr.bf16.mxu0 0
      %5470 = vmatpush1.bf16.msra.mxu0 0
      %5471 = vmatprep.subr.bf16.mxu0 0
      %5472 = vmatpush1.bf16.msra.mxu0 0
      %5473 = vmatprep.subr.bf16.mxu0 0
      %5474 = vmatpush1.bf16.msra.mxu0 0
      %5475 = vmatprep.subr.bf16.mxu0 0
      %5476 = vmatpush1.bf16.msra.mxu0 0
      %5477 = vmatprep.subr.bf16.mxu0 0
      %5478 = vmatpush1.bf16.msra.mxu0 0
      %5479 = vmatprep.subr.bf16.mxu0 0
      %5480 = vmatpush1.bf16.msra.mxu0 0
      %5481 = vmatprep.subr.bf16.mxu0 0
      %5482 = vmatpush1.bf16.msra.mxu0 0
      %5483 = vmatprep.mubr.bf16.mxu0 0
      %5484 = vmatmul.mubr.bf16.gmra.mrb[0].mxu0 %v783
      %v5485 = vpop.f32.mrb[0].mxu0
      %v5486 = vadd.f32 0.0, %v5485
      %v5487 = vpop.f32.mrb[0].mxu0
      %v5488 = vpop.f32.mrb[0].mxu0
      %v5489 = vadd.f32 0.0, %v5488
      %v5490 = vpop.f32.mrb[0].mxu0
      %5491 = vdwg.mxu0
      %v5492 = vpack.c.bf16 %v5489, %v5486
      %v5494 = vsel %vm781, %v5492, 0
      %5496 = vmatprep.subr.bf16.mxu0 0
      %5497 = vmatpush1.bf16.msra.mxu0 %v835
      %5498 = vmatprep.subr.bf16.mxu0 0
      %5499 = vmatpush1.bf16.msra.mxu0 0
      %5500 = vmatprep.subr.bf16.mxu0 0
      %5501 = vmatpush1.bf16.msra.mxu0 0
      %5502 = vmatprep.subr.bf16.mxu0 0
      %5503 = vmatpush1.bf16.msra.mxu0 0
      %5504 = vmatprep.subr.bf16.mxu0 0
      %5505 = vmatpush1.bf16.msra.mxu0 0
      %5506 = vmatprep.subr.bf16.mxu0 0
      %5507 = vmatpush1.bf16.msra.mxu0 0
      %5508 = vmatprep.subr.bf16.mxu0 0
      %5509 = vmatpush1.bf16.msra.mxu0 0
      %5510 = vmatprep.subr.bf16.mxu0 0
      %5511 = vmatpush1.bf16.msra.mxu0 0
      %5512 = vmatprep.subr.bf16.mxu0 0
      %5513 = vmatpush1.bf16.msra.mxu0 0
      %5514 = vmatprep.subr.bf16.mxu0 0
      %5515 = vmatpush1.bf16.msra.mxu0 0
      %5516 = vmatprep.subr.bf16.mxu0 0
      %5517 = vmatpush1.bf16.msra.mxu0 0
      %5518 = vmatprep.subr.bf16.mxu0 0
      %5519 = vmatpush1.bf16.msra.mxu0 0
      %5520 = vmatprep.subr.bf16.mxu0 0
      %5521 = vmatpush1.bf16.msra.mxu0 0
      %5522 = vmatprep.subr.bf16.mxu0 0
      %5523 = vmatpush1.bf16.msra.mxu0 0
      %5524 = vmatprep.subr.bf16.mxu0 0
      %5525 = vmatpush1.bf16.msra.mxu0 0
      %5526 = vmatprep.subr.bf16.mxu0 0
      %5527 = vmatpush1.bf16.msra.mxu0 0
      %5528 = vmatprep.mubr.bf16.mxu0 0
      %5529 = vmatmul.mubr.bf16.gmra.mrb[0].mxu0 %v5494
      %v5530 = vpop.f32.mrb[0].mxu0
      %v5531 = vadd.f32 0.0, %v5530
      %v5532 = vpop.f32.mrb[0].mxu0
      %v5533 = vpop.f32.mrb[0].mxu0
      %v5534 = vadd.f32 0.0, %v5533
      %v5535 = vpop.f32.mrb[0].mxu0
      %5536 = vdwg.mxu0
      %s5537 = scalar_lea.vmem %s428, 44
      %v5538 = vld [vmem:[%s5537] sm:$0xf]
      %v5540 = vsel %vm785, %v5538, 0
      %5542 = vmatprep.subr.bf16.mxu0 0
      %5543 = vmatpush1.bf16.msra.mxu0 %v5540
      %5544 = vmatprep.subr.bf16.mxu0 0
      %5545 = vmatpush1.bf16.msra.mxu0 0
      %5546 = vmatprep.subr.bf16.mxu0 0
      %5547 = vmatpush1.bf16.msra.mxu0 0
      %5548 = vmatprep.subr.bf16.mxu0 0
      %5549 = vmatpush1.bf16.msra.mxu0 0
      %5550 = vmatprep.subr.bf16.mxu0 0
      %5551 = vmatpush1.bf16.msra.mxu0 0
      %5552 = vmatprep.subr.bf16.mxu0 0
      %5553 = vmatpush1.bf16.msra.mxu0 0
      %5554 = vmatprep.subr.bf16.mxu0 0
      %5555 = vmatpush1.bf16.msra.mxu0 0
      %5556 = vmatprep.subr.bf16.mxu0 0
      %5557 = vmatpush1.bf16.msra.mxu0 0
      %5558 = vmatprep.subr.bf16.mxu0 0
      %5559 = vmatpush1.bf16.msra.mxu0 0
      %5560 = vmatprep.subr.bf16.mxu0 0
      %5561 = vmatpush1.bf16.msra.mxu0 0
      %5562 = vmatprep.subr.bf16.mxu0 0
      %5563 = vmatpush1.bf16.msra.mxu0 0
      %5564 = vmatprep.subr.bf16.mxu0 0
      %5565 = vmatpush1.bf16.msra.mxu0 0
      %5566 = vmatprep.subr.bf16.mxu0 0
      %5567 = vmatpush1.bf16.msra.mxu0 0
      %5568 = vmatprep.subr.bf16.mxu0 0
      %5569 = vmatpush1.bf16.msra.mxu0 0
      %5570 = vmatprep.subr.bf16.mxu0 0
      %5571 = vmatpush1.bf16.msra.mxu0 0
      %5572 = vmatprep.subr.bf16.mxu0 0
      %5573 = vmatpush1.bf16.msra.mxu0 0
      %5574 = vmatprep.mubr.bf16.mxu0 0
      %5575 = vmatmul.mubr.bf16.gmra.mrb[0].mxu0 %v783
      %v5576 = vpop.f32.mrb[0].mxu0
      %v5577 = vadd.f32 0.0, %v5576
      %v5578 = vpop.f32.mrb[0].mxu0
      %v5579 = vpop.f32.mrb[0].mxu0
      %v5580 = vadd.f32 0.0, %v5579
      %v5581 = vpop.f32.mrb[0].mxu0
      %5582 = vdwg.mxu0
      %v5583 = vpack.c.bf16 %v5580, %v5577
      %v5585 = vsel %vm781, %v5583, 0
      %5587 = vmatprep.subr.bf16.mxu0 0
      %5588 = vmatpush1.bf16.msra.mxu0 %v835
      %5589 = vmatprep.subr.bf16.mxu0 0
      %5590 = vmatpush1.bf16.msra.mxu0 0
      %5591 = vmatprep.subr.bf16.mxu0 0
      %5592 = vmatpush1.bf16.msra.mxu0 0
      %5593 = vmatprep.subr.bf16.mxu0 0
      %5594 = vmatpush1.bf16.msra.mxu0 0
      %5595 = vmatprep.subr.bf16.mxu0 0
      %5596 = vmatpush1.bf16.msra.mxu0 0
      %5597 = vmatprep.subr.bf16.mxu0 0
      %5598 = vmatpush1.bf16.msra.mxu0 0
      %5599 = vmatprep.subr.bf16.mxu0 0
      %5600 = vmatpush1.bf16.msra.mxu0 0
      %5601 = vmatprep.subr.bf16.mxu0 0
      %5602 = vmatpush1.bf16.msra.mxu0 0
      %5603 = vmatprep.subr.bf16.mxu0 0
      %5604 = vmatpush1.bf16.msra.mxu0 0
      %5605 = vmatprep.subr.bf16.mxu0 0
      %5606 = vmatpush1.bf16.msra.mxu0 0
      %5607 = vmatprep.subr.bf16.mxu0 0
      %5608 = vmatpush1.bf16.msra.mxu0 0
      %5609 = vmatprep.subr.bf16.mxu0 0
      %5610 = vmatpush1.bf16.msra.mxu0 0
      %5611 = vmatprep.subr.bf16.mxu0 0
      %5612 = vmatpush1.bf16.msra.mxu0 0
      %5613 = vmatprep.subr.bf16.mxu0 0
      %5614 = vmatpush1.bf16.msra.mxu0 0
      %5615 = vmatprep.subr.bf16.mxu0 0
      %5616 = vmatpush1.bf16.msra.mxu0 0
      %5617 = vmatprep.subr.bf16.mxu0 0
      %5618 = vmatpush1.bf16.msra.mxu0 0
      %5619 = vmatprep.mubr.bf16.mxu0 0
      %5620 = vmatmul.mubr.bf16.gmra.mrb[0].mxu0 %v5585
      %v5621 = vpop.f32.mrb[0].mxu0
      %v5622 = vadd.f32 0.0, %v5621
      %v5623 = vpop.f32.mrb[0].mxu0
      %v5624 = vpop.f32.mrb[0].mxu0
      %v5625 = vadd.f32 0.0, %v5624
      %v5626 = vpop.f32.mrb[0].mxu0
      %5627 = vdwg.mxu0
      %v5628 = vmin.f32 %v5531, %v5622
      %v5629 = vmin.f32 %v5534, %v5625
      %s5630 = scalar_lea.vmem %s428, 68
      %v5631 = vld [vmem:[%s5630] sm:$0xf]
      %v5633 = vsel %vm785, %v5631, 0
      %5635 = vmatprep.subr.bf16.mxu0 0
      %5636 = vmatpush1.bf16.msra.mxu0 %v5633
      %5637 = vmatprep.subr.bf16.mxu0 0
      %5638 = vmatpush1.bf16.msra.mxu0 0
      %5639 = vmatprep.subr.bf16.mxu0 0
      %5640 = vmatpush1.bf16.msra.mxu0 0
      %5641 = vmatprep.subr.bf16.mxu0 0
      %5642 = vmatpush1.bf16.msra.mxu0 0
      %5643 = vmatprep.subr.bf16.mxu0 0
      %5644 = vmatpush1.bf16.msra.mxu0 0
      %5645 = vmatprep.subr.bf16.mxu0 0
      %5646 = vmatpush1.bf16.msra.mxu0 0
      %5647 = vmatprep.subr.bf16.mxu0 0
      %5648 = vmatpush1.bf16.msra.mxu0 0
      %5649 = vmatprep.subr.bf16.mxu0 0
      %5650 = vmatpush1.bf16.msra.mxu0 0
      %5651 = vmatprep.subr.bf16.mxu0 0
      %5652 = vmatpush1.bf16.msra.mxu0 0
      %5653 = vmatprep.subr.bf16.mxu0 0
      %5654 = vmatpush1.bf16.msra.mxu0 0
      %5655 = vmatprep.subr.bf16.mxu0 0
      %5656 = vmatpush1.bf16.msra.mxu0 0
      %5657 = vmatprep.subr.bf16.mxu0 0
      %5658 = vmatpush1.bf16.msra.mxu0 0
      %5659 = vmatprep.subr.bf16.mxu0 0
      %5660 = vmatpush1.bf16.msra.mxu0 0
      %5661 = vmatprep.subr.bf16.mxu0 0
      %5662 = vmatpush1.bf16.msra.mxu0 0
      %5663 = vmatprep.subr.bf16.mxu0 0
      %5664 = vmatpush1.bf16.msra.mxu0 0
      %5665 = vmatprep.subr.bf16.mxu0 0
      %5666 = vmatpush1.bf16.msra.mxu0 0
      %5667 = vmatprep.mubr.bf16.mxu0 0
      %5668 = vmatmul.mubr.bf16.gmra.mrb[0].mxu0 %v783
      %v5669 = vpop.f32.mrb[0].mxu0
      %v5670 = vadd.f32 0.0, %v5669
      %v5671 = vpop.f32.mrb[0].mxu0
      %v5672 = vpop.f32.mrb[0].mxu0
      %v5673 = vadd.f32 0.0, %v5672
      %v5674 = vpop.f32.mrb[0].mxu0
      %5675 = vdwg.mxu0
      %v5676 = vpack.c.bf16 %v5673, %v5670
      %v5678 = vsel %vm781, %v5676, 0
      %5680 = vmatprep.subr.bf16.mxu0 0
      %5681 = vmatpush1.bf16.msra.mxu0 %v835
      %5682 = vmatprep.subr.bf16.mxu0 0
      %5683 = vmatpush1.bf16.msra.mxu0 0
      %5684 = vmatprep.subr.bf16.mxu0 0
      %5685 = vmatpush1.bf16.msra.mxu0 0
      %5686 = vmatprep.subr.bf16.mxu0 0
      %5687 = vmatpush1.bf16.msra.mxu0 0
      %5688 = vmatprep.subr.bf16.mxu0 0
      %5689 = vmatpush1.bf16.msra.mxu0 0
      %5690 = vmatprep.subr.bf16.mxu0 0
      %5691 = vmatpush1.bf16.msra.mxu0 0
      %5692 = vmatprep.subr.bf16.mxu0 0
      %5693 = vmatpush1.bf16.msra.mxu0 0
      %5694 = vmatprep.subr.bf16.mxu0 0
      %5695 = vmatpush1.bf16.msra.mxu0 0
      %5696 = vmatprep.subr.bf16.mxu0 0
      %5697 = vmatpush1.bf16.msra.mxu0 0
      %5698 = vmatprep.subr.bf16.mxu0 0
      %5699 = vmatpush1.bf16.msra.mxu0 0
      %5700 = vmatprep.subr.bf16.mxu0 0
      %5701 = vmatpush1.bf16.msra.mxu0 0
      %5702 = vmatprep.subr.bf16.mxu0 0
      %5703 = vmatpush1.bf16.msra.mxu0 0
      %5704 = vmatprep.subr.bf16.mxu0 0
      %5705 = vmatpush1.bf16.msra.mxu0 0
      %5706 = vmatprep.subr.bf16.mxu0 0
      %5707 = vmatpush1.bf16.msra.mxu0 0
      %5708 = vmatprep.subr.bf16.mxu0 0
      %5709 = vmatpush1.bf16.msra.mxu0 0
      %5710 = vmatprep.subr.bf16.mxu0 0
      %5711 = vmatpush1.bf16.msra.mxu0 0
      %5712 = vmatprep.mubr.bf16.mxu0 0
      %5713 = vmatmul.mubr.bf16.gmra.mrb[0].mxu0 %v5678
      %v5714 = vpop.f32.mrb[0].mxu0
      %v5715 = vadd.f32 0.0, %v5714
      %v5716 = vpop.f32.mrb[0].mxu0
      %v5717 = vpop.f32.mrb[0].mxu0
      %v5718 = vadd.f32 0.0, %v5717
      %v5719 = vpop.f32.mrb[0].mxu0
      %5720 = vdwg.mxu0
      %v5721 = vmin.f32 %v5628, %v5715
      %v5722 = vmin.f32 %v5629, %v5718
      %s5723 = scalar_lea.vmem %s428, 92
      %v5724 = vld [vmem:[%s5723] sm:$0xf]
      %v5726 = vsel %vm785, %v5724, 0
      %5728 = vmatprep.subr.bf16.mxu0 0
      %5729 = vmatpush1.bf16.msra.mxu0 %v5726
      %5730 = vmatprep.subr.bf16.mxu0 0
      %5731 = vmatpush1.bf16.msra.mxu0 0
      %5732 = vmatprep.subr.bf16.mxu0 0
      %5733 = vmatpush1.bf16.msra.mxu0 0
      %5734 = vmatprep.subr.bf16.mxu0 0
      %5735 = vmatpush1.bf16.msra.mxu0 0
      %5736 = vmatprep.subr.bf16.mxu0 0
      %5737 = vmatpush1.bf16.msra.mxu0 0
      %5738 = vmatprep.subr.bf16.mxu0 0
      %5739 = vmatpush1.bf16.msra.mxu0 0
      %5740 = vmatprep.subr.bf16.mxu0 0
      %5741 = vmatpush1.bf16.msra.mxu0 0
      %5742 = vmatprep.subr.bf16.mxu0 0
      %5743 = vmatpush1.bf16.msra.mxu0 0
      %5744 = vmatprep.subr.bf16.mxu0 0
      %5745 = vmatpush1.bf16.msra.mxu0 0
      %5746 = vmatprep.subr.bf16.mxu0 0
      %5747 = vmatpush1.bf16.msra.mxu0 0
      %5748 = vmatprep.subr.bf16.mxu0 0
      %5749 = vmatpush1.bf16.msra.mxu0 0
      %5750 = vmatprep.subr.bf16.mxu0 0
      %5751 = vmatpush1.bf16.msra.mxu0 0
      %5752 = vmatprep.subr.bf16.mxu0 0
      %5753 = vmatpush1.bf16.msra.mxu0 0
      %5754 = vmatprep.subr.bf16.mxu0 0
      %5755 = vmatpush1.bf16.msra.mxu0 0
      %5756 = vmatprep.subr.bf16.mxu0 0
      %5757 = vmatpush1.bf16.msra.mxu0 0
      %5758 = vmatprep.subr.bf16.mxu0 0
      %5759 = vmatpush1.bf16.msra.mxu0 0
      %5760 = vmatprep.mubr.bf16.mxu0 0
      %5761 = vmatmul.mubr.bf16.gmra.mrb[0].mxu0 %v783
      %v5762 = vpop.f32.mrb[0].mxu0
      %v5763 = vadd.f32 0.0, %v5762
      %v5764 = vpop.f32.mrb[0].mxu0
      %v5765 = vpop.f32.mrb[0].mxu0
      %v5766 = vadd.f32 0.0, %v5765
      %v5767 = vpop.f32.mrb[0].mxu0
      %5768 = vdwg.mxu0
      %v5769 = vpack.c.bf16 %v5766, %v5763
      %v5771 = vsel %vm781, %v5769, 0
      %5773 = vmatprep.subr.bf16.mxu0 0
      %5774 = vmatpush1.bf16.msra.mxu0 %v835
      %5775 = vmatprep.subr.bf16.mxu0 0
      %5776 = vmatpush1.bf16.msra.mxu0 0
      %5777 = vmatprep.subr.bf16.mxu0 0
      %5778 = vmatpush1.bf16.msra.mxu0 0
      %5779 = vmatprep.subr.bf16.mxu0 0
      %5780 = vmatpush1.bf16.msra.mxu0 0
      %5781 = vmatprep.subr.bf16.mxu0 0
      %5782 = vmatpush1.bf16.msra.mxu0 0
      %5783 = vmatprep.subr.bf16.mxu0 0
      %5784 = vmatpush1.bf16.msra.mxu0 0
      %5785 = vmatprep.subr.bf16.mxu0 0
      %5786 = vmatpush1.bf16.msra.mxu0 0
      %5787 = vmatprep.subr.bf16.mxu0 0
      %5788 = vmatpush1.bf16.msra.mxu0 0
      %5789 = vmatprep.subr.bf16.mxu0 0
      %5790 = vmatpush1.bf16.msra.mxu0 0
      %5791 = vmatprep.subr.bf16.mxu0 0
      %5792 = vmatpush1.bf16.msra.mxu0 0
      %5793 = vmatprep.subr.bf16.mxu0 0
      %5794 = vmatpush1.bf16.msra.mxu0 0
      %5795 = vmatprep.subr.bf16.mxu0 0
      %5796 = vmatpush1.bf16.msra.mxu0 0
      %5797 = vmatprep.subr.bf16.mxu0 0
      %5798 = vmatpush1.bf16.msra.mxu0 0
      %5799 = vmatprep.subr.bf16.mxu0 0
      %5800 = vmatpush1.bf16.msra.mxu0 0
      %5801 = vmatprep.subr.bf16.mxu0 0
      %5802 = vmatpush1.bf16.msra.mxu0 0
      %5803 = vmatprep.subr.bf16.mxu0 0
      %5804 = vmatpush1.bf16.msra.mxu0 0
      %5805 = vmatprep.mubr.bf16.mxu0 0
      %5806 = vmatmul.mubr.bf16.gmra.mrb[0].mxu0 %v5771
      %v5807 = vpop.f32.mrb[0].mxu0
      %v5808 = vadd.f32 0.0, %v5807
      %v5809 = vpop.f32.mrb[0].mxu0
      %v5810 = vpop.f32.mrb[0].mxu0
      %v5811 = vadd.f32 0.0, %v5810
      %v5812 = vpop.f32.mrb[0].mxu0
      %5813 = vdwg.mxu0
      %v5814 = vmin.f32 %v5721, %v5808
      %v5815 = vmin.f32 %v5722, %v5811
      %s5816 = scalar_lea.vmem %s428, 116
      %v5817 = vld [vmem:[%s5816] sm:$0xf]
      %v5819 = vsel %vm785, %v5817, 0
      %5821 = vmatprep.subr.bf16.mxu0 0
      %5822 = vmatpush1.bf16.msra.mxu0 %v5819
      %5823 = vmatprep.subr.bf16.mxu0 0
      %5824 = vmatpush1.bf16.msra.mxu0 0
      %5825 = vmatprep.subr.bf16.mxu0 0
      %5826 = vmatpush1.bf16.msra.mxu0 0
      %5827 = vmatprep.subr.bf16.mxu0 0
      %5828 = vmatpush1.bf16.msra.mxu0 0
      %5829 = vmatprep.subr.bf16.mxu0 0
      %5830 = vmatpush1.bf16.msra.mxu0 0
      %5831 = vmatprep.subr.bf16.mxu0 0
      %5832 = vmatpush1.bf16.msra.mxu0 0
      %5833 = vmatprep.subr.bf16.mxu0 0
      %5834 = vmatpush1.bf16.msra.mxu0 0
      %5835 = vmatprep.subr.bf16.mxu0 0
      %5836 = vmatpush1.bf16.msra.mxu0 0
      %5837 = vmatprep.subr.bf16.mxu0 0
      %5838 = vmatpush1.bf16.msra.mxu0 0
      %5839 = vmatprep.subr.bf16.mxu0 0
      %5840 = vmatpush1.bf16.msra.mxu0 0
      %5841 = vmatprep.subr.bf16.mxu0 0
      %5842 = vmatpush1.bf16.msra.mxu0 0
      %5843 = vmatprep.subr.bf16.mxu0 0
      %5844 = vmatpush1.bf16.msra.mxu0 0
      %5845 = vmatprep.subr.bf16.mxu0 0
      %5846 = vmatpush1.bf16.msra.mxu0 0
      %5847 = vmatprep.subr.bf16.mxu0 0
      %5848 = vmatpush1.bf16.msra.mxu0 0
      %5849 = vmatprep.subr.bf16.mxu0 0
      %5850 = vmatpush1.bf16.msra.mxu0 0
      %5851 = vmatprep.subr.bf16.mxu0 0
      %5852 = vmatpush1.bf16.msra.mxu0 0
      %5853 = vmatprep.mubr.bf16.mxu0 0
      %5854 = vmatmul.mubr.bf16.gmra.mrb[0].mxu0 %v783
      %v5855 = vpop.f32.mrb[0].mxu0
      %v5856 = vadd.f32 0.0, %v5855
      %v5857 = vpop.f32.mrb[0].mxu0
      %v5858 = vpop.f32.mrb[0].mxu0
      %v5859 = vadd.f32 0.0, %v5858
      %v5860 = vpop.f32.mrb[0].mxu0
      %5861 = vdwg.mxu0
      %v5862 = vpack.c.bf16 %v5859, %v5856
      %v5864 = vsel %vm781, %v5862, 0
      %5866 = vmatprep.subr.bf16.mxu0 0
      %5867 = vmatpush1.bf16.msra.mxu0 %v835
      %5868 = vmatprep.subr.bf16.mxu0 0
      %5869 = vmatpush1.bf16.msra.mxu0 0
      %5870 = vmatprep.subr.bf16.mxu0 0
      %5871 = vmatpush1.bf16.msra.mxu0 0
      %5872 = vmatprep.subr.bf16.mxu0 0
      %5873 = vmatpush1.bf16.msra.mxu0 0
      %5874 = vmatprep.subr.bf16.mxu0 0
      %5875 = vmatpush1.bf16.msra.mxu0 0
      %5876 = vmatprep.subr.bf16.mxu0 0
      %5877 = vmatpush1.bf16.msra.mxu0 0
      %5878 = vmatprep.subr.bf16.mxu0 0
      %5879 = vmatpush1.bf16.msra.mxu0 0
      %5880 = vmatprep.subr.bf16.mxu0 0
      %5881 = vmatpush1.bf16.msra.mxu0 0
      %5882 = vmatprep.subr.bf16.mxu0 0
      %5883 = vmatpush1.bf16.msra.mxu0 0
      %5884 = vmatprep.subr.bf16.mxu0 0
      %5885 = vmatpush1.bf16.msra.mxu0 0
      %5886 = vmatprep.subr.bf16.mxu0 0
      %5887 = vmatpush1.bf16.msra.mxu0 0
      %5888 = vmatprep.subr.bf16.mxu0 0
      %5889 = vmatpush1.bf16.msra.mxu0 0
      %5890 = vmatprep.subr.bf16.mxu0 0
      %5891 = vmatpush1.bf16.msra.mxu0 0
      %5892 = vmatprep.subr.bf16.mxu0 0
      %5893 = vmatpush1.bf16.msra.mxu0 0
      %5894 = vmatprep.subr.bf16.mxu0 0
      %5895 = vmatpush1.bf16.msra.mxu0 0
      %5896 = vmatprep.subr.bf16.mxu0 0
      %5897 = vmatpush1.bf16.msra.mxu0 0
      %5898 = vmatprep.mubr.bf16.mxu0 0
      %5899 = vmatmul.mubr.bf16.gmra.mrb[0].mxu0 %v5864
      %v5900 = vpop.f32.mrb[0].mxu0
      %v5901 = vadd.f32 0.0, %v5900
      %v5902 = vpop.f32.mrb[0].mxu0
      %v5903 = vpop.f32.mrb[0].mxu0
      %v5904 = vadd.f32 0.0, %v5903
      %v5905 = vpop.f32.mrb[0].mxu0
      %5906 = vdwg.mxu0
      %v5907 = vmin.f32 %v5814, %v5901
      %v5908 = vmin.f32 %v5815, %v5904
      %s5909 = scalar_lea.vmem %s428, 140
      %v5910 = vld [vmem:[%s5909] sm:$0xf]
      %v5912 = vsel %vm785, %v5910, 0
      %5914 = vmatprep.subr.bf16.mxu0 0
      %5915 = vmatpush1.bf16.msra.mxu0 %v5912
      %5916 = vmatprep.subr.bf16.mxu0 0
      %5917 = vmatpush1.bf16.msra.mxu0 0
      %5918 = vmatprep.subr.bf16.mxu0 0
      %5919 = vmatpush1.bf16.msra.mxu0 0
      %5920 = vmatprep.subr.bf16.mxu0 0
      %5921 = vmatpush1.bf16.msra.mxu0 0
      %5922 = vmatprep.subr.bf16.mxu0 0
      %5923 = vmatpush1.bf16.msra.mxu0 0
      %5924 = vmatprep.subr.bf16.mxu0 0
      %5925 = vmatpush1.bf16.msra.mxu0 0
      %5926 = vmatprep.subr.bf16.mxu0 0
      %5927 = vmatpush1.bf16.msra.mxu0 0
      %5928 = vmatprep.subr.bf16.mxu0 0
      %5929 = vmatpush1.bf16.msra.mxu0 0
      %5930 = vmatprep.subr.bf16.mxu0 0
      %5931 = vmatpush1.bf16.msra.mxu0 0
      %5932 = vmatprep.subr.bf16.mxu0 0
      %5933 = vmatpush1.bf16.msra.mxu0 0
      %5934 = vmatprep.subr.bf16.mxu0 0
      %5935 = vmatpush1.bf16.msra.mxu0 0
      %5936 = vmatprep.subr.bf16.mxu0 0
      %5937 = vmatpush1.bf16.msra.mxu0 0
      %5938 = vmatprep.subr.bf16.mxu0 0
      %5939 = vmatpush1.bf16.msra.mxu0 0
      %5940 = vmatprep.subr.bf16.mxu0 0
      %5941 = vmatpush1.bf16.msra.mxu0 0
      %5942 = vmatprep.subr.bf16.mxu0 0
      %5943 = vmatpush1.bf16.msra.mxu0 0
      %5944 = vmatprep.subr.bf16.mxu0 0
      %5945 = vmatpush1.bf16.msra.mxu0 0
      %5946 = vmatprep.mubr.bf16.mxu0 0
      %5947 = vmatmul.mubr.bf16.gmra.mrb[0].mxu0 %v783
      %v5948 = vpop.f32.mrb[0].mxu0
      %v5949 = vadd.f32 0.0, %v5948
      %v5950 = vpop.f32.mrb[0].mxu0
      %v5951 = vpop.f32.mrb[0].mxu0
      %v5952 = vadd.f32 0.0, %v5951
      %v5953 = vpop.f32.mrb[0].mxu0
      %5954 = vdwg.mxu0
      %v5955 = vpack.c.bf16 %v5952, %v5949
      %v5957 = vsel %vm781, %v5955, 0
      %5959 = vmatprep.subr.bf16.mxu0 0
      %5960 = vmatpush1.bf16.msra.mxu0 %v835
      %5961 = vmatprep.subr.bf16.mxu0 0
      %5962 = vmatpush1.bf16.msra.mxu0 0
      %5963 = vmatprep.subr.bf16.mxu0 0
      %5964 = vmatpush1.bf16.msra.mxu0 0
      %5965 = vmatprep.subr.bf16.mxu0 0
      %5966 = vmatpush1.bf16.msra.mxu0 0
      %5967 = vmatprep.subr.bf16.mxu0 0
      %5968 = vmatpush1.bf16.msra.mxu0 0
      %5969 = vmatprep.subr.bf16.mxu0 0
      %5970 = vmatpush1.bf16.msra.mxu0 0
      %5971 = vmatprep.subr.bf16.mxu0 0
      %5972 = vmatpush1.bf16.msra.mxu0 0
      %5973 = vmatprep.subr.bf16.mxu0 0
      %5974 = vmatpush1.bf16.msra.mxu0 0
      %5975 = vmatprep.subr.bf16.mxu0 0
      %5976 = vmatpush1.bf16.msra.mxu0 0
      %5977 = vmatprep.subr.bf16.mxu0 0
      %5978 = vmatpush1.bf16.msra.mxu0 0
      %5979 = vmatprep.subr.bf16.mxu0 0
      %5980 = vmatpush1.bf16.msra.mxu0 0
      %5981 = vmatprep.subr.bf16.mxu0 0
      %5982 = vmatpush1.bf16.msra.mxu0 0
      %5983 = vmatprep.subr.bf16.mxu0 0
      %5984 = vmatpush1.bf16.msra.mxu0 0
      %5985 = vmatprep.subr.bf16.mxu0 0
      %5986 = vmatpush1.bf16.msra.mxu0 0
      %5987 = vmatprep.subr.bf16.mxu0 0
      %5988 = vmatpush1.bf16.msra.mxu0 0
      %5989 = vmatprep.subr.bf16.mxu0 0
      %5990 = vmatpush1.bf16.msra.mxu0 0
      %5991 = vmatprep.mubr.bf16.mxu0 0
      %5992 = vmatmul.mubr.bf16.gmra.mrb[0].mxu0 %v5957
      %v5993 = vpop.f32.mrb[0].mxu0
      %v5994 = vadd.f32 0.0, %v5993
      %v5995 = vpop.f32.mrb[0].mxu0
      %v5996 = vpop.f32.mrb[0].mxu0
      %v5997 = vadd.f32 0.0, %v5996
      %v5998 = vpop.f32.mrb[0].mxu0
      %5999 = vdwg.mxu0
      %v6000 = vmin.f32 %v5907, %v5994
      %v6001 = vmin.f32 %v5908, %v5997
      %s6002 = scalar_lea.vmem %s428, 164
      %v6003 = vld [vmem:[%s6002] sm:$0xf]
      %v6005 = vsel %vm785, %v6003, 0
      %6007 = vmatprep.subr.bf16.mxu0 0
      %6008 = vmatpush1.bf16.msra.mxu0 %v6005
      %6009 = vmatprep.subr.bf16.mxu0 0
      %6010 = vmatpush1.bf16.msra.mxu0 0
      %6011 = vmatprep.subr.bf16.mxu0 0
      %6012 = vmatpush1.bf16.msra.mxu0 0
      %6013 = vmatprep.subr.bf16.mxu0 0
      %6014 = vmatpush1.bf16.msra.mxu0 0
      %6015 = vmatprep.subr.bf16.mxu0 0
      %6016 = vmatpush1.bf16.msra.mxu0 0
      %6017 = vmatprep.subr.bf16.mxu0 0
      %6018 = vmatpush1.bf16.msra.mxu0 0
      %6019 = vmatprep.subr.bf16.mxu0 0
      %6020 = vmatpush1.bf16.msra.mxu0 0
      %6021 = vmatprep.subr.bf16.mxu0 0
      %6022 = vmatpush1.bf16.msra.mxu0 0
      %6023 = vmatprep.subr.bf16.mxu0 0
      %6024 = vmatpush1.bf16.msra.mxu0 0
      %6025 = vmatprep.subr.bf16.mxu0 0
      %6026 = vmatpush1.bf16.msra.mxu0 0
      %6027 = vmatprep.subr.bf16.mxu0 0
      %6028 = vmatpush1.bf16.msra.mxu0 0
      %6029 = vmatprep.subr.bf16.mxu0 0
      %6030 = vmatpush1.bf16.msra.mxu0 0
      %6031 = vmatprep.subr.bf16.mxu0 0
      %6032 = vmatpush1.bf16.msra.mxu0 0
      %6033 = vmatprep.subr.bf16.mxu0 0
      %6034 = vmatpush1.bf16.msra.mxu0 0
      %6035 = vmatprep.subr.bf16.mxu0 0
      %6036 = vmatpush1.bf16.msra.mxu0 0
      %6037 = vmatprep.subr.bf16.mxu0 0
      %6038 = vmatpush1.bf16.msra.mxu0 0
      %6039 = vmatprep.mubr.bf16.mxu0 0
      %6040 = vmatmul.mubr.bf16.gmra.mrb[0].mxu0 %v783
      %v6041 = vpop.f32.mrb[0].mxu0
      %v6042 = vadd.f32 0.0, %v6041
      %v6043 = vpop.f32.mrb[0].mxu0
      %v6044 = vpop.f32.mrb[0].mxu0
      %v6045 = vadd.f32 0.0, %v6044
      %v6046 = vpop.f32.mrb[0].mxu0
      %6047 = vdwg.mxu0
      %v6048 = vpack.c.bf16 %v6045, %v6042
      %v6050 = vsel %vm781, %v6048, 0
      %6052 = vmatprep.subr.bf16.mxu0 0
      %6053 = vmatpush1.bf16.msra.mxu0 %v835
      %6054 = vmatprep.subr.bf16.mxu0 0
      %6055 = vmatpush1.bf16.msra.mxu0 0
      %6056 = vmatprep.subr.bf16.mxu0 0
      %6057 = vmatpush1.bf16.msra.mxu0 0
      %6058 = vmatprep.subr.bf16.mxu0 0
      %6059 = vmatpush1.bf16.msra.mxu0 0
      %6060 = vmatprep.subr.bf16.mxu0 0
      %6061 = vmatpush1.bf16.msra.mxu0 0
      %6062 = vmatprep.subr.bf16.mxu0 0
      %6063 = vmatpush1.bf16.msra.mxu0 0
      %6064 = vmatprep.subr.bf16.mxu0 0
      %6065 = vmatpush1.bf16.msra.mxu0 0
      %6066 = vmatprep.subr.bf16.mxu0 0
      %6067 = vmatpush1.bf16.msra.mxu0 0
      %6068 = vmatprep.subr.bf16.mxu0 0
      %6069 = vmatpush1.bf16.msra.mxu0 0
      %6070 = vmatprep.subr.bf16.mxu0 0
      %6071 = vmatpush1.bf16.msra.mxu0 0
      %6072 = vmatprep.subr.bf16.mxu0 0
      %6073 = vmatpush1.bf16.msra.mxu0 0
      %6074 = vmatprep.subr.bf16.mxu0 0
      %6075 = vmatpush1.bf16.msra.mxu0 0
      %6076 = vmatprep.subr.bf16.mxu0 0
      %6077 = vmatpush1.bf16.msra.mxu0 0
      %6078 = vmatprep.subr.bf16.mxu0 0
      %6079 = vmatpush1.bf16.msra.mxu0 0
      %6080 = vmatprep.subr.bf16.mxu0 0
      %6081 = vmatpush1.bf16.msra.mxu0 0
      %6082 = vmatprep.subr.bf16.mxu0 0
      %6083 = vmatpush1.bf16.msra.mxu0 0
      %6084 = vmatprep.mubr.bf16.mxu0 0
      %6085 = vmatmul.mubr.bf16.gmra.mrb[0].mxu0 %v6050
      %v6086 = vpop.f32.mrb[0].mxu0
      %v6087 = vadd.f32 0.0, %v6086
      %v6088 = vpop.f32.mrb[0].mxu0
      %v6089 = vpop.f32.mrb[0].mxu0
      %v6090 = vadd.f32 0.0, %v6089
      %v6091 = vpop.f32.mrb[0].mxu0
      %6092 = vdwg.mxu0
      %v6093 = vmin.f32 %v6000, %v6087
      %v6094 = vmin.f32 %v6001, %v6090
      %s6095 = scalar_lea.vmem %s428, 188
      %v6096 = vld [vmem:[%s6095] sm:$0xf]
      %v6098 = vsel %vm785, %v6096, 0
      %6100 = vmatprep.subr.bf16.mxu0 0
      %6101 = vmatpush1.bf16.msra.mxu0 %v6098
      %6102 = vmatprep.subr.bf16.mxu0 0
      %6103 = vmatpush1.bf16.msra.mxu0 0
      %6104 = vmatprep.subr.bf16.mxu0 0
      %6105 = vmatpush1.bf16.msra.mxu0 0
      %6106 = vmatprep.subr.bf16.mxu0 0
      %6107 = vmatpush1.bf16.msra.mxu0 0
      %6108 = vmatprep.subr.bf16.mxu0 0
      %6109 = vmatpush1.bf16.msra.mxu0 0
      %6110 = vmatprep.subr.bf16.mxu0 0
      %6111 = vmatpush1.bf16.msra.mxu0 0
      %6112 = vmatprep.subr.bf16.mxu0 0
      %6113 = vmatpush1.bf16.msra.mxu0 0
      %6114 = vmatprep.subr.bf16.mxu0 0
      %6115 = vmatpush1.bf16.msra.mxu0 0
      %6116 = vmatprep.subr.bf16.mxu0 0
      %6117 = vmatpush1.bf16.msra.mxu0 0
      %6118 = vmatprep.subr.bf16.mxu0 0
      %6119 = vmatpush1.bf16.msra.mxu0 0
      %6120 = vmatprep.subr.bf16.mxu0 0
      %6121 = vmatpush1.bf16.msra.mxu0 0
      %6122 = vmatprep.subr.bf16.mxu0 0
      %6123 = vmatpush1.bf16.msra.mxu0 0
      %6124 = vmatprep.subr.bf16.mxu0 0
      %6125 = vmatpush1.bf16.msra.mxu0 0
      %6126 = vmatprep.subr.bf16.mxu0 0
      %6127 = vmatpush1.bf16.msra.mxu0 0
      %6128 = vmatprep.subr.bf16.mxu0 0
      %6129 = vmatpush1.bf16.msra.mxu0 0
      %6130 = vmatprep.subr.bf16.mxu0 0
      %6131 = vmatpush1.bf16.msra.mxu0 0
      %6132 = vmatprep.mubr.bf16.mxu0 0
      %6133 = vmatmul.mubr.bf16.gmra.mrb[0].mxu0 %v783
      %v6134 = vpop.f32.mrb[0].mxu0
      %v6135 = vadd.f32 0.0, %v6134
      %v6136 = vpop.f32.mrb[0].mxu0
      %v6137 = vpop.f32.mrb[0].mxu0
      %v6138 = vadd.f32 0.0, %v6137
      %v6139 = vpop.f32.mrb[0].mxu0
      %6140 = vdwg.mxu0
      %v6141 = vpack.c.bf16 %v6138, %v6135
      %v6143 = vsel %vm781, %v6141, 0
      %6145 = vmatprep.subr.bf16.mxu0 0
      %6146 = vmatpush1.bf16.msra.mxu0 %v835
      %6147 = vmatprep.subr.bf16.mxu0 0
      %6148 = vmatpush1.bf16.msra.mxu0 0
      %6149 = vmatprep.subr.bf16.mxu0 0
      %6150 = vmatpush1.bf16.msra.mxu0 0
      %6151 = vmatprep.subr.bf16.mxu0 0
      %6152 = vmatpush1.bf16.msra.mxu0 0
      %6153 = vmatprep.subr.bf16.mxu0 0
      %6154 = vmatpush1.bf16.msra.mxu0 0
      %6155 = vmatprep.subr.bf16.mxu0 0
      %6156 = vmatpush1.bf16.msra.mxu0 0
      %6157 = vmatprep.subr.bf16.mxu0 0
      %6158 = vmatpush1.bf16.msra.mxu0 0
      %6159 = vmatprep.subr.bf16.mxu0 0
      %6160 = vmatpush1.bf16.msra.mxu0 0
      %6161 = vmatprep.subr.bf16.mxu0 0
      %6162 = vmatpush1.bf16.msra.mxu0 0
      %6163 = vmatprep.subr.bf16.mxu0 0
      %6164 = vmatpush1.bf16.msra.mxu0 0
      %6165 = vmatprep.subr.bf16.mxu0 0
      %6166 = vmatpush1.bf16.msra.mxu0 0
      %6167 = vmatprep.subr.bf16.mxu0 0
      %6168 = vmatpush1.bf16.msra.mxu0 0
      %6169 = vmatprep.subr.bf16.mxu0 0
      %6170 = vmatpush1.bf16.msra.mxu0 0
      %6171 = vmatprep.subr.bf16.mxu0 0
      %6172 = vmatpush1.bf16.msra.mxu0 0
      %6173 = vmatprep.subr.bf16.mxu0 0
      %6174 = vmatpush1.bf16.msra.mxu0 0
      %6175 = vmatprep.subr.bf16.mxu0 0
      %6176 = vmatpush1.bf16.msra.mxu0 0
      %6177 = vmatprep.mubr.bf16.mxu0 0
      %6178 = vmatmul.mubr.bf16.gmra.mrb[0].mxu0 %v6143
      %v6179 = vpop.f32.mrb[0].mxu0
      %v6180 = vadd.f32 0.0, %v6179
      %v6181 = vpop.f32.mrb[0].mxu0
      %v6182 = vpop.f32.mrb[0].mxu0
      %v6183 = vadd.f32 0.0, %v6182
      %v6184 = vpop.f32.mrb[0].mxu0
      %6185 = vdwg.mxu0
      %v6186 = vmin.f32 %v6093, %v6180
      %v6187 = vmin.f32 %v6094, %v6183
      %v6188 = vmul.f32 %v6186, %v524
      %v6189 = vmul.f32 %v6187, %v525
      %v6190 = vadd.f32 %v5432, %v6188
      %v6191 = vadd.f32 %v5433, %v6189
      %v6192 = vsub.f32 1.0, %v524
      %v6193 = vsub.f32 1.0, %v525
      %v6194 = vmul.f32 %v6186, %v6192
      %v6195 = vmul.f32 %v6187, %v6193
      %v6196 = vmul.f32 %v6194, %v476
      %v6197 = vmul.f32 %v6195, %v477
      %vm6198 = vcmp.ne.f32.partialorder %v6196, 0.0
      %vm6199 = vcmp.ne.f32.partialorder %v6197, 0.0
      %v6200 = vsel %vm6198, %v6196, inf
      %v6201 = vsel %vm6199, %v6197, inf
      %v6202 = vmin.f32 %v5444, %v6200
      %v6203 = vmin.f32 %v5445, %v6201
      %s6204 = scalar_lea.vmem [#allocation2], 3
      %v6205 = vld [vmem:[%s6204] sm:$0x1]
      %v6206 = vsel %vm630, %v6190, 0.0
      %v6207 = vsel %vm630, %v6191, 0.0
      %v6208 = vadd.f32 %v6206, %v6207
      %v6209 = vrot.slane %v6208, 4
      %v6210 = vadd.f32 %v6208, %v6209
      %v6211 = vrot.slane %v6210, 2
      %v6212 = vadd.f32 %v6210, %v6211
      %v6213 = vrot.slane %v6212, 1
      %v6214 = vadd.f32 %v6212, %v6213
      %v6215 = vadd.f32 %v6205, %v6214
      %6216 = vst.msk [vmem:[%s6204] sm:$0x1] %vm641, %v6215
      %s6217 = scalar_lea.vmem [#allocation2], 4
      %v6218 = vld [vmem:[%s6217] sm:$0x1]
      %v6219 = vsel %vm630, %v6202, inf
      %v6220 = vsel %vm630, %v6203, inf
      %v6221 = vmin.f32 %v6219, %v6220
      %v6222 = vrot.slane %v6221, 4
      %v6223 = vmin.f32 %v6221, %v6222
      %v6224 = vrot.slane %v6223, 2
      %v6225 = vmin.f32 %v6223, %v6224
      %v6226 = vrot.slane %v6225, 1
      %v6227 = vmin.f32 %v6225, %v6226
      %v6228 = vmin.f32 %v6218, %v6227
      %6229 = vst.msk [vmem:[%s6217] sm:$0x1] %vm641, %v6228
      // Predicated region
      $region53: #{local_center_loss_forward.1} parent=47 // pred_check
        %p6230 = pneg %p440
      $region54: #{local_center_loss_forward.1} parent=47 // pred_check_branch
        %6232 = sbr.rel (%p6230) target = $region56
      $region55: #{local_center_loss_forward.1} parent=47 // pred_region
        %v6233 = vld [vmem:[#allocation2] sm:$0x1]
        %v6234 = vsel %vm641, %v6233, 0.0
        %6235 = vadd.xlane.f32.xlu0 %v6234
        %v6236 = vpop.xlane.xlu0 %6235
        %vm6237 = vcmask 0
        %6238 = vst.msk [vmem:[%s438] sm:$0x1] %vm6237, %v6236
        %v6239 = vld [vmem:[%s643] sm:$0x1]
        %v6240 = vsel %vm641, %v6239, 0.0
        %6241 = vadd.xlane.f32.xlu0 %v6240
        %v6242 = vpop.xlane.xlu0 %6241
        %s6243 = scalar_lea.vmem %s438, 1
        %6244 = vst.msk [vmem:[%s6243] sm:$0x1] %vm6237, %v6242
        %v6245 = vld [vmem:[%s759] sm:$0x1]
        %v6246 = vsel %vm641, %v6245, 0.0
        %6247 = vadd.xlane.f32.xlu0 %v6246
        %v6248 = vpop.xlane.xlu0 %6247
        %s6249 = scalar_lea.vmem %s438, 2
        %6250 = vst.msk [vmem:[%s6249] sm:$0x1] %vm6237, %v6248
        %v6251 = vld [vmem:[%s6204] sm:$0x1]
        %v6252 = vsel %vm641, %v6251, 0.0
        %6253 = vadd.xlane.f32.xlu0 %v6252
        %v6254 = vpop.xlane.xlu0 %6253
        %s6255 = scalar_lea.vmem %s438, 3
        %6256 = vst.msk [vmem:[%s6255] sm:$0x1] %vm6237, %v6254
        %v6257 = vld [vmem:[%s6217] sm:$0x1]
        %v6258 = vsel %vm641, %v6257, inf
        %6259 = vmin.xlane.f32.xlu0 %v6258
        %v6260 = vpop.xlane.xlu0 %6259
        %s6261 = scalar_lea.vmem %s438, 4
        %6262 = vst.msk [vmem:[%s6261] sm:$0x1] %vm6237, %v6260
        %v6263 = vld [vmem:[%s1395] sm:$0x1]
        %v6264 = vsel %vm641, %v6263, 0.0
        %6265 = vadd.xlane.f32.xlu0 %v6264
        %v6266 = vpop.xlane.xlu0 %6265
        %s6267 = scalar_lea.vmem %s438, 5
        %6268 = vst.msk [vmem:[%s6267] sm:$0x1] %vm6237, %v6266
        %v6269 = vld [vmem:[%s1440] sm:$0x1]
        %v6270 = vsel %vm641, %v6269, 0.0
        %6271 = vadd.xlane.f32.xlu0 %v6270
        %v6272 = vpop.xlane.xlu0 %6271
        %s6273 = scalar_lea.vmem %s438, 6
        %6274 = vst.msk [vmem:[%s6273] sm:$0x1] %vm6237, %v6272
        %v6275 = vld [vmem:[%s1485] sm:$0x1]
        %v6276 = vsel %vm641, %v6275, 0.0
        %6277 = vadd.xlane.f32.xlu0 %v6276
        %v6278 = vpop.xlane.xlu0 %6277
        %s6279 = scalar_lea.vmem %s438, 7
        %6280 = vst.msk [vmem:[%s6279] sm:$0x1] %vm6237, %v6278
        %v6281 = vld [vmem:[%s1530] sm:$0x1]
        %v6282 = vsel %vm641, %v6281, 0.0
        %6283 = vadd.xlane.f32.xlu0 %v6282
        %v6284 = vpop.xlane.xlu0 %6283
        %s6285 = scalar_lea.vmem %s438, 8
        %6286 = vst.msk [vmem:[%s6285] sm:$0x1] %vm6237, %v6284
        %v6287 = vld [vmem:[%s1575] sm:$0x1]
        %v6288 = vsel %vm641, %v6287, 0.0
        %6289 = vadd.xlane.f32.xlu0 %v6288
        %v6290 = vpop.xlane.xlu0 %6289
        %s6291 = scalar_lea.vmem %s438, 9
        %6292 = vst.msk [vmem:[%s6291] sm:$0x1] %vm6237, %v6290
        %v6293 = vld [vmem:[%s1620] sm:$0x1]
        %v6294 = vsel %vm641, %v6293, 0.0
        %6295 = vadd.xlane.f32.xlu0 %v6294
        %v6296 = vpop.xlane.xlu0 %6295
        %s6297 = scalar_lea.vmem %s438, 10
        %6298 = vst.msk [vmem:[%s6297] sm:$0x1] %vm6237, %v6296
        %v6299 = vld [vmem:[%s1410] sm:$0x1]
        %v6300 = vsel %vm641, %v6299, 0.0
        %6301 = vadd.xlane.f32.xlu0 %v6300
        %v6302 = vpop.xlane.xlu0 %6301
        %s6303 = scalar_lea.vmem %s438, 11
        %6304 = vst.msk [vmem:[%s6303] sm:$0x1] %vm6237, %v6302
        %v6305 = vld [vmem:[%s1455] sm:$0x1]
        %v6306 = vsel %vm641, %v6305, 0.0
        %6307 = vadd.xlane.f32.xlu0 %v6306
        %v6308 = vpop.xlane.xlu0 %6307
        %s6309 = scalar_lea.vmem %s438, 12
        %6310 = vst.msk [vmem:[%s6309] sm:$0x1] %vm6237, %v6308
        %v6311 = vld [vmem:[%s1500] sm:$0x1]
        %v6312 = vsel %vm641, %v6311, 0.0
        %6313 = vadd.xlane.f32.xlu0 %v6312
        %v6314 = vpop.xlane.xlu0 %6313
        %s6315 = scalar_lea.vmem %s438, 13
        %6316 = vst.msk [vmem:[%s6315] sm:$0x1] %vm6237, %v6314
        %v6317 = vld [vmem:[%s1545] sm:$0x1]
        %v6318 = vsel %vm641, %v6317, 0.0
        %6319 = vadd.xlane.f32.xlu0 %v6318
        %v6320 = vpop.xlane.xlu0 %6319
        %s6321 = scalar_lea.vmem %s438, 14
        %6322 = vst.msk [vmem:[%s6321] sm:$0x1] %vm6237, %v6320
        %v6323 = vld [vmem:[%s1590] sm:$0x1]
        %v6324 = vsel %vm641, %v6323, 0.0
        %6325 = vadd.xlane.f32.xlu0 %v6324
        %v6326 = vpop.xlane.xlu0 %6325
        %s6327 = scalar_lea.vmem %s438, 15
        %6328 = vst.msk [vmem:[%s6327] sm:$0x1] %vm6237, %v6326
        %v6329 = vld [vmem:[%s1635] sm:$0x1]
        %v6330 = vsel %vm641, %v6329, 0.0
        %6331 = vadd.xlane.f32.xlu0 %v6330
        %v6332 = vpop.xlane.xlu0 %6331
        %s6333 = scalar_lea.vmem %s438, 16
        %6334 = vst.msk [vmem:[%s6333] sm:$0x1] %vm6237, %v6332
        %v6335 = vld [vmem:[%s1423] sm:$0x1]
        %v6336 = vsel %vm641, %v6335, 0.0
        %6337 = vadd.xlane.f32.xlu0 %v6336
        %v6338 = vpop.xlane.xlu0 %6337
        %s6339 = scalar_lea.vmem %s438, 17
        %6340 = vst.msk [vmem:[%s6339] sm:$0x1] %vm6237, %v6338
        %v6341 = vld [vmem:[%s1468] sm:$0x1]
        %v6342 = vsel %vm641, %v6341, 0.0
        %6343 = vadd.xlane.f32.xlu0 %v6342
        %v6344 = vpop.xlane.xlu0 %6343
        %s6345 = scalar_lea.vmem %s438, 18
        %6346 = vst.msk [vmem:[%s6345] sm:$0x1] %vm6237, %v6344
        %v6347 = vld [vmem:[%s1513] sm:$0x1]
        %v6348 = vsel %vm641, %v6347, 0.0
        %6349 = vadd.xlane.f32.xlu0 %v6348
        %v6350 = vpop.xlane.xlu0 %6349
        %s6351 = scalar_lea.vmem %s438, 19
        %6352 = vst.msk [vmem:[%s6351] sm:$0x1] %vm6237, %v6350
        %v6353 = vld [vmem:[%s1558] sm:$0x1]
        %v6354 = vsel %vm641, %v6353, 0.0
        %6355 = vadd.xlane.f32.xlu0 %v6354
        %v6356 = vpop.xlane.xlu0 %6355
        %s6357 = scalar_lea.vmem %s438, 20
        %6358 = vst.msk [vmem:[%s6357] sm:$0x1] %vm6237, %v6356
        %v6359 = vld [vmem:[%s1603] sm:$0x1]
        %v6360 = vsel %vm641, %v6359, 0.0
        %6361 = vadd.xlane.f32.xlu0 %v6360
        %v6362 = vpop.xlane.xlu0 %6361
        %s6363 = scalar_lea.vmem %s438, 21
        %6364 = vst.msk [vmem:[%s6363] sm:$0x1] %vm6237, %v6362
        %v6365 = vld [vmem:[%s1648] sm:$0x1]
        %v6366 = vsel %vm641, %v6365, 0.0
        %6367 = vadd.xlane.f32.xlu0 %v6366
        %v6368 = vpop.xlane.xlu0 %6367
        %s6369 = scalar_lea.vmem %s438, 22
        %6370 = vst.msk [vmem:[%s6369] sm:$0x1] %vm6237, %v6368
      $region56: #{local_center_loss_forward.1} parent=47 // pred_fallthru
        _
      %p6371 = scmp.lt.s32.totalorder %s22, 1
      %s6372 = scalar_select %p6371, %s22, 1
      %s6373 = smul.addr %s6372, 23
      %s6374 = scalar_lea.vmem %s7, %s6373
      // Predicated region
      $region57: #{local_center_loss_forward.1} parent=47 // pred_check
        %p6375 = pneg %p231
      $region58: #{local_center_loss_forward.1} parent=47 // pred_check_branch
        %6377 = sbr.rel (%p6375) target = $region60
      $region59: #{local_center_loss_forward.1} parent=47 // pred_region
        _
      $region60: #{local_center_loss_forward.1} parent=47 // pred_fallthru
        _
    $region48: #{local_center_loss_forward.1} parent=5 // pred_fallthru
      _
    %p6378 = scmp.le.s32.totalorder 2, %s13
    // Predicated region
    $region61: #{local_center_loss_forward.1} parent=5 // pred_check
      %p6379 = pneg %p6378
    $region62: #{local_center_loss_forward.1} parent=5 // pred_check_branch
      %6381 = sbr.rel (%p6379) target = $region64
    $region63: #{local_center_loss_forward.1} parent=5 // pred_region
      %s6382 = ssub.s32 %s13, 2
      // Predicated region
      $region65: #{local_center_loss_forward.1} parent=63 // pred_check
        %p6383 = pneg %p237
      $region66: #{local_center_loss_forward.1} parent=63 // pred_check_branch
        %6385 = sbr.rel (%p6383) target = $region68
      $region67: #{local_center_loss_forward.1} parent=63 // pred_region
        %p6386 = scmp.lt.s32.totalorder %s24, 1
        %s6387 = scalar_select %p6386, %s24, 1
        %s6388 = smul.addr %s6387, 23
        %s6389 = scalar_lea.vmem %s7, %s6388
      $region68: #{local_center_loss_forward.1} parent=63 // pred_fallthru
        _
    $region64: #{local_center_loss_forward.1} parent=5 // pred_fallthru
      _
  $region6: #{local_center_loss_forward.1} parent=0 // loop_footer
    %s17 = sadd.s32 1, %s13
  $region7: #{local_center_loss_forward.1} parent=0 // loop_footer_branch
    %12 = sbr.rel target = $region3
  $region8: #{local_center_loss_forward.1} parent=0 // loop_exit
    _

</llo_original>
